<compile_context>
chip_gen: v6e
topology: v6e:2x2x1
jax: 0.10.0
libtpu: 0.0.40
codegen_flags: <defaults>
</compile_context>

<pallas_src>
from functools import partial

import jax
import jax.numpy as jnp
from jax.experimental import pallas as pl
from jax.experimental.pallas import tpu as pltpu


_MAX_ROW_TILE = 512          # row tile for the M (spatial/batch-row) grid axis
_FC1_PAD = 1024              # fc1 width 1000 padded to a lane-dense 1024
_COMPILER_PARAMS = pltpu.CompilerParams(
    dimension_semantics=("parallel",),          # M axis shards across TCs (v7x megacore)
    vmem_limit_bytes=32 * 1024 * 1024,
)


# ----------------------------- Pallas kernels ----------------------------- #

def _conv1_pool_kernel(p00_ref, p01_ref, p10_ref, p11_ref, w_ref, b_ref, o_ref):
    """conv1 (Cin=1, k=3) + bias + ReLU + 2x2 maxpool, VPU only (no MXU).

    Each p*_ref is one pool-candidate im2col slab (tm, 9); w_ref is (9, 32).
    K=9 / N=32 would leave an MXU pass >90% empty, so do 9 broadcast MACs.
    """
    w = w_ref[...]                       # (9, 32) f32
    b = b_ref[...]                       # (1, 32) f32

    def tap_mm(p_ref):
        p = p_ref[...]                   # (tm, 9) f32
        acc = p[:, 0:1] * w[0:1, :]      # (tm,1)*(1,32) -> (tm,32) lane/sublane bcast
        for k in range(1, 9):
            acc = acc + p[:, k:k + 1] * w[k:k + 1, :]
        return acc

    g = jnp.maximum(jnp.maximum(tap_mm(p00_ref), tap_mm(p01_ref)),
                    jnp.maximum(tap_mm(p10_ref), tap_mm(p11_ref)))
    o_ref[...] = jnp.maximum(g + b, 0.0).astype(o_ref.dtype)


def _conv2_pool_kernel(p00_ref, p01_ref, p10_ref, p11_ref, w_ref, b_ref, o_ref):
    """conv2 + bias + ReLU + 2x2 maxpool, bf16 MXU GEMM with f32 accumulation."""
    w = w_ref[...]                       # (288, 64) bf16

    def mm(p_ref):
        return jnp.dot(p_ref[...], w, preferred_element_type=jnp.float32)

    g = jnp.maximum(jnp.maximum(mm(p00_ref), mm(p01_ref)),
                    jnp.maximum(mm(p10_ref), mm(p11_ref)))
    o_ref[...] = jnp.maximum(g + b_ref[...], 0.0).astype(o_ref.dtype)


def _mlp_kernel(x_ref, w1_ref, b1_ref, w2_ref, b2_ref, o_ref):
    """fc1 then fc2 (no activation in between, matching the PyTorch module)."""
    h = jnp.dot(x_ref[...], w1_ref[...], preferred_element_type=jnp.float32) + b1_ref[...]
    o_ref[...] = (jnp.dot(h.astype(w2_ref.dtype), w2_ref[...],
                          preferred_element_type=jnp.float32) + b2_ref[...])


# --------------------------- pallas_call wrappers -------------------------- #

def _row_tile(M):
    return M if M <= _MAX_ROW_TILE else _MAX_ROW_TILE


def _row_spec(tm, cols):
    return pl.BlockSpec((tm, cols), lambda i: (i, 0))


def _const_spec(shape):
    # Weights / biases: same block every grid step -> stays VMEM-resident.
    return pl.BlockSpec(shape, lambda i: (0, 0))


def conv1_pool(p00, p01, p10, p11, w, b):
    M, K = p00.shape
    C = w.shape[1]
    tm = _row_tile(M)
    pspec = _row_spec(tm, K)
    return pl.pallas_call(
        _conv1_pool_kernel,
        out_shape=jax.ShapeDtypeStruct((M, C), jnp.bfloat16),
        grid=(pl.cdiv(M, tm),),
        in_specs=[pspec, pspec, pspec, pspec, _const_spec(w.shape), _const_spec(b.shape)],
        out_specs=_row_spec(tm, C),
        compiler_params=_COMPILER_PARAMS,
    )(p00, p01, p10, p11, w, b)


def conv2_pool(p00, p01, p10, p11, w, b):
    M, K = p00.shape
    C = w.shape[1]
    tm = _row_tile(M)
    pspec = _row_spec(tm, K)
    return pl.pallas_call(
        _conv2_pool_kernel,
        out_shape=jax.ShapeDtypeStruct((M, C), jnp.bfloat16),
        grid=(pl.cdiv(M, tm),),
        in_specs=[pspec, pspec, pspec, pspec, _const_spec(w.shape), _const_spec(b.shape)],
        out_specs=_row_spec(tm, C),
        compiler_params=_COMPILER_PARAMS,
    )(p00, p01, p10, p11, w, b)


def mlp(x, w1, b1, w2, b2):
    M, F = x.shape
    C = w2.shape[1]
    tm = _row_tile(M)
    return pl.pallas_call(
        _mlp_kernel,
        out_shape=jax.ShapeDtypeStruct((M, C), jnp.float32),
        grid=(pl.cdiv(M, tm),),
        in_specs=[_row_spec(tm, F),
                  _const_spec(w1.shape), _const_spec(b1.shape),
                  _const_spec(w2.shape), _const_spec(b2.shape)],
        out_specs=_row_spec(tm, C),
        compiler_params=_COMPILER_PARAMS,
    )(x, w1, b1, w2, b2)


# ------------------------------- JAX glue --------------------------------- #

def _pool_candidate_patches(a):
    """a: (N, H, W, C) NHWC -> 4 im2col slabs, one per 2x2-pool candidate (dy, dx).

    Each slab has rows ordered (n, py, px) over the *pooled* output grid and columns
    ordered (kh, kw, cin).  Feeding these directly to the fused conv+pool kernel means
    the full-resolution pre-pool activation is never materialized in HBM.
    """
    N, H, W, C = a.shape
    Hp, Wp = (H - 2) // 2, (W - 2) // 2       # floor-mode 2x2/stride-2 pool
    slabs = []
    for dy in range(2):
        for dx in range(2):
            taps = []
            for kh in range(3):
                for kw in range(3):
                    r0, c0 = dy + kh, dx + kw
                    taps.append(a[:, r0:r0 + 2 * Hp - 1:2, c0:c0 + 2 * Wp - 1:2, :])
            slabs.append(jnp.concatenate(taps, axis=-1).reshape(N * Hp * Wp, 9 * C))
    return slabs


def init_convnet_params(key, w, h, n_classes):
    """PyTorch-layout parameters (Conv2d: (Cout,Cin,kh,kw); Linear: (out,in))."""
    ks = jax.random.split(key, 8)
    s = 0.05
    feat = (w - 6) * (h - 6) * 4
    return dict(
        conv1_w=jax.random.normal(ks[0], (32, 1, 3, 3), jnp.float32) * s,
        conv1_b=jax.random.normal(ks[1], (32,), jnp.float32) * s,
        conv2_w=jax.random.normal(ks[2], (64, 32, 3, 3), jnp.float32) * s,
        conv2_b=jax.random.normal(ks[3], (64,), jnp.float32) * s,
        fc1_w=jax.random.normal(ks[4], (1000, feat), jnp.float32) * s,
        fc1_b=jax.random.normal(ks[5], (1000,), jnp.float32) * s,
        fc2_w=jax.random.normal(ks[6], (n_classes, 1000), jnp.float32) * s,
        fc2_b=jax.random.normal(ks[7], (n_classes,), jnp.float32) * s,
    )


def prepare_params(params, w_img, h_img, n_classes):
    """One-time re-layout of the PyTorch-style weights for the kernels (not per-forward)."""
    Hp2 = ((h_img - 2) // 2 - 2) // 2
    Wp2 = ((w_img - 2) // 2 - 2) // 2
    F = Hp2 * Wp2 * 64
    n_pad = ((n_classes + 127) // 128) * 128   # lane-dense fc2 output, sliced outside

    # conv weights -> im2col layout (rows ordered (kh, kw, cin))
    c1w = jnp.transpose(params['conv1_w'], (2, 3, 1, 0)).reshape(9 * 1, 32).astype(jnp.float32)
    c2w = jnp.transpose(params['conv2_w'], (2, 3, 1, 0)).reshape(9 * 32, 64).astype(jnp.bfloat16)

    # fc1: fold the PyTorch NCHW .view(N,-1) permutation into the weight's input dim so the
    # activation flatten becomes a free NHWC reshape; pad 1000 -> 1024 output lanes.
    fc1 = params['fc1_w'].reshape(1000, 64, Hp2, Wp2)
    fc1 = jnp.transpose(fc1, (2, 3, 1, 0)).reshape(F, 1000)
    fc1 = jnp.pad(fc1, ((0, 0), (0, _FC1_PAD - 1000)))
    fc1_b = jnp.pad(params['fc1_b'], (0, _FC1_PAD - 1000)).reshape(1, _FC1_PAD)

    # fc2: pre-transpose once; pad input rows 1000 -> 1024 and output cols -> 128 lanes.
    fc2 = jnp.pad(params['fc2_w'].T, ((0, _FC1_PAD - 1000), (0, n_pad - n_classes)))
    fc2_b = jnp.pad(params['fc2_b'], (0, n_pad - n_classes)).reshape(1, n_pad)

    return dict(
        conv1_w=c1w,
        conv1_b=params['conv1_b'].reshape(1, 32).astype(jnp.float32),
        conv2_w=c2w,
        conv2_b=params['conv2_b'].reshape(1, 64).astype(jnp.float32),
        fc1_w=fc1.astype(jnp.bfloat16),
        fc1_b=fc1_b.astype(jnp.float32),
        fc2_w=fc2.astype(jnp.bfloat16),
        fc2_b=fc2_b.astype(jnp.float32),
    )


@partial(jax.jit, static_argnums=(2,))
def convnet_forward(prep, x_nchw, n_classes):
    N, _, H, W = x_nchw.shape
    x = jnp.transpose(x_nchw, (0, 2, 3, 1)).astype(jnp.float32)   # NCHW -> NHWC (N,H,W,1)

    # stage 1: conv1 -> ReLU -> 2x2 maxpool, one fused kernel (VPU taps, no MXU)
    Hp1, Wp1 = (H - 2) // 2, (W - 2) // 2
    y1 = conv1_pool(*_pool_candidate_patches(x), prep['conv1_w'], prep['conv1_b'])
    y1 = y1.reshape(N, Hp1, Wp1, 32)                              # bf16 activation

    # stage 2: conv2 -> ReLU -> 2x2 maxpool, one fused kernel (bf16 MXU GEMM)
    Hp2, Wp2 = (Hp1 - 2) // 2, (Wp1 - 2) // 2
    y2 = conv2_pool(*_pool_candidate_patches(y1), prep['conv2_w'], prep['conv2_b'])
    feat = y2.reshape(N, Hp2 * Wp2 * 64)   # NHWC flatten; NCHW permutation folded into fc1_w

    # TODO(synk): nn.Dropout(p=0.5) is modeled in eval mode (identity); training-mode RNG masking omitted.

    # fc1 -> fc2 fused; output padded to 128 lanes inside the kernel, sliced here.
    out_padded = mlp(feat, prep['fc1_w'], prep['fc1_b'], prep['fc2_w'], prep['fc2_b'])
    return out_padded[:, :n_classes]


if __name__ == "__main__":
    # small shapes consistent with the module: (w-6) and (h-6) must be multiples of 4
    W_IMG = H_IMG = 18
    N_CLASSES = 10
    BATCH = 2

    key = jax.random.PRNGKey(0)
    kx, kp = jax.random.split(key)
    x = jax.random.normal(kx, (BATCH, 1, H_IMG, W_IMG), jnp.float32)

    torch_style_params = init_convnet_params(kp, W_IMG, H_IMG, N_CLASSES)
    prepped = prepare_params(torch_style_params, W_IMG, H_IMG, N_CLASSES)

    out = convnet_forward(prepped, x, N_CLASSES)
    out = jax.block_until_ready(out)
    assert out.shape == (BATCH, N_CLASSES) and out.dtype == jnp.float32
    print("KERNEL_OK")
</pallas_src>

<mosaic_0001>
module attributes {stable_mosaic.version = 11 : i64} {
  func.func @_conv1_pool_kernel(%arg0: i32, %arg1: memref<128x9xf32, #tpu.memory_space<vmem>>, %arg2: memref<128x9xf32, #tpu.memory_space<vmem>>, %arg3: memref<128x9xf32, #tpu.memory_space<vmem>>, %arg4: memref<128x9xf32, #tpu.memory_space<vmem>>, %arg5: memref<9x32xf32, #tpu.memory_space<vmem>>, %arg6: memref<1x32xf32, #tpu.memory_space<vmem>>, %arg7: memref<128x32xbf16, #tpu.memory_space<vmem>>) attributes {dimension_semantics = [#tpu.dimension_semantics<parallel>], iteration_bounds = array<i64: 1>, scalar_prefetch = 0 : i64, scratch_operands = 0 : i64, tpu.core_type = #tpu.core_type<tc>, window_params = [{transform_indices = @transform_0, window_bounds = array<i64: 128, 9>}, {transform_indices = @transform_1, window_bounds = array<i64: 128, 9>}, {transform_indices = @transform_2, window_bounds = array<i64: 128, 9>}, {transform_indices = @transform_3, window_bounds = array<i64: 128, 9>}, {pipeline_mode = #tpu.pipeline_mode<synchronous>, transform_indices = @transform_4, window_bounds = array<i64: 9, 32>}, {pipeline_mode = #tpu.pipeline_mode<synchronous>, transform_indices = @transform_5, window_bounds = array<i64: 1, 32>}, {transform_indices = @transform_6, window_bounds = array<i64: 128, 32>}]} {
    %c0 = arith.constant 0 : index
    %c0_0 = arith.constant 0 : index
    %0 = vector.load %arg5[%c0, %c0_0] : memref<9x32xf32, #tpu.memory_space<vmem>>, vector<9x32xf32>
    %c0_1 = arith.constant 0 : index
    %c0_2 = arith.constant 0 : index
    %1 = vector.load %arg6[%c0_1, %c0_2] : memref<1x32xf32, #tpu.memory_space<vmem>>, vector<1x32xf32>
    %c0_3 = arith.constant 0 : index
    %c0_4 = arith.constant 0 : index
    %2 = vector.load %arg1[%c0_3, %c0_4] : memref<128x9xf32, #tpu.memory_space<vmem>>, vector<128x9xf32>
    %3 = vector.extract_strided_slice %2 {offsets = [0, 0], sizes = [128, 1], strides = [1, 1]} : vector<128x9xf32> to vector<128x1xf32>
    %4 = vector.extract_strided_slice %0 {offsets = [0, 0], sizes = [1, 32], strides = [1, 1]} : vector<9x32xf32> to vector<1x32xf32>
    %5 = vector.broadcast %3 : vector<128x1xf32> to vector<128x32xf32>
    %6 = vector.broadcast %4 : vector<1x32xf32> to vector<128x32xf32>
    %7 = arith.mulf %5, %6 : vector<128x32xf32>
    %8 = vector.extract_strided_slice %2 {offsets = [0, 1], sizes = [128, 1], strides = [1, 1]} : vector<128x9xf32> to vector<128x1xf32>
    %9 = vector.extract_strided_slice %0 {offsets = [1, 0], sizes = [1, 32], strides = [1, 1]} : vector<9x32xf32> to vector<1x32xf32>
    %10 = vector.broadcast %8 : vector<128x1xf32> to vector<128x32xf32>
    %11 = vector.broadcast %9 : vector<1x32xf32> to vector<128x32xf32>
    %12 = arith.mulf %10, %11 : vector<128x32xf32>
    %13 = arith.addf %7, %12 : vector<128x32xf32>
    %14 = vector.extract_strided_slice %2 {offsets = [0, 2], sizes = [128, 1], strides = [1, 1]} : vector<128x9xf32> to vector<128x1xf32>
    %15 = vector.extract_strided_slice %0 {offsets = [2, 0], sizes = [1, 32], strides = [1, 1]} : vector<9x32xf32> to vector<1x32xf32>
    %16 = vector.broadcast %14 : vector<128x1xf32> to vector<128x32xf32>
    %17 = vector.broadcast %15 : vector<1x32xf32> to vector<128x32xf32>
    %18 = arith.mulf %16, %17 : vector<128x32xf32>
    %19 = arith.addf %13, %18 : vector<128x32xf32>
    %20 = vector.extract_strided_slice %2 {offsets = [0, 3], sizes = [128, 1], strides = [1, 1]} : vector<128x9xf32> to vector<128x1xf32>
    %21 = vector.extract_strided_slice %0 {offsets = [3, 0], sizes = [1, 32], strides = [1, 1]} : vector<9x32xf32> to vector<1x32xf32>
    %22 = vector.broadcast %20 : vector<128x1xf32> to vector<128x32xf32>
    %23 = vector.broadcast %21 : vector<1x32xf32> to vector<128x32xf32>
    %24 = arith.mulf %22, %23 : vector<128x32xf32>
    %25 = arith.addf %19, %24 : vector<128x32xf32>
    %26 = vector.extract_strided_slice %2 {offsets = [0, 4], sizes = [128, 1], strides = [1, 1]} : vector<128x9xf32> to vector<128x1xf32>
    %27 = vector.extract_strided_slice %0 {offsets = [4, 0], sizes = [1, 32], strides = [1, 1]} : vector<9x32xf32> to vector<1x32xf32>
    %28 = vector.broadcast %26 : vector<128x1xf32> to vector<128x32xf32>
    %29 = vector.broadcast %27 : vector<1x32xf32> to vector<128x32xf32>
    %30 = arith.mulf %28, %29 : vector<128x32xf32>
    %31 = arith.addf %25, %30 : vector<128x32xf32>
    %32 = vector.extract_strided_slice %2 {offsets = [0, 5], sizes = [128, 1], strides = [1, 1]} : vector<128x9xf32> to vector<128x1xf32>
    %33 = vector.extract_strided_slice %0 {offsets = [5, 0], sizes = [1, 32], strides = [1, 1]} : vector<9x32xf32> to vector<1x32xf32>
    %34 = vector.broadcast %32 : vector<128x1xf32> to vector<128x32xf32>
    %35 = vector.broadcast %33 : vector<1x32xf32> to vector<128x32xf32>
    %36 = arith.mulf %34, %35 : vector<128x32xf32>
    %37 = arith.addf %31, %36 : vector<128x32xf32>
    %38 = vector.extract_strided_slice %2 {offsets = [0, 6], sizes = [128, 1], strides = [1, 1]} : vector<128x9xf32> to vector<128x1xf32>
    %39 = vector.extract_strided_slice %0 {offsets = [6, 0], sizes = [1, 32], strides = [1, 1]} : vector<9x32xf32> to vector<1x32xf32>
    %40 = vector.broadcast %38 : vector<128x1xf32> to vector<128x32xf32>
    %41 = vector.broadcast %39 : vector<1x32xf32> to vector<128x32xf32>
    %42 = arith.mulf %40, %41 : vector<128x32xf32>
    %43 = arith.addf %37, %42 : vector<128x32xf32>
    %44 = vector.extract_strided_slice %2 {offsets = [0, 7], sizes = [128, 1], strides = [1, 1]} : vector<128x9xf32> to vector<128x1xf32>
    %45 = vector.extract_strided_slice %0 {offsets = [7, 0], sizes = [1, 32], strides = [1, 1]} : vector<9x32xf32> to vector<1x32xf32>
    %46 = vector.broadcast %44 : vector<128x1xf32> to vector<128x32xf32>
    %47 = vector.broadcast %45 : vector<1x32xf32> to vector<128x32xf32>
    %48 = arith.mulf %46, %47 : vector<128x32xf32>
    %49 = arith.addf %43, %48 : vector<128x32xf32>
    %50 = vector.extract_strided_slice %2 {offsets = [0, 8], sizes = [128, 1], strides = [1, 1]} : vector<128x9xf32> to vector<128x1xf32>
    %51 = vector.extract_strided_slice %0 {offsets = [8, 0], sizes = [1, 32], strides = [1, 1]} : vector<9x32xf32> to vector<1x32xf32>
    %52 = vector.broadcast %50 : vector<128x1xf32> to vector<128x32xf32>
    %53 = vector.broadcast %51 : vector<1x32xf32> to vector<128x32xf32>
    %54 = arith.mulf %52, %53 : vector<128x32xf32>
    %55 = arith.addf %49, %54 : vector<128x32xf32>
    %c0_5 = arith.constant 0 : index
    %c0_6 = arith.constant 0 : index
    %56 = vector.load %arg2[%c0_5, %c0_6] : memref<128x9xf32, #tpu.memory_space<vmem>>, vector<128x9xf32>
    %57 = vector.extract_strided_slice %56 {offsets = [0, 0], sizes = [128, 1], strides = [1, 1]} : vector<128x9xf32> to vector<128x1xf32>
    %58 = vector.extract_strided_slice %0 {offsets = [0, 0], sizes = [1, 32], strides = [1, 1]} : vector<9x32xf32> to vector<1x32xf32>
    %59 = vector.broadcast %57 : vector<128x1xf32> to vector<128x32xf32>
    %60 = vector.broadcast %58 : vector<1x32xf32> to vector<128x32xf32>
    %61 = arith.mulf %59, %60 : vector<128x32xf32>
    %62 = vector.extract_strided_slice %56 {offsets = [0, 1], sizes = [128, 1], strides = [1, 1]} : vector<128x9xf32> to vector<128x1xf32>
    %63 = vector.extract_strided_slice %0 {offsets = [1, 0], sizes = [1, 32], strides = [1, 1]} : vector<9x32xf32> to vector<1x32xf32>
    %64 = vector.broadcast %62 : vector<128x1xf32> to vector<128x32xf32>
    %65 = vector.broadcast %63 : vector<1x32xf32> to vector<128x32xf32>
    %66 = arith.mulf %64, %65 : vector<128x32xf32>
    %67 = arith.addf %61, %66 : vector<128x32xf32>
    %68 = vector.extract_strided_slice %56 {offsets = [0, 2], sizes = [128, 1], strides = [1, 1]} : vector<128x9xf32> to vector<128x1xf32>
    %69 = vector.extract_strided_slice %0 {offsets = [2, 0], sizes = [1, 32], strides = [1, 1]} : vector<9x32xf32> to vector<1x32xf32>
    %70 = vector.broadcast %68 : vector<128x1xf32> to vector<128x32xf32>
    %71 = vector.broadcast %69 : vector<1x32xf32> to vector<128x32xf32>
    %72 = arith.mulf %70, %71 : vector<128x32xf32>
    %73 = arith.addf %67, %72 : vector<128x32xf32>
    %74 = vector.extract_strided_slice %56 {offsets = [0, 3], sizes = [128, 1], strides = [1, 1]} : vector<128x9xf32> to vector<128x1xf32>
    %75 = vector.extract_strided_slice %0 {offsets = [3, 0], sizes = [1, 32], strides = [1, 1]} : vector<9x32xf32> to vector<1x32xf32>
    %76 = vector.broadcast %74 : vector<128x1xf32> to vector<128x32xf32>
    %77 = vector.broadcast %75 : vector<1x32xf32> to vector<128x32xf32>
    %78 = arith.mulf %76, %77 : vector<128x32xf32>
    %79 = arith.addf %73, %78 : vector<128x32xf32>
    %80 = vector.extract_strided_slice %56 {offsets = [0, 4], sizes = [128, 1], strides = [1, 1]} : vector<128x9xf32> to vector<128x1xf32>
    %81 = vector.extract_strided_slice %0 {offsets = [4, 0], sizes = [1, 32], strides = [1, 1]} : vector<9x32xf32> to vector<1x32xf32>
    %82 = vector.broadcast %80 : vector<128x1xf32> to vector<128x32xf32>
    %83 = vector.broadcast %81 : vector<1x32xf32> to vector<128x32xf32>
    %84 = arith.mulf %82, %83 : vector<128x32xf32>
    %85 = arith.addf %79, %84 : vector<128x32xf32>
    %86 = vector.extract_strided_slice %56 {offsets = [0, 5], sizes = [128, 1], strides = [1, 1]} : vector<128x9xf32> to vector<128x1xf32>
    %87 = vector.extract_strided_slice %0 {offsets = [5, 0], sizes = [1, 32], strides = [1, 1]} : vector<9x32xf32> to vector<1x32xf32>
    %88 = vector.broadcast %86 : vector<128x1xf32> to vector<128x32xf32>
    %89 = vector.broadcast %87 : vector<1x32xf32> to vector<128x32xf32>
    %90 = arith.mulf %88, %89 : vector<128x32xf32>
    %91 = arith.addf %85, %90 : vector<128x32xf32>
    %92 = vector.extract_strided_slice %56 {offsets = [0, 6], sizes = [128, 1], strides = [1, 1]} : vector<128x9xf32> to vector<128x1xf32>
    %93 = vector.extract_strided_slice %0 {offsets = [6, 0], sizes = [1, 32], strides = [1, 1]} : vector<9x32xf32> to vector<1x32xf32>
    %94 = vector.broadcast %92 : vector<128x1xf32> to vector<128x32xf32>
    %95 = vector.broadcast %93 : vector<1x32xf32> to vector<128x32xf32>
    %96 = arith.mulf %94, %95 : vector<128x32xf32>
    %97 = arith.addf %91, %96 : vector<128x32xf32>
    %98 = vector.extract_strided_slice %56 {offsets = [0, 7], sizes = [128, 1], strides = [1, 1]} : vector<128x9xf32> to vector<128x1xf32>
    %99 = vector.extract_strided_slice %0 {offsets = [7, 0], sizes = [1, 32], strides = [1, 1]} : vector<9x32xf32> to vector<1x32xf32>
    %100 = vector.broadcast %98 : vector<128x1xf32> to vector<128x32xf32>
    %101 = vector.broadcast %99 : vector<1x32xf32> to vector<128x32xf32>
    %102 = arith.mulf %100, %101 : vector<128x32xf32>
    %103 = arith.addf %97, %102 : vector<128x32xf32>
    %104 = vector.extract_strided_slice %56 {offsets = [0, 8], sizes = [128, 1], strides = [1, 1]} : vector<128x9xf32> to vector<128x1xf32>
    %105 = vector.extract_strided_slice %0 {offsets = [8, 0], sizes = [1, 32], strides = [1, 1]} : vector<9x32xf32> to vector<1x32xf32>
    %106 = vector.broadcast %104 : vector<128x1xf32> to vector<128x32xf32>
    %107 = vector.broadcast %105 : vector<1x32xf32> to vector<128x32xf32>
    %108 = arith.mulf %106, %107 : vector<128x32xf32>
    %109 = arith.addf %103, %108 : vector<128x32xf32>
    %110 = arith.maximumf %55, %109 : vector<128x32xf32>
    %c0_7 = arith.constant 0 : index
    %c0_8 = arith.constant 0 : index
    %111 = vector.load %arg3[%c0_7, %c0_8] : memref<128x9xf32, #tpu.memory_space<vmem>>, vector<128x9xf32>
    %112 = vector.extract_strided_slice %111 {offsets = [0, 0], sizes = [128, 1], strides = [1, 1]} : vector<128x9xf32> to vector<128x1xf32>
    %113 = vector.extract_strided_slice %0 {offsets = [0, 0], sizes = [1, 32], strides = [1, 1]} : vector<9x32xf32> to vector<1x32xf32>
    %114 = vector.broadcast %112 : vector<128x1xf32> to vector<128x32xf32>
    %115 = vector.broadcast %113 : vector<1x32xf32> to vector<128x32xf32>
    %116 = arith.mulf %114, %115 : vector<128x32xf32>
    %117 = vector.extract_strided_slice %111 {offsets = [0, 1], sizes = [128, 1], strides = [1, 1]} : vector<128x9xf32> to vector<128x1xf32>
    %118 = vector.extract_strided_slice %0 {offsets = [1, 0], sizes = [1, 32], strides = [1, 1]} : vector<9x32xf32> to vector<1x32xf32>
    %119 = vector.broadcast %117 : vector<128x1xf32> to vector<128x32xf32>
    %120 = vector.broadcast %118 : vector<1x32xf32> to vector<128x32xf32>
    %121 = arith.mulf %119, %120 : vector<128x32xf32>
    %122 = arith.addf %116, %121 : vector<128x32xf32>
    %123 = vector.extract_strided_slice %111 {offsets = [0, 2], sizes = [128, 1], strides = [1, 1]} : vector<128x9xf32> to vector<128x1xf32>
    %124 = vector.extract_strided_slice %0 {offsets = [2, 0], sizes = [1, 32], strides = [1, 1]} : vector<9x32xf32> to vector<1x32xf32>
    %125 = vector.broadcast %123 : vector<128x1xf32> to vector<128x32xf32>
    %126 = vector.broadcast %124 : vector<1x32xf32> to vector<128x32xf32>
    %127 = arith.mulf %125, %126 : vector<128x32xf32>
    %128 = arith.addf %122, %127 : vector<128x32xf32>
    %129 = vector.extract_strided_slice %111 {offsets = [0, 3], sizes = [128, 1], strides = [1, 1]} : vector<128x9xf32> to vector<128x1xf32>
    %130 = vector.extract_strided_slice %0 {offsets = [3, 0], sizes = [1, 32], strides = [1, 1]} : vector<9x32xf32> to vector<1x32xf32>
    %131 = vector.broadcast %129 : vector<128x1xf32> to vector<128x32xf32>
    %132 = vector.broadcast %130 : vector<1x32xf32> to vector<128x32xf32>
    %133 = arith.mulf %131, %132 : vector<128x32xf32>
    %134 = arith.addf %128, %133 : vector<128x32xf32>
    %135 = vector.extract_strided_slice %111 {offsets = [0, 4], sizes = [128, 1], strides = [1, 1]} : vector<128x9xf32> to vector<128x1xf32>
    %136 = vector.extract_strided_slice %0 {offsets = [4, 0], sizes = [1, 32], strides = [1, 1]} : vector<9x32xf32> to vector<1x32xf32>
    %137 = vector.broadcast %135 : vector<128x1xf32> to vector<128x32xf32>
    %138 = vector.broadcast %136 : vector<1x32xf32> to vector<128x32xf32>
    %139 = arith.mulf %137, %138 : vector<128x32xf32>
    %140 = arith.addf %134, %139 : vector<128x32xf32>
    %141 = vector.extract_strided_slice %111 {offsets = [0, 5], sizes = [128, 1], strides = [1, 1]} : vector<128x9xf32> to vector<128x1xf32>
    %142 = vector.extract_strided_slice %0 {offsets = [5, 0], sizes = [1, 32], strides = [1, 1]} : vector<9x32xf32> to vector<1x32xf32>
    %143 = vector.broadcast %141 : vector<128x1xf32> to vector<128x32xf32>
    %144 = vector.broadcast %142 : vector<1x32xf32> to vector<128x32xf32>
    %145 = arith.mulf %143, %144 : vector<128x32xf32>
    %146 = arith.addf %140, %145 : vector<128x32xf32>
    %147 = vector.extract_strided_slice %111 {offsets = [0, 6], sizes = [128, 1], strides = [1, 1]} : vector<128x9xf32> to vector<128x1xf32>
    %148 = vector.extract_strided_slice %0 {offsets = [6, 0], sizes = [1, 32], strides = [1, 1]} : vector<9x32xf32> to vector<1x32xf32>
    %149 = vector.broadcast %147 : vector<128x1xf32> to vector<128x32xf32>
    %150 = vector.broadcast %148 : vector<1x32xf32> to vector<128x32xf32>
    %151 = arith.mulf %149, %150 : vector<128x32xf32>
    %152 = arith.addf %146, %151 : vector<128x32xf32>
    %153 = vector.extract_strided_slice %111 {offsets = [0, 7], sizes = [128, 1], strides = [1, 1]} : vector<128x9xf32> to vector<128x1xf32>
    %154 = vector.extract_strided_slice %0 {offsets = [7, 0], sizes = [1, 32], strides = [1, 1]} : vector<9x32xf32> to vector<1x32xf32>
    %155 = vector.broadcast %153 : vector<128x1xf32> to vector<128x32xf32>
    %156 = vector.broadcast %154 : vector<1x32xf32> to vector<128x32xf32>
    %157 = arith.mulf %155, %156 : vector<128x32xf32>
    %158 = arith.addf %152, %157 : vector<128x32xf32>
    %159 = vector.extract_strided_slice %111 {offsets = [0, 8], sizes = [128, 1], strides = [1, 1]} : vector<128x9xf32> to vector<128x1xf32>
    %160 = vector.extract_strided_slice %0 {offsets = [8, 0], sizes = [1, 32], strides = [1, 1]} : vector<9x32xf32> to vector<1x32xf32>
    %161 = vector.broadcast %159 : vector<128x1xf32> to vector<128x32xf32>
    %162 = vector.broadcast %160 : vector<1x32xf32> to vector<128x32xf32>
    %163 = arith.mulf %161, %162 : vector<128x32xf32>
    %164 = arith.addf %158, %163 : vector<128x32xf32>
    %c0_9 = arith.constant 0 : index
    %c0_10 = arith.constant 0 : index
    %165 = vector.load %arg4[%c0_9, %c0_10] : memref<128x9xf32, #tpu.memory_space<vmem>>, vector<128x9xf32>
    %166 = vector.extract_strided_slice %165 {offsets = [0, 0], sizes = [128, 1], strides = [1, 1]} : vector<128x9xf32> to vector<128x1xf32>
    %167 = vector.extract_strided_slice %0 {offsets = [0, 0], sizes = [1, 32], strides = [1, 1]} : vector<9x32xf32> to vector<1x32xf32>
    %168 = vector.broadcast %166 : vector<128x1xf32> to vector<128x32xf32>
    %169 = vector.broadcast %167 : vector<1x32xf32> to vector<128x32xf32>
    %170 = arith.mulf %168, %169 : vector<128x32xf32>
    %171 = vector.extract_strided_slice %165 {offsets = [0, 1], sizes = [128, 1], strides = [1, 1]} : vector<128x9xf32> to vector<128x1xf32>
    %172 = vector.extract_strided_slice %0 {offsets = [1, 0], sizes = [1, 32], strides = [1, 1]} : vector<9x32xf32> to vector<1x32xf32>
    %173 = vector.broadcast %171 : vector<128x1xf32> to vector<128x32xf32>
    %174 = vector.broadcast %172 : vector<1x32xf32> to vector<128x32xf32>
    %175 = arith.mulf %173, %174 : vector<128x32xf32>
    %176 = arith.addf %170, %175 : vector<128x32xf32>
    %177 = vector.extract_strided_slice %165 {offsets = [0, 2], sizes = [128, 1], strides = [1, 1]} : vector<128x9xf32> to vector<128x1xf32>
    %178 = vector.extract_strided_slice %0 {offsets = [2, 0], sizes = [1, 32], strides = [1, 1]} : vector<9x32xf32> to vector<1x32xf32>
    %179 = vector.broadcast %177 : vector<128x1xf32> to vector<128x32xf32>
    %180 = vector.broadcast %178 : vector<1x32xf32> to vector<128x32xf32>
    %181 = arith.mulf %179, %180 : vector<128x32xf32>
    %182 = arith.addf %176, %181 : vector<128x32xf32>
    %183 = vector.extract_strided_slice %165 {offsets = [0, 3], sizes = [128, 1], strides = [1, 1]} : vector<128x9xf32> to vector<128x1xf32>
    %184 = vector.extract_strided_slice %0 {offsets = [3, 0], sizes = [1, 32], strides = [1, 1]} : vector<9x32xf32> to vector<1x32xf32>
    %185 = vector.broadcast %183 : vector<128x1xf32> to vector<128x32xf32>
    %186 = vector.broadcast %184 : vector<1x32xf32> to vector<128x32xf32>
    %187 = arith.mulf %185, %186 : vector<128x32xf32>
    %188 = arith.addf %182, %187 : vector<128x32xf32>
    %189 = vector.extract_strided_slice %165 {offsets = [0, 4], sizes = [128, 1], strides = [1, 1]} : vector<128x9xf32> to vector<128x1xf32>
    %190 = vector.extract_strided_slice %0 {offsets = [4, 0], sizes = [1, 32], strides = [1, 1]} : vector<9x32xf32> to vector<1x32xf32>
    %191 = vector.broadcast %189 : vector<128x1xf32> to vector<128x32xf32>
    %192 = vector.broadcast %190 : vector<1x32xf32> to vector<128x32xf32>
    %193 = arith.mulf %191, %192 : vector<128x32xf32>
    %194 = arith.addf %188, %193 : vector<128x32xf32>
    %195 = vector.extract_strided_slice %165 {offsets = [0, 5], sizes = [128, 1], strides = [1, 1]} : vector<128x9xf32> to vector<128x1xf32>
    %196 = vector.extract_strided_slice %0 {offsets = [5, 0], sizes = [1, 32], strides = [1, 1]} : vector<9x32xf32> to vector<1x32xf32>
    %197 = vector.broadcast %195 : vector<128x1xf32> to vector<128x32xf32>
    %198 = vector.broadcast %196 : vector<1x32xf32> to vector<128x32xf32>
    %199 = arith.mulf %197, %198 : vector<128x32xf32>
    %200 = arith.addf %194, %199 : vector<128x32xf32>
    %201 = vector.extract_strided_slice %165 {offsets = [0, 6], sizes = [128, 1], strides = [1, 1]} : vector<128x9xf32> to vector<128x1xf32>
    %202 = vector.extract_strided_slice %0 {offsets = [6, 0], sizes = [1, 32], strides = [1, 1]} : vector<9x32xf32> to vector<1x32xf32>
    %203 = vector.broadcast %201 : vector<128x1xf32> to vector<128x32xf32>
    %204 = vector.broadcast %202 : vector<1x32xf32> to vector<128x32xf32>
    %205 = arith.mulf %203, %204 : vector<128x32xf32>
    %206 = arith.addf %200, %205 : vector<128x32xf32>
    %207 = vector.extract_strided_slice %165 {offsets = [0, 7], sizes = [128, 1], strides = [1, 1]} : vector<128x9xf32> to vector<128x1xf32>
    %208 = vector.extract_strided_slice %0 {offsets = [7, 0], sizes = [1, 32], strides = [1, 1]} : vector<9x32xf32> to vector<1x32xf32>
    %209 = vector.broadcast %207 : vector<128x1xf32> to vector<128x32xf32>
    %210 = vector.broadcast %208 : vector<1x32xf32> to vector<128x32xf32>
    %211 = arith.mulf %209, %210 : vector<128x32xf32>
    %212 = arith.addf %206, %211 : vector<128x32xf32>
    %213 = vector.extract_strided_slice %165 {offsets = [0, 8], sizes = [128, 1], strides = [1, 1]} : vector<128x9xf32> to vector<128x1xf32>
    %214 = vector.extract_strided_slice %0 {offsets = [8, 0], sizes = [1, 32], strides = [1, 1]} : vector<9x32xf32> to vector<1x32xf32>
    %215 = vector.broadcast %213 : vector<128x1xf32> to vector<128x32xf32>
    %216 = vector.broadcast %214 : vector<1x32xf32> to vector<128x32xf32>
    %217 = arith.mulf %215, %216 : vector<128x32xf32>
    %218 = arith.addf %212, %217 : vector<128x32xf32>
    %219 = arith.maximumf %164, %218 : vector<128x32xf32>
    %220 = arith.maximumf %110, %219 : vector<128x32xf32>
    %221 = vector.broadcast %1 : vector<1x32xf32> to vector<128x32xf32>
    %222 = arith.addf %220, %221 : vector<128x32xf32>
    %cst = arith.constant 0.000000e+00 : f32
    %223 = vector.broadcast %cst : f32 to vector<128x32xf32>
    %224 = arith.maximumf %222, %223 : vector<128x32xf32>
    %225 = arith.truncf %224 : vector<128x32xf32> to vector<128x32xbf16>
    %c0_11 = arith.constant 0 : index
    %c0_12 = arith.constant 0 : index
    %226 = vector.load %arg7[%c0_11, %c0_12] : memref<128x32xbf16, #tpu.memory_space<vmem>>, vector<128x32xbf16>
    tpu.vector_store %arg7[%c0_11, %c0_12], %225 {strides = array<i32>} : memref<128x32xbf16, #tpu.memory_space<vmem>>, vector<128x32xbf16>,
    return
  }
  func.func @transform_0(%arg0: i32) -> (i32, i32) {
    %c0_i32 = arith.constant 0 : i32
    %c0_i32_0 = arith.constant 0 : i32
    return %arg0, %c0_i32 : i32, i32
  }
  func.func @transform_1(%arg0: i32) -> (i32, i32) {
    %c0_i32 = arith.constant 0 : i32
    %c0_i32_0 = arith.constant 0 : i32
    return %arg0, %c0_i32 : i32, i32
  }
  func.func @transform_2(%arg0: i32) -> (i32, i32) {
    %c0_i32 = arith.constant 0 : i32
    %c0_i32_0 = arith.constant 0 : i32
    return %arg0, %c0_i32 : i32, i32
  }
  func.func @transform_3(%arg0: i32) -> (i32, i32) {
    %c0_i32 = arith.constant 0 : i32
    %c0_i32_0 = arith.constant 0 : i32
    return %arg0, %c0_i32 : i32, i32
  }
  func.func @transform_4(%arg0: i32) -> (i32, i32) {
    %c0_i32 = arith.constant 0 : i32
    %c0_i32_0 = arith.constant 0 : i32
    %c0_i32_1 = arith.constant 0 : i32
    return %c0_i32, %c0_i32_0 : i32, i32
  }
  func.func @transform_5(%arg0: i32) -> (i32, i32) {
    %c0_i32 = arith.constant 0 : i32
    %c0_i32_0 = arith.constant 0 : i32
    %c0_i32_1 = arith.constant 0 : i32
    return %c0_i32, %c0_i32_0 : i32, i32
  }
  func.func @transform_6(%arg0: i32) -> (i32, i32) {
    %c0_i32 = arith.constant 0 : i32
    %c0_i32_0 = arith.constant 0 : i32
    return %arg0, %c0_i32 : i32, i32
  }
}

module attributes {stable_mosaic.version = 11 : i64} {
  func.func @_conv2_pool_kernel(%arg0: i32, %arg1: memref<18x288xbf16, #tpu.memory_space<vmem>>, %arg2: memref<18x288xbf16, #tpu.memory_space<vmem>>, %arg3: memref<18x288xbf16, #tpu.memory_space<vmem>>, %arg4: memref<18x288xbf16, #tpu.memory_space<vmem>>, %arg5: memref<288x64xbf16, #tpu.memory_space<vmem>>, %arg6: memref<1x64xf32, #tpu.memory_space<vmem>>, %arg7: memref<18x64xbf16, #tpu.memory_space<vmem>>) attributes {dimension_semantics = [#tpu.dimension_semantics<parallel>], iteration_bounds = array<i64: 1>, scalar_prefetch = 0 : i64, scratch_operands = 0 : i64, tpu.core_type = #tpu.core_type<tc>, window_params = [{transform_indices = @transform_0, window_bounds = array<i64: 18, 288>}, {transform_indices = @transform_1, window_bounds = array<i64: 18, 288>}, {transform_indices = @transform_2, window_bounds = array<i64: 18, 288>}, {transform_indices = @transform_3, window_bounds = array<i64: 18, 288>}, {pipeline_mode = #tpu.pipeline_mode<synchronous>, transform_indices = @transform_4, window_bounds = array<i64: 288, 64>}, {pipeline_mode = #tpu.pipeline_mode<synchronous>, transform_indices = @transform_5, window_bounds = array<i64: 1, 64>}, {transform_indices = @transform_6, window_bounds = array<i64: 18, 64>}]} {
    %c0 = arith.constant 0 : index
    %c0_0 = arith.constant 0 : index
    %0 = vector.load %arg5[%c0, %c0_0] : memref<288x64xbf16, #tpu.memory_space<vmem>>, vector<288x64xbf16>
    %c0_1 = arith.constant 0 : index
    %c0_2 = arith.constant 0 : index
    %1 = vector.load %arg1[%c0_1, %c0_2] : memref<18x288xbf16, #tpu.memory_space<vmem>>, vector<18x288xbf16>
    %cst = arith.constant dense<0.000000e+00> : vector<18x64xf32>
    %2 = tpu.matmul %1, %0, %cst {dimension_numbers = #tpu.dot_dimension_numbers<[1], [0], [0], [1], [0, 0, 1, 1], [], []>} : vector<18x288xbf16>, vector<288x64xbf16>, vector<18x64xf32> -> vector<18x64xf32>
    %c0_3 = arith.constant 0 : index
    %c0_4 = arith.constant 0 : index
    %3 = vector.load %arg2[%c0_3, %c0_4] : memref<18x288xbf16, #tpu.memory_space<vmem>>, vector<18x288xbf16>
    %cst_5 = arith.constant dense<0.000000e+00> : vector<18x64xf32>
    %4 = tpu.matmul %3, %0, %cst_5 {dimension_numbers = #tpu.dot_dimension_numbers<[1], [0], [0], [1], [0, 0, 1, 1], [], []>} : vector<18x288xbf16>, vector<288x64xbf16>, vector<18x64xf32> -> vector<18x64xf32>
    %5 = arith.maximumf %2, %4 : vector<18x64xf32>
    %c0_6 = arith.constant 0 : index
    %c0_7 = arith.constant 0 : index
    %6 = vector.load %arg3[%c0_6, %c0_7] : memref<18x288xbf16, #tpu.memory_space<vmem>>, vector<18x288xbf16>
    %cst_8 = arith.constant dense<0.000000e+00> : vector<18x64xf32>
    %7 = tpu.matmul %6, %0, %cst_8 {dimension_numbers = #tpu.dot_dimension_numbers<[1], [0], [0], [1], [0, 0, 1, 1], [], []>} : vector<18x288xbf16>, vector<288x64xbf16>, vector<18x64xf32> -> vector<18x64xf32>
    %c0_9 = arith.constant 0 : index
    %c0_10 = arith.constant 0 : index
    %8 = vector.load %arg4[%c0_9, %c0_10] : memref<18x288xbf16, #tpu.memory_space<vmem>>, vector<18x288xbf16>
    %cst_11 = arith.constant dense<0.000000e+00> : vector<18x64xf32>
    %9 = tpu.matmul %8, %0, %cst_11 {dimension_numbers = #tpu.dot_dimension_numbers<[1], [0], [0], [1], [0, 0, 1, 1], [], []>} : vector<18x288xbf16>, vector<288x64xbf16>, vector<18x64xf32> -> vector<18x64xf32>
    %10 = arith.maximumf %7, %9 : vector<18x64xf32>
    %11 = arith.maximumf %5, %10 : vector<18x64xf32>
    %c0_12 = arith.constant 0 : index
    %c0_13 = arith.constant 0 : index
    %12 = vector.load %arg6[%c0_12, %c0_13] : memref<1x64xf32, #tpu.memory_space<vmem>>, vector<1x64xf32>
    %13 = vector.broadcast %12 : vector<1x64xf32> to vector<18x64xf32>
    %14 = arith.addf %11, %13 : vector<18x64xf32>
    %cst_14 = arith.constant 0.000000e+00 : f32
    %15 = vector.broadcast %cst_14 : f32 to vector<18x64xf32>
    %16 = arith.maximumf %14, %15 : vector<18x64xf32>
    %17 = arith.truncf %16 : vector<18x64xf32> to vector<18x64xbf16>
    %c0_15 = arith.constant 0 : index
    %c0_16 = arith.constant 0 : index
    %18 = vector.load %arg7[%c0_15, %c0_16] : memref<18x64xbf16, #tpu.memory_space<vmem>>, vector<18x64xbf16>
    tpu.vector_store %arg7[%c0_15, %c0_16], %17 {strides = array<i32>} : memref<18x64xbf16, #tpu.memory_space<vmem>>, vector<18x64xbf16>,
    return
  }
  func.func @transform_0(%arg0: i32) -> (i32, i32) {
    %c0_i32 = arith.constant 0 : i32
    %c0_i32_0 = arith.constant 0 : i32
    return %arg0, %c0_i32 : i32, i32
  }
  func.func @transform_1(%arg0: i32) -> (i32, i32) {
    %c0_i32 = arith.constant 0 : i32
    %c0_i32_0 = arith.constant 0 : i32
    return %arg0, %c0_i32 : i32, i32
  }
  func.func @transform_2(%arg0: i32) -> (i32, i32) {
    %c0_i32 = arith.constant 0 : i32
    %c0_i32_0 = arith.constant 0 : i32
    return %arg0, %c0_i32 : i32, i32
  }
  func.func @transform_3(%arg0: i32) -> (i32, i32) {
    %c0_i32 = arith.constant 0 : i32
    %c0_i32_0 = arith.constant 0 : i32
    return %arg0, %c0_i32 : i32, i32
  }
  func.func @transform_4(%arg0: i32) -> (i32, i32) {
    %c0_i32 = arith.constant 0 : i32
    %c0_i32_0 = arith.constant 0 : i32
    %c0_i32_1 = arith.constant 0 : i32
    return %c0_i32, %c0_i32_0 : i32, i32
  }
  func.func @transform_5(%arg0: i32) -> (i32, i32) {
    %c0_i32 = arith.constant 0 : i32
    %c0_i32_0 = arith.constant 0 : i32
    %c0_i32_1 = arith.constant 0 : i32
    return %c0_i32, %c0_i32_0 : i32, i32
  }
  func.func @transform_6(%arg0: i32) -> (i32, i32) {
    %c0_i32 = arith.constant 0 : i32
    %c0_i32_0 = arith.constant 0 : i32
    return %arg0, %c0_i32 : i32, i32
  }
}

module attributes {stable_mosaic.version = 11 : i64} {
  func.func @_mlp_kernel(%arg0: i32, %arg1: memref<2x576xbf16, #tpu.memory_space<vmem>>, %arg2: memref<576x1024xbf16, #tpu.memory_space<vmem>>, %arg3: memref<1x1024xf32, #tpu.memory_space<vmem>>, %arg4: memref<1024x128xbf16, #tpu.memory_space<vmem>>, %arg5: memref<1x128xf32, #tpu.memory_space<vmem>>, %arg6: memref<2x128xf32, #tpu.memory_space<vmem>>) attributes {dimension_semantics = [#tpu.dimension_semantics<parallel>], iteration_bounds = array<i64: 1>, scalar_prefetch = 0 : i64, scratch_operands = 0 : i64, tpu.core_type = #tpu.core_type<tc>, window_params = [{transform_indices = @transform_0, window_bounds = array<i64: 2, 576>}, {pipeline_mode = #tpu.pipeline_mode<synchronous>, transform_indices = @transform_1, window_bounds = array<i64: 576, 1024>}, {pipeline_mode = #tpu.pipeline_mode<synchronous>, transform_indices = @transform_2, window_bounds = array<i64: 1, 1024>}, {pipeline_mode = #tpu.pipeline_mode<synchronous>, transform_indices = @transform_3, window_bounds = array<i64: 1024, 128>}, {pipeline_mode = #tpu.pipeline_mode<synchronous>, transform_indices = @transform_4, window_bounds = array<i64: 1, 128>}, {transform_indices = @transform_5, window_bounds = array<i64: 2, 128>}]} {
    %c0 = arith.constant 0 : index
    %c0_0 = arith.constant 0 : index
    %0 = vector.load %arg1[%c0, %c0_0] : memref<2x576xbf16, #tpu.memory_space<vmem>>, vector<2x576xbf16>
    %c0_1 = arith.constant 0 : index
    %c0_2 = arith.constant 0 : index
    %1 = vector.load %arg2[%c0_1, %c0_2] : memref<576x1024xbf16, #tpu.memory_space<vmem>>, vector<576x1024xbf16>
    %cst = arith.constant dense<0.000000e+00> : vector<2x1024xf32>
    %2 = tpu.matmul %0, %1, %cst {dimension_numbers = #tpu.dot_dimension_numbers<[1], [0], [0], [1], [0, 0, 1, 1], [], []>} : vector<2x576xbf16>, vector<576x1024xbf16>, vector<2x1024xf32> -> vector<2x1024xf32>
    %c0_3 = arith.constant 0 : index
    %c0_4 = arith.constant 0 : index
    %3 = vector.load %arg3[%c0_3, %c0_4] : memref<1x1024xf32, #tpu.memory_space<vmem>>, vector<1x1024xf32>
    %4 = vector.broadcast %3 : vector<1x1024xf32> to vector<2x1024xf32>
    %5 = arith.addf %2, %4 : vector<2x1024xf32>
    %6 = arith.truncf %5 : vector<2x1024xf32> to vector<2x1024xbf16>
    %c0_5 = arith.constant 0 : index
    %c0_6 = arith.constant 0 : index
    %7 = vector.load %arg4[%c0_5, %c0_6] : memref<1024x128xbf16, #tpu.memory_space<vmem>>, vector<1024x128xbf16>
    %cst_7 = arith.constant dense<0.000000e+00> : vector<2x128xf32>
    %8 = tpu.matmul %6, %7, %cst_7 {dimension_numbers = #tpu.dot_dimension_numbers<[1], [0], [0], [1], [0, 0, 1, 1], [], []>} : vector<2x1024xbf16>, vector<1024x128xbf16>, vector<2x128xf32> -> vector<2x128xf32>
    %c0_8 = arith.constant 0 : index
    %c0_9 = arith.constant 0 : index
    %9 = vector.load %arg5[%c0_8, %c0_9] : memref<1x128xf32, #tpu.memory_space<vmem>>, vector<1x128xf32>
    %10 = vector.broadcast %9 : vector<1x128xf32> to vector<2x128xf32>
    %11 = arith.addf %8, %10 : vector<2x128xf32>
    %c0_10 = arith.constant 0 : index
    %c0_11 = arith.constant 0 : index
    %12 = vector.load %arg6[%c0_10, %c0_11] : memref<2x128xf32, #tpu.memory_space<vmem>>, vector<2x128xf32>
    tpu.vector_store %arg6[%c0_10, %c0_11], %11 {strides = array<i32>} : memref<2x128xf32, #tpu.memory_space<vmem>>, vector<2x128xf32>,
    return
  }
  func.func @transform_0(%arg0: i32) -> (i32, i32) {
    %c0_i32 = arith.constant 0 : i32
    %c0_i32_0 = arith.constant 0 : i32
    return %arg0, %c0_i32 : i32, i32
  }
  func.func @transform_1(%arg0: i32) -> (i32, i32) {
    %c0_i32 = arith.constant 0 : i32
    %c0_i32_0 = arith.constant 0 : i32
    %c0_i32_1 = arith.constant 0 : i32
    return %c0_i32, %c0_i32_0 : i32, i32
  }
  func.func @transform_2(%arg0: i32) -> (i32, i32) {
    %c0_i32 = arith.constant 0 : i32
    %c0_i32_0 = arith.constant 0 : i32
    %c0_i32_1 = arith.constant 0 : i32
    return %c0_i32, %c0_i32_0 : i32, i32
  }
  func.func @transform_3(%arg0: i32) -> (i32, i32) {
    %c0_i32 = arith.constant 0 : i32
    %c0_i32_0 = arith.constant 0 : i32
    %c0_i32_1 = arith.constant 0 : i32
    return %c0_i32, %c0_i32_0 : i32, i32
  }
  func.func @transform_4(%arg0: i32) -> (i32, i32) {
    %c0_i32 = arith.constant 0 : i32
    %c0_i32_0 = arith.constant 0 : i32
    %c0_i32_1 = arith.constant 0 : i32
    return %c0_i32, %c0_i32_0 : i32, i32
  }
  func.func @transform_5(%arg0: i32) -> (i32, i32) {
    %c0_i32 = arith.constant 0 : i32
    %c0_i32_0 = arith.constant 0 : i32
    return %arg0, %c0_i32 : i32, i32
  }
}

</mosaic_0001>

<llo_original>
// kernel: convnet_forward.4
$region0: #{convnet_forward.4}
  #allocation0 [shape = 'u32[]', space=smem, size = 0x4, offset = 0x4, fixed_abs, tag = 'smem constant byte address 0x4 - core index']
  #allocation1 [shape = 'u32[144,128]{1,0:T(1,128)}', space=vmem, size = 0x12000, scoped, tag = 'internal scratch']
  %s0 = inlined_call_operand.vmem [shape: bf16[18,288], index: 0, kind: input, shape index: {}]
  %s1 = inlined_call_operand.vmem [shape: bf16[18,288], index: 1, kind: input, shape index: {}]
  %s2 = inlined_call_operand.vmem [shape: bf16[18,288], index: 2, kind: input, shape index: {}]
  %s3 = inlined_call_operand.vmem [shape: bf16[18,288], index: 3, kind: input, shape index: {}]
  %s4 = inlined_call_operand.vmem [shape: bf16[288,64], index: 4, kind: input, shape index: {}]
  %s5 = inlined_call_operand.vmem [shape: f32[1,64], index: 5, kind: input, shape index: {}]
  %s6 = inlined_call_operand.vmem [shape: bf16[18,64], index: 6, kind: output, shape index: {}]
  %s7 = sld [smem:[#allocation0]]
  $region34: #{convnet_forward.4} parent=0
    _
  %s9 = ssub.s32 1, %s7
  %s10 = scalar_select 0, %s9, %s7
  // Predicated region
  $region2: #{convnet_forward.4} parent=0 // pred_check
    _
  $region3: #{convnet_forward.4} parent=0 // pred_check_branch
    %12 = sbr.rel (0) target = $region5
  $region4: #{convnet_forward.4} parent=0 // pred_region
    _
  $region5: #{convnet_forward.4} parent=0 // pred_fallthru
    _
  // Predicated region
  $region6: #{convnet_forward.4} parent=0 // pred_check
    _
  $region7: #{convnet_forward.4} parent=0 // pred_check_branch
    %14 = sbr.rel (0) target = $region9
  $region8: #{convnet_forward.4} parent=0 // pred_region
    _
  $region9: #{convnet_forward.4} parent=0 // pred_fallthru
    _
  // Predicated region
  $region10: #{convnet_forward.4} parent=0 // pred_check
    _
  $region11: #{convnet_forward.4} parent=0 // pred_check_branch
    %16 = sbr.rel (0) target = $region13
  $region12: #{convnet_forward.4} parent=0 // pred_region
    _
  $region13: #{convnet_forward.4} parent=0 // pred_fallthru
    _
  // Predicated region
  $region14: #{convnet_forward.4} parent=0 // pred_check
    _
  $region15: #{convnet_forward.4} parent=0 // pred_check_branch
    %18 = sbr.rel (0) target = $region17
  $region16: #{convnet_forward.4} parent=0 // pred_region
    _
  $region17: #{convnet_forward.4} parent=0 // pred_fallthru
    _
  // Predicated region
  $region18: #{convnet_forward.4} parent=0 // pred_check
    _
  $region19: #{convnet_forward.4} parent=0 // pred_check_branch
    %20 = sbr.rel (0) target = $region21
  $region20: #{convnet_forward.4} parent=0 // pred_region
    _
  $region21: #{convnet_forward.4} parent=0 // pred_fallthru
    _
  // Predicated region
  $region22: #{convnet_forward.4} parent=0 // pred_check
    _
  $region23: #{convnet_forward.4} parent=0 // pred_check_branch
    %22 = sbr.rel (0) target = $region25
  $region24: #{convnet_forward.4} parent=0 // pred_region
    _
  $region25: #{convnet_forward.4} parent=0 // pred_fallthru
    _
  %v24 = vld [vmem:[%s4] sm:$0xf]
  %v25 = vld [vmem:[%s4 + $0x4] sm:$0xf]
  %v26 = vld [vmem:[%s4 + $0x8] sm:$0xf]
  %v27 = vld [vmem:[%s4 + $0xc] sm:$0xf]
  %v28 = vld [vmem:[%s4 + $0x10] sm:$0xf]
  %v29 = vld [vmem:[%s4 + $0x14] sm:$0xf]
  %v30 = vld [vmem:[%s4 + $0x18] sm:$0xf]
  %v31 = vld [vmem:[%s4 + $0x1c] sm:$0xf]
  %v32 = vld [vmem:[%s4 + $0x20] sm:$0xf]
  %v33 = vld [vmem:[%s4 + $0x24] sm:$0xf]
  %v34 = vld [vmem:[%s4 + $0x28] sm:$0xf]
  %v35 = vld [vmem:[%s4 + $0x2c] sm:$0xf]
  %v36 = vld [vmem:[%s4 + $0x30] sm:$0xf]
  %v37 = vld [vmem:[%s4 + $0x34] sm:$0xf]
  %v38 = vld [vmem:[%s4 + $0x38] sm:$0xf]
  %v39 = vld [vmem:[%s4 + $0x3c] sm:$0xf]
  %v40 = vld [vmem:[%s4 + $0x40] sm:$0xf]
  %v41 = vld [vmem:[%s4 + $0x44] sm:$0xf]
  %v42 = vld [vmem:[%s4 + $0x48] sm:$0xf]
  %v43 = vld [vmem:[%s4 + $0x4c] sm:$0xf]
  %v44 = vld [vmem:[%s4 + $0x50] sm:$0xf]
  %v45 = vld [vmem:[%s4 + $0x54] sm:$0xf]
  %v46 = vld [vmem:[%s4 + $0x58] sm:$0xf]
  %v47 = vld [vmem:[%s4 + $0x5c] sm:$0xf]
  %v48 = vld [vmem:[%s4 + $0x60] sm:$0xf]
  %v49 = vld [vmem:[%s4 + $0x64] sm:$0xf]
  %v50 = vld [vmem:[%s4 + $0x68] sm:$0xf]
  %v51 = vld [vmem:[%s4 + $0x6c] sm:$0xf]
  %v52 = vld [vmem:[%s4 + $0x70] sm:$0xf]
  %v53 = vld [vmem:[%s4 + $0x74] sm:$0xf]
  %v54 = vld [vmem:[%s4 + $0x78] sm:$0xf]
  %v55 = vld [vmem:[%s4 + $0x7c] sm:$0xf]
  %v56 = vld [vmem:[%s4 + $0x80] sm:$0xf]
  %v57 = vld [vmem:[%s4 + $0x84] sm:$0xf]
  %v58 = vld [vmem:[%s4 + $0x88] sm:$0xf]
  %v59 = vld [vmem:[%s4 + $0x8c] sm:$0xf]
  %v60 = vld [vmem:[%s0] sm:$0xff]
  %v61 = vld [vmem:[%s0 + $0x8] sm:$0xf]
  %v62 = vld [vmem:[%s0 + $0xc] sm:$0xff]
  %v63 = vld [vmem:[%s0 + $0x14] sm:$0xf]
  %v64 = vld [vmem:[%s0 + $0x18] sm:$0x11]
  %v65 = vld [vmem:[%s0 + $0x20] sm:$0x1]
  %v72 = vunpack.c.l.b16 %v60
  %v73 = vunpack.c.h.b16 %v60
  %v74 = vunpack.c.l.b16 %v61
  %v75 = vunpack.c.l.b16 %v62
  %v76 = vunpack.c.h.b16 %v62
  %v77 = vunpack.c.l.b16 %v63
  %v78 = vunpack.c.l.b16 %v64
  %v79 = vunpack.c.h.b16 %v64
  %v80 = vunpack.c.l.b16 %v65
  %v81 = vpack.c.b16 %v75, %v72
  %v82 = vpack.c.b16 %v76, %v73
  %v83 = vpack.c.b16 %v77, %v74
  %v84 = vpack.c.b16 %v78, %v78
  %v85 = vpack.c.b16 %v79, %v79
  %v86 = vpack.c.b16 %v80, %v80
  %v127 = vunpack.c.l.b16 %v24
  %v128 = vunpack.c.l.b16 %v25
  %v129 = vunpack.c.l.b16 %v26
  %v130 = vunpack.c.l.b16 %v27
  %v131 = vunpack.c.l.b16 %v28
  %v132 = vunpack.c.l.b16 %v29
  %v133 = vunpack.c.l.b16 %v30
  %v134 = vunpack.c.l.b16 %v31
  %v135 = vunpack.c.l.b16 %v32
  %v136 = vunpack.c.l.b16 %v33
  %v137 = vunpack.c.l.b16 %v34
  %v138 = vunpack.c.l.b16 %v35
  %v139 = vunpack.c.l.b16 %v36
  %v140 = vunpack.c.l.b16 %v37
  %v141 = vunpack.c.l.b16 %v38
  %v142 = vunpack.c.l.b16 %v39
  %v143 = vunpack.c.l.b16 %v40
  %v144 = vunpack.c.l.b16 %v41
  %v145 = vunpack.c.l.b16 %v42
  %v146 = vunpack.c.l.b16 %v43
  %v147 = vunpack.c.l.b16 %v44
  %v148 = vunpack.c.l.b16 %v45
  %v149 = vunpack.c.l.b16 %v46
  %v150 = vunpack.c.l.b16 %v47
  %v151 = vunpack.c.l.b16 %v48
  %v152 = vunpack.c.l.b16 %v49
  %v153 = vunpack.c.l.b16 %v50
  %v154 = vunpack.c.l.b16 %v51
  %v155 = vunpack.c.l.b16 %v52
  %v156 = vunpack.c.l.b16 %v53
  %v157 = vunpack.c.l.b16 %v54
  %v158 = vunpack.c.l.b16 %v55
  %v159 = vunpack.c.l.b16 %v56
  %v160 = vunpack.c.l.b16 %v57
  %v161 = vunpack.c.l.b16 %v58
  %v162 = vunpack.c.l.b16 %v59
  %v163 = vpack.c.b16 %v128, %v127
  %v164 = vpack.c.b16 %v130, %v129
  %v165 = vpack.c.b16 %v132, %v131
  %v166 = vpack.c.b16 %v134, %v133
  %v167 = vpack.c.b16 %v136, %v135
  %v168 = vpack.c.b16 %v138, %v137
  %v169 = vpack.c.b16 %v140, %v139
  %v170 = vpack.c.b16 %v142, %v141
  %v171 = vpack.c.b16 %v144, %v143
  %v172 = vpack.c.b16 %v146, %v145
  %v173 = vpack.c.b16 %v148, %v147
  %v174 = vpack.c.b16 %v150, %v149
  %v175 = vpack.c.b16 %v152, %v151
  %v176 = vpack.c.b16 %v154, %v153
  %v177 = vpack.c.b16 %v156, %v155
  %v178 = vpack.c.b16 %v158, %v157
  %v179 = vpack.c.b16 %v160, %v159
  %v180 = vpack.c.b16 %v162, %v161
  %vm199 = vcmask 261120
  %v201 = vsel %vm199, %v83, 0
  %v204 = vsel %vm199, %v86, 0
  %206 = vmatprep.subr.bf16.mxu0 0
  %207 = vmatpush1.bf16.msra.mxu0 %v170
  %208 = vmatprep.subr.bf16.mxu0 0
  %209 = vmatpush1.bf16.msra.mxu0 %v169
  %210 = vmatprep.subr.bf16.mxu0 0
  %211 = vmatpush1.bf16.msra.mxu0 %v168
  %212 = vmatprep.subr.bf16.mxu0 0
  %213 = vmatpush1.bf16.msra.mxu0 %v167
  %214 = vmatprep.subr.bf16.mxu0 0
  %215 = vmatpush1.bf16.msra.mxu0 %v166
  %216 = vmatprep.subr.bf16.mxu0 0
  %217 = vmatpush1.bf16.msra.mxu0 %v165
  %218 = vmatprep.subr.bf16.mxu0 0
  %219 = vmatpush1.bf16.msra.mxu0 %v164
  %220 = vmatprep.subr.bf16.mxu0 0
  %221 = vmatpush1.bf16.msra.mxu0 %v163
  %222 = vmatprep.subr.bf16.mxu0 0
  %223 = vmatpush2.bf16.msra.mxu0 %v178
  %224 = vmatprep.subr.bf16.mxu0 0
  %225 = vmatpush2.bf16.msra.mxu0 %v177
  %226 = vmatprep.subr.bf16.mxu0 0
  %227 = vmatpush2.bf16.msra.mxu0 %v176
  %228 = vmatprep.subr.bf16.mxu0 0
  %229 = vmatpush2.bf16.msra.mxu0 %v175
  %230 = vmatprep.subr.bf16.mxu0 0
  %231 = vmatpush2.bf16.msra.mxu0 %v174
  %232 = vmatprep.subr.bf16.mxu0 0
  %233 = vmatpush2.bf16.msra.mxu0 %v173
  %234 = vmatprep.subr.bf16.mxu0 0
  %235 = vmatpush2.bf16.msra.mxu0 %v172
  %236 = vmatprep.subr.bf16.mxu0 0
  %237 = vmatpush2.bf16.msra.mxu0 %v171
  %238 = vmatprep.mubr.bf16.mxu0 %v82
  %239 = vmatmul.mubr.bf16.gmra.mxu0 %v81
  %v240 = vpop.f32.mrf.mxu0
  %v241 = vadd.f32 0.0, %v240
  %v242 = vpop.f32.mrf.mxu0
  %v243 = vpop.f32.mrf.mxu0
  %v244 = vadd.f32 0.0, %v243
  %v245 = vpop.f32.mrf.mxu0
  %246 = vmatprep.mubr.bf16.mxu0 %v85
  %247 = vmatmul.mubr.bf16.gmra.mxu0 %v84
  %v248 = vpop.f32.mrf.mxu0
  %v249 = vadd.f32 0.0, %v248
  %v250 = vpop.f32.mrf.mxu0
  %v251 = vpop.f32.mrf.mxu0
  %v252 = vpop.f32.mrf.mxu0
  %253 = vdwg.mxu0
  %254 = vmatprep.subr.bf16.mxu0 0
  %255 = vmatpush1.bf16.msra.mxu0 0
  %256 = vmatprep.subr.bf16.mxu0 0
  %257 = vmatpush1.bf16.msra.mxu0 0
  %258 = vmatprep.subr.bf16.mxu0 0
  %259 = vmatpush1.bf16.msra.mxu0 0
  %260 = vmatprep.subr.bf16.mxu0 0
  %261 = vmatpush1.bf16.msra.mxu0 0
  %262 = vmatprep.subr.bf16.mxu0 0
  %263 = vmatpush1.bf16.msra.mxu0 0
  %264 = vmatprep.subr.bf16.mxu0 0
  %265 = vmatpush1.bf16.msra.mxu0 0
  %266 = vmatprep.subr.bf16.mxu0 0
  %267 = vmatpush1.bf16.msra.mxu0 %v180
  %268 = vmatprep.subr.bf16.mxu0 0
  %269 = vmatpush1.bf16.msra.mxu0 %v179
  %270 = vmatprep.subr.bf16.mxu0 0
  %271 = vmatpush2.bf16.msra.mxu0 0
  %272 = vmatprep.subr.bf16.mxu0 0
  %273 = vmatpush2.bf16.msra.mxu0 0
  %274 = vmatprep.subr.bf16.mxu0 0
  %275 = vmatpush2.bf16.msra.mxu0 0
  %276 = vmatprep.subr.bf16.mxu0 0
  %277 = vmatpush2.bf16.msra.mxu0 0
  %278 = vmatprep.subr.bf16.mxu0 0
  %279 = vmatpush2.bf16.msra.mxu0 0
  %280 = vmatprep.subr.bf16.mxu0 0
  %281 = vmatpush2.bf16.msra.mxu0 0
  %282 = vmatprep.subr.bf16.mxu0 0
  %283 = vmatpush2.bf16.msra.mxu0 0
  %284 = vmatprep.subr.bf16.mxu0 0
  %285 = vmatpush2.bf16.msra.mxu0 0
  %286 = vmatprep.mubr.bf16.mxu0 0
  %287 = vmatmul.mubr.bf16.gmra.mxu0 %v201
  %v288 = vpop.f32.mrf.mxu0
  %v289 = vadd.f32 %v241, %v288
  %v290 = vpop.f32.mrf.mxu0
  %v291 = vpop.f32.mrf.mxu0
  %v292 = vadd.f32 %v244, %v291
  %v293 = vpop.f32.mrf.mxu0
  %294 = vmatprep.mubr.bf16.mxu0 0
  %295 = vmatmul.mubr.bf16.gmra.mxu0 %v204
  %v296 = vpop.f32.mrf.mxu0
  %v297 = vadd.f32 %v249, %v296
  %v298 = vpop.f32.mrf.mxu0
  %v299 = vpop.f32.mrf.mxu0
  %v300 = vpop.f32.mrf.mxu0
  %301 = vdwg.mxu0
  %v302 = vld [vmem:[%s1] sm:$0xff]
  %v303 = vld [vmem:[%s1 + $0x8] sm:$0xf]
  %v304 = vld [vmem:[%s1 + $0xc] sm:$0xff]
  %v305 = vld [vmem:[%s1 + $0x14] sm:$0xf]
  %v306 = vld [vmem:[%s1 + $0x18] sm:$0x11]
  %v307 = vld [vmem:[%s1 + $0x20] sm:$0x1]
  %v314 = vunpack.c.l.b16 %v302
  %v315 = vunpack.c.h.b16 %v302
  %v316 = vunpack.c.l.b16 %v303
  %v317 = vunpack.c.l.b16 %v304
  %v318 = vunpack.c.h.b16 %v304
  %v319 = vunpack.c.l.b16 %v305
  %v320 = vunpack.c.l.b16 %v306
  %v321 = vunpack.c.h.b16 %v306
  %v322 = vunpack.c.l.b16 %v307
  %v323 = vpack.c.b16 %v317, %v314
  %v324 = vpack.c.b16 %v318, %v315
  %v325 = vpack.c.b16 %v319, %v316
  %v326 = vpack.c.b16 %v320, %v320
  %v327 = vpack.c.b16 %v321, %v321
  %v328 = vpack.c.b16 %v322, %v322
  %v334 = vsel %vm199, %v325, 0
  %v337 = vsel %vm199, %v328, 0
  %339 = vmatprep.subr.bf16.mxu0 0
  %340 = vmatpush1.bf16.msra.mxu0 %v170
  %341 = vmatprep.subr.bf16.mxu0 0
  %342 = vmatpush1.bf16.msra.mxu0 %v169
  %343 = vmatprep.subr.bf16.mxu0 0
  %344 = vmatpush1.bf16.msra.mxu0 %v168
  %345 = vmatprep.subr.bf16.mxu0 0
  %346 = vmatpush1.bf16.msra.mxu0 %v167
  %347 = vmatprep.subr.bf16.mxu0 0
  %348 = vmatpush1.bf16.msra.mxu0 %v166
  %349 = vmatprep.subr.bf16.mxu0 0
  %350 = vmatpush1.bf16.msra.mxu0 %v165
  %351 = vmatprep.subr.bf16.mxu0 0
  %352 = vmatpush1.bf16.msra.mxu0 %v164
  %353 = vmatprep.subr.bf16.mxu0 0
  %354 = vmatpush1.bf16.msra.mxu0 %v163
  %355 = vmatprep.subr.bf16.mxu0 0
  %356 = vmatpush2.bf16.msra.mxu0 %v178
  %357 = vmatprep.subr.bf16.mxu0 0
  %358 = vmatpush2.bf16.msra.mxu0 %v177
  %359 = vmatprep.subr.bf16.mxu0 0
  %360 = vmatpush2.bf16.msra.mxu0 %v176
  %361 = vmatprep.subr.bf16.mxu0 0
  %362 = vmatpush2.bf16.msra.mxu0 %v175
  %363 = vmatprep.subr.bf16.mxu0 0
  %364 = vmatpush2.bf16.msra.mxu0 %v174
  %365 = vmatprep.subr.bf16.mxu0 0
  %366 = vmatpush2.bf16.msra.mxu0 %v173
  %367 = vmatprep.subr.bf16.mxu0 0
  %368 = vmatpush2.bf16.msra.mxu0 %v172
  %369 = vmatprep.subr.bf16.mxu0 0
  %370 = vmatpush2.bf16.msra.mxu0 %v171
  %371 = vmatprep.mubr.bf16.mxu0 %v324
  %372 = vmatmul.mubr.bf16.gmra.mxu0 %v323
  %v373 = vpop.f32.mrf.mxu0
  %v374 = vadd.f32 0.0, %v373
  %v375 = vpop.f32.mrf.mxu0
  %v376 = vpop.f32.mrf.mxu0
  %v377 = vadd.f32 0.0, %v376
  %v378 = vpop.f32.mrf.mxu0
  %379 = vmatprep.mubr.bf16.mxu0 %v327
  %380 = vmatmul.mubr.bf16.gmra.mxu0 %v326
  %v381 = vpop.f32.mrf.mxu0
  %v382 = vadd.f32 0.0, %v381
  %v383 = vpop.f32.mrf.mxu0
  %v384 = vpop.f32.mrf.mxu0
  %v385 = vpop.f32.mrf.mxu0
  %386 = vdwg.mxu0
  %387 = vmatprep.subr.bf16.mxu0 0
  %388 = vmatpush1.bf16.msra.mxu0 0
  %389 = vmatprep.subr.bf16.mxu0 0
  %390 = vmatpush1.bf16.msra.mxu0 0
  %391 = vmatprep.subr.bf16.mxu0 0
  %392 = vmatpush1.bf16.msra.mxu0 0
  %393 = vmatprep.subr.bf16.mxu0 0
  %394 = vmatpush1.bf16.msra.mxu0 0
  %395 = vmatprep.subr.bf16.mxu0 0
  %396 = vmatpush1.bf16.msra.mxu0 0
  %397 = vmatprep.subr.bf16.mxu0 0
  %398 = vmatpush1.bf16.msra.mxu0 0
  %399 = vmatprep.subr.bf16.mxu0 0
  %400 = vmatpush1.bf16.msra.mxu0 %v180
  %401 = vmatprep.subr.bf16.mxu0 0
  %402 = vmatpush1.bf16.msra.mxu0 %v179
  %403 = vmatprep.subr.bf16.mxu0 0
  %404 = vmatpush2.bf16.msra.mxu0 0
  %405 = vmatprep.subr.bf16.mxu0 0
  %406 = vmatpush2.bf16.msra.mxu0 0
  %407 = vmatprep.subr.bf16.mxu0 0
  %408 = vmatpush2.bf16.msra.mxu0 0
  %409 = vmatprep.subr.bf16.mxu0 0
  %410 = vmatpush2.bf16.msra.mxu0 0
  %411 = vmatprep.subr.bf16.mxu0 0
  %412 = vmatpush2.bf16.msra.mxu0 0
  %413 = vmatprep.subr.bf16.mxu0 0
  %414 = vmatpush2.bf16.msra.mxu0 0
  %415 = vmatprep.subr.bf16.mxu0 0
  %416 = vmatpush2.bf16.msra.mxu0 0
  %417 = vmatprep.subr.bf16.mxu0 0
  %418 = vmatpush2.bf16.msra.mxu0 0
  %419 = vmatprep.mubr.bf16.mxu0 0
  %420 = vmatmul.mubr.bf16.gmra.mxu0 %v334
  %v421 = vpop.f32.mrf.mxu0
  %v422 = vadd.f32 %v374, %v421
  %v423 = vpop.f32.mrf.mxu0
  %v424 = vpop.f32.mrf.mxu0
  %v425 = vadd.f32 %v377, %v424
  %v426 = vpop.f32.mrf.mxu0
  %427 = vmatprep.mubr.bf16.mxu0 0
  %428 = vmatmul.mubr.bf16.gmra.mxu0 %v337
  %v429 = vpop.f32.mrf.mxu0
  %v430 = vadd.f32 %v382, %v429
  %v431 = vpop.f32.mrf.mxu0
  %v432 = vpop.f32.mrf.mxu0
  %v433 = vpop.f32.mrf.mxu0
  %434 = vdwg.mxu0
  %v435 = vmax.f32 %v289, %v422
  %v436 = vmax.f32 %v292, %v425
  %v437 = vmax.f32 %v297, %v430
  %v438 = vld [vmem:[%s2] sm:$0xff]
  %v439 = vld [vmem:[%s2 + $0x8] sm:$0xf]
  %v440 = vld [vmem:[%s2 + $0xc] sm:$0xff]
  %v441 = vld [vmem:[%s2 + $0x14] sm:$0xf]
  %v442 = vld [vmem:[%s2 + $0x18] sm:$0x11]
  %v443 = vld [vmem:[%s2 + $0x20] sm:$0x1]
  %v450 = vunpack.c.l.b16 %v438
  %v451 = vunpack.c.h.b16 %v438
  %v452 = vunpack.c.l.b16 %v439
  %v453 = vunpack.c.l.b16 %v440
  %v454 = vunpack.c.h.b16 %v440
  %v455 = vunpack.c.l.b16 %v441
  %v456 = vunpack.c.l.b16 %v442
  %v457 = vunpack.c.h.b16 %v442
  %v458 = vunpack.c.l.b16 %v443
  %v459 = vpack.c.b16 %v453, %v450
  %v460 = vpack.c.b16 %v454, %v451
  %v461 = vpack.c.b16 %v455, %v452
  %v462 = vpack.c.b16 %v456, %v456
  %v463 = vpack.c.b16 %v457, %v457
  %v464 = vpack.c.b16 %v458, %v458
  %v470 = vsel %vm199, %v461, 0
  %v473 = vsel %vm199, %v464, 0
  %475 = vmatprep.subr.bf16.mxu0 0
  %476 = vmatpush1.bf16.msra.mxu0 %v170
  %477 = vmatprep.subr.bf16.mxu0 0
  %478 = vmatpush1.bf16.msra.mxu0 %v169
  %479 = vmatprep.subr.bf16.mxu0 0
  %480 = vmatpush1.bf16.msra.mxu0 %v168
  %481 = vmatprep.subr.bf16.mxu0 0
  %482 = vmatpush1.bf16.msra.mxu0 %v167
  %483 = vmatprep.subr.bf16.mxu0 0
  %484 = vmatpush1.bf16.msra.mxu0 %v166
  %485 = vmatprep.subr.bf16.mxu0 0
  %486 = vmatpush1.bf16.msra.mxu0 %v165
  %487 = vmatprep.subr.bf16.mxu0 0
  %488 = vmatpush1.bf16.msra.mxu0 %v164
  %489 = vmatprep.subr.bf16.mxu0 0
  %490 = vmatpush1.bf16.msra.mxu0 %v163
  %491 = vmatprep.subr.bf16.mxu0 0
  %492 = vmatpush2.bf16.msra.mxu0 %v178
  %493 = vmatprep.subr.bf16.mxu0 0
  %494 = vmatpush2.bf16.msra.mxu0 %v177
  %495 = vmatprep.subr.bf16.mxu0 0
  %496 = vmatpush2.bf16.msra.mxu0 %v176
  %497 = vmatprep.subr.bf16.mxu0 0
  %498 = vmatpush2.bf16.msra.mxu0 %v175
  %499 = vmatprep.subr.bf16.mxu0 0
  %500 = vmatpush2.bf16.msra.mxu0 %v174
  %501 = vmatprep.subr.bf16.mxu0 0
  %502 = vmatpush2.bf16.msra.mxu0 %v173
  %503 = vmatprep.subr.bf16.mxu0 0
  %504 = vmatpush2.bf16.msra.mxu0 %v172
  %505 = vmatprep.subr.bf16.mxu0 0
  %506 = vmatpush2.bf16.msra.mxu0 %v171
  %507 = vmatprep.mubr.bf16.mxu0 %v460
  %508 = vmatmul.mubr.bf16.gmra.mxu0 %v459
  %v509 = vpop.f32.mrf.mxu0
  %v510 = vadd.f32 0.0, %v509
  %v511 = vpop.f32.mrf.mxu0
  %v512 = vpop.f32.mrf.mxu0
  %v513 = vadd.f32 0.0, %v512
  %v514 = vpop.f32.mrf.mxu0
  %515 = vmatprep.mubr.bf16.mxu0 %v463
  %516 = vmatmul.mubr.bf16.gmra.mxu0 %v462
  %v517 = vpop.f32.mrf.mxu0
  %v518 = vadd.f32 0.0, %v517
  %v519 = vpop.f32.mrf.mxu0
  %v520 = vpop.f32.mrf.mxu0
  %v521 = vpop.f32.mrf.mxu0
  %522 = vdwg.mxu0
  %523 = vmatprep.subr.bf16.mxu0 0
  %524 = vmatpush1.bf16.msra.mxu0 0
  %525 = vmatprep.subr.bf16.mxu0 0
  %526 = vmatpush1.bf16.msra.mxu0 0
  %527 = vmatprep.subr.bf16.mxu0 0
  %528 = vmatpush1.bf16.msra.mxu0 0
  %529 = vmatprep.subr.bf16.mxu0 0
  %530 = vmatpush1.bf16.msra.mxu0 0
  %531 = vmatprep.subr.bf16.mxu0 0
  %532 = vmatpush1.bf16.msra.mxu0 0
  %533 = vmatprep.subr.bf16.mxu0 0
  %534 = vmatpush1.bf16.msra.mxu0 0
  %535 = vmatprep.subr.bf16.mxu0 0
  %536 = vmatpush1.bf16.msra.mxu0 %v180
  %537 = vmatprep.subr.bf16.mxu0 0
  %538 = vmatpush1.bf16.msra.mxu0 %v179
  %539 = vmatprep.subr.bf16.mxu0 0
  %540 = vmatpush2.bf16.msra.mxu0 0
  %541 = vmatprep.subr.bf16.mxu0 0
  %542 = vmatpush2.bf16.msra.mxu0 0
  %543 = vmatprep.subr.bf16.mxu0 0
  %544 = vmatpush2.bf16.msra.mxu0 0
  %545 = vmatprep.subr.bf16.mxu0 0
  %546 = vmatpush2.bf16.msra.mxu0 0
  %547 = vmatprep.subr.bf16.mxu0 0
  %548 = vmatpush2.bf16.msra.mxu0 0
  %549 = vmatprep.subr.bf16.mxu0 0
  %550 = vmatpush2.bf16.msra.mxu0 0
  %551 = vmatprep.subr.bf16.mxu0 0
  %552 = vmatpush2.bf16.msra.mxu0 0
  %553 = vmatprep.subr.bf16.mxu0 0
  %554 = vmatpush2.bf16.msra.mxu0 0
  %555 = vmatprep.mubr.bf16.mxu0 0
  %556 = vmatmul.mubr.bf16.gmra.mxu0 %v470
  %v557 = vpop.f32.mrf.mxu0
  %v558 = vadd.f32 %v510, %v557
  %v559 = vpop.f32.mrf.mxu0
  %v560 = vpop.f32.mrf.mxu0
  %v561 = vadd.f32 %v513, %v560
  %v562 = vpop.f32.mrf.mxu0
  %563 = vmatprep.mubr.bf16.mxu0 0
  %564 = vmatmul.mubr.bf16.gmra.mxu0 %v473
  %v565 = vpop.f32.mrf.mxu0
  %v566 = vadd.f32 %v518, %v565
  %v567 = vpop.f32.mrf.mxu0
  %v568 = vpop.f32.mrf.mxu0
  %v569 = vpop.f32.mrf.mxu0
  %570 = vdwg.mxu0
  %v571 = vld [vmem:[%s3] sm:$0xff]
  %v572 = vld [vmem:[%s3 + $0x8] sm:$0xf]
  %v573 = vld [vmem:[%s3 + $0xc] sm:$0xff]
  %v574 = vld [vmem:[%s3 + $0x14] sm:$0xf]
  %v575 = vld [vmem:[%s3 + $0x18] sm:$0x11]
  %v576 = vld [vmem:[%s3 + $0x20] sm:$0x1]
  %v583 = vunpack.c.l.b16 %v571
  %v584 = vunpack.c.h.b16 %v571
  %v585 = vunpack.c.l.b16 %v572
  %v586 = vunpack.c.l.b16 %v573
  %v587 = vunpack.c.h.b16 %v573
  %v588 = vunpack.c.l.b16 %v574
  %v589 = vunpack.c.l.b16 %v575
  %v590 = vunpack.c.h.b16 %v575
  %v591 = vunpack.c.l.b16 %v576
  %v592 = vpack.c.b16 %v586, %v583
  %v593 = vpack.c.b16 %v587, %v584
  %v594 = vpack.c.b16 %v588, %v585
  %v595 = vpack.c.b16 %v589, %v589
  %v596 = vpack.c.b16 %v590, %v590
  %v597 = vpack.c.b16 %v591, %v591
  %v603 = vsel %vm199, %v594, 0
  %v606 = vsel %vm199, %v597, 0
  %608 = vmatprep.subr.bf16.mxu0 0
  %609 = vmatpush1.bf16.msra.mxu0 %v170
  %610 = vmatprep.subr.bf16.mxu0 0
  %611 = vmatpush1.bf16.msra.mxu0 %v169
  %612 = vmatprep.subr.bf16.mxu0 0
  %613 = vmatpush1.bf16.msra.mxu0 %v168
  %614 = vmatprep.subr.bf16.mxu0 0
  %615 = vmatpush1.bf16.msra.mxu0 %v167
  %616 = vmatprep.subr.bf16.mxu0 0
  %617 = vmatpush1.bf16.msra.mxu0 %v166
  %618 = vmatprep.subr.bf16.mxu0 0
  %619 = vmatpush1.bf16.msra.mxu0 %v165
  %620 = vmatprep.subr.bf16.mxu0 0
  %621 = vmatpush1.bf16.msra.mxu0 %v164
  %622 = vmatprep.subr.bf16.mxu0 0
  %623 = vmatpush1.bf16.msra.mxu0 %v163
  %624 = vmatprep.subr.bf16.mxu0 0
  %625 = vmatpush2.bf16.msra.mxu0 %v178
  %626 = vmatprep.subr.bf16.mxu0 0
  %627 = vmatpush2.bf16.msra.mxu0 %v177
  %628 = vmatprep.subr.bf16.mxu0 0
  %629 = vmatpush2.bf16.msra.mxu0 %v176
  %630 = vmatprep.subr.bf16.mxu0 0
  %631 = vmatpush2.bf16.msra.mxu0 %v175
  %632 = vmatprep.subr.bf16.mxu0 0
  %633 = vmatpush2.bf16.msra.mxu0 %v174
  %634 = vmatprep.subr.bf16.mxu0 0
  %635 = vmatpush2.bf16.msra.mxu0 %v173
  %636 = vmatprep.subr.bf16.mxu0 0
  %637 = vmatpush2.bf16.msra.mxu0 %v172
  %638 = vmatprep.subr.bf16.mxu0 0
  %639 = vmatpush2.bf16.msra.mxu0 %v171
  %640 = vmatprep.mubr.bf16.mxu0 %v593
  %641 = vmatmul.mubr.bf16.gmra.mxu0 %v592
  %v642 = vpop.f32.mrf.mxu0
  %v643 = vadd.f32 0.0, %v642
  %v644 = vpop.f32.mrf.mxu0
  %v645 = vpop.f32.mrf.mxu0
  %v646 = vadd.f32 0.0, %v645
  %v647 = vpop.f32.mrf.mxu0
  %648 = vmatprep.mubr.bf16.mxu0 %v596
  %649 = vmatmul.mubr.bf16.gmra.mxu0 %v595
  %v650 = vpop.f32.mrf.mxu0
  %v651 = vadd.f32 0.0, %v650
  %v652 = vpop.f32.mrf.mxu0
  %v653 = vpop.f32.mrf.mxu0
  %v654 = vpop.f32.mrf.mxu0
  %655 = vdwg.mxu0
  %656 = vmatprep.subr.bf16.mxu0 0
  %657 = vmatpush1.bf16.msra.mxu0 0
  %658 = vmatprep.subr.bf16.mxu0 0
  %659 = vmatpush1.bf16.msra.mxu0 0
  %660 = vmatprep.subr.bf16.mxu0 0
  %661 = vmatpush1.bf16.msra.mxu0 0
  %662 = vmatprep.subr.bf16.mxu0 0
  %663 = vmatpush1.bf16.msra.mxu0 0
  %664 = vmatprep.subr.bf16.mxu0 0
  %665 = vmatpush1.bf16.msra.mxu0 0
  %666 = vmatprep.subr.bf16.mxu0 0
  %667 = vmatpush1.bf16.msra.mxu0 0
  %668 = vmatprep.subr.bf16.mxu0 0
  %669 = vmatpush1.bf16.msra.mxu0 %v180
  %670 = vmatprep.subr.bf16.mxu0 0
  %671 = vmatpush1.bf16.msra.mxu0 %v179
  %672 = vmatprep.subr.bf16.mxu0 0
  %673 = vmatpush2.bf16.msra.mxu0 0
  %674 = vmatprep.subr.bf16.mxu0 0
  %675 = vmatpush2.bf16.msra.mxu0 0
  %676 = vmatprep.subr.bf16.mxu0 0
  %677 = vmatpush2.bf16.msra.mxu0 0
  %678 = vmatprep.subr.bf16.mxu0 0
  %679 = vmatpush2.bf16.msra.mxu0 0
  %680 = vmatprep.subr.bf16.mxu0 0
  %681 = vmatpush2.bf16.msra.mxu0 0
  %682 = vmatprep.subr.bf16.mxu0 0
  %683 = vmatpush2.bf16.msra.mxu0 0
  %684 = vmatprep.subr.bf16.mxu0 0
  %685 = vmatpush2.bf16.msra.mxu0 0
  %686 = vmatprep.subr.bf16.mxu0 0
  %687 = vmatpush2.bf16.msra.mxu0 0
  %688 = vmatprep.mubr.bf16.mxu0 0
  %689 = vmatmul.mubr.bf16.gmra.mxu0 %v603
  %v690 = vpop.f32.mrf.mxu0
  %v691 = vadd.f32 %v643, %v690
  %v692 = vpop.f32.mrf.mxu0
  %v693 = vpop.f32.mrf.mxu0
  %v694 = vadd.f32 %v646, %v693
  %v695 = vpop.f32.mrf.mxu0
  %696 = vmatprep.mubr.bf16.mxu0 0
  %697 = vmatmul.mubr.bf16.gmra.mxu0 %v606
  %v698 = vpop.f32.mrf.mxu0
  %v699 = vadd.f32 %v651, %v698
  %v700 = vpop.f32.mrf.mxu0
  %v701 = vpop.f32.mrf.mxu0
  %v702 = vpop.f32.mrf.mxu0
  %703 = vdwg.mxu0
  %v704 = vmax.f32 %v558, %v691
  %v705 = vmax.f32 %v561, %v694
  %v706 = vmax.f32 %v566, %v699
  %v707 = vmax.f32 %v435, %v704
  %v708 = vmax.f32 %v436, %v705
  %v709 = vmax.f32 %v437, %v706
  %v710 = vld [vmem:[%s5] sm:$0x1]
  %v712 = vlaneseq
  %v713 = vshrl.u32 %v712, 7
  %v714 = vsub.s32 0, %v713
  %v715 = vrot.slane %v710, %v714
  %v717 = vadd.f32 %v707, %v715
  %v718 = vadd.f32 %v708, %v715
  %v719 = vadd.f32 %v709, %v715
  %v720 = vmax.f32 %v717, 0.0
  %v721 = vmax.f32 %v718, 0.0
  %v722 = vmax.f32 %v719, 0.0
  %v723 = vpack.c.bf16 %v721, %v720
  %v724 = vpack.c.bf16 %v722, %v722
  %v727 = vunpack.c.l.b16 %v723
  %v728 = vunpack.c.h.b16 %v723
  %v729 = vunpack.c.l.b16 %v724
  %v730 = vpack.c.b16 %v727, %v727
  %v731 = vpack.c.b16 %v728, %v728
  %v732 = vpack.c.b16 %v729, %v729
  %vm736 = vcmask 519168
  %737 = vst.msk [vmem:[%s6] sm:$0xf] %vm736, %v730
  %738 = vst.msk [vmem:[%s6 + $0x4] sm:$0xf] %vm736, %v731
  %vm739 = vcmask 516096
  %740 = vst.msk [vmem:[%s6 + $0x8] sm:$0x1] %vm739, %v732
  // Predicated region
  $region26: #{convnet_forward.4} parent=0 // pred_check
    _
  $region27: #{convnet_forward.4} parent=0 // pred_check_branch
    %742 = sbr.rel (0) target = $region29
  $region28: #{convnet_forward.4} parent=0 // pred_region
    _
  $region29: #{convnet_forward.4} parent=0 // pred_fallthru
    _
  // Predicated region
  $region30: #{convnet_forward.4} parent=0 // pred_check
    _
  $region31: #{convnet_forward.4} parent=0 // pred_check_branch
    %744 = sbr.rel (0) target = $region33
  $region32: #{convnet_forward.4} parent=0 // pred_region
    _
  $region33: #{convnet_forward.4} parent=0 // pred_fallthru
    _

// kernel: convnet_forward.3
$region0: #{convnet_forward.3}
  #allocation0 [shape = 'u32[]', space=smem, size = 0x4, offset = 0x4, fixed_abs, tag = 'smem constant byte address 0x4 - core index']
  #allocation1 [shape = 'u32[144,128]{1,0:T(1,128)}', space=vmem, size = 0x12000, scoped, tag = 'internal scratch']
  %s0 = inlined_call_operand.vmem [shape: f32[128,9], index: 0, kind: input, shape index: {}]
  %s1 = inlined_call_operand.vmem [shape: f32[128,9], index: 1, kind: input, shape index: {}]
  %s2 = inlined_call_operand.vmem [shape: f32[128,9], index: 2, kind: input, shape index: {}]
  %s3 = inlined_call_operand.vmem [shape: f32[128,9], index: 3, kind: input, shape index: {}]
  %s4 = inlined_call_operand.vmem [shape: f32[9,32], index: 4, kind: input, shape index: {}]
  %s5 = inlined_call_operand.vmem [shape: f32[1,32], index: 5, kind: input, shape index: {}]
  %s6 = inlined_call_operand.vmem [shape: bf16[128,32], index: 6, kind: output, shape index: {}]
  %s7 = sld [smem:[#allocation0]]
  $region34: #{convnet_forward.3} parent=0
    _
  %s9 = ssub.s32 1, %s7
  %s10 = scalar_select 0, %s9, %s7
  // Predicated region
  $region2: #{convnet_forward.3} parent=0 // pred_check
    _
  $region3: #{convnet_forward.3} parent=0 // pred_check_branch
    %12 = sbr.rel (0) target = $region5
  $region4: #{convnet_forward.3} parent=0 // pred_region
    _
  $region5: #{convnet_forward.3} parent=0 // pred_fallthru
    _
  // Predicated region
  $region6: #{convnet_forward.3} parent=0 // pred_check
    _
  $region7: #{convnet_forward.3} parent=0 // pred_check_branch
    %14 = sbr.rel (0) target = $region9
  $region8: #{convnet_forward.3} parent=0 // pred_region
    _
  $region9: #{convnet_forward.3} parent=0 // pred_fallthru
    _
  // Predicated region
  $region10: #{convnet_forward.3} parent=0 // pred_check
    _
  $region11: #{convnet_forward.3} parent=0 // pred_check_branch
    %16 = sbr.rel (0) target = $region13
  $region12: #{convnet_forward.3} parent=0 // pred_region
    _
  $region13: #{convnet_forward.3} parent=0 // pred_fallthru
    _
  // Predicated region
  $region14: #{convnet_forward.3} parent=0 // pred_check
    _
  $region15: #{convnet_forward.3} parent=0 // pred_check_branch
    %18 = sbr.rel (0) target = $region17
  $region16: #{convnet_forward.3} parent=0 // pred_region
    _
  $region17: #{convnet_forward.3} parent=0 // pred_fallthru
    _
  // Predicated region
  $region18: #{convnet_forward.3} parent=0 // pred_check
    _
  $region19: #{convnet_forward.3} parent=0 // pred_check_branch
    %20 = sbr.rel (0) target = $region21
  $region20: #{convnet_forward.3} parent=0 // pred_region
    _
  $region21: #{convnet_forward.3} parent=0 // pred_fallthru
    _
  // Predicated region
  $region22: #{convnet_forward.3} parent=0 // pred_check
    _
  $region23: #{convnet_forward.3} parent=0 // pred_check_branch
    %22 = sbr.rel (0) target = $region25
  $region24: #{convnet_forward.3} parent=0 // pred_region
    _
  $region25: #{convnet_forward.3} parent=0 // pred_fallthru
    _
  %v23 = vld [vmem:[%s4] sm:$0xff]
  %v24 = vld [vmem:[%s4 + $0x8] sm:$0x1]
  %v25 = vld [vmem:[%s5] sm:$0x1]
  %v26 = vld [vmem:[%s0] sm:$0xff]
  %v27 = vld [vmem:[%s0 + $0x8] sm:$0xff]
  %v28 = vld [vmem:[%s0 + $0x10] sm:$0xff]
  %v29 = vld [vmem:[%s0 + $0x18] sm:$0xff]
  %v30 = vld [vmem:[%s0 + $0x20] sm:$0xff]
  %v31 = vld [vmem:[%s0 + $0x28] sm:$0xff]
  %v32 = vld [vmem:[%s0 + $0x30] sm:$0xff]
  %v33 = vld [vmem:[%s0 + $0x38] sm:$0xff]
  %v34 = vld [vmem:[%s0 + $0x40] sm:$0xff]
  %v35 = vld [vmem:[%s0 + $0x48] sm:$0xff]
  %v36 = vld [vmem:[%s0 + $0x50] sm:$0xff]
  %v37 = vld [vmem:[%s0 + $0x58] sm:$0xff]
  %v38 = vld [vmem:[%s0 + $0x60] sm:$0xff]
  %v39 = vld [vmem:[%s0 + $0x68] sm:$0xff]
  %v40 = vld [vmem:[%s0 + $0x70] sm:$0xff]
  %v41 = vld [vmem:[%s0 + $0x78] sm:$0xff]
  %43 = vset.pattern.permute.xlu0 0
  %44 = vperm.xlu0 %43, %v26
  %v45 = vpop.permute.xlu0 %44
  %48 = vset.pattern.permute.xlu0 0
  %49 = vperm.xlu0 %48, %v27
  %v50 = vpop.permute.xlu0 %49
  %53 = vset.pattern.permute.xlu0 0
  %54 = vperm.xlu0 %53, %v28
  %v55 = vpop.permute.xlu0 %54
  %58 = vset.pattern.permute.xlu0 0
  %59 = vperm.xlu0 %58, %v29
  %v60 = vpop.permute.xlu0 %59
  %63 = vset.pattern.permute.xlu0 0
  %64 = vperm.xlu0 %63, %v30
  %v65 = vpop.permute.xlu0 %64
  %68 = vset.pattern.permute.xlu0 0
  %69 = vperm.xlu0 %68, %v31
  %v70 = vpop.permute.xlu0 %69
  %73 = vset.pattern.permute.xlu0 0
  %74 = vperm.xlu0 %73, %v32
  %v75 = vpop.permute.xlu0 %74
  %78 = vset.pattern.permute.xlu0 0
  %79 = vperm.xlu0 %78, %v33
  %v80 = vpop.permute.xlu0 %79
  %83 = vset.pattern.permute.xlu0 0
  %84 = vperm.xlu0 %83, %v34
  %v85 = vpop.permute.xlu0 %84
  %88 = vset.pattern.permute.xlu0 0
  %89 = vperm.xlu0 %88, %v35
  %v90 = vpop.permute.xlu0 %89
  %93 = vset.pattern.permute.xlu0 0
  %94 = vperm.xlu0 %93, %v36
  %v95 = vpop.permute.xlu0 %94
  %98 = vset.pattern.permute.xlu0 0
  %99 = vperm.xlu0 %98, %v37
  %v100 = vpop.permute.xlu0 %99
  %103 = vset.pattern.permute.xlu0 0
  %104 = vperm.xlu0 %103, %v38
  %v105 = vpop.permute.xlu0 %104
  %108 = vset.pattern.permute.xlu0 0
  %109 = vperm.xlu0 %108, %v39
  %v110 = vpop.permute.xlu0 %109
  %113 = vset.pattern.permute.xlu0 0
  %114 = vperm.xlu0 %113, %v40
  %v115 = vpop.permute.xlu0 %114
  %118 = vset.pattern.permute.xlu0 0
  %119 = vperm.xlu0 %118, %v41
  %v120 = vpop.permute.xlu0 %119
  %v122 = vlaneseq
  %v123 = vshrl.u32 %v122, 7
  %v124 = vsub.s32 0, %v123
  %v125 = vrot.slane %v23, %v124
  %v126 = vmul.f32 %v45, %v125
  %v127 = vmul.f32 %v50, %v125
  %v128 = vmul.f32 %v55, %v125
  %v129 = vmul.f32 %v60, %v125
  %v130 = vmul.f32 %v65, %v125
  %v131 = vmul.f32 %v70, %v125
  %v132 = vmul.f32 %v75, %v125
  %v133 = vmul.f32 %v80, %v125
  %v134 = vmul.f32 %v85, %v125
  %v135 = vmul.f32 %v90, %v125
  %v136 = vmul.f32 %v95, %v125
  %v137 = vmul.f32 %v100, %v125
  %v138 = vmul.f32 %v105, %v125
  %v139 = vmul.f32 %v110, %v125
  %v140 = vmul.f32 %v115, %v125
  %v141 = vmul.f32 %v120, %v125
  %142 = vset.pattern.permute.xlu0 1
  %143 = vperm.xlu0 %142, %v26
  %v144 = vpop.permute.xlu0 %143
  %146 = vset.pattern.permute.xlu0 1
  %147 = vperm.xlu0 %146, %v27
  %v148 = vpop.permute.xlu0 %147
  %150 = vset.pattern.permute.xlu0 1
  %151 = vperm.xlu0 %150, %v28
  %v152 = vpop.permute.xlu0 %151
  %154 = vset.pattern.permute.xlu0 1
  %155 = vperm.xlu0 %154, %v29
  %v156 = vpop.permute.xlu0 %155
  %158 = vset.pattern.permute.xlu0 1
  %159 = vperm.xlu0 %158, %v30
  %v160 = vpop.permute.xlu0 %159
  %162 = vset.pattern.permute.xlu0 1
  %163 = vperm.xlu0 %162, %v31
  %v164 = vpop.permute.xlu0 %163
  %166 = vset.pattern.permute.xlu0 1
  %167 = vperm.xlu0 %166, %v32
  %v168 = vpop.permute.xlu0 %167
  %170 = vset.pattern.permute.xlu0 1
  %171 = vperm.xlu0 %170, %v33
  %v172 = vpop.permute.xlu0 %171
  %174 = vset.pattern.permute.xlu0 1
  %175 = vperm.xlu0 %174, %v34
  %v176 = vpop.permute.xlu0 %175
  %178 = vset.pattern.permute.xlu0 1
  %179 = vperm.xlu0 %178, %v35
  %v180 = vpop.permute.xlu0 %179
  %182 = vset.pattern.permute.xlu0 1
  %183 = vperm.xlu0 %182, %v36
  %v184 = vpop.permute.xlu0 %183
  %186 = vset.pattern.permute.xlu0 1
  %187 = vperm.xlu0 %186, %v37
  %v188 = vpop.permute.xlu0 %187
  %190 = vset.pattern.permute.xlu0 1
  %191 = vperm.xlu0 %190, %v38
  %v192 = vpop.permute.xlu0 %191
  %194 = vset.pattern.permute.xlu0 1
  %195 = vperm.xlu0 %194, %v39
  %v196 = vpop.permute.xlu0 %195
  %198 = vset.pattern.permute.xlu0 1
  %199 = vperm.xlu0 %198, %v40
  %v200 = vpop.permute.xlu0 %199
  %202 = vset.pattern.permute.xlu0 1
  %203 = vperm.xlu0 %202, %v41
  %v204 = vpop.permute.xlu0 %203
  %v206 = vlaneseq
  %v207 = vshrl.u32 %v206, 7
  %v208 = vsub.s32 1, %v207
  %v209 = vrot.slane %v23, %v208
  %v210 = vmul.f32 %v144, %v209
  %v211 = vmul.f32 %v148, %v209
  %v212 = vmul.f32 %v152, %v209
  %v213 = vmul.f32 %v156, %v209
  %v214 = vmul.f32 %v160, %v209
  %v215 = vmul.f32 %v164, %v209
  %v216 = vmul.f32 %v168, %v209
  %v217 = vmul.f32 %v172, %v209
  %v218 = vmul.f32 %v176, %v209
  %v219 = vmul.f32 %v180, %v209
  %v220 = vmul.f32 %v184, %v209
  %v221 = vmul.f32 %v188, %v209
  %v222 = vmul.f32 %v192, %v209
  %v223 = vmul.f32 %v196, %v209
  %v224 = vmul.f32 %v200, %v209
  %v225 = vmul.f32 %v204, %v209
  %v226 = vadd.f32 %v126, %v210
  %v227 = vadd.f32 %v127, %v211
  %v228 = vadd.f32 %v128, %v212
  %v229 = vadd.f32 %v129, %v213
  %v230 = vadd.f32 %v130, %v214
  %v231 = vadd.f32 %v131, %v215
  %v232 = vadd.f32 %v132, %v216
  %v233 = vadd.f32 %v133, %v217
  %v234 = vadd.f32 %v134, %v218
  %v235 = vadd.f32 %v135, %v219
  %v236 = vadd.f32 %v136, %v220
  %v237 = vadd.f32 %v137, %v221
  %v238 = vadd.f32 %v138, %v222
  %v239 = vadd.f32 %v139, %v223
  %v240 = vadd.f32 %v140, %v224
  %v241 = vadd.f32 %v141, %v225
  %242 = vset.pattern.permute.xlu0 2
  %243 = vperm.xlu0 %242, %v26
  %v244 = vpop.permute.xlu0 %243
  %246 = vset.pattern.permute.xlu0 2
  %247 = vperm.xlu0 %246, %v27
  %v248 = vpop.permute.xlu0 %247
  %250 = vset.pattern.permute.xlu0 2
  %251 = vperm.xlu0 %250, %v28
  %v252 = vpop.permute.xlu0 %251
  %254 = vset.pattern.permute.xlu0 2
  %255 = vperm.xlu0 %254, %v29
  %v256 = vpop.permute.xlu0 %255
  %258 = vset.pattern.permute.xlu0 2
  %259 = vperm.xlu0 %258, %v30
  %v260 = vpop.permute.xlu0 %259
  %262 = vset.pattern.permute.xlu0 2
  %263 = vperm.xlu0 %262, %v31
  %v264 = vpop.permute.xlu0 %263
  %266 = vset.pattern.permute.xlu0 2
  %267 = vperm.xlu0 %266, %v32
  %v268 = vpop.permute.xlu0 %267
  %270 = vset.pattern.permute.xlu0 2
  %271 = vperm.xlu0 %270, %v33
  %v272 = vpop.permute.xlu0 %271
  %274 = vset.pattern.permute.xlu0 2
  %275 = vperm.xlu0 %274, %v34
  %v276 = vpop.permute.xlu0 %275
  %278 = vset.pattern.permute.xlu0 2
  %279 = vperm.xlu0 %278, %v35
  %v280 = vpop.permute.xlu0 %279
  %282 = vset.pattern.permute.xlu0 2
  %283 = vperm.xlu0 %282, %v36
  %v284 = vpop.permute.xlu0 %283
  %286 = vset.pattern.permute.xlu0 2
  %287 = vperm.xlu0 %286, %v37
  %v288 = vpop.permute.xlu0 %287
  %290 = vset.pattern.permute.xlu0 2
  %291 = vperm.xlu0 %290, %v38
  %v292 = vpop.permute.xlu0 %291
  %294 = vset.pattern.permute.xlu0 2
  %295 = vperm.xlu0 %294, %v39
  %v296 = vpop.permute.xlu0 %295
  %298 = vset.pattern.permute.xlu0 2
  %299 = vperm.xlu0 %298, %v40
  %v300 = vpop.permute.xlu0 %299
  %302 = vset.pattern.permute.xlu0 2
  %303 = vperm.xlu0 %302, %v41
  %v304 = vpop.permute.xlu0 %303
  %v306 = vlaneseq
  %v307 = vshrl.u32 %v306, 7
  %v308 = vsub.s32 2, %v307
  %v309 = vrot.slane %v23, %v308
  %v310 = vmul.f32 %v244, %v309
  %v311 = vmul.f32 %v248, %v309
  %v312 = vmul.f32 %v252, %v309
  %v313 = vmul.f32 %v256, %v309
  %v314 = vmul.f32 %v260, %v309
  %v315 = vmul.f32 %v264, %v309
  %v316 = vmul.f32 %v268, %v309
  %v317 = vmul.f32 %v272, %v309
  %v318 = vmul.f32 %v276, %v309
  %v319 = vmul.f32 %v280, %v309
  %v320 = vmul.f32 %v284, %v309
  %v321 = vmul.f32 %v288, %v309
  %v322 = vmul.f32 %v292, %v309
  %v323 = vmul.f32 %v296, %v309
  %v324 = vmul.f32 %v300, %v309
  %v325 = vmul.f32 %v304, %v309
  %v326 = vadd.f32 %v226, %v310
  %v327 = vadd.f32 %v227, %v311
  %v328 = vadd.f32 %v228, %v312
  %v329 = vadd.f32 %v229, %v313
  %v330 = vadd.f32 %v230, %v314
  %v331 = vadd.f32 %v231, %v315
  %v332 = vadd.f32 %v232, %v316
  %v333 = vadd.f32 %v233, %v317
  %v334 = vadd.f32 %v234, %v318
  %v335 = vadd.f32 %v235, %v319
  %v336 = vadd.f32 %v236, %v320
  %v337 = vadd.f32 %v237, %v321
  %v338 = vadd.f32 %v238, %v322
  %v339 = vadd.f32 %v239, %v323
  %v340 = vadd.f32 %v240, %v324
  %v341 = vadd.f32 %v241, %v325
  %342 = vset.pattern.permute.xlu0 3
  %343 = vperm.xlu0 %342, %v26
  %v344 = vpop.permute.xlu0 %343
  %346 = vset.pattern.permute.xlu0 3
  %347 = vperm.xlu0 %346, %v27
  %v348 = vpop.permute.xlu0 %347
  %350 = vset.pattern.permute.xlu0 3
  %351 = vperm.xlu0 %350, %v28
  %v352 = vpop.permute.xlu0 %351
  %354 = vset.pattern.permute.xlu0 3
  %355 = vperm.xlu0 %354, %v29
  %v356 = vpop.permute.xlu0 %355
  %358 = vset.pattern.permute.xlu0 3
  %359 = vperm.xlu0 %358, %v30
  %v360 = vpop.permute.xlu0 %359
  %362 = vset.pattern.permute.xlu0 3
  %363 = vperm.xlu0 %362, %v31
  %v364 = vpop.permute.xlu0 %363
  %366 = vset.pattern.permute.xlu0 3
  %367 = vperm.xlu0 %366, %v32
  %v368 = vpop.permute.xlu0 %367
  %370 = vset.pattern.permute.xlu0 3
  %371 = vperm.xlu0 %370, %v33
  %v372 = vpop.permute.xlu0 %371
  %374 = vset.pattern.permute.xlu0 3
  %375 = vperm.xlu0 %374, %v34
  %v376 = vpop.permute.xlu0 %375
  %378 = vset.pattern.permute.xlu0 3
  %379 = vperm.xlu0 %378, %v35
  %v380 = vpop.permute.xlu0 %379
  %382 = vset.pattern.permute.xlu0 3
  %383 = vperm.xlu0 %382, %v36
  %v384 = vpop.permute.xlu0 %383
  %386 = vset.pattern.permute.xlu0 3
  %387 = vperm.xlu0 %386, %v37
  %v388 = vpop.permute.xlu0 %387
  %390 = vset.pattern.permute.xlu0 3
  %391 = vperm.xlu0 %390, %v38
  %v392 = vpop.permute.xlu0 %391
  %394 = vset.pattern.permute.xlu0 3
  %395 = vperm.xlu0 %394, %v39
  %v396 = vpop.permute.xlu0 %395
  %398 = vset.pattern.permute.xlu0 3
  %399 = vperm.xlu0 %398, %v40
  %v400 = vpop.permute.xlu0 %399
  %402 = vset.pattern.permute.xlu0 3
  %403 = vperm.xlu0 %402, %v41
  %v404 = vpop.permute.xlu0 %403
  %v406 = vlaneseq
  %v407 = vshrl.u32 %v406, 7
  %v408 = vsub.s32 3, %v407
  %v409 = vrot.slane %v23, %v408
  %v410 = vmul.f32 %v344, %v409
  %v411 = vmul.f32 %v348, %v409
  %v412 = vmul.f32 %v352, %v409
  %v413 = vmul.f32 %v356, %v409
  %v414 = vmul.f32 %v360, %v409
  %v415 = vmul.f32 %v364, %v409
  %v416 = vmul.f32 %v368, %v409
  %v417 = vmul.f32 %v372, %v409
  %v418 = vmul.f32 %v376, %v409
  %v419 = vmul.f32 %v380, %v409
  %v420 = vmul.f32 %v384, %v409
  %v421 = vmul.f32 %v388, %v409
  %v422 = vmul.f32 %v392, %v409
  %v423 = vmul.f32 %v396, %v409
  %v424 = vmul.f32 %v400, %v409
  %v425 = vmul.f32 %v404, %v409
  %v426 = vadd.f32 %v326, %v410
  %v427 = vadd.f32 %v327, %v411
  %v428 = vadd.f32 %v328, %v412
  %v429 = vadd.f32 %v329, %v413
  %v430 = vadd.f32 %v330, %v414
  %v431 = vadd.f32 %v331, %v415
  %v432 = vadd.f32 %v332, %v416
  %v433 = vadd.f32 %v333, %v417
  %v434 = vadd.f32 %v334, %v418
  %v435 = vadd.f32 %v335, %v419
  %v436 = vadd.f32 %v336, %v420
  %v437 = vadd.f32 %v337, %v421
  %v438 = vadd.f32 %v338, %v422
  %v439 = vadd.f32 %v339, %v423
  %v440 = vadd.f32 %v340, %v424
  %v441 = vadd.f32 %v341, %v425
  %442 = vset.pattern.permute.xlu0 4
  %443 = vperm.xlu0 %442, %v26
  %v444 = vpop.permute.xlu0 %443
  %446 = vset.pattern.permute.xlu0 4
  %447 = vperm.xlu0 %446, %v27
  %v448 = vpop.permute.xlu0 %447
  %450 = vset.pattern.permute.xlu0 4
  %451 = vperm.xlu0 %450, %v28
  %v452 = vpop.permute.xlu0 %451
  %454 = vset.pattern.permute.xlu0 4
  %455 = vperm.xlu0 %454, %v29
  %v456 = vpop.permute.xlu0 %455
  %458 = vset.pattern.permute.xlu0 4
  %459 = vperm.xlu0 %458, %v30
  %v460 = vpop.permute.xlu0 %459
  %462 = vset.pattern.permute.xlu0 4
  %463 = vperm.xlu0 %462, %v31
  %v464 = vpop.permute.xlu0 %463
  %466 = vset.pattern.permute.xlu0 4
  %467 = vperm.xlu0 %466, %v32
  %v468 = vpop.permute.xlu0 %467
  %470 = vset.pattern.permute.xlu0 4
  %471 = vperm.xlu0 %470, %v33
  %v472 = vpop.permute.xlu0 %471
  %474 = vset.pattern.permute.xlu0 4
  %475 = vperm.xlu0 %474, %v34
  %v476 = vpop.permute.xlu0 %475
  %478 = vset.pattern.permute.xlu0 4
  %479 = vperm.xlu0 %478, %v35
  %v480 = vpop.permute.xlu0 %479
  %482 = vset.pattern.permute.xlu0 4
  %483 = vperm.xlu0 %482, %v36
  %v484 = vpop.permute.xlu0 %483
  %486 = vset.pattern.permute.xlu0 4
  %487 = vperm.xlu0 %486, %v37
  %v488 = vpop.permute.xlu0 %487
  %490 = vset.pattern.permute.xlu0 4
  %491 = vperm.xlu0 %490, %v38
  %v492 = vpop.permute.xlu0 %491
  %494 = vset.pattern.permute.xlu0 4
  %495 = vperm.xlu0 %494, %v39
  %v496 = vpop.permute.xlu0 %495
  %498 = vset.pattern.permute.xlu0 4
  %499 = vperm.xlu0 %498, %v40
  %v500 = vpop.permute.xlu0 %499
  %502 = vset.pattern.permute.xlu0 4
  %503 = vperm.xlu0 %502, %v41
  %v504 = vpop.permute.xlu0 %503
  %v506 = vlaneseq
  %v507 = vshrl.u32 %v506, 7
  %v508 = vsub.s32 4, %v507
  %v509 = vrot.slane %v23, %v508
  %v510 = vmul.f32 %v444, %v509
  %v511 = vmul.f32 %v448, %v509
  %v512 = vmul.f32 %v452, %v509
  %v513 = vmul.f32 %v456, %v509
  %v514 = vmul.f32 %v460, %v509
  %v515 = vmul.f32 %v464, %v509
  %v516 = vmul.f32 %v468, %v509
  %v517 = vmul.f32 %v472, %v509
  %v518 = vmul.f32 %v476, %v509
  %v519 = vmul.f32 %v480, %v509
  %v520 = vmul.f32 %v484, %v509
  %v521 = vmul.f32 %v488, %v509
  %v522 = vmul.f32 %v492, %v509
  %v523 = vmul.f32 %v496, %v509
  %v524 = vmul.f32 %v500, %v509
  %v525 = vmul.f32 %v504, %v509
  %v526 = vadd.f32 %v426, %v510
  %v527 = vadd.f32 %v427, %v511
  %v528 = vadd.f32 %v428, %v512
  %v529 = vadd.f32 %v429, %v513
  %v530 = vadd.f32 %v430, %v514
  %v531 = vadd.f32 %v431, %v515
  %v532 = vadd.f32 %v432, %v516
  %v533 = vadd.f32 %v433, %v517
  %v534 = vadd.f32 %v434, %v518
  %v535 = vadd.f32 %v435, %v519
  %v536 = vadd.f32 %v436, %v520
  %v537 = vadd.f32 %v437, %v521
  %v538 = vadd.f32 %v438, %v522
  %v539 = vadd.f32 %v439, %v523
  %v540 = vadd.f32 %v440, %v524
  %v541 = vadd.f32 %v441, %v525
  %542 = vset.pattern.permute.xlu0 5
  %543 = vperm.xlu0 %542, %v26
  %v544 = vpop.permute.xlu0 %543
  %546 = vset.pattern.permute.xlu0 5
  %547 = vperm.xlu0 %546, %v27
  %v548 = vpop.permute.xlu0 %547
  %550 = vset.pattern.permute.xlu0 5
  %551 = vperm.xlu0 %550, %v28
  %v552 = vpop.permute.xlu0 %551
  %554 = vset.pattern.permute.xlu0 5
  %555 = vperm.xlu0 %554, %v29
  %v556 = vpop.permute.xlu0 %555
  %558 = vset.pattern.permute.xlu0 5
  %559 = vperm.xlu0 %558, %v30
  %v560 = vpop.permute.xlu0 %559
  %562 = vset.pattern.permute.xlu0 5
  %563 = vperm.xlu0 %562, %v31
  %v564 = vpop.permute.xlu0 %563
  %566 = vset.pattern.permute.xlu0 5
  %567 = vperm.xlu0 %566, %v32
  %v568 = vpop.permute.xlu0 %567
  %570 = vset.pattern.permute.xlu0 5
  %571 = vperm.xlu0 %570, %v33
  %v572 = vpop.permute.xlu0 %571
  %574 = vset.pattern.permute.xlu0 5
  %575 = vperm.xlu0 %574, %v34
  %v576 = vpop.permute.xlu0 %575
  %578 = vset.pattern.permute.xlu0 5
  %579 = vperm.xlu0 %578, %v35
  %v580 = vpop.permute.xlu0 %579
  %582 = vset.pattern.permute.xlu0 5
  %583 = vperm.xlu0 %582, %v36
  %v584 = vpop.permute.xlu0 %583
  %586 = vset.pattern.permute.xlu0 5
  %587 = vperm.xlu0 %586, %v37
  %v588 = vpop.permute.xlu0 %587
  %590 = vset.pattern.permute.xlu0 5
  %591 = vperm.xlu0 %590, %v38
  %v592 = vpop.permute.xlu0 %591
  %594 = vset.pattern.permute.xlu0 5
  %595 = vperm.xlu0 %594, %v39
  %v596 = vpop.permute.xlu0 %595
  %598 = vset.pattern.permute.xlu0 5
  %599 = vperm.xlu0 %598, %v40
  %v600 = vpop.permute.xlu0 %599
  %602 = vset.pattern.permute.xlu0 5
  %603 = vperm.xlu0 %602, %v41
  %v604 = vpop.permute.xlu0 %603
  %v606 = vlaneseq
  %v607 = vshrl.u32 %v606, 7
  %v608 = vsub.s32 5, %v607
  %v609 = vrot.slane %v23, %v608
  %v610 = vmul.f32 %v544, %v609
  %v611 = vmul.f32 %v548, %v609
  %v612 = vmul.f32 %v552, %v609
  %v613 = vmul.f32 %v556, %v609
  %v614 = vmul.f32 %v560, %v609
  %v615 = vmul.f32 %v564, %v609
  %v616 = vmul.f32 %v568, %v609
  %v617 = vmul.f32 %v572, %v609
  %v618 = vmul.f32 %v576, %v609
  %v619 = vmul.f32 %v580, %v609
  %v620 = vmul.f32 %v584, %v609
  %v621 = vmul.f32 %v588, %v609
  %v622 = vmul.f32 %v592, %v609
  %v623 = vmul.f32 %v596, %v609
  %v624 = vmul.f32 %v600, %v609
  %v625 = vmul.f32 %v604, %v609
  %v626 = vadd.f32 %v526, %v610
  %v627 = vadd.f32 %v527, %v611
  %v628 = vadd.f32 %v528, %v612
  %v629 = vadd.f32 %v529, %v613
  %v630 = vadd.f32 %v530, %v614
  %v631 = vadd.f32 %v531, %v615
  %v632 = vadd.f32 %v532, %v616
  %v633 = vadd.f32 %v533, %v617
  %v634 = vadd.f32 %v534, %v618
  %v635 = vadd.f32 %v535, %v619
  %v636 = vadd.f32 %v536, %v620
  %v637 = vadd.f32 %v537, %v621
  %v638 = vadd.f32 %v538, %v622
  %v639 = vadd.f32 %v539, %v623
  %v640 = vadd.f32 %v540, %v624
  %v641 = vadd.f32 %v541, %v625
  %642 = vset.pattern.permute.xlu0 6
  %643 = vperm.xlu0 %642, %v26
  %v644 = vpop.permute.xlu0 %643
  %646 = vset.pattern.permute.xlu0 6
  %647 = vperm.xlu0 %646, %v27
  %v648 = vpop.permute.xlu0 %647
  %650 = vset.pattern.permute.xlu0 6
  %651 = vperm.xlu0 %650, %v28
  %v652 = vpop.permute.xlu0 %651
  %654 = vset.pattern.permute.xlu0 6
  %655 = vperm.xlu0 %654, %v29
  %v656 = vpop.permute.xlu0 %655
  %658 = vset.pattern.permute.xlu0 6
  %659 = vperm.xlu0 %658, %v30
  %v660 = vpop.permute.xlu0 %659
  %662 = vset.pattern.permute.xlu0 6
  %663 = vperm.xlu0 %662, %v31
  %v664 = vpop.permute.xlu0 %663
  %666 = vset.pattern.permute.xlu0 6
  %667 = vperm.xlu0 %666, %v32
  %v668 = vpop.permute.xlu0 %667
  %670 = vset.pattern.permute.xlu0 6
  %671 = vperm.xlu0 %670, %v33
  %v672 = vpop.permute.xlu0 %671
  %674 = vset.pattern.permute.xlu0 6
  %675 = vperm.xlu0 %674, %v34
  %v676 = vpop.permute.xlu0 %675
  %678 = vset.pattern.permute.xlu0 6
  %679 = vperm.xlu0 %678, %v35
  %v680 = vpop.permute.xlu0 %679
  %682 = vset.pattern.permute.xlu0 6
  %683 = vperm.xlu0 %682, %v36
  %v684 = vpop.permute.xlu0 %683
  %686 = vset.pattern.permute.xlu0 6
  %687 = vperm.xlu0 %686, %v37
  %v688 = vpop.permute.xlu0 %687
  %690 = vset.pattern.permute.xlu0 6
  %691 = vperm.xlu0 %690, %v38
  %v692 = vpop.permute.xlu0 %691
  %694 = vset.pattern.permute.xlu0 6
  %695 = vperm.xlu0 %694, %v39
  %v696 = vpop.permute.xlu0 %695
  %698 = vset.pattern.permute.xlu0 6
  %699 = vperm.xlu0 %698, %v40
  %v700 = vpop.permute.xlu0 %699
  %702 = vset.pattern.permute.xlu0 6
  %703 = vperm.xlu0 %702, %v41
  %v704 = vpop.permute.xlu0 %703
  %v706 = vlaneseq
  %v707 = vshrl.u32 %v706, 7
  %v708 = vsub.s32 6, %v707
  %v709 = vrot.slane %v23, %v708
  %v710 = vmul.f32 %v644, %v709
  %v711 = vmul.f32 %v648, %v709
  %v712 = vmul.f32 %v652, %v709
  %v713 = vmul.f32 %v656, %v709
  %v714 = vmul.f32 %v660, %v709
  %v715 = vmul.f32 %v664, %v709
  %v716 = vmul.f32 %v668, %v709
  %v717 = vmul.f32 %v672, %v709
  %v718 = vmul.f32 %v676, %v709
  %v719 = vmul.f32 %v680, %v709
  %v720 = vmul.f32 %v684, %v709
  %v721 = vmul.f32 %v688, %v709
  %v722 = vmul.f32 %v692, %v709
  %v723 = vmul.f32 %v696, %v709
  %v724 = vmul.f32 %v700, %v709
  %v725 = vmul.f32 %v704, %v709
  %v726 = vadd.f32 %v626, %v710
  %v727 = vadd.f32 %v627, %v711
  %v728 = vadd.f32 %v628, %v712
  %v729 = vadd.f32 %v629, %v713
  %v730 = vadd.f32 %v630, %v714
  %v731 = vadd.f32 %v631, %v715
  %v732 = vadd.f32 %v632, %v716
  %v733 = vadd.f32 %v633, %v717
  %v734 = vadd.f32 %v634, %v718
  %v735 = vadd.f32 %v635, %v719
  %v736 = vadd.f32 %v636, %v720
  %v737 = vadd.f32 %v637, %v721
  %v738 = vadd.f32 %v638, %v722
  %v739 = vadd.f32 %v639, %v723
  %v740 = vadd.f32 %v640, %v724
  %v741 = vadd.f32 %v641, %v725
  %742 = vset.pattern.permute.xlu0 7
  %743 = vperm.xlu0 %742, %v26
  %v744 = vpop.permute.xlu0 %743
  %746 = vset.pattern.permute.xlu0 7
  %747 = vperm.xlu0 %746, %v27
  %v748 = vpop.permute.xlu0 %747
  %750 = vset.pattern.permute.xlu0 7
  %751 = vperm.xlu0 %750, %v28
  %v752 = vpop.permute.xlu0 %751
  %754 = vset.pattern.permute.xlu0 7
  %755 = vperm.xlu0 %754, %v29
  %v756 = vpop.permute.xlu0 %755
  %758 = vset.pattern.permute.xlu0 7
  %759 = vperm.xlu0 %758, %v30
  %v760 = vpop.permute.xlu0 %759
  %762 = vset.pattern.permute.xlu0 7
  %763 = vperm.xlu0 %762, %v31
  %v764 = vpop.permute.xlu0 %763
  %766 = vset.pattern.permute.xlu0 7
  %767 = vperm.xlu0 %766, %v32
  %v768 = vpop.permute.xlu0 %767
  %770 = vset.pattern.permute.xlu0 7
  %771 = vperm.xlu0 %770, %v33
  %v772 = vpop.permute.xlu0 %771
  %774 = vset.pattern.permute.xlu0 7
  %775 = vperm.xlu0 %774, %v34
  %v776 = vpop.permute.xlu0 %775
  %778 = vset.pattern.permute.xlu0 7
  %779 = vperm.xlu0 %778, %v35
  %v780 = vpop.permute.xlu0 %779
  %782 = vset.pattern.permute.xlu0 7
  %783 = vperm.xlu0 %782, %v36
  %v784 = vpop.permute.xlu0 %783
  %786 = vset.pattern.permute.xlu0 7
  %787 = vperm.xlu0 %786, %v37
  %v788 = vpop.permute.xlu0 %787
  %790 = vset.pattern.permute.xlu0 7
  %791 = vperm.xlu0 %790, %v38
  %v792 = vpop.permute.xlu0 %791
  %794 = vset.pattern.permute.xlu0 7
  %795 = vperm.xlu0 %794, %v39
  %v796 = vpop.permute.xlu0 %795
  %798 = vset.pattern.permute.xlu0 7
  %799 = vperm.xlu0 %798, %v40
  %v800 = vpop.permute.xlu0 %799
  %802 = vset.pattern.permute.xlu0 7
  %803 = vperm.xlu0 %802, %v41
  %v804 = vpop.permute.xlu0 %803
  %v806 = vlaneseq
  %v807 = vshrl.u32 %v806, 7
  %v808 = vsub.s32 7, %v807
  %v809 = vrot.slane %v23, %v808
  %v810 = vmul.f32 %v744, %v809
  %v811 = vmul.f32 %v748, %v809
  %v812 = vmul.f32 %v752, %v809
  %v813 = vmul.f32 %v756, %v809
  %v814 = vmul.f32 %v760, %v809
  %v815 = vmul.f32 %v764, %v809
  %v816 = vmul.f32 %v768, %v809
  %v817 = vmul.f32 %v772, %v809
  %v818 = vmul.f32 %v776, %v809
  %v819 = vmul.f32 %v780, %v809
  %v820 = vmul.f32 %v784, %v809
  %v821 = vmul.f32 %v788, %v809
  %v822 = vmul.f32 %v792, %v809
  %v823 = vmul.f32 %v796, %v809
  %v824 = vmul.f32 %v800, %v809
  %v825 = vmul.f32 %v804, %v809
  %v826 = vadd.f32 %v726, %v810
  %v827 = vadd.f32 %v727, %v811
  %v828 = vadd.f32 %v728, %v812
  %v829 = vadd.f32 %v729, %v813
  %v830 = vadd.f32 %v730, %v814
  %v831 = vadd.f32 %v731, %v815
  %v832 = vadd.f32 %v732, %v816
  %v833 = vadd.f32 %v733, %v817
  %v834 = vadd.f32 %v734, %v818
  %v835 = vadd.f32 %v735, %v819
  %v836 = vadd.f32 %v736, %v820
  %v837 = vadd.f32 %v737, %v821
  %v838 = vadd.f32 %v738, %v822
  %v839 = vadd.f32 %v739, %v823
  %v840 = vadd.f32 %v740, %v824
  %v841 = vadd.f32 %v741, %v825
  %842 = vset.pattern.permute.xlu0 8
  %843 = vperm.xlu0 %842, %v26
  %v844 = vpop.permute.xlu0 %843
  %846 = vset.pattern.permute.xlu0 8
  %847 = vperm.xlu0 %846, %v27
  %v848 = vpop.permute.xlu0 %847
  %850 = vset.pattern.permute.xlu0 8
  %851 = vperm.xlu0 %850, %v28
  %v852 = vpop.permute.xlu0 %851
  %854 = vset.pattern.permute.xlu0 8
  %855 = vperm.xlu0 %854, %v29
  %v856 = vpop.permute.xlu0 %855
  %858 = vset.pattern.permute.xlu0 8
  %859 = vperm.xlu0 %858, %v30
  %v860 = vpop.permute.xlu0 %859
  %862 = vset.pattern.permute.xlu0 8
  %863 = vperm.xlu0 %862, %v31
  %v864 = vpop.permute.xlu0 %863
  %866 = vset.pattern.permute.xlu0 8
  %867 = vperm.xlu0 %866, %v32
  %v868 = vpop.permute.xlu0 %867
  %870 = vset.pattern.permute.xlu0 8
  %871 = vperm.xlu0 %870, %v33
  %v872 = vpop.permute.xlu0 %871
  %874 = vset.pattern.permute.xlu0 8
  %875 = vperm.xlu0 %874, %v34
  %v876 = vpop.permute.xlu0 %875
  %878 = vset.pattern.permute.xlu0 8
  %879 = vperm.xlu0 %878, %v35
  %v880 = vpop.permute.xlu0 %879
  %882 = vset.pattern.permute.xlu0 8
  %883 = vperm.xlu0 %882, %v36
  %v884 = vpop.permute.xlu0 %883
  %886 = vset.pattern.permute.xlu0 8
  %887 = vperm.xlu0 %886, %v37
  %v888 = vpop.permute.xlu0 %887
  %890 = vset.pattern.permute.xlu0 8
  %891 = vperm.xlu0 %890, %v38
  %v892 = vpop.permute.xlu0 %891
  %894 = vset.pattern.permute.xlu0 8
  %895 = vperm.xlu0 %894, %v39
  %v896 = vpop.permute.xlu0 %895
  %898 = vset.pattern.permute.xlu0 8
  %899 = vperm.xlu0 %898, %v40
  %v900 = vpop.permute.xlu0 %899
  %902 = vset.pattern.permute.xlu0 8
  %903 = vperm.xlu0 %902, %v41
  %v904 = vpop.permute.xlu0 %903
  %v906 = vlaneseq
  %v907 = vshrl.u32 %v906, 7
  %v908 = vsub.s32 0, %v907
  %v909 = vrot.slane %v24, %v908
  %v910 = vmul.f32 %v844, %v909
  %v911 = vmul.f32 %v848, %v909
  %v912 = vmul.f32 %v852, %v909
  %v913 = vmul.f32 %v856, %v909
  %v914 = vmul.f32 %v860, %v909
  %v915 = vmul.f32 %v864, %v909
  %v916 = vmul.f32 %v868, %v909
  %v917 = vmul.f32 %v872, %v909
  %v918 = vmul.f32 %v876, %v909
  %v919 = vmul.f32 %v880, %v909
  %v920 = vmul.f32 %v884, %v909
  %v921 = vmul.f32 %v888, %v909
  %v922 = vmul.f32 %v892, %v909
  %v923 = vmul.f32 %v896, %v909
  %v924 = vmul.f32 %v900, %v909
  %v925 = vmul.f32 %v904, %v909
  %v926 = vadd.f32 %v826, %v910
  %v927 = vadd.f32 %v827, %v911
  %v928 = vadd.f32 %v828, %v912
  %v929 = vadd.f32 %v829, %v913
  %v930 = vadd.f32 %v830, %v914
  %v931 = vadd.f32 %v831, %v915
  %v932 = vadd.f32 %v832, %v916
  %v933 = vadd.f32 %v833, %v917
  %v934 = vadd.f32 %v834, %v918
  %v935 = vadd.f32 %v835, %v919
  %v936 = vadd.f32 %v836, %v920
  %v937 = vadd.f32 %v837, %v921
  %v938 = vadd.f32 %v838, %v922
  %v939 = vadd.f32 %v839, %v923
  %v940 = vadd.f32 %v840, %v924
  %v941 = vadd.f32 %v841, %v925
  %v942 = vld [vmem:[%s1] sm:$0xff]
  %v943 = vld [vmem:[%s1 + $0x8] sm:$0xff]
  %v944 = vld [vmem:[%s1 + $0x10] sm:$0xff]
  %v945 = vld [vmem:[%s1 + $0x18] sm:$0xff]
  %v946 = vld [vmem:[%s1 + $0x20] sm:$0xff]
  %v947 = vld [vmem:[%s1 + $0x28] sm:$0xff]
  %v948 = vld [vmem:[%s1 + $0x30] sm:$0xff]
  %v949 = vld [vmem:[%s1 + $0x38] sm:$0xff]
  %v950 = vld [vmem:[%s1 + $0x40] sm:$0xff]
  %v951 = vld [vmem:[%s1 + $0x48] sm:$0xff]
  %v952 = vld [vmem:[%s1 + $0x50] sm:$0xff]
  %v953 = vld [vmem:[%s1 + $0x58] sm:$0xff]
  %v954 = vld [vmem:[%s1 + $0x60] sm:$0xff]
  %v955 = vld [vmem:[%s1 + $0x68] sm:$0xff]
  %v956 = vld [vmem:[%s1 + $0x70] sm:$0xff]
  %v957 = vld [vmem:[%s1 + $0x78] sm:$0xff]
  %959 = vset.pattern.permute.xlu0 0
  %960 = vperm.xlu0 %959, %v942
  %v961 = vpop.permute.xlu0 %960
  %964 = vset.pattern.permute.xlu0 0
  %965 = vperm.xlu0 %964, %v943
  %v966 = vpop.permute.xlu0 %965
  %969 = vset.pattern.permute.xlu0 0
  %970 = vperm.xlu0 %969, %v944
  %v971 = vpop.permute.xlu0 %970
  %974 = vset.pattern.permute.xlu0 0
  %975 = vperm.xlu0 %974, %v945
  %v976 = vpop.permute.xlu0 %975
  %979 = vset.pattern.permute.xlu0 0
  %980 = vperm.xlu0 %979, %v946
  %v981 = vpop.permute.xlu0 %980
  %984 = vset.pattern.permute.xlu0 0
  %985 = vperm.xlu0 %984, %v947
  %v986 = vpop.permute.xlu0 %985
  %989 = vset.pattern.permute.xlu0 0
  %990 = vperm.xlu0 %989, %v948
  %v991 = vpop.permute.xlu0 %990
  %994 = vset.pattern.permute.xlu0 0
  %995 = vperm.xlu0 %994, %v949
  %v996 = vpop.permute.xlu0 %995
  %999 = vset.pattern.permute.xlu0 0
  %1000 = vperm.xlu0 %999, %v950
  %v1001 = vpop.permute.xlu0 %1000
  %1004 = vset.pattern.permute.xlu0 0
  %1005 = vperm.xlu0 %1004, %v951
  %v1006 = vpop.permute.xlu0 %1005
  %1009 = vset.pattern.permute.xlu0 0
  %1010 = vperm.xlu0 %1009, %v952
  %v1011 = vpop.permute.xlu0 %1010
  %1014 = vset.pattern.permute.xlu0 0
  %1015 = vperm.xlu0 %1014, %v953
  %v1016 = vpop.permute.xlu0 %1015
  %1019 = vset.pattern.permute.xlu0 0
  %1020 = vperm.xlu0 %1019, %v954
  %v1021 = vpop.permute.xlu0 %1020
  %1024 = vset.pattern.permute.xlu0 0
  %1025 = vperm.xlu0 %1024, %v955
  %v1026 = vpop.permute.xlu0 %1025
  %1029 = vset.pattern.permute.xlu0 0
  %1030 = vperm.xlu0 %1029, %v956
  %v1031 = vpop.permute.xlu0 %1030
  %1034 = vset.pattern.permute.xlu0 0
  %1035 = vperm.xlu0 %1034, %v957
  %v1036 = vpop.permute.xlu0 %1035
  %v1038 = vmul.f32 %v961, %v125
  %v1039 = vmul.f32 %v966, %v125
  %v1040 = vmul.f32 %v971, %v125
  %v1041 = vmul.f32 %v976, %v125
  %v1042 = vmul.f32 %v981, %v125
  %v1043 = vmul.f32 %v986, %v125
  %v1044 = vmul.f32 %v991, %v125
  %v1045 = vmul.f32 %v996, %v125
  %v1046 = vmul.f32 %v1001, %v125
  %v1047 = vmul.f32 %v1006, %v125
  %v1048 = vmul.f32 %v1011, %v125
  %v1049 = vmul.f32 %v1016, %v125
  %v1050 = vmul.f32 %v1021, %v125
  %v1051 = vmul.f32 %v1026, %v125
  %v1052 = vmul.f32 %v1031, %v125
  %v1053 = vmul.f32 %v1036, %v125
  %1054 = vset.pattern.permute.xlu0 1
  %1055 = vperm.xlu0 %1054, %v942
  %v1056 = vpop.permute.xlu0 %1055
  %1058 = vset.pattern.permute.xlu0 1
  %1059 = vperm.xlu0 %1058, %v943
  %v1060 = vpop.permute.xlu0 %1059
  %1062 = vset.pattern.permute.xlu0 1
  %1063 = vperm.xlu0 %1062, %v944
  %v1064 = vpop.permute.xlu0 %1063
  %1066 = vset.pattern.permute.xlu0 1
  %1067 = vperm.xlu0 %1066, %v945
  %v1068 = vpop.permute.xlu0 %1067
  %1070 = vset.pattern.permute.xlu0 1
  %1071 = vperm.xlu0 %1070, %v946
  %v1072 = vpop.permute.xlu0 %1071
  %1074 = vset.pattern.permute.xlu0 1
  %1075 = vperm.xlu0 %1074, %v947
  %v1076 = vpop.permute.xlu0 %1075
  %1078 = vset.pattern.permute.xlu0 1
  %1079 = vperm.xlu0 %1078, %v948
  %v1080 = vpop.permute.xlu0 %1079
  %1082 = vset.pattern.permute.xlu0 1
  %1083 = vperm.xlu0 %1082, %v949
  %v1084 = vpop.permute.xlu0 %1083
  %1086 = vset.pattern.permute.xlu0 1
  %1087 = vperm.xlu0 %1086, %v950
  %v1088 = vpop.permute.xlu0 %1087
  %1090 = vset.pattern.permute.xlu0 1
  %1091 = vperm.xlu0 %1090, %v951
  %v1092 = vpop.permute.xlu0 %1091
  %1094 = vset.pattern.permute.xlu0 1
  %1095 = vperm.xlu0 %1094, %v952
  %v1096 = vpop.permute.xlu0 %1095
  %1098 = vset.pattern.permute.xlu0 1
  %1099 = vperm.xlu0 %1098, %v953
  %v1100 = vpop.permute.xlu0 %1099
  %1102 = vset.pattern.permute.xlu0 1
  %1103 = vperm.xlu0 %1102, %v954
  %v1104 = vpop.permute.xlu0 %1103
  %1106 = vset.pattern.permute.xlu0 1
  %1107 = vperm.xlu0 %1106, %v955
  %v1108 = vpop.permute.xlu0 %1107
  %1110 = vset.pattern.permute.xlu0 1
  %1111 = vperm.xlu0 %1110, %v956
  %v1112 = vpop.permute.xlu0 %1111
  %1114 = vset.pattern.permute.xlu0 1
  %1115 = vperm.xlu0 %1114, %v957
  %v1116 = vpop.permute.xlu0 %1115
  %v1118 = vmul.f32 %v1056, %v209
  %v1119 = vmul.f32 %v1060, %v209
  %v1120 = vmul.f32 %v1064, %v209
  %v1121 = vmul.f32 %v1068, %v209
  %v1122 = vmul.f32 %v1072, %v209
  %v1123 = vmul.f32 %v1076, %v209
  %v1124 = vmul.f32 %v1080, %v209
  %v1125 = vmul.f32 %v1084, %v209
  %v1126 = vmul.f32 %v1088, %v209
  %v1127 = vmul.f32 %v1092, %v209
  %v1128 = vmul.f32 %v1096, %v209
  %v1129 = vmul.f32 %v1100, %v209
  %v1130 = vmul.f32 %v1104, %v209
  %v1131 = vmul.f32 %v1108, %v209
  %v1132 = vmul.f32 %v1112, %v209
  %v1133 = vmul.f32 %v1116, %v209
  %v1134 = vadd.f32 %v1038, %v1118
  %v1135 = vadd.f32 %v1039, %v1119
  %v1136 = vadd.f32 %v1040, %v1120
  %v1137 = vadd.f32 %v1041, %v1121
  %v1138 = vadd.f32 %v1042, %v1122
  %v1139 = vadd.f32 %v1043, %v1123
  %v1140 = vadd.f32 %v1044, %v1124
  %v1141 = vadd.f32 %v1045, %v1125
  %v1142 = vadd.f32 %v1046, %v1126
  %v1143 = vadd.f32 %v1047, %v1127
  %v1144 = vadd.f32 %v1048, %v1128
  %v1145 = vadd.f32 %v1049, %v1129
  %v1146 = vadd.f32 %v1050, %v1130
  %v1147 = vadd.f32 %v1051, %v1131
  %v1148 = vadd.f32 %v1052, %v1132
  %v1149 = vadd.f32 %v1053, %v1133
  %1150 = vset.pattern.permute.xlu0 2
  %1151 = vperm.xlu0 %1150, %v942
  %v1152 = vpop.permute.xlu0 %1151
  %1154 = vset.pattern.permute.xlu0 2
  %1155 = vperm.xlu0 %1154, %v943
  %v1156 = vpop.permute.xlu0 %1155
  %1158 = vset.pattern.permute.xlu0 2
  %1159 = vperm.xlu0 %1158, %v944
  %v1160 = vpop.permute.xlu0 %1159
  %1162 = vset.pattern.permute.xlu0 2
  %1163 = vperm.xlu0 %1162, %v945
  %v1164 = vpop.permute.xlu0 %1163
  %1166 = vset.pattern.permute.xlu0 2
  %1167 = vperm.xlu0 %1166, %v946
  %v1168 = vpop.permute.xlu0 %1167
  %1170 = vset.pattern.permute.xlu0 2
  %1171 = vperm.xlu0 %1170, %v947
  %v1172 = vpop.permute.xlu0 %1171
  %1174 = vset.pattern.permute.xlu0 2
  %1175 = vperm.xlu0 %1174, %v948
  %v1176 = vpop.permute.xlu0 %1175
  %1178 = vset.pattern.permute.xlu0 2
  %1179 = vperm.xlu0 %1178, %v949
  %v1180 = vpop.permute.xlu0 %1179
  %1182 = vset.pattern.permute.xlu0 2
  %1183 = vperm.xlu0 %1182, %v950
  %v1184 = vpop.permute.xlu0 %1183
  %1186 = vset.pattern.permute.xlu0 2
  %1187 = vperm.xlu0 %1186, %v951
  %v1188 = vpop.permute.xlu0 %1187
  %1190 = vset.pattern.permute.xlu0 2
  %1191 = vperm.xlu0 %1190, %v952
  %v1192 = vpop.permute.xlu0 %1191
  %1194 = vset.pattern.permute.xlu0 2
  %1195 = vperm.xlu0 %1194, %v953
  %v1196 = vpop.permute.xlu0 %1195
  %1198 = vset.pattern.permute.xlu0 2
  %1199 = vperm.xlu0 %1198, %v954
  %v1200 = vpop.permute.xlu0 %1199
  %1202 = vset.pattern.permute.xlu0 2
  %1203 = vperm.xlu0 %1202, %v955
  %v1204 = vpop.permute.xlu0 %1203
  %1206 = vset.pattern.permute.xlu0 2
  %1207 = vperm.xlu0 %1206, %v956
  %v1208 = vpop.permute.xlu0 %1207
  %1210 = vset.pattern.permute.xlu0 2
  %1211 = vperm.xlu0 %1210, %v957
  %v1212 = vpop.permute.xlu0 %1211
  %v1214 = vmul.f32 %v1152, %v309
  %v1215 = vmul.f32 %v1156, %v309
  %v1216 = vmul.f32 %v1160, %v309
  %v1217 = vmul.f32 %v1164, %v309
  %v1218 = vmul.f32 %v1168, %v309
  %v1219 = vmul.f32 %v1172, %v309
  %v1220 = vmul.f32 %v1176, %v309
  %v1221 = vmul.f32 %v1180, %v309
  %v1222 = vmul.f32 %v1184, %v309
  %v1223 = vmul.f32 %v1188, %v309
  %v1224 = vmul.f32 %v1192, %v309
  %v1225 = vmul.f32 %v1196, %v309
  %v1226 = vmul.f32 %v1200, %v309
  %v1227 = vmul.f32 %v1204, %v309
  %v1228 = vmul.f32 %v1208, %v309
  %v1229 = vmul.f32 %v1212, %v309
  %v1230 = vadd.f32 %v1134, %v1214
  %v1231 = vadd.f32 %v1135, %v1215
  %v1232 = vadd.f32 %v1136, %v1216
  %v1233 = vadd.f32 %v1137, %v1217
  %v1234 = vadd.f32 %v1138, %v1218
  %v1235 = vadd.f32 %v1139, %v1219
  %v1236 = vadd.f32 %v1140, %v1220
  %v1237 = vadd.f32 %v1141, %v1221
  %v1238 = vadd.f32 %v1142, %v1222
  %v1239 = vadd.f32 %v1143, %v1223
  %v1240 = vadd.f32 %v1144, %v1224
  %v1241 = vadd.f32 %v1145, %v1225
  %v1242 = vadd.f32 %v1146, %v1226
  %v1243 = vadd.f32 %v1147, %v1227
  %v1244 = vadd.f32 %v1148, %v1228
  %v1245 = vadd.f32 %v1149, %v1229
  %1246 = vset.pattern.permute.xlu0 3
  %1247 = vperm.xlu0 %1246, %v942
  %v1248 = vpop.permute.xlu0 %1247
  %1250 = vset.pattern.permute.xlu0 3
  %1251 = vperm.xlu0 %1250, %v943
  %v1252 = vpop.permute.xlu0 %1251
  %1254 = vset.pattern.permute.xlu0 3
  %1255 = vperm.xlu0 %1254, %v944
  %v1256 = vpop.permute.xlu0 %1255
  %1258 = vset.pattern.permute.xlu0 3
  %1259 = vperm.xlu0 %1258, %v945
  %v1260 = vpop.permute.xlu0 %1259
  %1262 = vset.pattern.permute.xlu0 3
  %1263 = vperm.xlu0 %1262, %v946
  %v1264 = vpop.permute.xlu0 %1263
  %1266 = vset.pattern.permute.xlu0 3
  %1267 = vperm.xlu0 %1266, %v947
  %v1268 = vpop.permute.xlu0 %1267
  %1270 = vset.pattern.permute.xlu0 3
  %1271 = vperm.xlu0 %1270, %v948
  %v1272 = vpop.permute.xlu0 %1271
  %1274 = vset.pattern.permute.xlu0 3
  %1275 = vperm.xlu0 %1274, %v949
  %v1276 = vpop.permute.xlu0 %1275
  %1278 = vset.pattern.permute.xlu0 3
  %1279 = vperm.xlu0 %1278, %v950
  %v1280 = vpop.permute.xlu0 %1279
  %1282 = vset.pattern.permute.xlu0 3
  %1283 = vperm.xlu0 %1282, %v951
  %v1284 = vpop.permute.xlu0 %1283
  %1286 = vset.pattern.permute.xlu0 3
  %1287 = vperm.xlu0 %1286, %v952
  %v1288 = vpop.permute.xlu0 %1287
  %1290 = vset.pattern.permute.xlu0 3
  %1291 = vperm.xlu0 %1290, %v953
  %v1292 = vpop.permute.xlu0 %1291
  %1294 = vset.pattern.permute.xlu0 3
  %1295 = vperm.xlu0 %1294, %v954
  %v1296 = vpop.permute.xlu0 %1295
  %1298 = vset.pattern.permute.xlu0 3
  %1299 = vperm.xlu0 %1298, %v955
  %v1300 = vpop.permute.xlu0 %1299
  %1302 = vset.pattern.permute.xlu0 3
  %1303 = vperm.xlu0 %1302, %v956
  %v1304 = vpop.permute.xlu0 %1303
  %1306 = vset.pattern.permute.xlu0 3
  %1307 = vperm.xlu0 %1306, %v957
  %v1308 = vpop.permute.xlu0 %1307
  %v1310 = vmul.f32 %v1248, %v409
  %v1311 = vmul.f32 %v1252, %v409
  %v1312 = vmul.f32 %v1256, %v409
  %v1313 = vmul.f32 %v1260, %v409
  %v1314 = vmul.f32 %v1264, %v409
  %v1315 = vmul.f32 %v1268, %v409
  %v1316 = vmul.f32 %v1272, %v409
  %v1317 = vmul.f32 %v1276, %v409
  %v1318 = vmul.f32 %v1280, %v409
  %v1319 = vmul.f32 %v1284, %v409
  %v1320 = vmul.f32 %v1288, %v409
  %v1321 = vmul.f32 %v1292, %v409
  %v1322 = vmul.f32 %v1296, %v409
  %v1323 = vmul.f32 %v1300, %v409
  %v1324 = vmul.f32 %v1304, %v409
  %v1325 = vmul.f32 %v1308, %v409
  %v1326 = vadd.f32 %v1230, %v1310
  %v1327 = vadd.f32 %v1231, %v1311
  %v1328 = vadd.f32 %v1232, %v1312
  %v1329 = vadd.f32 %v1233, %v1313
  %v1330 = vadd.f32 %v1234, %v1314
  %v1331 = vadd.f32 %v1235, %v1315
  %v1332 = vadd.f32 %v1236, %v1316
  %v1333 = vadd.f32 %v1237, %v1317
  %v1334 = vadd.f32 %v1238, %v1318
  %v1335 = vadd.f32 %v1239, %v1319
  %v1336 = vadd.f32 %v1240, %v1320
  %v1337 = vadd.f32 %v1241, %v1321
  %v1338 = vadd.f32 %v1242, %v1322
  %v1339 = vadd.f32 %v1243, %v1323
  %v1340 = vadd.f32 %v1244, %v1324
  %v1341 = vadd.f32 %v1245, %v1325
  %1342 = vset.pattern.permute.xlu0 4
  %1343 = vperm.xlu0 %1342, %v942
  %v1344 = vpop.permute.xlu0 %1343
  %1346 = vset.pattern.permute.xlu0 4
  %1347 = vperm.xlu0 %1346, %v943
  %v1348 = vpop.permute.xlu0 %1347
  %1350 = vset.pattern.permute.xlu0 4
  %1351 = vperm.xlu0 %1350, %v944
  %v1352 = vpop.permute.xlu0 %1351
  %1354 = vset.pattern.permute.xlu0 4
  %1355 = vperm.xlu0 %1354, %v945
  %v1356 = vpop.permute.xlu0 %1355
  %1358 = vset.pattern.permute.xlu0 4
  %1359 = vperm.xlu0 %1358, %v946
  %v1360 = vpop.permute.xlu0 %1359
  %1362 = vset.pattern.permute.xlu0 4
  %1363 = vperm.xlu0 %1362, %v947
  %v1364 = vpop.permute.xlu0 %1363
  %1366 = vset.pattern.permute.xlu0 4
  %1367 = vperm.xlu0 %1366, %v948
  %v1368 = vpop.permute.xlu0 %1367
  %1370 = vset.pattern.permute.xlu0 4
  %1371 = vperm.xlu0 %1370, %v949
  %v1372 = vpop.permute.xlu0 %1371
  %1374 = vset.pattern.permute.xlu0 4
  %1375 = vperm.xlu0 %1374, %v950
  %v1376 = vpop.permute.xlu0 %1375
  %1378 = vset.pattern.permute.xlu0 4
  %1379 = vperm.xlu0 %1378, %v951
  %v1380 = vpop.permute.xlu0 %1379
  %1382 = vset.pattern.permute.xlu0 4
  %1383 = vperm.xlu0 %1382, %v952
  %v1384 = vpop.permute.xlu0 %1383
  %1386 = vset.pattern.permute.xlu0 4
  %1387 = vperm.xlu0 %1386, %v953
  %v1388 = vpop.permute.xlu0 %1387
  %1390 = vset.pattern.permute.xlu0 4
  %1391 = vperm.xlu0 %1390, %v954
  %v1392 = vpop.permute.xlu0 %1391
  %1394 = vset.pattern.permute.xlu0 4
  %1395 = vperm.xlu0 %1394, %v955
  %v1396 = vpop.permute.xlu0 %1395
  %1398 = vset.pattern.permute.xlu0 4
  %1399 = vperm.xlu0 %1398, %v956
  %v1400 = vpop.permute.xlu0 %1399
  %1402 = vset.pattern.permute.xlu0 4
  %1403 = vperm.xlu0 %1402, %v957
  %v1404 = vpop.permute.xlu0 %1403
  %v1406 = vmul.f32 %v1344, %v509
  %v1407 = vmul.f32 %v1348, %v509
  %v1408 = vmul.f32 %v1352, %v509
  %v1409 = vmul.f32 %v1356, %v509
  %v1410 = vmul.f32 %v1360, %v509
  %v1411 = vmul.f32 %v1364, %v509
  %v1412 = vmul.f32 %v1368, %v509
  %v1413 = vmul.f32 %v1372, %v509
  %v1414 = vmul.f32 %v1376, %v509
  %v1415 = vmul.f32 %v1380, %v509
  %v1416 = vmul.f32 %v1384, %v509
  %v1417 = vmul.f32 %v1388, %v509
  %v1418 = vmul.f32 %v1392, %v509
  %v1419 = vmul.f32 %v1396, %v509
  %v1420 = vmul.f32 %v1400, %v509
  %v1421 = vmul.f32 %v1404, %v509
  %v1422 = vadd.f32 %v1326, %v1406
  %v1423 = vadd.f32 %v1327, %v1407
  %v1424 = vadd.f32 %v1328, %v1408
  %v1425 = vadd.f32 %v1329, %v1409
  %v1426 = vadd.f32 %v1330, %v1410
  %v1427 = vadd.f32 %v1331, %v1411
  %v1428 = vadd.f32 %v1332, %v1412
  %v1429 = vadd.f32 %v1333, %v1413
  %v1430 = vadd.f32 %v1334, %v1414
  %v1431 = vadd.f32 %v1335, %v1415
  %v1432 = vadd.f32 %v1336, %v1416
  %v1433 = vadd.f32 %v1337, %v1417
  %v1434 = vadd.f32 %v1338, %v1418
  %v1435 = vadd.f32 %v1339, %v1419
  %v1436 = vadd.f32 %v1340, %v1420
  %v1437 = vadd.f32 %v1341, %v1421
  %1438 = vset.pattern.permute.xlu0 5
  %1439 = vperm.xlu0 %1438, %v942
  %v1440 = vpop.permute.xlu0 %1439
  %1442 = vset.pattern.permute.xlu0 5
  %1443 = vperm.xlu0 %1442, %v943
  %v1444 = vpop.permute.xlu0 %1443
  %1446 = vset.pattern.permute.xlu0 5
  %1447 = vperm.xlu0 %1446, %v944
  %v1448 = vpop.permute.xlu0 %1447
  %1450 = vset.pattern.permute.xlu0 5
  %1451 = vperm.xlu0 %1450, %v945
  %v1452 = vpop.permute.xlu0 %1451
  %1454 = vset.pattern.permute.xlu0 5
  %1455 = vperm.xlu0 %1454, %v946
  %v1456 = vpop.permute.xlu0 %1455
  %1458 = vset.pattern.permute.xlu0 5
  %1459 = vperm.xlu0 %1458, %v947
  %v1460 = vpop.permute.xlu0 %1459
  %1462 = vset.pattern.permute.xlu0 5
  %1463 = vperm.xlu0 %1462, %v948
  %v1464 = vpop.permute.xlu0 %1463
  %1466 = vset.pattern.permute.xlu0 5
  %1467 = vperm.xlu0 %1466, %v949
  %v1468 = vpop.permute.xlu0 %1467
  %1470 = vset.pattern.permute.xlu0 5
  %1471 = vperm.xlu0 %1470, %v950
  %v1472 = vpop.permute.xlu0 %1471
  %1474 = vset.pattern.permute.xlu0 5
  %1475 = vperm.xlu0 %1474, %v951
  %v1476 = vpop.permute.xlu0 %1475
  %1478 = vset.pattern.permute.xlu0 5
  %1479 = vperm.xlu0 %1478, %v952
  %v1480 = vpop.permute.xlu0 %1479
  %1482 = vset.pattern.permute.xlu0 5
  %1483 = vperm.xlu0 %1482, %v953
  %v1484 = vpop.permute.xlu0 %1483
  %1486 = vset.pattern.permute.xlu0 5
  %1487 = vperm.xlu0 %1486, %v954
  %v1488 = vpop.permute.xlu0 %1487
  %1490 = vset.pattern.permute.xlu0 5
  %1491 = vperm.xlu0 %1490, %v955
  %v1492 = vpop.permute.xlu0 %1491
  %1494 = vset.pattern.permute.xlu0 5
  %1495 = vperm.xlu0 %1494, %v956
  %v1496 = vpop.permute.xlu0 %1495
  %1498 = vset.pattern.permute.xlu0 5
  %1499 = vperm.xlu0 %1498, %v957
  %v1500 = vpop.permute.xlu0 %1499
  %v1502 = vmul.f32 %v1440, %v609
  %v1503 = vmul.f32 %v1444, %v609
  %v1504 = vmul.f32 %v1448, %v609
  %v1505 = vmul.f32 %v1452, %v609
  %v1506 = vmul.f32 %v1456, %v609
  %v1507 = vmul.f32 %v1460, %v609
  %v1508 = vmul.f32 %v1464, %v609
  %v1509 = vmul.f32 %v1468, %v609
  %v1510 = vmul.f32 %v1472, %v609
  %v1511 = vmul.f32 %v1476, %v609
  %v1512 = vmul.f32 %v1480, %v609
  %v1513 = vmul.f32 %v1484, %v609
  %v1514 = vmul.f32 %v1488, %v609
  %v1515 = vmul.f32 %v1492, %v609
  %v1516 = vmul.f32 %v1496, %v609
  %v1517 = vmul.f32 %v1500, %v609
  %v1518 = vadd.f32 %v1422, %v1502
  %v1519 = vadd.f32 %v1423, %v1503
  %v1520 = vadd.f32 %v1424, %v1504
  %v1521 = vadd.f32 %v1425, %v1505
  %v1522 = vadd.f32 %v1426, %v1506
  %v1523 = vadd.f32 %v1427, %v1507
  %v1524 = vadd.f32 %v1428, %v1508
  %v1525 = vadd.f32 %v1429, %v1509
  %v1526 = vadd.f32 %v1430, %v1510
  %v1527 = vadd.f32 %v1431, %v1511
  %v1528 = vadd.f32 %v1432, %v1512
  %v1529 = vadd.f32 %v1433, %v1513
  %v1530 = vadd.f32 %v1434, %v1514
  %v1531 = vadd.f32 %v1435, %v1515
  %v1532 = vadd.f32 %v1436, %v1516
  %v1533 = vadd.f32 %v1437, %v1517
  %1534 = vset.pattern.permute.xlu0 6
  %1535 = vperm.xlu0 %1534, %v942
  %v1536 = vpop.permute.xlu0 %1535
  %1538 = vset.pattern.permute.xlu0 6
  %1539 = vperm.xlu0 %1538, %v943
  %v1540 = vpop.permute.xlu0 %1539
  %1542 = vset.pattern.permute.xlu0 6
  %1543 = vperm.xlu0 %1542, %v944
  %v1544 = vpop.permute.xlu0 %1543
  %1546 = vset.pattern.permute.xlu0 6
  %1547 = vperm.xlu0 %1546, %v945
  %v1548 = vpop.permute.xlu0 %1547
  %1550 = vset.pattern.permute.xlu0 6
  %1551 = vperm.xlu0 %1550, %v946
  %v1552 = vpop.permute.xlu0 %1551
  %1554 = vset.pattern.permute.xlu0 6
  %1555 = vperm.xlu0 %1554, %v947
  %v1556 = vpop.permute.xlu0 %1555
  %1558 = vset.pattern.permute.xlu0 6
  %1559 = vperm.xlu0 %1558, %v948
  %v1560 = vpop.permute.xlu0 %1559
  %1562 = vset.pattern.permute.xlu0 6
  %1563 = vperm.xlu0 %1562, %v949
  %v1564 = vpop.permute.xlu0 %1563
  %1566 = vset.pattern.permute.xlu0 6
  %1567 = vperm.xlu0 %1566, %v950
  %v1568 = vpop.permute.xlu0 %1567
  %1570 = vset.pattern.permute.xlu0 6
  %1571 = vperm.xlu0 %1570, %v951
  %v1572 = vpop.permute.xlu0 %1571
  %1574 = vset.pattern.permute.xlu0 6
  %1575 = vperm.xlu0 %1574, %v952
  %v1576 = vpop.permute.xlu0 %1575
  %1578 = vset.pattern.permute.xlu0 6
  %1579 = vperm.xlu0 %1578, %v953
  %v1580 = vpop.permute.xlu0 %1579
  %1582 = vset.pattern.permute.xlu0 6
  %1583 = vperm.xlu0 %1582, %v954
  %v1584 = vpop.permute.xlu0 %1583
  %1586 = vset.pattern.permute.xlu0 6
  %1587 = vperm.xlu0 %1586, %v955
  %v1588 = vpop.permute.xlu0 %1587
  %1590 = vset.pattern.permute.xlu0 6
  %1591 = vperm.xlu0 %1590, %v956
  %v1592 = vpop.permute.xlu0 %1591
  %1594 = vset.pattern.permute.xlu0 6
  %1595 = vperm.xlu0 %1594, %v957
  %v1596 = vpop.permute.xlu0 %1595
  %v1598 = vmul.f32 %v1536, %v709
  %v1599 = vmul.f32 %v1540, %v709
  %v1600 = vmul.f32 %v1544, %v709
  %v1601 = vmul.f32 %v1548, %v709
  %v1602 = vmul.f32 %v1552, %v709
  %v1603 = vmul.f32 %v1556, %v709
  %v1604 = vmul.f32 %v1560, %v709
  %v1605 = vmul.f32 %v1564, %v709
  %v1606 = vmul.f32 %v1568, %v709
  %v1607 = vmul.f32 %v1572, %v709
  %v1608 = vmul.f32 %v1576, %v709
  %v1609 = vmul.f32 %v1580, %v709
  %v1610 = vmul.f32 %v1584, %v709
  %v1611 = vmul.f32 %v1588, %v709
  %v1612 = vmul.f32 %v1592, %v709
  %v1613 = vmul.f32 %v1596, %v709
  %v1614 = vadd.f32 %v1518, %v1598
  %v1615 = vadd.f32 %v1519, %v1599
  %v1616 = vadd.f32 %v1520, %v1600
  %v1617 = vadd.f32 %v1521, %v1601
  %v1618 = vadd.f32 %v1522, %v1602
  %v1619 = vadd.f32 %v1523, %v1603
  %v1620 = vadd.f32 %v1524, %v1604
  %v1621 = vadd.f32 %v1525, %v1605
  %v1622 = vadd.f32 %v1526, %v1606
  %v1623 = vadd.f32 %v1527, %v1607
  %v1624 = vadd.f32 %v1528, %v1608
  %v1625 = vadd.f32 %v1529, %v1609
  %v1626 = vadd.f32 %v1530, %v1610
  %v1627 = vadd.f32 %v1531, %v1611
  %v1628 = vadd.f32 %v1532, %v1612
  %v1629 = vadd.f32 %v1533, %v1613
  %1630 = vset.pattern.permute.xlu0 7
  %1631 = vperm.xlu0 %1630, %v942
  %v1632 = vpop.permute.xlu0 %1631
  %1634 = vset.pattern.permute.xlu0 7
  %1635 = vperm.xlu0 %1634, %v943
  %v1636 = vpop.permute.xlu0 %1635
  %1638 = vset.pattern.permute.xlu0 7
  %1639 = vperm.xlu0 %1638, %v944
  %v1640 = vpop.permute.xlu0 %1639
  %1642 = vset.pattern.permute.xlu0 7
  %1643 = vperm.xlu0 %1642, %v945
  %v1644 = vpop.permute.xlu0 %1643
  %1646 = vset.pattern.permute.xlu0 7
  %1647 = vperm.xlu0 %1646, %v946
  %v1648 = vpop.permute.xlu0 %1647
  %1650 = vset.pattern.permute.xlu0 7
  %1651 = vperm.xlu0 %1650, %v947
  %v1652 = vpop.permute.xlu0 %1651
  %1654 = vset.pattern.permute.xlu0 7
  %1655 = vperm.xlu0 %1654, %v948
  %v1656 = vpop.permute.xlu0 %1655
  %1658 = vset.pattern.permute.xlu0 7
  %1659 = vperm.xlu0 %1658, %v949
  %v1660 = vpop.permute.xlu0 %1659
  %1662 = vset.pattern.permute.xlu0 7
  %1663 = vperm.xlu0 %1662, %v950
  %v1664 = vpop.permute.xlu0 %1663
  %1666 = vset.pattern.permute.xlu0 7
  %1667 = vperm.xlu0 %1666, %v951
  %v1668 = vpop.permute.xlu0 %1667
  %1670 = vset.pattern.permute.xlu0 7
  %1671 = vperm.xlu0 %1670, %v952
  %v1672 = vpop.permute.xlu0 %1671
  %1674 = vset.pattern.permute.xlu0 7
  %1675 = vperm.xlu0 %1674, %v953
  %v1676 = vpop.permute.xlu0 %1675
  %1678 = vset.pattern.permute.xlu0 7
  %1679 = vperm.xlu0 %1678, %v954
  %v1680 = vpop.permute.xlu0 %1679
  %1682 = vset.pattern.permute.xlu0 7
  %1683 = vperm.xlu0 %1682, %v955
  %v1684 = vpop.permute.xlu0 %1683
  %1686 = vset.pattern.permute.xlu0 7
  %1687 = vperm.xlu0 %1686, %v956
  %v1688 = vpop.permute.xlu0 %1687
  %1690 = vset.pattern.permute.xlu0 7
  %1691 = vperm.xlu0 %1690, %v957
  %v1692 = vpop.permute.xlu0 %1691
  %v1694 = vmul.f32 %v1632, %v809
  %v1695 = vmul.f32 %v1636, %v809
  %v1696 = vmul.f32 %v1640, %v809
  %v1697 = vmul.f32 %v1644, %v809
  %v1698 = vmul.f32 %v1648, %v809
  %v1699 = vmul.f32 %v1652, %v809
  %v1700 = vmul.f32 %v1656, %v809
  %v1701 = vmul.f32 %v1660, %v809
  %v1702 = vmul.f32 %v1664, %v809
  %v1703 = vmul.f32 %v1668, %v809
  %v1704 = vmul.f32 %v1672, %v809
  %v1705 = vmul.f32 %v1676, %v809
  %v1706 = vmul.f32 %v1680, %v809
  %v1707 = vmul.f32 %v1684, %v809
  %v1708 = vmul.f32 %v1688, %v809
  %v1709 = vmul.f32 %v1692, %v809
  %v1710 = vadd.f32 %v1614, %v1694
  %v1711 = vadd.f32 %v1615, %v1695
  %v1712 = vadd.f32 %v1616, %v1696
  %v1713 = vadd.f32 %v1617, %v1697
  %v1714 = vadd.f32 %v1618, %v1698
  %v1715 = vadd.f32 %v1619, %v1699
  %v1716 = vadd.f32 %v1620, %v1700
  %v1717 = vadd.f32 %v1621, %v1701
  %v1718 = vadd.f32 %v1622, %v1702
  %v1719 = vadd.f32 %v1623, %v1703
  %v1720 = vadd.f32 %v1624, %v1704
  %v1721 = vadd.f32 %v1625, %v1705
  %v1722 = vadd.f32 %v1626, %v1706
  %v1723 = vadd.f32 %v1627, %v1707
  %v1724 = vadd.f32 %v1628, %v1708
  %v1725 = vadd.f32 %v1629, %v1709
  %1726 = vset.pattern.permute.xlu0 8
  %1727 = vperm.xlu0 %1726, %v942
  %v1728 = vpop.permute.xlu0 %1727
  %1730 = vset.pattern.permute.xlu0 8
  %1731 = vperm.xlu0 %1730, %v943
  %v1732 = vpop.permute.xlu0 %1731
  %1734 = vset.pattern.permute.xlu0 8
  %1735 = vperm.xlu0 %1734, %v944
  %v1736 = vpop.permute.xlu0 %1735
  %1738 = vset.pattern.permute.xlu0 8
  %1739 = vperm.xlu0 %1738, %v945
  %v1740 = vpop.permute.xlu0 %1739
  %1742 = vset.pattern.permute.xlu0 8
  %1743 = vperm.xlu0 %1742, %v946
  %v1744 = vpop.permute.xlu0 %1743
  %1746 = vset.pattern.permute.xlu0 8
  %1747 = vperm.xlu0 %1746, %v947
  %v1748 = vpop.permute.xlu0 %1747
  %1750 = vset.pattern.permute.xlu0 8
  %1751 = vperm.xlu0 %1750, %v948
  %v1752 = vpop.permute.xlu0 %1751
  %1754 = vset.pattern.permute.xlu0 8
  %1755 = vperm.xlu0 %1754, %v949
  %v1756 = vpop.permute.xlu0 %1755
  %1758 = vset.pattern.permute.xlu0 8
  %1759 = vperm.xlu0 %1758, %v950
  %v1760 = vpop.permute.xlu0 %1759
  %1762 = vset.pattern.permute.xlu0 8
  %1763 = vperm.xlu0 %1762, %v951
  %v1764 = vpop.permute.xlu0 %1763
  %1766 = vset.pattern.permute.xlu0 8
  %1767 = vperm.xlu0 %1766, %v952
  %v1768 = vpop.permute.xlu0 %1767
  %1770 = vset.pattern.permute.xlu0 8
  %1771 = vperm.xlu0 %1770, %v953
  %v1772 = vpop.permute.xlu0 %1771
  %1774 = vset.pattern.permute.xlu0 8
  %1775 = vperm.xlu0 %1774, %v954
  %v1776 = vpop.permute.xlu0 %1775
  %1778 = vset.pattern.permute.xlu0 8
  %1779 = vperm.xlu0 %1778, %v955
  %v1780 = vpop.permute.xlu0 %1779
  %1782 = vset.pattern.permute.xlu0 8
  %1783 = vperm.xlu0 %1782, %v956
  %v1784 = vpop.permute.xlu0 %1783
  %1786 = vset.pattern.permute.xlu0 8
  %1787 = vperm.xlu0 %1786, %v957
  %v1788 = vpop.permute.xlu0 %1787
  %v1790 = vmul.f32 %v1728, %v909
  %v1791 = vmul.f32 %v1732, %v909
  %v1792 = vmul.f32 %v1736, %v909
  %v1793 = vmul.f32 %v1740, %v909
  %v1794 = vmul.f32 %v1744, %v909
  %v1795 = vmul.f32 %v1748, %v909
  %v1796 = vmul.f32 %v1752, %v909
  %v1797 = vmul.f32 %v1756, %v909
  %v1798 = vmul.f32 %v1760, %v909
  %v1799 = vmul.f32 %v1764, %v909
  %v1800 = vmul.f32 %v1768, %v909
  %v1801 = vmul.f32 %v1772, %v909
  %v1802 = vmul.f32 %v1776, %v909
  %v1803 = vmul.f32 %v1780, %v909
  %v1804 = vmul.f32 %v1784, %v909
  %v1805 = vmul.f32 %v1788, %v909
  %v1806 = vadd.f32 %v1710, %v1790
  %v1807 = vadd.f32 %v1711, %v1791
  %v1808 = vadd.f32 %v1712, %v1792
  %v1809 = vadd.f32 %v1713, %v1793
  %v1810 = vadd.f32 %v1714, %v1794
  %v1811 = vadd.f32 %v1715, %v1795
  %v1812 = vadd.f32 %v1716, %v1796
  %v1813 = vadd.f32 %v1717, %v1797
  %v1814 = vadd.f32 %v1718, %v1798
  %v1815 = vadd.f32 %v1719, %v1799
  %v1816 = vadd.f32 %v1720, %v1800
  %v1817 = vadd.f32 %v1721, %v1801
  %v1818 = vadd.f32 %v1722, %v1802
  %v1819 = vadd.f32 %v1723, %v1803
  %v1820 = vadd.f32 %v1724, %v1804
  %v1821 = vadd.f32 %v1725, %v1805
  %v1822 = vmax.f32 %v926, %v1806
  %v1823 = vmax.f32 %v927, %v1807
  %v1824 = vmax.f32 %v928, %v1808
  %v1825 = vmax.f32 %v929, %v1809
  %v1826 = vmax.f32 %v930, %v1810
  %v1827 = vmax.f32 %v931, %v1811
  %v1828 = vmax.f32 %v932, %v1812
  %v1829 = vmax.f32 %v933, %v1813
  %v1830 = vmax.f32 %v934, %v1814
  %v1831 = vmax.f32 %v935, %v1815
  %v1832 = vmax.f32 %v936, %v1816
  %v1833 = vmax.f32 %v937, %v1817
  %v1834 = vmax.f32 %v938, %v1818
  %v1835 = vmax.f32 %v939, %v1819
  %v1836 = vmax.f32 %v940, %v1820
  %v1837 = vmax.f32 %v941, %v1821
  %v1838 = vld [vmem:[%s2] sm:$0xff]
  %v1839 = vld [vmem:[%s2 + $0x8] sm:$0xff]
  %v1840 = vld [vmem:[%s2 + $0x10] sm:$0xff]
  %v1841 = vld [vmem:[%s2 + $0x18] sm:$0xff]
  %v1842 = vld [vmem:[%s2 + $0x20] sm:$0xff]
  %v1843 = vld [vmem:[%s2 + $0x28] sm:$0xff]
  %v1844 = vld [vmem:[%s2 + $0x30] sm:$0xff]
  %v1845 = vld [vmem:[%s2 + $0x38] sm:$0xff]
  %v1846 = vld [vmem:[%s2 + $0x40] sm:$0xff]
  %v1847 = vld [vmem:[%s2 + $0x48] sm:$0xff]
  %v1848 = vld [vmem:[%s2 + $0x50] sm:$0xff]
  %v1849 = vld [vmem:[%s2 + $0x58] sm:$0xff]
  %v1850 = vld [vmem:[%s2 + $0x60] sm:$0xff]
  %v1851 = vld [vmem:[%s2 + $0x68] sm:$0xff]
  %v1852 = vld [vmem:[%s2 + $0x70] sm:$0xff]
  %v1853 = vld [vmem:[%s2 + $0x78] sm:$0xff]
  %1855 = vset.pattern.permute.xlu0 0
  %1856 = vperm.xlu0 %1855, %v1838
  %v1857 = vpop.permute.xlu0 %1856
  %1860 = vset.pattern.permute.xlu0 0
  %1861 = vperm.xlu0 %1860, %v1839
  %v1862 = vpop.permute.xlu0 %1861
  %1865 = vset.pattern.permute.xlu0 0
  %1866 = vperm.xlu0 %1865, %v1840
  %v1867 = vpop.permute.xlu0 %1866
  %1870 = vset.pattern.permute.xlu0 0
  %1871 = vperm.xlu0 %1870, %v1841
  %v1872 = vpop.permute.xlu0 %1871
  %1875 = vset.pattern.permute.xlu0 0
  %1876 = vperm.xlu0 %1875, %v1842
  %v1877 = vpop.permute.xlu0 %1876
  %1880 = vset.pattern.permute.xlu0 0
  %1881 = vperm.xlu0 %1880, %v1843
  %v1882 = vpop.permute.xlu0 %1881
  %1885 = vset.pattern.permute.xlu0 0
  %1886 = vperm.xlu0 %1885, %v1844
  %v1887 = vpop.permute.xlu0 %1886
  %1890 = vset.pattern.permute.xlu0 0
  %1891 = vperm.xlu0 %1890, %v1845
  %v1892 = vpop.permute.xlu0 %1891
  %1895 = vset.pattern.permute.xlu0 0
  %1896 = vperm.xlu0 %1895, %v1846
  %v1897 = vpop.permute.xlu0 %1896
  %1900 = vset.pattern.permute.xlu0 0
  %1901 = vperm.xlu0 %1900, %v1847
  %v1902 = vpop.permute.xlu0 %1901
  %1905 = vset.pattern.permute.xlu0 0
  %1906 = vperm.xlu0 %1905, %v1848
  %v1907 = vpop.permute.xlu0 %1906
  %1910 = vset.pattern.permute.xlu0 0
  %1911 = vperm.xlu0 %1910, %v1849
  %v1912 = vpop.permute.xlu0 %1911
  %1915 = vset.pattern.permute.xlu0 0
  %1916 = vperm.xlu0 %1915, %v1850
  %v1917 = vpop.permute.xlu0 %1916
  %1920 = vset.pattern.permute.xlu0 0
  %1921 = vperm.xlu0 %1920, %v1851
  %v1922 = vpop.permute.xlu0 %1921
  %1925 = vset.pattern.permute.xlu0 0
  %1926 = vperm.xlu0 %1925, %v1852
  %v1927 = vpop.permute.xlu0 %1926
  %1930 = vset.pattern.permute.xlu0 0
  %1931 = vperm.xlu0 %1930, %v1853
  %v1932 = vpop.permute.xlu0 %1931
  %v1934 = vmul.f32 %v1857, %v125
  %v1935 = vmul.f32 %v1862, %v125
  %v1936 = vmul.f32 %v1867, %v125
  %v1937 = vmul.f32 %v1872, %v125
  %v1938 = vmul.f32 %v1877, %v125
  %v1939 = vmul.f32 %v1882, %v125
  %v1940 = vmul.f32 %v1887, %v125
  %v1941 = vmul.f32 %v1892, %v125
  %v1942 = vmul.f32 %v1897, %v125
  %v1943 = vmul.f32 %v1902, %v125
  %v1944 = vmul.f32 %v1907, %v125
  %v1945 = vmul.f32 %v1912, %v125
  %v1946 = vmul.f32 %v1917, %v125
  %v1947 = vmul.f32 %v1922, %v125
  %v1948 = vmul.f32 %v1927, %v125
  %v1949 = vmul.f32 %v1932, %v125
  %1950 = vset.pattern.permute.xlu0 1
  %1951 = vperm.xlu0 %1950, %v1838
  %v1952 = vpop.permute.xlu0 %1951
  %1954 = vset.pattern.permute.xlu0 1
  %1955 = vperm.xlu0 %1954, %v1839
  %v1956 = vpop.permute.xlu0 %1955
  %1958 = vset.pattern.permute.xlu0 1
  %1959 = vperm.xlu0 %1958, %v1840
  %v1960 = vpop.permute.xlu0 %1959
  %1962 = vset.pattern.permute.xlu0 1
  %1963 = vperm.xlu0 %1962, %v1841
  %v1964 = vpop.permute.xlu0 %1963
  %1966 = vset.pattern.permute.xlu0 1
  %1967 = vperm.xlu0 %1966, %v1842
  %v1968 = vpop.permute.xlu0 %1967
  %1970 = vset.pattern.permute.xlu0 1
  %1971 = vperm.xlu0 %1970, %v1843
  %v1972 = vpop.permute.xlu0 %1971
  %1974 = vset.pattern.permute.xlu0 1
  %1975 = vperm.xlu0 %1974, %v1844
  %v1976 = vpop.permute.xlu0 %1975
  %1978 = vset.pattern.permute.xlu0 1
  %1979 = vperm.xlu0 %1978, %v1845
  %v1980 = vpop.permute.xlu0 %1979
  %1982 = vset.pattern.permute.xlu0 1
  %1983 = vperm.xlu0 %1982, %v1846
  %v1984 = vpop.permute.xlu0 %1983
  %1986 = vset.pattern.permute.xlu0 1
  %1987 = vperm.xlu0 %1986, %v1847
  %v1988 = vpop.permute.xlu0 %1987
  %1990 = vset.pattern.permute.xlu0 1
  %1991 = vperm.xlu0 %1990, %v1848
  %v1992 = vpop.permute.xlu0 %1991
  %1994 = vset.pattern.permute.xlu0 1
  %1995 = vperm.xlu0 %1994, %v1849
  %v1996 = vpop.permute.xlu0 %1995
  %1998 = vset.pattern.permute.xlu0 1
  %1999 = vperm.xlu0 %1998, %v1850
  %v2000 = vpop.permute.xlu0 %1999
  %2002 = vset.pattern.permute.xlu0 1
  %2003 = vperm.xlu0 %2002, %v1851
  %v2004 = vpop.permute.xlu0 %2003
  %2006 = vset.pattern.permute.xlu0 1
  %2007 = vperm.xlu0 %2006, %v1852
  %v2008 = vpop.permute.xlu0 %2007
  %2010 = vset.pattern.permute.xlu0 1
  %2011 = vperm.xlu0 %2010, %v1853
  %v2012 = vpop.permute.xlu0 %2011
  %v2014 = vmul.f32 %v1952, %v209
  %v2015 = vmul.f32 %v1956, %v209
  %v2016 = vmul.f32 %v1960, %v209
  %v2017 = vmul.f32 %v1964, %v209
  %v2018 = vmul.f32 %v1968, %v209
  %v2019 = vmul.f32 %v1972, %v209
  %v2020 = vmul.f32 %v1976, %v209
  %v2021 = vmul.f32 %v1980, %v209
  %v2022 = vmul.f32 %v1984, %v209
  %v2023 = vmul.f32 %v1988, %v209
  %v2024 = vmul.f32 %v1992, %v209
  %v2025 = vmul.f32 %v1996, %v209
  %v2026 = vmul.f32 %v2000, %v209
  %v2027 = vmul.f32 %v2004, %v209
  %v2028 = vmul.f32 %v2008, %v209
  %v2029 = vmul.f32 %v2012, %v209
  %v2030 = vadd.f32 %v1934, %v2014
  %v2031 = vadd.f32 %v1935, %v2015
  %v2032 = vadd.f32 %v1936, %v2016
  %v2033 = vadd.f32 %v1937, %v2017
  %v2034 = vadd.f32 %v1938, %v2018
  %v2035 = vadd.f32 %v1939, %v2019
  %v2036 = vadd.f32 %v1940, %v2020
  %v2037 = vadd.f32 %v1941, %v2021
  %v2038 = vadd.f32 %v1942, %v2022
  %v2039 = vadd.f32 %v1943, %v2023
  %v2040 = vadd.f32 %v1944, %v2024
  %v2041 = vadd.f32 %v1945, %v2025
  %v2042 = vadd.f32 %v1946, %v2026
  %v2043 = vadd.f32 %v1947, %v2027
  %v2044 = vadd.f32 %v1948, %v2028
  %v2045 = vadd.f32 %v1949, %v2029
  %2046 = vset.pattern.permute.xlu0 2
  %2047 = vperm.xlu0 %2046, %v1838
  %v2048 = vpop.permute.xlu0 %2047
  %2050 = vset.pattern.permute.xlu0 2
  %2051 = vperm.xlu0 %2050, %v1839
  %v2052 = vpop.permute.xlu0 %2051
  %2054 = vset.pattern.permute.xlu0 2
  %2055 = vperm.xlu0 %2054, %v1840
  %v2056 = vpop.permute.xlu0 %2055
  %2058 = vset.pattern.permute.xlu0 2
  %2059 = vperm.xlu0 %2058, %v1841
  %v2060 = vpop.permute.xlu0 %2059
  %2062 = vset.pattern.permute.xlu0 2
  %2063 = vperm.xlu0 %2062, %v1842
  %v2064 = vpop.permute.xlu0 %2063
  %2066 = vset.pattern.permute.xlu0 2
  %2067 = vperm.xlu0 %2066, %v1843
  %v2068 = vpop.permute.xlu0 %2067
  %2070 = vset.pattern.permute.xlu0 2
  %2071 = vperm.xlu0 %2070, %v1844
  %v2072 = vpop.permute.xlu0 %2071
  %2074 = vset.pattern.permute.xlu0 2
  %2075 = vperm.xlu0 %2074, %v1845
  %v2076 = vpop.permute.xlu0 %2075
  %2078 = vset.pattern.permute.xlu0 2
  %2079 = vperm.xlu0 %2078, %v1846
  %v2080 = vpop.permute.xlu0 %2079
  %2082 = vset.pattern.permute.xlu0 2
  %2083 = vperm.xlu0 %2082, %v1847
  %v2084 = vpop.permute.xlu0 %2083
  %2086 = vset.pattern.permute.xlu0 2
  %2087 = vperm.xlu0 %2086, %v1848
  %v2088 = vpop.permute.xlu0 %2087
  %2090 = vset.pattern.permute.xlu0 2
  %2091 = vperm.xlu0 %2090, %v1849
  %v2092 = vpop.permute.xlu0 %2091
  %2094 = vset.pattern.permute.xlu0 2
  %2095 = vperm.xlu0 %2094, %v1850
  %v2096 = vpop.permute.xlu0 %2095
  %2098 = vset.pattern.permute.xlu0 2
  %2099 = vperm.xlu0 %2098, %v1851
  %v2100 = vpop.permute.xlu0 %2099
  %2102 = vset.pattern.permute.xlu0 2
  %2103 = vperm.xlu0 %2102, %v1852
  %v2104 = vpop.permute.xlu0 %2103
  %2106 = vset.pattern.permute.xlu0 2
  %2107 = vperm.xlu0 %2106, %v1853
  %v2108 = vpop.permute.xlu0 %2107
  %v2110 = vmul.f32 %v2048, %v309
  %v2111 = vmul.f32 %v2052, %v309
  %v2112 = vmul.f32 %v2056, %v309
  %v2113 = vmul.f32 %v2060, %v309
  %v2114 = vmul.f32 %v2064, %v309
  %v2115 = vmul.f32 %v2068, %v309
  %v2116 = vmul.f32 %v2072, %v309
  %v2117 = vmul.f32 %v2076, %v309
  %v2118 = vmul.f32 %v2080, %v309
  %v2119 = vmul.f32 %v2084, %v309
  %v2120 = vmul.f32 %v2088, %v309
  %v2121 = vmul.f32 %v2092, %v309
  %v2122 = vmul.f32 %v2096, %v309
  %v2123 = vmul.f32 %v2100, %v309
  %v2124 = vmul.f32 %v2104, %v309
  %v2125 = vmul.f32 %v2108, %v309
  %v2126 = vadd.f32 %v2030, %v2110
  %v2127 = vadd.f32 %v2031, %v2111
  %v2128 = vadd.f32 %v2032, %v2112
  %v2129 = vadd.f32 %v2033, %v2113
  %v2130 = vadd.f32 %v2034, %v2114
  %v2131 = vadd.f32 %v2035, %v2115
  %v2132 = vadd.f32 %v2036, %v2116
  %v2133 = vadd.f32 %v2037, %v2117
  %v2134 = vadd.f32 %v2038, %v2118
  %v2135 = vadd.f32 %v2039, %v2119
  %v2136 = vadd.f32 %v2040, %v2120
  %v2137 = vadd.f32 %v2041, %v2121
  %v2138 = vadd.f32 %v2042, %v2122
  %v2139 = vadd.f32 %v2043, %v2123
  %v2140 = vadd.f32 %v2044, %v2124
  %v2141 = vadd.f32 %v2045, %v2125
  %2142 = vset.pattern.permute.xlu0 3
  %2143 = vperm.xlu0 %2142, %v1838
  %v2144 = vpop.permute.xlu0 %2143
  %2146 = vset.pattern.permute.xlu0 3
  %2147 = vperm.xlu0 %2146, %v1839
  %v2148 = vpop.permute.xlu0 %2147
  %2150 = vset.pattern.permute.xlu0 3
  %2151 = vperm.xlu0 %2150, %v1840
  %v2152 = vpop.permute.xlu0 %2151
  %2154 = vset.pattern.permute.xlu0 3
  %2155 = vperm.xlu0 %2154, %v1841
  %v2156 = vpop.permute.xlu0 %2155
  %2158 = vset.pattern.permute.xlu0 3
  %2159 = vperm.xlu0 %2158, %v1842
  %v2160 = vpop.permute.xlu0 %2159
  %2162 = vset.pattern.permute.xlu0 3
  %2163 = vperm.xlu0 %2162, %v1843
  %v2164 = vpop.permute.xlu0 %2163
  %2166 = vset.pattern.permute.xlu0 3
  %2167 = vperm.xlu0 %2166, %v1844
  %v2168 = vpop.permute.xlu0 %2167
  %2170 = vset.pattern.permute.xlu0 3
  %2171 = vperm.xlu0 %2170, %v1845
  %v2172 = vpop.permute.xlu0 %2171
  %2174 = vset.pattern.permute.xlu0 3
  %2175 = vperm.xlu0 %2174, %v1846
  %v2176 = vpop.permute.xlu0 %2175
  %2178 = vset.pattern.permute.xlu0 3
  %2179 = vperm.xlu0 %2178, %v1847
  %v2180 = vpop.permute.xlu0 %2179
  %2182 = vset.pattern.permute.xlu0 3
  %2183 = vperm.xlu0 %2182, %v1848
  %v2184 = vpop.permute.xlu0 %2183
  %2186 = vset.pattern.permute.xlu0 3
  %2187 = vperm.xlu0 %2186, %v1849
  %v2188 = vpop.permute.xlu0 %2187
  %2190 = vset.pattern.permute.xlu0 3
  %2191 = vperm.xlu0 %2190, %v1850
  %v2192 = vpop.permute.xlu0 %2191
  %2194 = vset.pattern.permute.xlu0 3
  %2195 = vperm.xlu0 %2194, %v1851
  %v2196 = vpop.permute.xlu0 %2195
  %2198 = vset.pattern.permute.xlu0 3
  %2199 = vperm.xlu0 %2198, %v1852
  %v2200 = vpop.permute.xlu0 %2199
  %2202 = vset.pattern.permute.xlu0 3
  %2203 = vperm.xlu0 %2202, %v1853
  %v2204 = vpop.permute.xlu0 %2203
  %v2206 = vmul.f32 %v2144, %v409
  %v2207 = vmul.f32 %v2148, %v409
  %v2208 = vmul.f32 %v2152, %v409
  %v2209 = vmul.f32 %v2156, %v409
  %v2210 = vmul.f32 %v2160, %v409
  %v2211 = vmul.f32 %v2164, %v409
  %v2212 = vmul.f32 %v2168, %v409
  %v2213 = vmul.f32 %v2172, %v409
  %v2214 = vmul.f32 %v2176, %v409
  %v2215 = vmul.f32 %v2180, %v409
  %v2216 = vmul.f32 %v2184, %v409
  %v2217 = vmul.f32 %v2188, %v409
  %v2218 = vmul.f32 %v2192, %v409
  %v2219 = vmul.f32 %v2196, %v409
  %v2220 = vmul.f32 %v2200, %v409
  %v2221 = vmul.f32 %v2204, %v409
  %v2222 = vadd.f32 %v2126, %v2206
  %v2223 = vadd.f32 %v2127, %v2207
  %v2224 = vadd.f32 %v2128, %v2208
  %v2225 = vadd.f32 %v2129, %v2209
  %v2226 = vadd.f32 %v2130, %v2210
  %v2227 = vadd.f32 %v2131, %v2211
  %v2228 = vadd.f32 %v2132, %v2212
  %v2229 = vadd.f32 %v2133, %v2213
  %v2230 = vadd.f32 %v2134, %v2214
  %v2231 = vadd.f32 %v2135, %v2215
  %v2232 = vadd.f32 %v2136, %v2216
  %v2233 = vadd.f32 %v2137, %v2217
  %v2234 = vadd.f32 %v2138, %v2218
  %v2235 = vadd.f32 %v2139, %v2219
  %v2236 = vadd.f32 %v2140, %v2220
  %v2237 = vadd.f32 %v2141, %v2221
  %2238 = vset.pattern.permute.xlu0 4
  %2239 = vperm.xlu0 %2238, %v1838
  %v2240 = vpop.permute.xlu0 %2239
  %2242 = vset.pattern.permute.xlu0 4
  %2243 = vperm.xlu0 %2242, %v1839
  %v2244 = vpop.permute.xlu0 %2243
  %2246 = vset.pattern.permute.xlu0 4
  %2247 = vperm.xlu0 %2246, %v1840
  %v2248 = vpop.permute.xlu0 %2247
  %2250 = vset.pattern.permute.xlu0 4
  %2251 = vperm.xlu0 %2250, %v1841
  %v2252 = vpop.permute.xlu0 %2251
  %2254 = vset.pattern.permute.xlu0 4
  %2255 = vperm.xlu0 %2254, %v1842
  %v2256 = vpop.permute.xlu0 %2255
  %2258 = vset.pattern.permute.xlu0 4
  %2259 = vperm.xlu0 %2258, %v1843
  %v2260 = vpop.permute.xlu0 %2259
  %2262 = vset.pattern.permute.xlu0 4
  %2263 = vperm.xlu0 %2262, %v1844
  %v2264 = vpop.permute.xlu0 %2263
  %2266 = vset.pattern.permute.xlu0 4
  %2267 = vperm.xlu0 %2266, %v1845
  %v2268 = vpop.permute.xlu0 %2267
  %2270 = vset.pattern.permute.xlu0 4
  %2271 = vperm.xlu0 %2270, %v1846
  %v2272 = vpop.permute.xlu0 %2271
  %2274 = vset.pattern.permute.xlu0 4
  %2275 = vperm.xlu0 %2274, %v1847
  %v2276 = vpop.permute.xlu0 %2275
  %2278 = vset.pattern.permute.xlu0 4
  %2279 = vperm.xlu0 %2278, %v1848
  %v2280 = vpop.permute.xlu0 %2279
  %2282 = vset.pattern.permute.xlu0 4
  %2283 = vperm.xlu0 %2282, %v1849
  %v2284 = vpop.permute.xlu0 %2283
  %2286 = vset.pattern.permute.xlu0 4
  %2287 = vperm.xlu0 %2286, %v1850
  %v2288 = vpop.permute.xlu0 %2287
  %2290 = vset.pattern.permute.xlu0 4
  %2291 = vperm.xlu0 %2290, %v1851
  %v2292 = vpop.permute.xlu0 %2291
  %2294 = vset.pattern.permute.xlu0 4
  %2295 = vperm.xlu0 %2294, %v1852
  %v2296 = vpop.permute.xlu0 %2295
  %2298 = vset.pattern.permute.xlu0 4
  %2299 = vperm.xlu0 %2298, %v1853
  %v2300 = vpop.permute.xlu0 %2299
  %v2302 = vmul.f32 %v2240, %v509
  %v2303 = vmul.f32 %v2244, %v509
  %v2304 = vmul.f32 %v2248, %v509
  %v2305 = vmul.f32 %v2252, %v509
  %v2306 = vmul.f32 %v2256, %v509
  %v2307 = vmul.f32 %v2260, %v509
  %v2308 = vmul.f32 %v2264, %v509
  %v2309 = vmul.f32 %v2268, %v509
  %v2310 = vmul.f32 %v2272, %v509
  %v2311 = vmul.f32 %v2276, %v509
  %v2312 = vmul.f32 %v2280, %v509
  %v2313 = vmul.f32 %v2284, %v509
  %v2314 = vmul.f32 %v2288, %v509
  %v2315 = vmul.f32 %v2292, %v509
  %v2316 = vmul.f32 %v2296, %v509
  %v2317 = vmul.f32 %v2300, %v509
  %v2318 = vadd.f32 %v2222, %v2302
  %v2319 = vadd.f32 %v2223, %v2303
  %v2320 = vadd.f32 %v2224, %v2304
  %v2321 = vadd.f32 %v2225, %v2305
  %v2322 = vadd.f32 %v2226, %v2306
  %v2323 = vadd.f32 %v2227, %v2307
  %v2324 = vadd.f32 %v2228, %v2308
  %v2325 = vadd.f32 %v2229, %v2309
  %v2326 = vadd.f32 %v2230, %v2310
  %v2327 = vadd.f32 %v2231, %v2311
  %v2328 = vadd.f32 %v2232, %v2312
  %v2329 = vadd.f32 %v2233, %v2313
  %v2330 = vadd.f32 %v2234, %v2314
  %v2331 = vadd.f32 %v2235, %v2315
  %v2332 = vadd.f32 %v2236, %v2316
  %v2333 = vadd.f32 %v2237, %v2317
  %2334 = vset.pattern.permute.xlu0 5
  %2335 = vperm.xlu0 %2334, %v1838
  %v2336 = vpop.permute.xlu0 %2335
  %2338 = vset.pattern.permute.xlu0 5
  %2339 = vperm.xlu0 %2338, %v1839
  %v2340 = vpop.permute.xlu0 %2339
  %2342 = vset.pattern.permute.xlu0 5
  %2343 = vperm.xlu0 %2342, %v1840
  %v2344 = vpop.permute.xlu0 %2343
  %2346 = vset.pattern.permute.xlu0 5
  %2347 = vperm.xlu0 %2346, %v1841
  %v2348 = vpop.permute.xlu0 %2347
  %2350 = vset.pattern.permute.xlu0 5
  %2351 = vperm.xlu0 %2350, %v1842
  %v2352 = vpop.permute.xlu0 %2351
  %2354 = vset.pattern.permute.xlu0 5
  %2355 = vperm.xlu0 %2354, %v1843
  %v2356 = vpop.permute.xlu0 %2355
  %2358 = vset.pattern.permute.xlu0 5
  %2359 = vperm.xlu0 %2358, %v1844
  %v2360 = vpop.permute.xlu0 %2359
  %2362 = vset.pattern.permute.xlu0 5
  %2363 = vperm.xlu0 %2362, %v1845
  %v2364 = vpop.permute.xlu0 %2363
  %2366 = vset.pattern.permute.xlu0 5
  %2367 = vperm.xlu0 %2366, %v1846
  %v2368 = vpop.permute.xlu0 %2367
  %2370 = vset.pattern.permute.xlu0 5
  %2371 = vperm.xlu0 %2370, %v1847
  %v2372 = vpop.permute.xlu0 %2371
  %2374 = vset.pattern.permute.xlu0 5
  %2375 = vperm.xlu0 %2374, %v1848
  %v2376 = vpop.permute.xlu0 %2375
  %2378 = vset.pattern.permute.xlu0 5
  %2379 = vperm.xlu0 %2378, %v1849
  %v2380 = vpop.permute.xlu0 %2379
  %2382 = vset.pattern.permute.xlu0 5
  %2383 = vperm.xlu0 %2382, %v1850
  %v2384 = vpop.permute.xlu0 %2383
  %2386 = vset.pattern.permute.xlu0 5
  %2387 = vperm.xlu0 %2386, %v1851
  %v2388 = vpop.permute.xlu0 %2387
  %2390 = vset.pattern.permute.xlu0 5
  %2391 = vperm.xlu0 %2390, %v1852
  %v2392 = vpop.permute.xlu0 %2391
  %2394 = vset.pattern.permute.xlu0 5
  %2395 = vperm.xlu0 %2394, %v1853
  %v2396 = vpop.permute.xlu0 %2395
  %v2398 = vmul.f32 %v2336, %v609
  %v2399 = vmul.f32 %v2340, %v609
  %v2400 = vmul.f32 %v2344, %v609
  %v2401 = vmul.f32 %v2348, %v609
  %v2402 = vmul.f32 %v2352, %v609
  %v2403 = vmul.f32 %v2356, %v609
  %v2404 = vmul.f32 %v2360, %v609
  %v2405 = vmul.f32 %v2364, %v609
  %v2406 = vmul.f32 %v2368, %v609
  %v2407 = vmul.f32 %v2372, %v609
  %v2408 = vmul.f32 %v2376, %v609
  %v2409 = vmul.f32 %v2380, %v609
  %v2410 = vmul.f32 %v2384, %v609
  %v2411 = vmul.f32 %v2388, %v609
  %v2412 = vmul.f32 %v2392, %v609
  %v2413 = vmul.f32 %v2396, %v609
  %v2414 = vadd.f32 %v2318, %v2398
  %v2415 = vadd.f32 %v2319, %v2399
  %v2416 = vadd.f32 %v2320, %v2400
  %v2417 = vadd.f32 %v2321, %v2401
  %v2418 = vadd.f32 %v2322, %v2402
  %v2419 = vadd.f32 %v2323, %v2403
  %v2420 = vadd.f32 %v2324, %v2404
  %v2421 = vadd.f32 %v2325, %v2405
  %v2422 = vadd.f32 %v2326, %v2406
  %v2423 = vadd.f32 %v2327, %v2407
  %v2424 = vadd.f32 %v2328, %v2408
  %v2425 = vadd.f32 %v2329, %v2409
  %v2426 = vadd.f32 %v2330, %v2410
  %v2427 = vadd.f32 %v2331, %v2411
  %v2428 = vadd.f32 %v2332, %v2412
  %v2429 = vadd.f32 %v2333, %v2413
  %2430 = vset.pattern.permute.xlu0 6
  %2431 = vperm.xlu0 %2430, %v1838
  %v2432 = vpop.permute.xlu0 %2431
  %2434 = vset.pattern.permute.xlu0 6
  %2435 = vperm.xlu0 %2434, %v1839
  %v2436 = vpop.permute.xlu0 %2435
  %2438 = vset.pattern.permute.xlu0 6
  %2439 = vperm.xlu0 %2438, %v1840
  %v2440 = vpop.permute.xlu0 %2439
  %2442 = vset.pattern.permute.xlu0 6
  %2443 = vperm.xlu0 %2442, %v1841
  %v2444 = vpop.permute.xlu0 %2443
  %2446 = vset.pattern.permute.xlu0 6
  %2447 = vperm.xlu0 %2446, %v1842
  %v2448 = vpop.permute.xlu0 %2447
  %2450 = vset.pattern.permute.xlu0 6
  %2451 = vperm.xlu0 %2450, %v1843
  %v2452 = vpop.permute.xlu0 %2451
  %2454 = vset.pattern.permute.xlu0 6
  %2455 = vperm.xlu0 %2454, %v1844
  %v2456 = vpop.permute.xlu0 %2455
  %2458 = vset.pattern.permute.xlu0 6
  %2459 = vperm.xlu0 %2458, %v1845
  %v2460 = vpop.permute.xlu0 %2459
  %2462 = vset.pattern.permute.xlu0 6
  %2463 = vperm.xlu0 %2462, %v1846
  %v2464 = vpop.permute.xlu0 %2463
  %2466 = vset.pattern.permute.xlu0 6
  %2467 = vperm.xlu0 %2466, %v1847
  %v2468 = vpop.permute.xlu0 %2467
  %2470 = vset.pattern.permute.xlu0 6
  %2471 = vperm.xlu0 %2470, %v1848
  %v2472 = vpop.permute.xlu0 %2471
  %2474 = vset.pattern.permute.xlu0 6
  %2475 = vperm.xlu0 %2474, %v1849
  %v2476 = vpop.permute.xlu0 %2475
  %2478 = vset.pattern.permute.xlu0 6
  %2479 = vperm.xlu0 %2478, %v1850
  %v2480 = vpop.permute.xlu0 %2479
  %2482 = vset.pattern.permute.xlu0 6
  %2483 = vperm.xlu0 %2482, %v1851
  %v2484 = vpop.permute.xlu0 %2483
  %2486 = vset.pattern.permute.xlu0 6
  %2487 = vperm.xlu0 %2486, %v1852
  %v2488 = vpop.permute.xlu0 %2487
  %2490 = vset.pattern.permute.xlu0 6
  %2491 = vperm.xlu0 %2490, %v1853
  %v2492 = vpop.permute.xlu0 %2491
  %v2494 = vmul.f32 %v2432, %v709
  %v2495 = vmul.f32 %v2436, %v709
  %v2496 = vmul.f32 %v2440, %v709
  %v2497 = vmul.f32 %v2444, %v709
  %v2498 = vmul.f32 %v2448, %v709
  %v2499 = vmul.f32 %v2452, %v709
  %v2500 = vmul.f32 %v2456, %v709
  %v2501 = vmul.f32 %v2460, %v709
  %v2502 = vmul.f32 %v2464, %v709
  %v2503 = vmul.f32 %v2468, %v709
  %v2504 = vmul.f32 %v2472, %v709
  %v2505 = vmul.f32 %v2476, %v709
  %v2506 = vmul.f32 %v2480, %v709
  %v2507 = vmul.f32 %v2484, %v709
  %v2508 = vmul.f32 %v2488, %v709
  %v2509 = vmul.f32 %v2492, %v709
  %v2510 = vadd.f32 %v2414, %v2494
  %v2511 = vadd.f32 %v2415, %v2495
  %v2512 = vadd.f32 %v2416, %v2496
  %v2513 = vadd.f32 %v2417, %v2497
  %v2514 = vadd.f32 %v2418, %v2498
  %v2515 = vadd.f32 %v2419, %v2499
  %v2516 = vadd.f32 %v2420, %v2500
  %v2517 = vadd.f32 %v2421, %v2501
  %v2518 = vadd.f32 %v2422, %v2502
  %v2519 = vadd.f32 %v2423, %v2503
  %v2520 = vadd.f32 %v2424, %v2504
  %v2521 = vadd.f32 %v2425, %v2505
  %v2522 = vadd.f32 %v2426, %v2506
  %v2523 = vadd.f32 %v2427, %v2507
  %v2524 = vadd.f32 %v2428, %v2508
  %v2525 = vadd.f32 %v2429, %v2509
  %2526 = vset.pattern.permute.xlu0 7
  %2527 = vperm.xlu0 %2526, %v1838
  %v2528 = vpop.permute.xlu0 %2527
  %2530 = vset.pattern.permute.xlu0 7
  %2531 = vperm.xlu0 %2530, %v1839
  %v2532 = vpop.permute.xlu0 %2531
  %2534 = vset.pattern.permute.xlu0 7
  %2535 = vperm.xlu0 %2534, %v1840
  %v2536 = vpop.permute.xlu0 %2535
  %2538 = vset.pattern.permute.xlu0 7
  %2539 = vperm.xlu0 %2538, %v1841
  %v2540 = vpop.permute.xlu0 %2539
  %2542 = vset.pattern.permute.xlu0 7
  %2543 = vperm.xlu0 %2542, %v1842
  %v2544 = vpop.permute.xlu0 %2543
  %2546 = vset.pattern.permute.xlu0 7
  %2547 = vperm.xlu0 %2546, %v1843
  %v2548 = vpop.permute.xlu0 %2547
  %2550 = vset.pattern.permute.xlu0 7
  %2551 = vperm.xlu0 %2550, %v1844
  %v2552 = vpop.permute.xlu0 %2551
  %2554 = vset.pattern.permute.xlu0 7
  %2555 = vperm.xlu0 %2554, %v1845
  %v2556 = vpop.permute.xlu0 %2555
  %2558 = vset.pattern.permute.xlu0 7
  %2559 = vperm.xlu0 %2558, %v1846
  %v2560 = vpop.permute.xlu0 %2559
  %2562 = vset.pattern.permute.xlu0 7
  %2563 = vperm.xlu0 %2562, %v1847
  %v2564 = vpop.permute.xlu0 %2563
  %2566 = vset.pattern.permute.xlu0 7
  %2567 = vperm.xlu0 %2566, %v1848
  %v2568 = vpop.permute.xlu0 %2567
  %2570 = vset.pattern.permute.xlu0 7
  %2571 = vperm.xlu0 %2570, %v1849
  %v2572 = vpop.permute.xlu0 %2571
  %2574 = vset.pattern.permute.xlu0 7
  %2575 = vperm.xlu0 %2574, %v1850
  %v2576 = vpop.permute.xlu0 %2575
  %2578 = vset.pattern.permute.xlu0 7
  %2579 = vperm.xlu0 %2578, %v1851
  %v2580 = vpop.permute.xlu0 %2579
  %2582 = vset.pattern.permute.xlu0 7
  %2583 = vperm.xlu0 %2582, %v1852
  %v2584 = vpop.permute.xlu0 %2583
  %2586 = vset.pattern.permute.xlu0 7
  %2587 = vperm.xlu0 %2586, %v1853
  %v2588 = vpop.permute.xlu0 %2587
  %v2590 = vmul.f32 %v2528, %v809
  %v2591 = vmul.f32 %v2532, %v809
  %v2592 = vmul.f32 %v2536, %v809
  %v2593 = vmul.f32 %v2540, %v809
  %v2594 = vmul.f32 %v2544, %v809
  %v2595 = vmul.f32 %v2548, %v809
  %v2596 = vmul.f32 %v2552, %v809
  %v2597 = vmul.f32 %v2556, %v809
  %v2598 = vmul.f32 %v2560, %v809
  %v2599 = vmul.f32 %v2564, %v809
  %v2600 = vmul.f32 %v2568, %v809
  %v2601 = vmul.f32 %v2572, %v809
  %v2602 = vmul.f32 %v2576, %v809
  %v2603 = vmul.f32 %v2580, %v809
  %v2604 = vmul.f32 %v2584, %v809
  %v2605 = vmul.f32 %v2588, %v809
  %v2606 = vadd.f32 %v2510, %v2590
  %v2607 = vadd.f32 %v2511, %v2591
  %v2608 = vadd.f32 %v2512, %v2592
  %v2609 = vadd.f32 %v2513, %v2593
  %v2610 = vadd.f32 %v2514, %v2594
  %v2611 = vadd.f32 %v2515, %v2595
  %v2612 = vadd.f32 %v2516, %v2596
  %v2613 = vadd.f32 %v2517, %v2597
  %v2614 = vadd.f32 %v2518, %v2598
  %v2615 = vadd.f32 %v2519, %v2599
  %v2616 = vadd.f32 %v2520, %v2600
  %v2617 = vadd.f32 %v2521, %v2601
  %v2618 = vadd.f32 %v2522, %v2602
  %v2619 = vadd.f32 %v2523, %v2603
  %v2620 = vadd.f32 %v2524, %v2604
  %v2621 = vadd.f32 %v2525, %v2605
  %2622 = vset.pattern.permute.xlu0 8
  %2623 = vperm.xlu0 %2622, %v1838
  %v2624 = vpop.permute.xlu0 %2623
  %2626 = vset.pattern.permute.xlu0 8
  %2627 = vperm.xlu0 %2626, %v1839
  %v2628 = vpop.permute.xlu0 %2627
  %2630 = vset.pattern.permute.xlu0 8
  %2631 = vperm.xlu0 %2630, %v1840
  %v2632 = vpop.permute.xlu0 %2631
  %2634 = vset.pattern.permute.xlu0 8
  %2635 = vperm.xlu0 %2634, %v1841
  %v2636 = vpop.permute.xlu0 %2635
  %2638 = vset.pattern.permute.xlu0 8
  %2639 = vperm.xlu0 %2638, %v1842
  %v2640 = vpop.permute.xlu0 %2639
  %2642 = vset.pattern.permute.xlu0 8
  %2643 = vperm.xlu0 %2642, %v1843
  %v2644 = vpop.permute.xlu0 %2643
  %2646 = vset.pattern.permute.xlu0 8
  %2647 = vperm.xlu0 %2646, %v1844
  %v2648 = vpop.permute.xlu0 %2647
  %2650 = vset.pattern.permute.xlu0 8
  %2651 = vperm.xlu0 %2650, %v1845
  %v2652 = vpop.permute.xlu0 %2651
  %2654 = vset.pattern.permute.xlu0 8
  %2655 = vperm.xlu0 %2654, %v1846
  %v2656 = vpop.permute.xlu0 %2655
  %2658 = vset.pattern.permute.xlu0 8
  %2659 = vperm.xlu0 %2658, %v1847
  %v2660 = vpop.permute.xlu0 %2659
  %2662 = vset.pattern.permute.xlu0 8
  %2663 = vperm.xlu0 %2662, %v1848
  %v2664 = vpop.permute.xlu0 %2663
  %2666 = vset.pattern.permute.xlu0 8
  %2667 = vperm.xlu0 %2666, %v1849
  %v2668 = vpop.permute.xlu0 %2667
  %2670 = vset.pattern.permute.xlu0 8
  %2671 = vperm.xlu0 %2670, %v1850
  %v2672 = vpop.permute.xlu0 %2671
  %2674 = vset.pattern.permute.xlu0 8
  %2675 = vperm.xlu0 %2674, %v1851
  %v2676 = vpop.permute.xlu0 %2675
  %2678 = vset.pattern.permute.xlu0 8
  %2679 = vperm.xlu0 %2678, %v1852
  %v2680 = vpop.permute.xlu0 %2679
  %2682 = vset.pattern.permute.xlu0 8
  %2683 = vperm.xlu0 %2682, %v1853
  %v2684 = vpop.permute.xlu0 %2683
  %v2686 = vmul.f32 %v2624, %v909
  %v2687 = vmul.f32 %v2628, %v909
  %v2688 = vmul.f32 %v2632, %v909
  %v2689 = vmul.f32 %v2636, %v909
  %v2690 = vmul.f32 %v2640, %v909
  %v2691 = vmul.f32 %v2644, %v909
  %v2692 = vmul.f32 %v2648, %v909
  %v2693 = vmul.f32 %v2652, %v909
  %v2694 = vmul.f32 %v2656, %v909
  %v2695 = vmul.f32 %v2660, %v909
  %v2696 = vmul.f32 %v2664, %v909
  %v2697 = vmul.f32 %v2668, %v909
  %v2698 = vmul.f32 %v2672, %v909
  %v2699 = vmul.f32 %v2676, %v909
  %v2700 = vmul.f32 %v2680, %v909
  %v2701 = vmul.f32 %v2684, %v909
  %v2702 = vadd.f32 %v2606, %v2686
  %v2703 = vadd.f32 %v2607, %v2687
  %v2704 = vadd.f32 %v2608, %v2688
  %v2705 = vadd.f32 %v2609, %v2689
  %v2706 = vadd.f32 %v2610, %v2690
  %v2707 = vadd.f32 %v2611, %v2691
  %v2708 = vadd.f32 %v2612, %v2692
  %v2709 = vadd.f32 %v2613, %v2693
  %v2710 = vadd.f32 %v2614, %v2694
  %v2711 = vadd.f32 %v2615, %v2695
  %v2712 = vadd.f32 %v2616, %v2696
  %v2713 = vadd.f32 %v2617, %v2697
  %v2714 = vadd.f32 %v2618, %v2698
  %v2715 = vadd.f32 %v2619, %v2699
  %v2716 = vadd.f32 %v2620, %v2700
  %v2717 = vadd.f32 %v2621, %v2701
  %v2718 = vld [vmem:[%s3] sm:$0xff]
  %v2719 = vld [vmem:[%s3 + $0x8] sm:$0xff]
  %v2720 = vld [vmem:[%s3 + $0x10] sm:$0xff]
  %v2721 = vld [vmem:[%s3 + $0x18] sm:$0xff]
  %v2722 = vld [vmem:[%s3 + $0x20] sm:$0xff]
  %v2723 = vld [vmem:[%s3 + $0x28] sm:$0xff]
  %v2724 = vld [vmem:[%s3 + $0x30] sm:$0xff]
  %v2725 = vld [vmem:[%s3 + $0x38] sm:$0xff]
  %v2726 = vld [vmem:[%s3 + $0x40] sm:$0xff]
  %v2727 = vld [vmem:[%s3 + $0x48] sm:$0xff]
  %v2728 = vld [vmem:[%s3 + $0x50] sm:$0xff]
  %v2729 = vld [vmem:[%s3 + $0x58] sm:$0xff]
  %v2730 = vld [vmem:[%s3 + $0x60] sm:$0xff]
  %v2731 = vld [vmem:[%s3 + $0x68] sm:$0xff]
  %v2732 = vld [vmem:[%s3 + $0x70] sm:$0xff]
  %v2733 = vld [vmem:[%s3 + $0x78] sm:$0xff]
  %2735 = vset.pattern.permute.xlu0 0
  %2736 = vperm.xlu0 %2735, %v2718
  %v2737 = vpop.permute.xlu0 %2736
  %2740 = vset.pattern.permute.xlu0 0
  %2741 = vperm.xlu0 %2740, %v2719
  %v2742 = vpop.permute.xlu0 %2741
  %2745 = vset.pattern.permute.xlu0 0
  %2746 = vperm.xlu0 %2745, %v2720
  %v2747 = vpop.permute.xlu0 %2746
  %2750 = vset.pattern.permute.xlu0 0
  %2751 = vperm.xlu0 %2750, %v2721
  %v2752 = vpop.permute.xlu0 %2751
  %2755 = vset.pattern.permute.xlu0 0
  %2756 = vperm.xlu0 %2755, %v2722
  %v2757 = vpop.permute.xlu0 %2756
  %2760 = vset.pattern.permute.xlu0 0
  %2761 = vperm.xlu0 %2760, %v2723
  %v2762 = vpop.permute.xlu0 %2761
  %2765 = vset.pattern.permute.xlu0 0
  %2766 = vperm.xlu0 %2765, %v2724
  %v2767 = vpop.permute.xlu0 %2766
  %2770 = vset.pattern.permute.xlu0 0
  %2771 = vperm.xlu0 %2770, %v2725
  %v2772 = vpop.permute.xlu0 %2771
  %2775 = vset.pattern.permute.xlu0 0
  %2776 = vperm.xlu0 %2775, %v2726
  %v2777 = vpop.permute.xlu0 %2776
  %2780 = vset.pattern.permute.xlu0 0
  %2781 = vperm.xlu0 %2780, %v2727
  %v2782 = vpop.permute.xlu0 %2781
  %2785 = vset.pattern.permute.xlu0 0
  %2786 = vperm.xlu0 %2785, %v2728
  %v2787 = vpop.permute.xlu0 %2786
  %2790 = vset.pattern.permute.xlu0 0
  %2791 = vperm.xlu0 %2790, %v2729
  %v2792 = vpop.permute.xlu0 %2791
  %2795 = vset.pattern.permute.xlu0 0
  %2796 = vperm.xlu0 %2795, %v2730
  %v2797 = vpop.permute.xlu0 %2796
  %2800 = vset.pattern.permute.xlu0 0
  %2801 = vperm.xlu0 %2800, %v2731
  %v2802 = vpop.permute.xlu0 %2801
  %2805 = vset.pattern.permute.xlu0 0
  %2806 = vperm.xlu0 %2805, %v2732
  %v2807 = vpop.permute.xlu0 %2806
  %2810 = vset.pattern.permute.xlu0 0
  %2811 = vperm.xlu0 %2810, %v2733
  %v2812 = vpop.permute.xlu0 %2811
  %v2814 = vmul.f32 %v2737, %v125
  %v2815 = vmul.f32 %v2742, %v125
  %v2816 = vmul.f32 %v2747, %v125
  %v2817 = vmul.f32 %v2752, %v125
  %v2818 = vmul.f32 %v2757, %v125
  %v2819 = vmul.f32 %v2762, %v125
  %v2820 = vmul.f32 %v2767, %v125
  %v2821 = vmul.f32 %v2772, %v125
  %v2822 = vmul.f32 %v2777, %v125
  %v2823 = vmul.f32 %v2782, %v125
  %v2824 = vmul.f32 %v2787, %v125
  %v2825 = vmul.f32 %v2792, %v125
  %v2826 = vmul.f32 %v2797, %v125
  %v2827 = vmul.f32 %v2802, %v125
  %v2828 = vmul.f32 %v2807, %v125
  %v2829 = vmul.f32 %v2812, %v125
  %2830 = vset.pattern.permute.xlu0 1
  %2831 = vperm.xlu0 %2830, %v2718
  %v2832 = vpop.permute.xlu0 %2831
  %2834 = vset.pattern.permute.xlu0 1
  %2835 = vperm.xlu0 %2834, %v2719
  %v2836 = vpop.permute.xlu0 %2835
  %2838 = vset.pattern.permute.xlu0 1
  %2839 = vperm.xlu0 %2838, %v2720
  %v2840 = vpop.permute.xlu0 %2839
  %2842 = vset.pattern.permute.xlu0 1
  %2843 = vperm.xlu0 %2842, %v2721
  %v2844 = vpop.permute.xlu0 %2843
  %2846 = vset.pattern.permute.xlu0 1
  %2847 = vperm.xlu0 %2846, %v2722
  %v2848 = vpop.permute.xlu0 %2847
  %2850 = vset.pattern.permute.xlu0 1
  %2851 = vperm.xlu0 %2850, %v2723
  %v2852 = vpop.permute.xlu0 %2851
  %2854 = vset.pattern.permute.xlu0 1
  %2855 = vperm.xlu0 %2854, %v2724
  %v2856 = vpop.permute.xlu0 %2855
  %2858 = vset.pattern.permute.xlu0 1
  %2859 = vperm.xlu0 %2858, %v2725
  %v2860 = vpop.permute.xlu0 %2859
  %2862 = vset.pattern.permute.xlu0 1
  %2863 = vperm.xlu0 %2862, %v2726
  %v2864 = vpop.permute.xlu0 %2863
  %2866 = vset.pattern.permute.xlu0 1
  %2867 = vperm.xlu0 %2866, %v2727
  %v2868 = vpop.permute.xlu0 %2867
  %2870 = vset.pattern.permute.xlu0 1
  %2871 = vperm.xlu0 %2870, %v2728
  %v2872 = vpop.permute.xlu0 %2871
  %2874 = vset.pattern.permute.xlu0 1
  %2875 = vperm.xlu0 %2874, %v2729
  %v2876 = vpop.permute.xlu0 %2875
  %2878 = vset.pattern.permute.xlu0 1
  %2879 = vperm.xlu0 %2878, %v2730
  %v2880 = vpop.permute.xlu0 %2879
  %2882 = vset.pattern.permute.xlu0 1
  %2883 = vperm.xlu0 %2882, %v2731
  %v2884 = vpop.permute.xlu0 %2883
  %2886 = vset.pattern.permute.xlu0 1
  %2887 = vperm.xlu0 %2886, %v2732
  %v2888 = vpop.permute.xlu0 %2887
  %2890 = vset.pattern.permute.xlu0 1
  %2891 = vperm.xlu0 %2890, %v2733
  %v2892 = vpop.permute.xlu0 %2891
  %v2894 = vmul.f32 %v2832, %v209
  %v2895 = vmul.f32 %v2836, %v209
  %v2896 = vmul.f32 %v2840, %v209
  %v2897 = vmul.f32 %v2844, %v209
  %v2898 = vmul.f32 %v2848, %v209
  %v2899 = vmul.f32 %v2852, %v209
  %v2900 = vmul.f32 %v2856, %v209
  %v2901 = vmul.f32 %v2860, %v209
  %v2902 = vmul.f32 %v2864, %v209
  %v2903 = vmul.f32 %v2868, %v209
  %v2904 = vmul.f32 %v2872, %v209
  %v2905 = vmul.f32 %v2876, %v209
  %v2906 = vmul.f32 %v2880, %v209
  %v2907 = vmul.f32 %v2884, %v209
  %v2908 = vmul.f32 %v2888, %v209
  %v2909 = vmul.f32 %v2892, %v209
  %v2910 = vadd.f32 %v2814, %v2894
  %v2911 = vadd.f32 %v2815, %v2895
  %v2912 = vadd.f32 %v2816, %v2896
  %v2913 = vadd.f32 %v2817, %v2897
  %v2914 = vadd.f32 %v2818, %v2898
  %v2915 = vadd.f32 %v2819, %v2899
  %v2916 = vadd.f32 %v2820, %v2900
  %v2917 = vadd.f32 %v2821, %v2901
  %v2918 = vadd.f32 %v2822, %v2902
  %v2919 = vadd.f32 %v2823, %v2903
  %v2920 = vadd.f32 %v2824, %v2904
  %v2921 = vadd.f32 %v2825, %v2905
  %v2922 = vadd.f32 %v2826, %v2906
  %v2923 = vadd.f32 %v2827, %v2907
  %v2924 = vadd.f32 %v2828, %v2908
  %v2925 = vadd.f32 %v2829, %v2909
  %2926 = vset.pattern.permute.xlu0 2
  %2927 = vperm.xlu0 %2926, %v2718
  %v2928 = vpop.permute.xlu0 %2927
  %2930 = vset.pattern.permute.xlu0 2
  %2931 = vperm.xlu0 %2930, %v2719
  %v2932 = vpop.permute.xlu0 %2931
  %2934 = vset.pattern.permute.xlu0 2
  %2935 = vperm.xlu0 %2934, %v2720
  %v2936 = vpop.permute.xlu0 %2935
  %2938 = vset.pattern.permute.xlu0 2
  %2939 = vperm.xlu0 %2938, %v2721
  %v2940 = vpop.permute.xlu0 %2939
  %2942 = vset.pattern.permute.xlu0 2
  %2943 = vperm.xlu0 %2942, %v2722
  %v2944 = vpop.permute.xlu0 %2943
  %2946 = vset.pattern.permute.xlu0 2
  %2947 = vperm.xlu0 %2946, %v2723
  %v2948 = vpop.permute.xlu0 %2947
  %2950 = vset.pattern.permute.xlu0 2
  %2951 = vperm.xlu0 %2950, %v2724
  %v2952 = vpop.permute.xlu0 %2951
  %2954 = vset.pattern.permute.xlu0 2
  %2955 = vperm.xlu0 %2954, %v2725
  %v2956 = vpop.permute.xlu0 %2955
  %2958 = vset.pattern.permute.xlu0 2
  %2959 = vperm.xlu0 %2958, %v2726
  %v2960 = vpop.permute.xlu0 %2959
  %2962 = vset.pattern.permute.xlu0 2
  %2963 = vperm.xlu0 %2962, %v2727
  %v2964 = vpop.permute.xlu0 %2963
  %2966 = vset.pattern.permute.xlu0 2
  %2967 = vperm.xlu0 %2966, %v2728
  %v2968 = vpop.permute.xlu0 %2967
  %2970 = vset.pattern.permute.xlu0 2
  %2971 = vperm.xlu0 %2970, %v2729
  %v2972 = vpop.permute.xlu0 %2971
  %2974 = vset.pattern.permute.xlu0 2
  %2975 = vperm.xlu0 %2974, %v2730
  %v2976 = vpop.permute.xlu0 %2975
  %2978 = vset.pattern.permute.xlu0 2
  %2979 = vperm.xlu0 %2978, %v2731
  %v2980 = vpop.permute.xlu0 %2979
  %2982 = vset.pattern.permute.xlu0 2
  %2983 = vperm.xlu0 %2982, %v2732
  %v2984 = vpop.permute.xlu0 %2983
  %2986 = vset.pattern.permute.xlu0 2
  %2987 = vperm.xlu0 %2986, %v2733
  %v2988 = vpop.permute.xlu0 %2987
  %v2990 = vmul.f32 %v2928, %v309
  %v2991 = vmul.f32 %v2932, %v309
  %v2992 = vmul.f32 %v2936, %v309
  %v2993 = vmul.f32 %v2940, %v309
  %v2994 = vmul.f32 %v2944, %v309
  %v2995 = vmul.f32 %v2948, %v309
  %v2996 = vmul.f32 %v2952, %v309
  %v2997 = vmul.f32 %v2956, %v309
  %v2998 = vmul.f32 %v2960, %v309
  %v2999 = vmul.f32 %v2964, %v309
  %v3000 = vmul.f32 %v2968, %v309
  %v3001 = vmul.f32 %v2972, %v309
  %v3002 = vmul.f32 %v2976, %v309
  %v3003 = vmul.f32 %v2980, %v309
  %v3004 = vmul.f32 %v2984, %v309
  %v3005 = vmul.f32 %v2988, %v309
  %v3006 = vadd.f32 %v2910, %v2990
  %v3007 = vadd.f32 %v2911, %v2991
  %v3008 = vadd.f32 %v2912, %v2992
  %v3009 = vadd.f32 %v2913, %v2993
  %v3010 = vadd.f32 %v2914, %v2994
  %v3011 = vadd.f32 %v2915, %v2995
  %v3012 = vadd.f32 %v2916, %v2996
  %v3013 = vadd.f32 %v2917, %v2997
  %v3014 = vadd.f32 %v2918, %v2998
  %v3015 = vadd.f32 %v2919, %v2999
  %v3016 = vadd.f32 %v2920, %v3000
  %v3017 = vadd.f32 %v2921, %v3001
  %v3018 = vadd.f32 %v2922, %v3002
  %v3019 = vadd.f32 %v2923, %v3003
  %v3020 = vadd.f32 %v2924, %v3004
  %v3021 = vadd.f32 %v2925, %v3005
  %3022 = vset.pattern.permute.xlu0 3
  %3023 = vperm.xlu0 %3022, %v2718
  %v3024 = vpop.permute.xlu0 %3023
  %3026 = vset.pattern.permute.xlu0 3
  %3027 = vperm.xlu0 %3026, %v2719
  %v3028 = vpop.permute.xlu0 %3027
  %3030 = vset.pattern.permute.xlu0 3
  %3031 = vperm.xlu0 %3030, %v2720
  %v3032 = vpop.permute.xlu0 %3031
  %3034 = vset.pattern.permute.xlu0 3
  %3035 = vperm.xlu0 %3034, %v2721
  %v3036 = vpop.permute.xlu0 %3035
  %3038 = vset.pattern.permute.xlu0 3
  %3039 = vperm.xlu0 %3038, %v2722
  %v3040 = vpop.permute.xlu0 %3039
  %3042 = vset.pattern.permute.xlu0 3
  %3043 = vperm.xlu0 %3042, %v2723
  %v3044 = vpop.permute.xlu0 %3043
  %3046 = vset.pattern.permute.xlu0 3
  %3047 = vperm.xlu0 %3046, %v2724
  %v3048 = vpop.permute.xlu0 %3047
  %3050 = vset.pattern.permute.xlu0 3
  %3051 = vperm.xlu0 %3050, %v2725
  %v3052 = vpop.permute.xlu0 %3051
  %3054 = vset.pattern.permute.xlu0 3
  %3055 = vperm.xlu0 %3054, %v2726
  %v3056 = vpop.permute.xlu0 %3055
  %3058 = vset.pattern.permute.xlu0 3
  %3059 = vperm.xlu0 %3058, %v2727
  %v3060 = vpop.permute.xlu0 %3059
  %3062 = vset.pattern.permute.xlu0 3
  %3063 = vperm.xlu0 %3062, %v2728
  %v3064 = vpop.permute.xlu0 %3063
  %3066 = vset.pattern.permute.xlu0 3
  %3067 = vperm.xlu0 %3066, %v2729
  %v3068 = vpop.permute.xlu0 %3067
  %3070 = vset.pattern.permute.xlu0 3
  %3071 = vperm.xlu0 %3070, %v2730
  %v3072 = vpop.permute.xlu0 %3071
  %3074 = vset.pattern.permute.xlu0 3
  %3075 = vperm.xlu0 %3074, %v2731
  %v3076 = vpop.permute.xlu0 %3075
  %3078 = vset.pattern.permute.xlu0 3
  %3079 = vperm.xlu0 %3078, %v2732
  %v3080 = vpop.permute.xlu0 %3079
  %3082 = vset.pattern.permute.xlu0 3
  %3083 = vperm.xlu0 %3082, %v2733
  %v3084 = vpop.permute.xlu0 %3083
  %v3086 = vmul.f32 %v3024, %v409
  %v3087 = vmul.f32 %v3028, %v409
  %v3088 = vmul.f32 %v3032, %v409
  %v3089 = vmul.f32 %v3036, %v409
  %v3090 = vmul.f32 %v3040, %v409
  %v3091 = vmul.f32 %v3044, %v409
  %v3092 = vmul.f32 %v3048, %v409
  %v3093 = vmul.f32 %v3052, %v409
  %v3094 = vmul.f32 %v3056, %v409
  %v3095 = vmul.f32 %v3060, %v409
  %v3096 = vmul.f32 %v3064, %v409
  %v3097 = vmul.f32 %v3068, %v409
  %v3098 = vmul.f32 %v3072, %v409
  %v3099 = vmul.f32 %v3076, %v409
  %v3100 = vmul.f32 %v3080, %v409
  %v3101 = vmul.f32 %v3084, %v409
  %v3102 = vadd.f32 %v3006, %v3086
  %v3103 = vadd.f32 %v3007, %v3087
  %v3104 = vadd.f32 %v3008, %v3088
  %v3105 = vadd.f32 %v3009, %v3089
  %v3106 = vadd.f32 %v3010, %v3090
  %v3107 = vadd.f32 %v3011, %v3091
  %v3108 = vadd.f32 %v3012, %v3092
  %v3109 = vadd.f32 %v3013, %v3093
  %v3110 = vadd.f32 %v3014, %v3094
  %v3111 = vadd.f32 %v3015, %v3095
  %v3112 = vadd.f32 %v3016, %v3096
  %v3113 = vadd.f32 %v3017, %v3097
  %v3114 = vadd.f32 %v3018, %v3098
  %v3115 = vadd.f32 %v3019, %v3099
  %v3116 = vadd.f32 %v3020, %v3100
  %v3117 = vadd.f32 %v3021, %v3101
  %3118 = vset.pattern.permute.xlu0 4
  %3119 = vperm.xlu0 %3118, %v2718
  %v3120 = vpop.permute.xlu0 %3119
  %3122 = vset.pattern.permute.xlu0 4
  %3123 = vperm.xlu0 %3122, %v2719
  %v3124 = vpop.permute.xlu0 %3123
  %3126 = vset.pattern.permute.xlu0 4
  %3127 = vperm.xlu0 %3126, %v2720
  %v3128 = vpop.permute.xlu0 %3127
  %3130 = vset.pattern.permute.xlu0 4
  %3131 = vperm.xlu0 %3130, %v2721
  %v3132 = vpop.permute.xlu0 %3131
  %3134 = vset.pattern.permute.xlu0 4
  %3135 = vperm.xlu0 %3134, %v2722
  %v3136 = vpop.permute.xlu0 %3135
  %3138 = vset.pattern.permute.xlu0 4
  %3139 = vperm.xlu0 %3138, %v2723
  %v3140 = vpop.permute.xlu0 %3139
  %3142 = vset.pattern.permute.xlu0 4
  %3143 = vperm.xlu0 %3142, %v2724
  %v3144 = vpop.permute.xlu0 %3143
  %3146 = vset.pattern.permute.xlu0 4
  %3147 = vperm.xlu0 %3146, %v2725
  %v3148 = vpop.permute.xlu0 %3147
  %3150 = vset.pattern.permute.xlu0 4
  %3151 = vperm.xlu0 %3150, %v2726
  %v3152 = vpop.permute.xlu0 %3151
  %3154 = vset.pattern.permute.xlu0 4
  %3155 = vperm.xlu0 %3154, %v2727
  %v3156 = vpop.permute.xlu0 %3155
  %3158 = vset.pattern.permute.xlu0 4
  %3159 = vperm.xlu0 %3158, %v2728
  %v3160 = vpop.permute.xlu0 %3159
  %3162 = vset.pattern.permute.xlu0 4
  %3163 = vperm.xlu0 %3162, %v2729
  %v3164 = vpop.permute.xlu0 %3163
  %3166 = vset.pattern.permute.xlu0 4
  %3167 = vperm.xlu0 %3166, %v2730
  %v3168 = vpop.permute.xlu0 %3167
  %3170 = vset.pattern.permute.xlu0 4
  %3171 = vperm.xlu0 %3170, %v2731
  %v3172 = vpop.permute.xlu0 %3171
  %3174 = vset.pattern.permute.xlu0 4
  %3175 = vperm.xlu0 %3174, %v2732
  %v3176 = vpop.permute.xlu0 %3175
  %3178 = vset.pattern.permute.xlu0 4
  %3179 = vperm.xlu0 %3178, %v2733
  %v3180 = vpop.permute.xlu0 %3179
  %v3182 = vmul.f32 %v3120, %v509
  %v3183 = vmul.f32 %v3124, %v509
  %v3184 = vmul.f32 %v3128, %v509
  %v3185 = vmul.f32 %v3132, %v509
  %v3186 = vmul.f32 %v3136, %v509
  %v3187 = vmul.f32 %v3140, %v509
  %v3188 = vmul.f32 %v3144, %v509
  %v3189 = vmul.f32 %v3148, %v509
  %v3190 = vmul.f32 %v3152, %v509
  %v3191 = vmul.f32 %v3156, %v509
  %v3192 = vmul.f32 %v3160, %v509
  %v3193 = vmul.f32 %v3164, %v509
  %v3194 = vmul.f32 %v3168, %v509
  %v3195 = vmul.f32 %v3172, %v509
  %v3196 = vmul.f32 %v3176, %v509
  %v3197 = vmul.f32 %v3180, %v509
  %v3198 = vadd.f32 %v3102, %v3182
  %v3199 = vadd.f32 %v3103, %v3183
  %v3200 = vadd.f32 %v3104, %v3184
  %v3201 = vadd.f32 %v3105, %v3185
  %v3202 = vadd.f32 %v3106, %v3186
  %v3203 = vadd.f32 %v3107, %v3187
  %v3204 = vadd.f32 %v3108, %v3188
  %v3205 = vadd.f32 %v3109, %v3189
  %v3206 = vadd.f32 %v3110, %v3190
  %v3207 = vadd.f32 %v3111, %v3191
  %v3208 = vadd.f32 %v3112, %v3192
  %v3209 = vadd.f32 %v3113, %v3193
  %v3210 = vadd.f32 %v3114, %v3194
  %v3211 = vadd.f32 %v3115, %v3195
  %v3212 = vadd.f32 %v3116, %v3196
  %v3213 = vadd.f32 %v3117, %v3197
  %3214 = vset.pattern.permute.xlu0 5
  %3215 = vperm.xlu0 %3214, %v2718
  %v3216 = vpop.permute.xlu0 %3215
  %3218 = vset.pattern.permute.xlu0 5
  %3219 = vperm.xlu0 %3218, %v2719
  %v3220 = vpop.permute.xlu0 %3219
  %3222 = vset.pattern.permute.xlu0 5
  %3223 = vperm.xlu0 %3222, %v2720
  %v3224 = vpop.permute.xlu0 %3223
  %3226 = vset.pattern.permute.xlu0 5
  %3227 = vperm.xlu0 %3226, %v2721
  %v3228 = vpop.permute.xlu0 %3227
  %3230 = vset.pattern.permute.xlu0 5
  %3231 = vperm.xlu0 %3230, %v2722
  %v3232 = vpop.permute.xlu0 %3231
  %3234 = vset.pattern.permute.xlu0 5
  %3235 = vperm.xlu0 %3234, %v2723
  %v3236 = vpop.permute.xlu0 %3235
  %3238 = vset.pattern.permute.xlu0 5
  %3239 = vperm.xlu0 %3238, %v2724
  %v3240 = vpop.permute.xlu0 %3239
  %3242 = vset.pattern.permute.xlu0 5
  %3243 = vperm.xlu0 %3242, %v2725
  %v3244 = vpop.permute.xlu0 %3243
  %3246 = vset.pattern.permute.xlu0 5
  %3247 = vperm.xlu0 %3246, %v2726
  %v3248 = vpop.permute.xlu0 %3247
  %3250 = vset.pattern.permute.xlu0 5
  %3251 = vperm.xlu0 %3250, %v2727
  %v3252 = vpop.permute.xlu0 %3251
  %3254 = vset.pattern.permute.xlu0 5
  %3255 = vperm.xlu0 %3254, %v2728
  %v3256 = vpop.permute.xlu0 %3255
  %3258 = vset.pattern.permute.xlu0 5
  %3259 = vperm.xlu0 %3258, %v2729
  %v3260 = vpop.permute.xlu0 %3259
  %3262 = vset.pattern.permute.xlu0 5
  %3263 = vperm.xlu0 %3262, %v2730
  %v3264 = vpop.permute.xlu0 %3263
  %3266 = vset.pattern.permute.xlu0 5
  %3267 = vperm.xlu0 %3266, %v2731
  %v3268 = vpop.permute.xlu0 %3267
  %3270 = vset.pattern.permute.xlu0 5
  %3271 = vperm.xlu0 %3270, %v2732
  %v3272 = vpop.permute.xlu0 %3271
  %3274 = vset.pattern.permute.xlu0 5
  %3275 = vperm.xlu0 %3274, %v2733
  %v3276 = vpop.permute.xlu0 %3275
  %v3278 = vmul.f32 %v3216, %v609
  %v3279 = vmul.f32 %v3220, %v609
  %v3280 = vmul.f32 %v3224, %v609
  %v3281 = vmul.f32 %v3228, %v609
  %v3282 = vmul.f32 %v3232, %v609
  %v3283 = vmul.f32 %v3236, %v609
  %v3284 = vmul.f32 %v3240, %v609
  %v3285 = vmul.f32 %v3244, %v609
  %v3286 = vmul.f32 %v3248, %v609
  %v3287 = vmul.f32 %v3252, %v609
  %v3288 = vmul.f32 %v3256, %v609
  %v3289 = vmul.f32 %v3260, %v609
  %v3290 = vmul.f32 %v3264, %v609
  %v3291 = vmul.f32 %v3268, %v609
  %v3292 = vmul.f32 %v3272, %v609
  %v3293 = vmul.f32 %v3276, %v609
  %v3294 = vadd.f32 %v3198, %v3278
  %v3295 = vadd.f32 %v3199, %v3279
  %v3296 = vadd.f32 %v3200, %v3280
  %v3297 = vadd.f32 %v3201, %v3281
  %v3298 = vadd.f32 %v3202, %v3282
  %v3299 = vadd.f32 %v3203, %v3283
  %v3300 = vadd.f32 %v3204, %v3284
  %v3301 = vadd.f32 %v3205, %v3285
  %v3302 = vadd.f32 %v3206, %v3286
  %v3303 = vadd.f32 %v3207, %v3287
  %v3304 = vadd.f32 %v3208, %v3288
  %v3305 = vadd.f32 %v3209, %v3289
  %v3306 = vadd.f32 %v3210, %v3290
  %v3307 = vadd.f32 %v3211, %v3291
  %v3308 = vadd.f32 %v3212, %v3292
  %v3309 = vadd.f32 %v3213, %v3293
  %3310 = vset.pattern.permute.xlu0 6
  %3311 = vperm.xlu0 %3310, %v2718
  %v3312 = vpop.permute.xlu0 %3311
  %3314 = vset.pattern.permute.xlu0 6
  %3315 = vperm.xlu0 %3314, %v2719
  %v3316 = vpop.permute.xlu0 %3315
  %3318 = vset.pattern.permute.xlu0 6
  %3319 = vperm.xlu0 %3318, %v2720
  %v3320 = vpop.permute.xlu0 %3319
  %3322 = vset.pattern.permute.xlu0 6
  %3323 = vperm.xlu0 %3322, %v2721
  %v3324 = vpop.permute.xlu0 %3323
  %3326 = vset.pattern.permute.xlu0 6
  %3327 = vperm.xlu0 %3326, %v2722
  %v3328 = vpop.permute.xlu0 %3327
  %3330 = vset.pattern.permute.xlu0 6
  %3331 = vperm.xlu0 %3330, %v2723
  %v3332 = vpop.permute.xlu0 %3331
  %3334 = vset.pattern.permute.xlu0 6
  %3335 = vperm.xlu0 %3334, %v2724
  %v3336 = vpop.permute.xlu0 %3335
  %3338 = vset.pattern.permute.xlu0 6
  %3339 = vperm.xlu0 %3338, %v2725
  %v3340 = vpop.permute.xlu0 %3339
  %3342 = vset.pattern.permute.xlu0 6
  %3343 = vperm.xlu0 %3342, %v2726
  %v3344 = vpop.permute.xlu0 %3343
  %3346 = vset.pattern.permute.xlu0 6
  %3347 = vperm.xlu0 %3346, %v2727
  %v3348 = vpop.permute.xlu0 %3347
  %3350 = vset.pattern.permute.xlu0 6
  %3351 = vperm.xlu0 %3350, %v2728
  %v3352 = vpop.permute.xlu0 %3351
  %3354 = vset.pattern.permute.xlu0 6
  %3355 = vperm.xlu0 %3354, %v2729
  %v3356 = vpop.permute.xlu0 %3355
  %3358 = vset.pattern.permute.xlu0 6
  %3359 = vperm.xlu0 %3358, %v2730
  %v3360 = vpop.permute.xlu0 %3359
  %3362 = vset.pattern.permute.xlu0 6
  %3363 = vperm.xlu0 %3362, %v2731
  %v3364 = vpop.permute.xlu0 %3363
  %3366 = vset.pattern.permute.xlu0 6
  %3367 = vperm.xlu0 %3366, %v2732
  %v3368 = vpop.permute.xlu0 %3367
  %3370 = vset.pattern.permute.xlu0 6
  %3371 = vperm.xlu0 %3370, %v2733
  %v3372 = vpop.permute.xlu0 %3371
  %v3374 = vmul.f32 %v3312, %v709
  %v3375 = vmul.f32 %v3316, %v709
  %v3376 = vmul.f32 %v3320, %v709
  %v3377 = vmul.f32 %v3324, %v709
  %v3378 = vmul.f32 %v3328, %v709
  %v3379 = vmul.f32 %v3332, %v709
  %v3380 = vmul.f32 %v3336, %v709
  %v3381 = vmul.f32 %v3340, %v709
  %v3382 = vmul.f32 %v3344, %v709
  %v3383 = vmul.f32 %v3348, %v709
  %v3384 = vmul.f32 %v3352, %v709
  %v3385 = vmul.f32 %v3356, %v709
  %v3386 = vmul.f32 %v3360, %v709
  %v3387 = vmul.f32 %v3364, %v709
  %v3388 = vmul.f32 %v3368, %v709
  %v3389 = vmul.f32 %v3372, %v709
  %v3390 = vadd.f32 %v3294, %v3374
  %v3391 = vadd.f32 %v3295, %v3375
  %v3392 = vadd.f32 %v3296, %v3376
  %v3393 = vadd.f32 %v3297, %v3377
  %v3394 = vadd.f32 %v3298, %v3378
  %v3395 = vadd.f32 %v3299, %v3379
  %v3396 = vadd.f32 %v3300, %v3380
  %v3397 = vadd.f32 %v3301, %v3381
  %v3398 = vadd.f32 %v3302, %v3382
  %v3399 = vadd.f32 %v3303, %v3383
  %v3400 = vadd.f32 %v3304, %v3384
  %v3401 = vadd.f32 %v3305, %v3385
  %v3402 = vadd.f32 %v3306, %v3386
  %v3403 = vadd.f32 %v3307, %v3387
  %v3404 = vadd.f32 %v3308, %v3388
  %v3405 = vadd.f32 %v3309, %v3389
  %3406 = vset.pattern.permute.xlu0 7
  %3407 = vperm.xlu0 %3406, %v2718
  %v3408 = vpop.permute.xlu0 %3407
  %3410 = vset.pattern.permute.xlu0 7
  %3411 = vperm.xlu0 %3410, %v2719
  %v3412 = vpop.permute.xlu0 %3411
  %3414 = vset.pattern.permute.xlu0 7
  %3415 = vperm.xlu0 %3414, %v2720
  %v3416 = vpop.permute.xlu0 %3415
  %3418 = vset.pattern.permute.xlu0 7
  %3419 = vperm.xlu0 %3418, %v2721
  %v3420 = vpop.permute.xlu0 %3419
  %3422 = vset.pattern.permute.xlu0 7
  %3423 = vperm.xlu0 %3422, %v2722
  %v3424 = vpop.permute.xlu0 %3423
  %3426 = vset.pattern.permute.xlu0 7
  %3427 = vperm.xlu0 %3426, %v2723
  %v3428 = vpop.permute.xlu0 %3427
  %3430 = vset.pattern.permute.xlu0 7
  %3431 = vperm.xlu0 %3430, %v2724
  %v3432 = vpop.permute.xlu0 %3431
  %3434 = vset.pattern.permute.xlu0 7
  %3435 = vperm.xlu0 %3434, %v2725
  %v3436 = vpop.permute.xlu0 %3435
  %3438 = vset.pattern.permute.xlu0 7
  %3439 = vperm.xlu0 %3438, %v2726
  %v3440 = vpop.permute.xlu0 %3439
  %3442 = vset.pattern.permute.xlu0 7
  %3443 = vperm.xlu0 %3442, %v2727
  %v3444 = vpop.permute.xlu0 %3443
  %3446 = vset.pattern.permute.xlu0 7
  %3447 = vperm.xlu0 %3446, %v2728
  %v3448 = vpop.permute.xlu0 %3447
  %3450 = vset.pattern.permute.xlu0 7
  %3451 = vperm.xlu0 %3450, %v2729
  %v3452 = vpop.permute.xlu0 %3451
  %3454 = vset.pattern.permute.xlu0 7
  %3455 = vperm.xlu0 %3454, %v2730
  %v3456 = vpop.permute.xlu0 %3455
  %3458 = vset.pattern.permute.xlu0 7
  %3459 = vperm.xlu0 %3458, %v2731
  %v3460 = vpop.permute.xlu0 %3459
  %3462 = vset.pattern.permute.xlu0 7
  %3463 = vperm.xlu0 %3462, %v2732
  %v3464 = vpop.permute.xlu0 %3463
  %3466 = vset.pattern.permute.xlu0 7
  %3467 = vperm.xlu0 %3466, %v2733
  %v3468 = vpop.permute.xlu0 %3467
  %v3470 = vmul.f32 %v3408, %v809
  %v3471 = vmul.f32 %v3412, %v809
  %v3472 = vmul.f32 %v3416, %v809
  %v3473 = vmul.f32 %v3420, %v809
  %v3474 = vmul.f32 %v3424, %v809
  %v3475 = vmul.f32 %v3428, %v809
  %v3476 = vmul.f32 %v3432, %v809
  %v3477 = vmul.f32 %v3436, %v809
  %v3478 = vmul.f32 %v3440, %v809
  %v3479 = vmul.f32 %v3444, %v809
  %v3480 = vmul.f32 %v3448, %v809
  %v3481 = vmul.f32 %v3452, %v809
  %v3482 = vmul.f32 %v3456, %v809
  %v3483 = vmul.f32 %v3460, %v809
  %v3484 = vmul.f32 %v3464, %v809
  %v3485 = vmul.f32 %v3468, %v809
  %v3486 = vadd.f32 %v3390, %v3470
  %v3487 = vadd.f32 %v3391, %v3471
  %v3488 = vadd.f32 %v3392, %v3472
  %v3489 = vadd.f32 %v3393, %v3473
  %v3490 = vadd.f32 %v3394, %v3474
  %v3491 = vadd.f32 %v3395, %v3475
  %v3492 = vadd.f32 %v3396, %v3476
  %v3493 = vadd.f32 %v3397, %v3477
  %v3494 = vadd.f32 %v3398, %v3478
  %v3495 = vadd.f32 %v3399, %v3479
  %v3496 = vadd.f32 %v3400, %v3480
  %v3497 = vadd.f32 %v3401, %v3481
  %v3498 = vadd.f32 %v3402, %v3482
  %v3499 = vadd.f32 %v3403, %v3483
  %v3500 = vadd.f32 %v3404, %v3484
  %v3501 = vadd.f32 %v3405, %v3485
  %3502 = vset.pattern.permute.xlu0 8
  %3503 = vperm.xlu0 %3502, %v2718
  %v3504 = vpop.permute.xlu0 %3503
  %3506 = vset.pattern.permute.xlu0 8
  %3507 = vperm.xlu0 %3506, %v2719
  %v3508 = vpop.permute.xlu0 %3507
  %3510 = vset.pattern.permute.xlu0 8
  %3511 = vperm.xlu0 %3510, %v2720
  %v3512 = vpop.permute.xlu0 %3511
  %3514 = vset.pattern.permute.xlu0 8
  %3515 = vperm.xlu0 %3514, %v2721
  %v3516 = vpop.permute.xlu0 %3515
  %3518 = vset.pattern.permute.xlu0 8
  %3519 = vperm.xlu0 %3518, %v2722
  %v3520 = vpop.permute.xlu0 %3519
  %3522 = vset.pattern.permute.xlu0 8
  %3523 = vperm.xlu0 %3522, %v2723
  %v3524 = vpop.permute.xlu0 %3523
  %3526 = vset.pattern.permute.xlu0 8
  %3527 = vperm.xlu0 %3526, %v2724
  %v3528 = vpop.permute.xlu0 %3527
  %3530 = vset.pattern.permute.xlu0 8
  %3531 = vperm.xlu0 %3530, %v2725
  %v3532 = vpop.permute.xlu0 %3531
  %3534 = vset.pattern.permute.xlu0 8
  %3535 = vperm.xlu0 %3534, %v2726
  %v3536 = vpop.permute.xlu0 %3535
  %3538 = vset.pattern.permute.xlu0 8
  %3539 = vperm.xlu0 %3538, %v2727
  %v3540 = vpop.permute.xlu0 %3539
  %3542 = vset.pattern.permute.xlu0 8
  %3543 = vperm.xlu0 %3542, %v2728
  %v3544 = vpop.permute.xlu0 %3543
  %3546 = vset.pattern.permute.xlu0 8
  %3547 = vperm.xlu0 %3546, %v2729
  %v3548 = vpop.permute.xlu0 %3547
  %3550 = vset.pattern.permute.xlu0 8
  %3551 = vperm.xlu0 %3550, %v2730
  %v3552 = vpop.permute.xlu0 %3551
  %3554 = vset.pattern.permute.xlu0 8
  %3555 = vperm.xlu0 %3554, %v2731
  %v3556 = vpop.permute.xlu0 %3555
  %3558 = vset.pattern.permute.xlu0 8
  %3559 = vperm.xlu0 %3558, %v2732
  %v3560 = vpop.permute.xlu0 %3559
  %3562 = vset.pattern.permute.xlu0 8
  %3563 = vperm.xlu0 %3562, %v2733
  %v3564 = vpop.permute.xlu0 %3563
  %v3566 = vmul.f32 %v3504, %v909
  %v3567 = vmul.f32 %v3508, %v909
  %v3568 = vmul.f32 %v3512, %v909
  %v3569 = vmul.f32 %v3516, %v909
  %v3570 = vmul.f32 %v3520, %v909
  %v3571 = vmul.f32 %v3524, %v909
  %v3572 = vmul.f32 %v3528, %v909
  %v3573 = vmul.f32 %v3532, %v909
  %v3574 = vmul.f32 %v3536, %v909
  %v3575 = vmul.f32 %v3540, %v909
  %v3576 = vmul.f32 %v3544, %v909
  %v3577 = vmul.f32 %v3548, %v909
  %v3578 = vmul.f32 %v3552, %v909
  %v3579 = vmul.f32 %v3556, %v909
  %v3580 = vmul.f32 %v3560, %v909
  %v3581 = vmul.f32 %v3564, %v909
  %v3582 = vadd.f32 %v3486, %v3566
  %v3583 = vadd.f32 %v3487, %v3567
  %v3584 = vadd.f32 %v3488, %v3568
  %v3585 = vadd.f32 %v3489, %v3569
  %v3586 = vadd.f32 %v3490, %v3570
  %v3587 = vadd.f32 %v3491, %v3571
  %v3588 = vadd.f32 %v3492, %v3572
  %v3589 = vadd.f32 %v3493, %v3573
  %v3590 = vadd.f32 %v3494, %v3574
  %v3591 = vadd.f32 %v3495, %v3575
  %v3592 = vadd.f32 %v3496, %v3576
  %v3593 = vadd.f32 %v3497, %v3577
  %v3594 = vadd.f32 %v3498, %v3578
  %v3595 = vadd.f32 %v3499, %v3579
  %v3596 = vadd.f32 %v3500, %v3580
  %v3597 = vadd.f32 %v3501, %v3581
  %v3598 = vmax.f32 %v2702, %v3582
  %v3599 = vmax.f32 %v2703, %v3583
  %v3600 = vmax.f32 %v2704, %v3584
  %v3601 = vmax.f32 %v2705, %v3585
  %v3602 = vmax.f32 %v2706, %v3586
  %v3603 = vmax.f32 %v2707, %v3587
  %v3604 = vmax.f32 %v2708, %v3588
  %v3605 = vmax.f32 %v2709, %v3589
  %v3606 = vmax.f32 %v2710, %v3590
  %v3607 = vmax.f32 %v2711, %v3591
  %v3608 = vmax.f32 %v2712, %v3592
  %v3609 = vmax.f32 %v2713, %v3593
  %v3610 = vmax.f32 %v2714, %v3594
  %v3611 = vmax.f32 %v2715, %v3595
  %v3612 = vmax.f32 %v2716, %v3596
  %v3613 = vmax.f32 %v2717, %v3597
  %v3614 = vmax.f32 %v1822, %v3598
  %v3615 = vmax.f32 %v1823, %v3599
  %v3616 = vmax.f32 %v1824, %v3600
  %v3617 = vmax.f32 %v1825, %v3601
  %v3618 = vmax.f32 %v1826, %v3602
  %v3619 = vmax.f32 %v1827, %v3603
  %v3620 = vmax.f32 %v1828, %v3604
  %v3621 = vmax.f32 %v1829, %v3605
  %v3622 = vmax.f32 %v1830, %v3606
  %v3623 = vmax.f32 %v1831, %v3607
  %v3624 = vmax.f32 %v1832, %v3608
  %v3625 = vmax.f32 %v1833, %v3609
  %v3626 = vmax.f32 %v1834, %v3610
  %v3627 = vmax.f32 %v1835, %v3611
  %v3628 = vmax.f32 %v1836, %v3612
  %v3629 = vmax.f32 %v1837, %v3613
  %v3631 = vlaneseq
  %v3632 = vshrl.u32 %v3631, 7
  %v3633 = vsub.s32 0, %v3632
  %v3634 = vrot.slane %v25, %v3633
  %v3636 = vadd.f32 %v3614, %v3634
  %v3637 = vadd.f32 %v3615, %v3634
  %v3638 = vadd.f32 %v3616, %v3634
  %v3639 = vadd.f32 %v3617, %v3634
  %v3640 = vadd.f32 %v3618, %v3634
  %v3641 = vadd.f32 %v3619, %v3634
  %v3642 = vadd.f32 %v3620, %v3634
  %v3643 = vadd.f32 %v3621, %v3634
  %v3644 = vadd.f32 %v3622, %v3634
  %v3645 = vadd.f32 %v3623, %v3634
  %v3646 = vadd.f32 %v3624, %v3634
  %v3647 = vadd.f32 %v3625, %v3634
  %v3648 = vadd.f32 %v3626, %v3634
  %v3649 = vadd.f32 %v3627, %v3634
  %v3650 = vadd.f32 %v3628, %v3634
  %v3651 = vadd.f32 %v3629, %v3634
  %v3652 = vmax.f32 %v3636, 0.0
  %v3653 = vmax.f32 %v3637, 0.0
  %v3654 = vmax.f32 %v3638, 0.0
  %v3655 = vmax.f32 %v3639, 0.0
  %v3656 = vmax.f32 %v3640, 0.0
  %v3657 = vmax.f32 %v3641, 0.0
  %v3658 = vmax.f32 %v3642, 0.0
  %v3659 = vmax.f32 %v3643, 0.0
  %v3660 = vmax.f32 %v3644, 0.0
  %v3661 = vmax.f32 %v3645, 0.0
  %v3662 = vmax.f32 %v3646, 0.0
  %v3663 = vmax.f32 %v3647, 0.0
  %v3664 = vmax.f32 %v3648, 0.0
  %v3665 = vmax.f32 %v3649, 0.0
  %v3666 = vmax.f32 %v3650, 0.0
  %v3667 = vmax.f32 %v3651, 0.0
  %v3668 = vpack.c.bf16 %v3653, %v3652
  %v3669 = vpack.c.bf16 %v3655, %v3654
  %v3670 = vpack.c.bf16 %v3657, %v3656
  %v3671 = vpack.c.bf16 %v3659, %v3658
  %v3672 = vpack.c.bf16 %v3661, %v3660
  %v3673 = vpack.c.bf16 %v3663, %v3662
  %v3674 = vpack.c.bf16 %v3665, %v3664
  %v3675 = vpack.c.bf16 %v3667, %v3666
  %v3684 = vunpack.c.l.b16 %v3668
  %v3685 = vunpack.c.h.b16 %v3668
  %v3686 = vunpack.c.l.b16 %v3669
  %v3687 = vunpack.c.h.b16 %v3669
  %v3688 = vunpack.c.l.b16 %v3670
  %v3689 = vunpack.c.h.b16 %v3670
  %v3690 = vunpack.c.l.b16 %v3671
  %v3691 = vunpack.c.h.b16 %v3671
  %v3692 = vunpack.c.l.b16 %v3672
  %v3693 = vunpack.c.h.b16 %v3672
  %v3694 = vunpack.c.l.b16 %v3673
  %v3695 = vunpack.c.h.b16 %v3673
  %v3696 = vunpack.c.l.b16 %v3674
  %v3697 = vunpack.c.h.b16 %v3674
  %v3698 = vunpack.c.l.b16 %v3675
  %v3699 = vunpack.c.h.b16 %v3675
  %v3700 = vpack.c.b16 %v3684, %v3684
  %v3701 = vpack.c.b16 %v3685, %v3685
  %v3702 = vpack.c.b16 %v3686, %v3686
  %v3703 = vpack.c.b16 %v3687, %v3687
  %v3704 = vpack.c.b16 %v3688, %v3688
  %v3705 = vpack.c.b16 %v3689, %v3689
  %v3706 = vpack.c.b16 %v3690, %v3690
  %v3707 = vpack.c.b16 %v3691, %v3691
  %v3708 = vpack.c.b16 %v3692, %v3692
  %v3709 = vpack.c.b16 %v3693, %v3693
  %v3710 = vpack.c.b16 %v3694, %v3694
  %v3711 = vpack.c.b16 %v3695, %v3695
  %v3712 = vpack.c.b16 %v3696, %v3696
  %v3713 = vpack.c.b16 %v3697, %v3697
  %v3714 = vpack.c.b16 %v3698, %v3698
  %v3715 = vpack.c.b16 %v3699, %v3699
  %vm3732 = vcmask 257024
  %3733 = vst.msk [vmem:[%s6] sm:$0xf] %vm3732, %v3700
  %3734 = vst.msk [vmem:[%s6 + $0x4] sm:$0xf] %vm3732, %v3701
  %3735 = vst.msk [vmem:[%s6 + $0x8] sm:$0xf] %vm3732, %v3702
  %3736 = vst.msk [vmem:[%s6 + $0xc] sm:$0xf] %vm3732, %v3703
  %3737 = vst.msk [vmem:[%s6 + $0x10] sm:$0xf] %vm3732, %v3704
  %3738 = vst.msk [vmem:[%s6 + $0x14] sm:$0xf] %vm3732, %v3705
  %3739 = vst.msk [vmem:[%s6 + $0x18] sm:$0xf] %vm3732, %v3706
  %3740 = vst.msk [vmem:[%s6 + $0x1c] sm:$0xf] %vm3732, %v3707
  %3741 = vst.msk [vmem:[%s6 + $0x20] sm:$0xf] %vm3732, %v3708
  %3742 = vst.msk [vmem:[%s6 + $0x24] sm:$0xf] %vm3732, %v3709
  %3743 = vst.msk [vmem:[%s6 + $0x28] sm:$0xf] %vm3732, %v3710
  %3744 = vst.msk [vmem:[%s6 + $0x2c] sm:$0xf] %vm3732, %v3711
  %3745 = vst.msk [vmem:[%s6 + $0x30] sm:$0xf] %vm3732, %v3712
  %3746 = vst.msk [vmem:[%s6 + $0x34] sm:$0xf] %vm3732, %v3713
  %3747 = vst.msk [vmem:[%s6 + $0x38] sm:$0xf] %vm3732, %v3714
  %3748 = vst.msk [vmem:[%s6 + $0x3c] sm:$0xf] %vm3732, %v3715
  // Predicated region
  $region26: #{convnet_forward.3} parent=0 // pred_check
    _
  $region27: #{convnet_forward.3} parent=0 // pred_check_branch
    %3750 = sbr.rel (0) target = $region29
  $region28: #{convnet_forward.3} parent=0 // pred_region
    _
  $region29: #{convnet_forward.3} parent=0 // pred_fallthru
    _
  // Predicated region
  $region30: #{convnet_forward.3} parent=0 // pred_check
    _
  $region31: #{convnet_forward.3} parent=0 // pred_check_branch
    %3752 = sbr.rel (0) target = $region33
  $region32: #{convnet_forward.3} parent=0 // pred_region
    _
  $region33: #{convnet_forward.3} parent=0 // pred_fallthru
    _

// kernel: convnet_forward.5
$region0: #{convnet_forward.5}
  #allocation0 [shape = 'u32[]', space=smem, size = 0x4, offset = 0x4, fixed_abs, tag = 'smem constant byte address 0x4 - core index']
  #allocation1 [shape = 'u32[144,128]{1,0:T(1,128)}', space=vmem, size = 0x12000, scoped, tag = 'internal scratch']
  %s0 = inlined_call_operand.vmem [shape: bf16[2,576], index: 0, kind: input, shape index: {}]
  %s1 = inlined_call_operand.vmem [shape: bf16[576,1024], index: 1, kind: input, shape index: {}]
  %s2 = inlined_call_operand.vmem [shape: f32[1,1024], index: 2, kind: input, shape index: {}]
  %s3 = inlined_call_operand.vmem [shape: bf16[1024,128], index: 3, kind: input, shape index: {}]
  %s4 = inlined_call_operand.vmem [shape: f32[1,128], index: 4, kind: input, shape index: {}]
  %s5 = inlined_call_operand.hbm [shape: f32[2,128], index: 5, kind: output, shape index: {}]
  %s6 = sld [smem:[#allocation0]]
  $region30: #{convnet_forward.5} parent=0
    _
  %s8 = ssub.s32 1, %s6
  %s9 = scalar_select 0, %s8, %s6
  $region1: #{convnet_forward.5} parent=0
    #allocation2 [shape = 'u8[1024]{0}', space=vmem, size = 0x400, scoped, tag = 'output window, operand 0, single buffered']
    #allocation3 [shape = 's32[1]{0}', space=sflag, size = 0x4, scoped, tag = 'scoped memory for convnet_forward.5']
    %10 = vsyncpa [#allocation3], 0
    // Predicated region
    $region2: #{convnet_forward.5} parent=1 // pred_check
      _
    $region3: #{convnet_forward.5} parent=1 // pred_check_branch
      %12 = sbr.rel (0) target = $region5
    $region4: #{convnet_forward.5} parent=1 // pred_region
      _
    $region5: #{convnet_forward.5} parent=1 // pred_fallthru
      _
    // Predicated region
    $region6: #{convnet_forward.5} parent=1 // pred_check
      _
    $region7: #{convnet_forward.5} parent=1 // pred_check_branch
      %14 = sbr.rel (0) target = $region9
    $region8: #{convnet_forward.5} parent=1 // pred_region
      _
    $region9: #{convnet_forward.5} parent=1 // pred_fallthru
      _
    // Predicated region
    $region10: #{convnet_forward.5} parent=1 // pred_check
      _
    $region11: #{convnet_forward.5} parent=1 // pred_check_branch
      %16 = sbr.rel (0) target = $region13
    $region12: #{convnet_forward.5} parent=1 // pred_region
      _
    $region13: #{convnet_forward.5} parent=1 // pred_fallthru
      _
    // Predicated region
    $region14: #{convnet_forward.5} parent=1 // pred_check
      _
    $region15: #{convnet_forward.5} parent=1 // pred_check_branch
      %18 = sbr.rel (0) target = $region17
    $region16: #{convnet_forward.5} parent=1 // pred_region
      _
    $region17: #{convnet_forward.5} parent=1 // pred_fallthru
      _
    // Predicated region
    $region18: #{convnet_forward.5} parent=1 // pred_check
      _
    $region19: #{convnet_forward.5} parent=1 // pred_check_branch
      %20 = sbr.rel (0) target = $region21
    $region20: #{convnet_forward.5} parent=1 // pred_region
      _
    $region21: #{convnet_forward.5} parent=1 // pred_fallthru
      _
    %v22 = vld [vmem:[%s0] sm:$0x1f]
    %v23 = vld [vmem:[%s1] sm:$0xff]
    %v24 = vld [vmem:[%s1 + $0x8] sm:$0xff]
    %v25 = vld [vmem:[%s1 + $0x10] sm:$0xff]
    %v26 = vld [vmem:[%s1 + $0x18] sm:$0xff]
    %v27 = vld [vmem:[%s1 + $0x20] sm:$0xff]
    %v28 = vld [vmem:[%s1 + $0x28] sm:$0xff]
    %v29 = vld [vmem:[%s1 + $0x30] sm:$0xff]
    %v30 = vld [vmem:[%s1 + $0x38] sm:$0xff]
    %v31 = vld [vmem:[%s1 + $0x40] sm:$0xff]
    %v32 = vld [vmem:[%s1 + $0x48] sm:$0xff]
    %v33 = vld [vmem:[%s1 + $0x50] sm:$0xff]
    %v34 = vld [vmem:[%s1 + $0x58] sm:$0xff]
    %v35 = vld [vmem:[%s1 + $0x60] sm:$0xff]
    %v36 = vld [vmem:[%s1 + $0x68] sm:$0xff]
    %v37 = vld [vmem:[%s1 + $0x70] sm:$0xff]
    %v38 = vld [vmem:[%s1 + $0x78] sm:$0xff]
    %v39 = vld [vmem:[%s1 + $0x80] sm:$0xff]
    %v40 = vld [vmem:[%s1 + $0x88] sm:$0xff]
    %v41 = vld [vmem:[%s1 + $0x90] sm:$0xff]
    %v42 = vld [vmem:[%s1 + $0x98] sm:$0xff]
    %v43 = vld [vmem:[%s1 + $0xa0] sm:$0xff]
    %v44 = vld [vmem:[%s1 + $0xa8] sm:$0xff]
    %v45 = vld [vmem:[%s1 + $0xb0] sm:$0xff]
    %v46 = vld [vmem:[%s1 + $0xb8] sm:$0xff]
    %v47 = vld [vmem:[%s1 + $0xc0] sm:$0xff]
    %v48 = vld [vmem:[%s1 + $0xc8] sm:$0xff]
    %v49 = vld [vmem:[%s1 + $0xd0] sm:$0xff]
    %v50 = vld [vmem:[%s1 + $0xd8] sm:$0xff]
    %v51 = vld [vmem:[%s1 + $0xe0] sm:$0xff]
    %v52 = vld [vmem:[%s1 + $0xe8] sm:$0xff]
    %v53 = vld [vmem:[%s1 + $0xf0] sm:$0xff]
    %v54 = vld [vmem:[%s1 + $0xf8] sm:$0xff]
    %v55 = vld [vmem:[%s1 + $0x100] sm:$0xff]
    %v56 = vld [vmem:[%s1 + $0x108] sm:$0xff]
    %v57 = vld [vmem:[%s1 + $0x110] sm:$0xff]
    %v58 = vld [vmem:[%s1 + $0x118] sm:$0xff]
    %v59 = vld [vmem:[%s1 + $0x120] sm:$0xff]
    %v60 = vld [vmem:[%s1 + $0x128] sm:$0xff]
    %v61 = vld [vmem:[%s1 + $0x130] sm:$0xff]
    %v62 = vld [vmem:[%s1 + $0x138] sm:$0xff]
    %v63 = vld [vmem:[%s1 + $0x140] sm:$0xff]
    %v64 = vld [vmem:[%s1 + $0x148] sm:$0xff]
    %v65 = vld [vmem:[%s1 + $0x150] sm:$0xff]
    %v66 = vld [vmem:[%s1 + $0x158] sm:$0xff]
    %v67 = vld [vmem:[%s1 + $0x160] sm:$0xff]
    %v68 = vld [vmem:[%s1 + $0x168] sm:$0xff]
    %v69 = vld [vmem:[%s1 + $0x170] sm:$0xff]
    %v70 = vld [vmem:[%s1 + $0x178] sm:$0xff]
    %v71 = vld [vmem:[%s1 + $0x180] sm:$0xff]
    %v72 = vld [vmem:[%s1 + $0x188] sm:$0xff]
    %v73 = vld [vmem:[%s1 + $0x190] sm:$0xff]
    %v74 = vld [vmem:[%s1 + $0x198] sm:$0xff]
    %v75 = vld [vmem:[%s1 + $0x1a0] sm:$0xff]
    %v76 = vld [vmem:[%s1 + $0x1a8] sm:$0xff]
    %v77 = vld [vmem:[%s1 + $0x1b0] sm:$0xff]
    %v78 = vld [vmem:[%s1 + $0x1b8] sm:$0xff]
    %v79 = vld [vmem:[%s1 + $0x1c0] sm:$0xff]
    %v80 = vld [vmem:[%s1 + $0x1c8] sm:$0xff]
    %v81 = vld [vmem:[%s1 + $0x1d0] sm:$0xff]
    %v82 = vld [vmem:[%s1 + $0x1d8] sm:$0xff]
    %v83 = vld [vmem:[%s1 + $0x1e0] sm:$0xff]
    %v84 = vld [vmem:[%s1 + $0x1e8] sm:$0xff]
    %v85 = vld [vmem:[%s1 + $0x1f0] sm:$0xff]
    %v86 = vld [vmem:[%s1 + $0x1f8] sm:$0xff]
    %v87 = vld [vmem:[%s1 + $0x200] sm:$0xff]
    %v88 = vld [vmem:[%s1 + $0x208] sm:$0xff]
    %v89 = vld [vmem:[%s1 + $0x210] sm:$0xff]
    %v90 = vld [vmem:[%s1 + $0x218] sm:$0xff]
    %v91 = vld [vmem:[%s1 + $0x220] sm:$0xff]
    %v92 = vld [vmem:[%s1 + $0x228] sm:$0xff]
    %v93 = vld [vmem:[%s1 + $0x230] sm:$0xff]
    %v94 = vld [vmem:[%s1 + $0x238] sm:$0xff]
    %v95 = vld [vmem:[%s1 + $0x240] sm:$0xff]
    %v96 = vld [vmem:[%s1 + $0x248] sm:$0xff]
    %v97 = vld [vmem:[%s1 + $0x250] sm:$0xff]
    %v98 = vld [vmem:[%s1 + $0x258] sm:$0xff]
    %v99 = vld [vmem:[%s1 + $0x260] sm:$0xff]
    %v100 = vld [vmem:[%s1 + $0x268] sm:$0xff]
    %v101 = vld [vmem:[%s1 + $0x270] sm:$0xff]
    %v102 = vld [vmem:[%s1 + $0x278] sm:$0xff]
    %v103 = vld [vmem:[%s1 + $0x280] sm:$0xff]
    %v104 = vld [vmem:[%s1 + $0x288] sm:$0xff]
    %v105 = vld [vmem:[%s1 + $0x290] sm:$0xff]
    %v106 = vld [vmem:[%s1 + $0x298] sm:$0xff]
    %v107 = vld [vmem:[%s1 + $0x2a0] sm:$0xff]
    %v108 = vld [vmem:[%s1 + $0x2a8] sm:$0xff]
    %v109 = vld [vmem:[%s1 + $0x2b0] sm:$0xff]
    %v110 = vld [vmem:[%s1 + $0x2b8] sm:$0xff]
    %v111 = vld [vmem:[%s1 + $0x2c0] sm:$0xff]
    %v112 = vld [vmem:[%s1 + $0x2c8] sm:$0xff]
    %v113 = vld [vmem:[%s1 + $0x2d0] sm:$0xff]
    %v114 = vld [vmem:[%s1 + $0x2d8] sm:$0xff]
    %v115 = vld [vmem:[%s1 + $0x2e0] sm:$0xff]
    %v116 = vld [vmem:[%s1 + $0x2e8] sm:$0xff]
    %v117 = vld [vmem:[%s1 + $0x2f0] sm:$0xff]
    %v118 = vld [vmem:[%s1 + $0x2f8] sm:$0xff]
    %v119 = vld [vmem:[%s1 + $0x300] sm:$0xff]
    %v120 = vld [vmem:[%s1 + $0x308] sm:$0xff]
    %v121 = vld [vmem:[%s1 + $0x310] sm:$0xff]
    %v122 = vld [vmem:[%s1 + $0x318] sm:$0xff]
    %v123 = vld [vmem:[%s1 + $0x320] sm:$0xff]
    %v124 = vld [vmem:[%s1 + $0x328] sm:$0xff]
    %v125 = vld [vmem:[%s1 + $0x330] sm:$0xff]
    %v126 = vld [vmem:[%s1 + $0x338] sm:$0xff]
    %v127 = vld [vmem:[%s1 + $0x340] sm:$0xff]
    %v128 = vld [vmem:[%s1 + $0x348] sm:$0xff]
    %v129 = vld [vmem:[%s1 + $0x350] sm:$0xff]
    %v130 = vld [vmem:[%s1 + $0x358] sm:$0xff]
    %v131 = vld [vmem:[%s1 + $0x360] sm:$0xff]
    %v132 = vld [vmem:[%s1 + $0x368] sm:$0xff]
    %v133 = vld [vmem:[%s1 + $0x370] sm:$0xff]
    %v134 = vld [vmem:[%s1 + $0x378] sm:$0xff]
    %v135 = vld [vmem:[%s1 + $0x380] sm:$0xff]
    %v136 = vld [vmem:[%s1 + $0x388] sm:$0xff]
    %v137 = vld [vmem:[%s1 + $0x390] sm:$0xff]
    %v138 = vld [vmem:[%s1 + $0x398] sm:$0xff]
    %v139 = vld [vmem:[%s1 + $0x3a0] sm:$0xff]
    %v140 = vld [vmem:[%s1 + $0x3a8] sm:$0xff]
    %v141 = vld [vmem:[%s1 + $0x3b0] sm:$0xff]
    %v142 = vld [vmem:[%s1 + $0x3b8] sm:$0xff]
    %v143 = vld [vmem:[%s1 + $0x3c0] sm:$0xff]
    %v144 = vld [vmem:[%s1 + $0x3c8] sm:$0xff]
    %v145 = vld [vmem:[%s1 + $0x3d0] sm:$0xff]
    %v146 = vld [vmem:[%s1 + $0x3d8] sm:$0xff]
    %v147 = vld [vmem:[%s1 + $0x3e0] sm:$0xff]
    %v148 = vld [vmem:[%s1 + $0x3e8] sm:$0xff]
    %v149 = vld [vmem:[%s1 + $0x3f0] sm:$0xff]
    %v150 = vld [vmem:[%s1 + $0x3f8] sm:$0xff]
    %v151 = vld [vmem:[%s1 + $0x400] sm:$0xff]
    %v152 = vld [vmem:[%s1 + $0x408] sm:$0xff]
    %v153 = vld [vmem:[%s1 + $0x410] sm:$0xff]
    %v154 = vld [vmem:[%s1 + $0x418] sm:$0xff]
    %v155 = vld [vmem:[%s1 + $0x420] sm:$0xff]
    %v156 = vld [vmem:[%s1 + $0x428] sm:$0xff]
    %v157 = vld [vmem:[%s1 + $0x430] sm:$0xff]
    %v158 = vld [vmem:[%s1 + $0x438] sm:$0xff]
    %v159 = vld [vmem:[%s1 + $0x440] sm:$0xff]
    %v160 = vld [vmem:[%s1 + $0x448] sm:$0xff]
    %v161 = vld [vmem:[%s1 + $0x450] sm:$0xff]
    %v162 = vld [vmem:[%s1 + $0x458] sm:$0xff]
    %v163 = vld [vmem:[%s1 + $0x460] sm:$0xff]
    %v164 = vld [vmem:[%s1 + $0x468] sm:$0xff]
    %v165 = vld [vmem:[%s1 + $0x470] sm:$0xff]
    %v166 = vld [vmem:[%s1 + $0x478] sm:$0xff]
    %v167 = vld [vmem:[%s1 + $0x480] sm:$0xff]
    %v168 = vld [vmem:[%s1 + $0x488] sm:$0xff]
    %v169 = vld [vmem:[%s1 + $0x490] sm:$0xff]
    %v170 = vld [vmem:[%s1 + $0x498] sm:$0xff]
    %v171 = vld [vmem:[%s1 + $0x4a0] sm:$0xff]
    %v172 = vld [vmem:[%s1 + $0x4a8] sm:$0xff]
    %v173 = vld [vmem:[%s1 + $0x4b0] sm:$0xff]
    %v174 = vld [vmem:[%s1 + $0x4b8] sm:$0xff]
    %v175 = vld [vmem:[%s1 + $0x4c0] sm:$0xff]
    %v176 = vld [vmem:[%s1 + $0x4c8] sm:$0xff]
    %v177 = vld [vmem:[%s1 + $0x4d0] sm:$0xff]
    %v178 = vld [vmem:[%s1 + $0x4d8] sm:$0xff]
    %v179 = vld [vmem:[%s1 + $0x4e0] sm:$0xff]
    %v180 = vld [vmem:[%s1 + $0x4e8] sm:$0xff]
    %v181 = vld [vmem:[%s1 + $0x4f0] sm:$0xff]
    %v182 = vld [vmem:[%s1 + $0x4f8] sm:$0xff]
    %v183 = vld [vmem:[%s1 + $0x500] sm:$0xff]
    %v184 = vld [vmem:[%s1 + $0x508] sm:$0xff]
    %v185 = vld [vmem:[%s1 + $0x510] sm:$0xff]
    %v186 = vld [vmem:[%s1 + $0x518] sm:$0xff]
    %v187 = vld [vmem:[%s1 + $0x520] sm:$0xff]
    %v188 = vld [vmem:[%s1 + $0x528] sm:$0xff]
    %v189 = vld [vmem:[%s1 + $0x530] sm:$0xff]
    %v190 = vld [vmem:[%s1 + $0x538] sm:$0xff]
    %v191 = vld [vmem:[%s1 + $0x540] sm:$0xff]
    %v192 = vld [vmem:[%s1 + $0x548] sm:$0xff]
    %v193 = vld [vmem:[%s1 + $0x550] sm:$0xff]
    %v194 = vld [vmem:[%s1 + $0x558] sm:$0xff]
    %v195 = vld [vmem:[%s1 + $0x560] sm:$0xff]
    %v196 = vld [vmem:[%s1 + $0x568] sm:$0xff]
    %v197 = vld [vmem:[%s1 + $0x570] sm:$0xff]
    %v198 = vld [vmem:[%s1 + $0x578] sm:$0xff]
    %v199 = vld [vmem:[%s1 + $0x580] sm:$0xff]
    %v200 = vld [vmem:[%s1 + $0x588] sm:$0xff]
    %v201 = vld [vmem:[%s1 + $0x590] sm:$0xff]
    %v202 = vld [vmem:[%s1 + $0x598] sm:$0xff]
    %v203 = vld [vmem:[%s1 + $0x5a0] sm:$0xff]
    %v204 = vld [vmem:[%s1 + $0x5a8] sm:$0xff]
    %v205 = vld [vmem:[%s1 + $0x5b0] sm:$0xff]
    %v206 = vld [vmem:[%s1 + $0x5b8] sm:$0xff]
    %v207 = vld [vmem:[%s1 + $0x5c0] sm:$0xff]
    %v208 = vld [vmem:[%s1 + $0x5c8] sm:$0xff]
    %v209 = vld [vmem:[%s1 + $0x5d0] sm:$0xff]
    %v210 = vld [vmem:[%s1 + $0x5d8] sm:$0xff]
    %v211 = vld [vmem:[%s1 + $0x5e0] sm:$0xff]
    %v212 = vld [vmem:[%s1 + $0x5e8] sm:$0xff]
    %v213 = vld [vmem:[%s1 + $0x5f0] sm:$0xff]
    %v214 = vld [vmem:[%s1 + $0x5f8] sm:$0xff]
    %v215 = vld [vmem:[%s1 + $0x600] sm:$0xff]
    %v216 = vld [vmem:[%s1 + $0x608] sm:$0xff]
    %v217 = vld [vmem:[%s1 + $0x610] sm:$0xff]
    %v218 = vld [vmem:[%s1 + $0x618] sm:$0xff]
    %v219 = vld [vmem:[%s1 + $0x620] sm:$0xff]
    %v220 = vld [vmem:[%s1 + $0x628] sm:$0xff]
    %v221 = vld [vmem:[%s1 + $0x630] sm:$0xff]
    %v222 = vld [vmem:[%s1 + $0x638] sm:$0xff]
    %v223 = vld [vmem:[%s1 + $0x640] sm:$0xff]
    %v224 = vld [vmem:[%s1 + $0x648] sm:$0xff]
    %v225 = vld [vmem:[%s1 + $0x650] sm:$0xff]
    %v226 = vld [vmem:[%s1 + $0x658] sm:$0xff]
    %v227 = vld [vmem:[%s1 + $0x660] sm:$0xff]
    %v228 = vld [vmem:[%s1 + $0x668] sm:$0xff]
    %v229 = vld [vmem:[%s1 + $0x670] sm:$0xff]
    %v230 = vld [vmem:[%s1 + $0x678] sm:$0xff]
    %v231 = vld [vmem:[%s1 + $0x680] sm:$0xff]
    %v232 = vld [vmem:[%s1 + $0x688] sm:$0xff]
    %v233 = vld [vmem:[%s1 + $0x690] sm:$0xff]
    %v234 = vld [vmem:[%s1 + $0x698] sm:$0xff]
    %v235 = vld [vmem:[%s1 + $0x6a0] sm:$0xff]
    %v236 = vld [vmem:[%s1 + $0x6a8] sm:$0xff]
    %v237 = vld [vmem:[%s1 + $0x6b0] sm:$0xff]
    %v238 = vld [vmem:[%s1 + $0x6b8] sm:$0xff]
    %v239 = vld [vmem:[%s1 + $0x6c0] sm:$0xff]
    %v240 = vld [vmem:[%s1 + $0x6c8] sm:$0xff]
    %v241 = vld [vmem:[%s1 + $0x6d0] sm:$0xff]
    %v242 = vld [vmem:[%s1 + $0x6d8] sm:$0xff]
    %v243 = vld [vmem:[%s1 + $0x6e0] sm:$0xff]
    %v244 = vld [vmem:[%s1 + $0x6e8] sm:$0xff]
    %v245 = vld [vmem:[%s1 + $0x6f0] sm:$0xff]
    %v246 = vld [vmem:[%s1 + $0x6f8] sm:$0xff]
    %v247 = vld [vmem:[%s1 + $0x700] sm:$0xff]
    %v248 = vld [vmem:[%s1 + $0x708] sm:$0xff]
    %v249 = vld [vmem:[%s1 + $0x710] sm:$0xff]
    %v250 = vld [vmem:[%s1 + $0x718] sm:$0xff]
    %v251 = vld [vmem:[%s1 + $0x720] sm:$0xff]
    %v252 = vld [vmem:[%s1 + $0x728] sm:$0xff]
    %v253 = vld [vmem:[%s1 + $0x730] sm:$0xff]
    %v254 = vld [vmem:[%s1 + $0x738] sm:$0xff]
    %v255 = vld [vmem:[%s1 + $0x740] sm:$0xff]
    %v256 = vld [vmem:[%s1 + $0x748] sm:$0xff]
    %v257 = vld [vmem:[%s1 + $0x750] sm:$0xff]
    %v258 = vld [vmem:[%s1 + $0x758] sm:$0xff]
    %v259 = vld [vmem:[%s1 + $0x760] sm:$0xff]
    %v260 = vld [vmem:[%s1 + $0x768] sm:$0xff]
    %v261 = vld [vmem:[%s1 + $0x770] sm:$0xff]
    %v262 = vld [vmem:[%s1 + $0x778] sm:$0xff]
    %v263 = vld [vmem:[%s1 + $0x780] sm:$0xff]
    %v264 = vld [vmem:[%s1 + $0x788] sm:$0xff]
    %v265 = vld [vmem:[%s1 + $0x790] sm:$0xff]
    %v266 = vld [vmem:[%s1 + $0x798] sm:$0xff]
    %v267 = vld [vmem:[%s1 + $0x7a0] sm:$0xff]
    %v268 = vld [vmem:[%s1 + $0x7a8] sm:$0xff]
    %v269 = vld [vmem:[%s1 + $0x7b0] sm:$0xff]
    %v270 = vld [vmem:[%s1 + $0x7b8] sm:$0xff]
    %v271 = vld [vmem:[%s1 + $0x7c0] sm:$0xff]
    %v272 = vld [vmem:[%s1 + $0x7c8] sm:$0xff]
    %v273 = vld [vmem:[%s1 + $0x7d0] sm:$0xff]
    %v274 = vld [vmem:[%s1 + $0x7d8] sm:$0xff]
    %v275 = vld [vmem:[%s1 + $0x7e0] sm:$0xff]
    %v276 = vld [vmem:[%s1 + $0x7e8] sm:$0xff]
    %v277 = vld [vmem:[%s1 + $0x7f0] sm:$0xff]
    %v278 = vld [vmem:[%s1 + $0x7f8] sm:$0xff]
    %v279 = vld [vmem:[%s1 + $0x800] sm:$0xff]
    %v280 = vld [vmem:[%s1 + $0x808] sm:$0xff]
    %v281 = vld [vmem:[%s1 + $0x810] sm:$0xff]
    %v282 = vld [vmem:[%s1 + $0x818] sm:$0xff]
    %v283 = vld [vmem:[%s1 + $0x820] sm:$0xff]
    %v284 = vld [vmem:[%s1 + $0x828] sm:$0xff]
    %v285 = vld [vmem:[%s1 + $0x830] sm:$0xff]
    %v286 = vld [vmem:[%s1 + $0x838] sm:$0xff]
    %v287 = vld [vmem:[%s1 + $0x840] sm:$0xff]
    %v288 = vld [vmem:[%s1 + $0x848] sm:$0xff]
    %v289 = vld [vmem:[%s1 + $0x850] sm:$0xff]
    %v290 = vld [vmem:[%s1 + $0x858] sm:$0xff]
    %v291 = vld [vmem:[%s1 + $0x860] sm:$0xff]
    %v292 = vld [vmem:[%s1 + $0x868] sm:$0xff]
    %v293 = vld [vmem:[%s1 + $0x870] sm:$0xff]
    %v294 = vld [vmem:[%s1 + $0x878] sm:$0xff]
    %v295 = vld [vmem:[%s1 + $0x880] sm:$0xff]
    %v296 = vld [vmem:[%s1 + $0x888] sm:$0xff]
    %v297 = vld [vmem:[%s1 + $0x890] sm:$0xff]
    %v298 = vld [vmem:[%s1 + $0x898] sm:$0xff]
    %v299 = vld [vmem:[%s1 + $0x8a0] sm:$0xff]
    %v300 = vld [vmem:[%s1 + $0x8a8] sm:$0xff]
    %v301 = vld [vmem:[%s1 + $0x8b0] sm:$0xff]
    %v302 = vld [vmem:[%s1 + $0x8b8] sm:$0xff]
    %v303 = vld [vmem:[%s1 + $0x8c0] sm:$0xff]
    %v304 = vld [vmem:[%s1 + $0x8c8] sm:$0xff]
    %v305 = vld [vmem:[%s1 + $0x8d0] sm:$0xff]
    %v306 = vld [vmem:[%s1 + $0x8d8] sm:$0xff]
    %v307 = vld [vmem:[%s1 + $0x8e0] sm:$0xff]
    %v308 = vld [vmem:[%s1 + $0x8e8] sm:$0xff]
    %v309 = vld [vmem:[%s1 + $0x8f0] sm:$0xff]
    %v310 = vld [vmem:[%s1 + $0x8f8] sm:$0xff]
    %v311 = vld [vmem:[%s2] sm:$0xff]
    %v313 = vlaneseq
    %v314 = vshrl.u32 %v313, 7
    %v315 = vsub.s32 0, %v314
    %v316 = vrot.slane %v311, %v315
    %v317 = vlaneseq
    %v318 = vshrl.u32 %v317, 7
    %v319 = vsub.s32 1, %v318
    %v320 = vrot.slane %v311, %v319
    %v321 = vlaneseq
    %v322 = vshrl.u32 %v321, 7
    %v323 = vsub.s32 2, %v322
    %v324 = vrot.slane %v311, %v323
    %v325 = vlaneseq
    %v326 = vshrl.u32 %v325, 7
    %v327 = vsub.s32 3, %v326
    %v328 = vrot.slane %v311, %v327
    %v329 = vlaneseq
    %v330 = vshrl.u32 %v329, 7
    %v331 = vsub.s32 4, %v330
    %v332 = vrot.slane %v311, %v331
    %v333 = vlaneseq
    %v334 = vshrl.u32 %v333, 7
    %v335 = vsub.s32 5, %v334
    %v336 = vrot.slane %v311, %v335
    %v337 = vlaneseq
    %v338 = vshrl.u32 %v337, 7
    %v339 = vsub.s32 6, %v338
    %v340 = vrot.slane %v311, %v339
    %v341 = vlaneseq
    %v342 = vshrl.u32 %v341, 7
    %v343 = vsub.s32 7, %v342
    %v344 = vrot.slane %v311, %v343
    %v354 = vcombine.high %v22, %v22
    %v356 = vunpack.c.l.s4 1966171168
    %v357 = vunpack.c.0.s8 %v356
    %v358 = vlaneseq
    %v359 = vshrl.u32 %v358, 7
    %v360 = vsub.s32 %v357, %v359
    %v361 = vrot.slane %v22, %v360
    %v363 = vunpack.c.l.s4 1966171168
    %v364 = vunpack.c.0.s8 %v363
    %v365 = vlaneseq
    %v366 = vshrl.u32 %v365, 7
    %v367 = vsub.s32 %v364, %v366
    %v368 = vrot.slane %v354, %v367
    %v369 = vcombine.high %v361, %v361
    %v371 = vunpack.c.l.s4 1966171168
    %v372 = vunpack.c.0.s8 %v371
    %v373 = vlaneseq
    %v374 = vshrl.u32 %v373, 7
    %v375 = vsub.s32 %v372, %v374
    %v376 = vrot.slane %v361, %v375
    %v378 = vunpack.c.l.s4 1966171168
    %v379 = vunpack.c.0.s8 %v378
    %v380 = vlaneseq
    %v381 = vshrl.u32 %v380, 7
    %v382 = vsub.s32 %v379, %v381
    %v383 = vrot.slane %v368, %v382
    %v385 = vunpack.c.l.s4 1966171168
    %v386 = vunpack.c.0.s8 %v385
    %v387 = vlaneseq
    %v388 = vshrl.u32 %v387, 7
    %v389 = vsub.s32 %v386, %v388
    %v390 = vrot.slane %v369, %v389
    %v391 = vcombine.high %v376, %v376
    %v392 = vcombine.high %v390, %v390
    %v685 = vunpack.c.l.b16 %v23
    %v686 = vunpack.c.h.b16 %v23
    %v687 = vunpack.c.l.b16 %v24
    %v688 = vunpack.c.h.b16 %v24
    %v689 = vunpack.c.l.b16 %v25
    %v690 = vunpack.c.h.b16 %v25
    %v691 = vunpack.c.l.b16 %v26
    %v692 = vunpack.c.h.b16 %v26
    %v693 = vunpack.c.l.b16 %v27
    %v694 = vunpack.c.h.b16 %v27
    %v695 = vunpack.c.l.b16 %v28
    %v696 = vunpack.c.h.b16 %v28
    %v697 = vunpack.c.l.b16 %v29
    %v698 = vunpack.c.h.b16 %v29
    %v699 = vunpack.c.l.b16 %v30
    %v700 = vunpack.c.h.b16 %v30
    %v701 = vunpack.c.l.b16 %v31
    %v702 = vunpack.c.h.b16 %v31
    %v703 = vunpack.c.l.b16 %v32
    %v704 = vunpack.c.h.b16 %v32
    %v705 = vunpack.c.l.b16 %v33
    %v706 = vunpack.c.h.b16 %v33
    %v707 = vunpack.c.l.b16 %v34
    %v708 = vunpack.c.h.b16 %v34
    %v709 = vunpack.c.l.b16 %v35
    %v710 = vunpack.c.h.b16 %v35
    %v711 = vunpack.c.l.b16 %v36
    %v712 = vunpack.c.h.b16 %v36
    %v713 = vunpack.c.l.b16 %v37
    %v714 = vunpack.c.h.b16 %v37
    %v715 = vunpack.c.l.b16 %v38
    %v716 = vunpack.c.h.b16 %v38
    %v717 = vunpack.c.l.b16 %v39
    %v718 = vunpack.c.h.b16 %v39
    %v719 = vunpack.c.l.b16 %v40
    %v720 = vunpack.c.h.b16 %v40
    %v721 = vunpack.c.l.b16 %v41
    %v722 = vunpack.c.h.b16 %v41
    %v723 = vunpack.c.l.b16 %v42
    %v724 = vunpack.c.h.b16 %v42
    %v725 = vunpack.c.l.b16 %v43
    %v726 = vunpack.c.h.b16 %v43
    %v727 = vunpack.c.l.b16 %v44
    %v728 = vunpack.c.h.b16 %v44
    %v729 = vunpack.c.l.b16 %v45
    %v730 = vunpack.c.h.b16 %v45
    %v731 = vunpack.c.l.b16 %v46
    %v732 = vunpack.c.h.b16 %v46
    %v733 = vunpack.c.l.b16 %v47
    %v734 = vunpack.c.h.b16 %v47
    %v735 = vunpack.c.l.b16 %v48
    %v736 = vunpack.c.h.b16 %v48
    %v737 = vunpack.c.l.b16 %v49
    %v738 = vunpack.c.h.b16 %v49
    %v739 = vunpack.c.l.b16 %v50
    %v740 = vunpack.c.h.b16 %v50
    %v741 = vunpack.c.l.b16 %v51
    %v742 = vunpack.c.h.b16 %v51
    %v743 = vunpack.c.l.b16 %v52
    %v744 = vunpack.c.h.b16 %v52
    %v745 = vunpack.c.l.b16 %v53
    %v746 = vunpack.c.h.b16 %v53
    %v747 = vunpack.c.l.b16 %v54
    %v748 = vunpack.c.h.b16 %v54
    %v749 = vunpack.c.l.b16 %v55
    %v750 = vunpack.c.h.b16 %v55
    %v751 = vunpack.c.l.b16 %v56
    %v752 = vunpack.c.h.b16 %v56
    %v753 = vunpack.c.l.b16 %v57
    %v754 = vunpack.c.h.b16 %v57
    %v755 = vunpack.c.l.b16 %v58
    %v756 = vunpack.c.h.b16 %v58
    %v757 = vunpack.c.l.b16 %v59
    %v758 = vunpack.c.h.b16 %v59
    %v759 = vunpack.c.l.b16 %v60
    %v760 = vunpack.c.h.b16 %v60
    %v761 = vunpack.c.l.b16 %v61
    %v762 = vunpack.c.h.b16 %v61
    %v763 = vunpack.c.l.b16 %v62
    %v764 = vunpack.c.h.b16 %v62
    %v765 = vunpack.c.l.b16 %v63
    %v766 = vunpack.c.h.b16 %v63
    %v767 = vunpack.c.l.b16 %v64
    %v768 = vunpack.c.h.b16 %v64
    %v769 = vunpack.c.l.b16 %v65
    %v770 = vunpack.c.h.b16 %v65
    %v771 = vunpack.c.l.b16 %v66
    %v772 = vunpack.c.h.b16 %v66
    %v773 = vunpack.c.l.b16 %v67
    %v774 = vunpack.c.h.b16 %v67
    %v775 = vunpack.c.l.b16 %v68
    %v776 = vunpack.c.h.b16 %v68
    %v777 = vunpack.c.l.b16 %v69
    %v778 = vunpack.c.h.b16 %v69
    %v779 = vunpack.c.l.b16 %v70
    %v780 = vunpack.c.h.b16 %v70
    %v781 = vunpack.c.l.b16 %v71
    %v782 = vunpack.c.h.b16 %v71
    %v783 = vunpack.c.l.b16 %v72
    %v784 = vunpack.c.h.b16 %v72
    %v785 = vunpack.c.l.b16 %v73
    %v786 = vunpack.c.h.b16 %v73
    %v787 = vunpack.c.l.b16 %v74
    %v788 = vunpack.c.h.b16 %v74
    %v789 = vunpack.c.l.b16 %v75
    %v790 = vunpack.c.h.b16 %v75
    %v791 = vunpack.c.l.b16 %v76
    %v792 = vunpack.c.h.b16 %v76
    %v793 = vunpack.c.l.b16 %v77
    %v794 = vunpack.c.h.b16 %v77
    %v795 = vunpack.c.l.b16 %v78
    %v796 = vunpack.c.h.b16 %v78
    %v797 = vunpack.c.l.b16 %v79
    %v798 = vunpack.c.h.b16 %v79
    %v799 = vunpack.c.l.b16 %v80
    %v800 = vunpack.c.h.b16 %v80
    %v801 = vunpack.c.l.b16 %v81
    %v802 = vunpack.c.h.b16 %v81
    %v803 = vunpack.c.l.b16 %v82
    %v804 = vunpack.c.h.b16 %v82
    %v805 = vunpack.c.l.b16 %v83
    %v806 = vunpack.c.h.b16 %v83
    %v807 = vunpack.c.l.b16 %v84
    %v808 = vunpack.c.h.b16 %v84
    %v809 = vunpack.c.l.b16 %v85
    %v810 = vunpack.c.h.b16 %v85
    %v811 = vunpack.c.l.b16 %v86
    %v812 = vunpack.c.h.b16 %v86
    %v813 = vunpack.c.l.b16 %v87
    %v814 = vunpack.c.h.b16 %v87
    %v815 = vunpack.c.l.b16 %v88
    %v816 = vunpack.c.h.b16 %v88
    %v817 = vunpack.c.l.b16 %v89
    %v818 = vunpack.c.h.b16 %v89
    %v819 = vunpack.c.l.b16 %v90
    %v820 = vunpack.c.h.b16 %v90
    %v821 = vunpack.c.l.b16 %v91
    %v822 = vunpack.c.h.b16 %v91
    %v823 = vunpack.c.l.b16 %v92
    %v824 = vunpack.c.h.b16 %v92
    %v825 = vunpack.c.l.b16 %v93
    %v826 = vunpack.c.h.b16 %v93
    %v827 = vunpack.c.l.b16 %v94
    %v828 = vunpack.c.h.b16 %v94
    %v829 = vunpack.c.l.b16 %v95
    %v830 = vunpack.c.h.b16 %v95
    %v831 = vunpack.c.l.b16 %v96
    %v832 = vunpack.c.h.b16 %v96
    %v833 = vunpack.c.l.b16 %v97
    %v834 = vunpack.c.h.b16 %v97
    %v835 = vunpack.c.l.b16 %v98
    %v836 = vunpack.c.h.b16 %v98
    %v837 = vunpack.c.l.b16 %v99
    %v838 = vunpack.c.h.b16 %v99
    %v839 = vunpack.c.l.b16 %v100
    %v840 = vunpack.c.h.b16 %v100
    %v841 = vunpack.c.l.b16 %v101
    %v842 = vunpack.c.h.b16 %v101
    %v843 = vunpack.c.l.b16 %v102
    %v844 = vunpack.c.h.b16 %v102
    %v845 = vunpack.c.l.b16 %v103
    %v846 = vunpack.c.h.b16 %v103
    %v847 = vunpack.c.l.b16 %v104
    %v848 = vunpack.c.h.b16 %v104
    %v849 = vunpack.c.l.b16 %v105
    %v850 = vunpack.c.h.b16 %v105
    %v851 = vunpack.c.l.b16 %v106
    %v852 = vunpack.c.h.b16 %v106
    %v853 = vunpack.c.l.b16 %v107
    %v854 = vunpack.c.h.b16 %v107
    %v855 = vunpack.c.l.b16 %v108
    %v856 = vunpack.c.h.b16 %v108
    %v857 = vunpack.c.l.b16 %v109
    %v858 = vunpack.c.h.b16 %v109
    %v859 = vunpack.c.l.b16 %v110
    %v860 = vunpack.c.h.b16 %v110
    %v861 = vunpack.c.l.b16 %v111
    %v862 = vunpack.c.h.b16 %v111
    %v863 = vunpack.c.l.b16 %v112
    %v864 = vunpack.c.h.b16 %v112
    %v865 = vunpack.c.l.b16 %v113
    %v866 = vunpack.c.h.b16 %v113
    %v867 = vunpack.c.l.b16 %v114
    %v868 = vunpack.c.h.b16 %v114
    %v869 = vunpack.c.l.b16 %v115
    %v870 = vunpack.c.h.b16 %v115
    %v871 = vunpack.c.l.b16 %v116
    %v872 = vunpack.c.h.b16 %v116
    %v873 = vunpack.c.l.b16 %v117
    %v874 = vunpack.c.h.b16 %v117
    %v875 = vunpack.c.l.b16 %v118
    %v876 = vunpack.c.h.b16 %v118
    %v877 = vunpack.c.l.b16 %v119
    %v878 = vunpack.c.h.b16 %v119
    %v879 = vunpack.c.l.b16 %v120
    %v880 = vunpack.c.h.b16 %v120
    %v881 = vunpack.c.l.b16 %v121
    %v882 = vunpack.c.h.b16 %v121
    %v883 = vunpack.c.l.b16 %v122
    %v884 = vunpack.c.h.b16 %v122
    %v885 = vunpack.c.l.b16 %v123
    %v886 = vunpack.c.h.b16 %v123
    %v887 = vunpack.c.l.b16 %v124
    %v888 = vunpack.c.h.b16 %v124
    %v889 = vunpack.c.l.b16 %v125
    %v890 = vunpack.c.h.b16 %v125
    %v891 = vunpack.c.l.b16 %v126
    %v892 = vunpack.c.h.b16 %v126
    %v893 = vunpack.c.l.b16 %v127
    %v894 = vunpack.c.h.b16 %v127
    %v895 = vunpack.c.l.b16 %v128
    %v896 = vunpack.c.h.b16 %v128
    %v897 = vunpack.c.l.b16 %v129
    %v898 = vunpack.c.h.b16 %v129
    %v899 = vunpack.c.l.b16 %v130
    %v900 = vunpack.c.h.b16 %v130
    %v901 = vunpack.c.l.b16 %v131
    %v902 = vunpack.c.h.b16 %v131
    %v903 = vunpack.c.l.b16 %v132
    %v904 = vunpack.c.h.b16 %v132
    %v905 = vunpack.c.l.b16 %v133
    %v906 = vunpack.c.h.b16 %v133
    %v907 = vunpack.c.l.b16 %v134
    %v908 = vunpack.c.h.b16 %v134
    %v909 = vunpack.c.l.b16 %v135
    %v910 = vunpack.c.h.b16 %v135
    %v911 = vunpack.c.l.b16 %v136
    %v912 = vunpack.c.h.b16 %v136
    %v913 = vunpack.c.l.b16 %v137
    %v914 = vunpack.c.h.b16 %v137
    %v915 = vunpack.c.l.b16 %v138
    %v916 = vunpack.c.h.b16 %v138
    %v917 = vunpack.c.l.b16 %v139
    %v918 = vunpack.c.h.b16 %v139
    %v919 = vunpack.c.l.b16 %v140
    %v920 = vunpack.c.h.b16 %v140
    %v921 = vunpack.c.l.b16 %v141
    %v922 = vunpack.c.h.b16 %v141
    %v923 = vunpack.c.l.b16 %v142
    %v924 = vunpack.c.h.b16 %v142
    %v925 = vunpack.c.l.b16 %v143
    %v926 = vunpack.c.h.b16 %v143
    %v927 = vunpack.c.l.b16 %v144
    %v928 = vunpack.c.h.b16 %v144
    %v929 = vunpack.c.l.b16 %v145
    %v930 = vunpack.c.h.b16 %v145
    %v931 = vunpack.c.l.b16 %v146
    %v932 = vunpack.c.h.b16 %v146
    %v933 = vunpack.c.l.b16 %v147
    %v934 = vunpack.c.h.b16 %v147
    %v935 = vunpack.c.l.b16 %v148
    %v936 = vunpack.c.h.b16 %v148
    %v937 = vunpack.c.l.b16 %v149
    %v938 = vunpack.c.h.b16 %v149
    %v939 = vunpack.c.l.b16 %v150
    %v940 = vunpack.c.h.b16 %v150
    %v941 = vunpack.c.l.b16 %v151
    %v942 = vunpack.c.h.b16 %v151
    %v943 = vunpack.c.l.b16 %v152
    %v944 = vunpack.c.h.b16 %v152
    %v945 = vunpack.c.l.b16 %v153
    %v946 = vunpack.c.h.b16 %v153
    %v947 = vunpack.c.l.b16 %v154
    %v948 = vunpack.c.h.b16 %v154
    %v949 = vunpack.c.l.b16 %v155
    %v950 = vunpack.c.h.b16 %v155
    %v951 = vunpack.c.l.b16 %v156
    %v952 = vunpack.c.h.b16 %v156
    %v953 = vunpack.c.l.b16 %v157
    %v954 = vunpack.c.h.b16 %v157
    %v955 = vunpack.c.l.b16 %v158
    %v956 = vunpack.c.h.b16 %v158
    %v957 = vunpack.c.l.b16 %v159
    %v958 = vunpack.c.h.b16 %v159
    %v959 = vunpack.c.l.b16 %v160
    %v960 = vunpack.c.h.b16 %v160
    %v961 = vunpack.c.l.b16 %v161
    %v962 = vunpack.c.h.b16 %v161
    %v963 = vunpack.c.l.b16 %v162
    %v964 = vunpack.c.h.b16 %v162
    %v965 = vunpack.c.l.b16 %v163
    %v966 = vunpack.c.h.b16 %v163
    %v967 = vunpack.c.l.b16 %v164
    %v968 = vunpack.c.h.b16 %v164
    %v969 = vunpack.c.l.b16 %v165
    %v970 = vunpack.c.h.b16 %v165
    %v971 = vunpack.c.l.b16 %v166
    %v972 = vunpack.c.h.b16 %v166
    %v973 = vunpack.c.l.b16 %v167
    %v974 = vunpack.c.h.b16 %v167
    %v975 = vunpack.c.l.b16 %v168
    %v976 = vunpack.c.h.b16 %v168
    %v977 = vunpack.c.l.b16 %v169
    %v978 = vunpack.c.h.b16 %v169
    %v979 = vunpack.c.l.b16 %v170
    %v980 = vunpack.c.h.b16 %v170
    %v981 = vunpack.c.l.b16 %v171
    %v982 = vunpack.c.h.b16 %v171
    %v983 = vunpack.c.l.b16 %v172
    %v984 = vunpack.c.h.b16 %v172
    %v985 = vunpack.c.l.b16 %v173
    %v986 = vunpack.c.h.b16 %v173
    %v987 = vunpack.c.l.b16 %v174
    %v988 = vunpack.c.h.b16 %v174
    %v989 = vunpack.c.l.b16 %v175
    %v990 = vunpack.c.h.b16 %v175
    %v991 = vunpack.c.l.b16 %v176
    %v992 = vunpack.c.h.b16 %v176
    %v993 = vunpack.c.l.b16 %v177
    %v994 = vunpack.c.h.b16 %v177
    %v995 = vunpack.c.l.b16 %v178
    %v996 = vunpack.c.h.b16 %v178
    %v997 = vunpack.c.l.b16 %v179
    %v998 = vunpack.c.h.b16 %v179
    %v999 = vunpack.c.l.b16 %v180
    %v1000 = vunpack.c.h.b16 %v180
    %v1001 = vunpack.c.l.b16 %v181
    %v1002 = vunpack.c.h.b16 %v181
    %v1003 = vunpack.c.l.b16 %v182
    %v1004 = vunpack.c.h.b16 %v182
    %v1005 = vunpack.c.l.b16 %v183
    %v1006 = vunpack.c.h.b16 %v183
    %v1007 = vunpack.c.l.b16 %v184
    %v1008 = vunpack.c.h.b16 %v184
    %v1009 = vunpack.c.l.b16 %v185
    %v1010 = vunpack.c.h.b16 %v185
    %v1011 = vunpack.c.l.b16 %v186
    %v1012 = vunpack.c.h.b16 %v186
    %v1013 = vunpack.c.l.b16 %v187
    %v1014 = vunpack.c.h.b16 %v187
    %v1015 = vunpack.c.l.b16 %v188
    %v1016 = vunpack.c.h.b16 %v188
    %v1017 = vunpack.c.l.b16 %v189
    %v1018 = vunpack.c.h.b16 %v189
    %v1019 = vunpack.c.l.b16 %v190
    %v1020 = vunpack.c.h.b16 %v190
    %v1021 = vunpack.c.l.b16 %v191
    %v1022 = vunpack.c.h.b16 %v191
    %v1023 = vunpack.c.l.b16 %v192
    %v1024 = vunpack.c.h.b16 %v192
    %v1025 = vunpack.c.l.b16 %v193
    %v1026 = vunpack.c.h.b16 %v193
    %v1027 = vunpack.c.l.b16 %v194
    %v1028 = vunpack.c.h.b16 %v194
    %v1029 = vunpack.c.l.b16 %v195
    %v1030 = vunpack.c.h.b16 %v195
    %v1031 = vunpack.c.l.b16 %v196
    %v1032 = vunpack.c.h.b16 %v196
    %v1033 = vunpack.c.l.b16 %v197
    %v1034 = vunpack.c.h.b16 %v197
    %v1035 = vunpack.c.l.b16 %v198
    %v1036 = vunpack.c.h.b16 %v198
    %v1037 = vunpack.c.l.b16 %v199
    %v1038 = vunpack.c.h.b16 %v199
    %v1039 = vunpack.c.l.b16 %v200
    %v1040 = vunpack.c.h.b16 %v200
    %v1041 = vunpack.c.l.b16 %v201
    %v1042 = vunpack.c.h.b16 %v201
    %v1043 = vunpack.c.l.b16 %v202
    %v1044 = vunpack.c.h.b16 %v202
    %v1045 = vunpack.c.l.b16 %v203
    %v1046 = vunpack.c.h.b16 %v203
    %v1047 = vunpack.c.l.b16 %v204
    %v1048 = vunpack.c.h.b16 %v204
    %v1049 = vunpack.c.l.b16 %v205
    %v1050 = vunpack.c.h.b16 %v205
    %v1051 = vunpack.c.l.b16 %v206
    %v1052 = vunpack.c.h.b16 %v206
    %v1053 = vunpack.c.l.b16 %v207
    %v1054 = vunpack.c.h.b16 %v207
    %v1055 = vunpack.c.l.b16 %v208
    %v1056 = vunpack.c.h.b16 %v208
    %v1057 = vunpack.c.l.b16 %v209
    %v1058 = vunpack.c.h.b16 %v209
    %v1059 = vunpack.c.l.b16 %v210
    %v1060 = vunpack.c.h.b16 %v210
    %v1061 = vunpack.c.l.b16 %v211
    %v1062 = vunpack.c.h.b16 %v211
    %v1063 = vunpack.c.l.b16 %v212
    %v1064 = vunpack.c.h.b16 %v212
    %v1065 = vunpack.c.l.b16 %v213
    %v1066 = vunpack.c.h.b16 %v213
    %v1067 = vunpack.c.l.b16 %v214
    %v1068 = vunpack.c.h.b16 %v214
    %v1069 = vunpack.c.l.b16 %v215
    %v1070 = vunpack.c.h.b16 %v215
    %v1071 = vunpack.c.l.b16 %v216
    %v1072 = vunpack.c.h.b16 %v216
    %v1073 = vunpack.c.l.b16 %v217
    %v1074 = vunpack.c.h.b16 %v217
    %v1075 = vunpack.c.l.b16 %v218
    %v1076 = vunpack.c.h.b16 %v218
    %v1077 = vunpack.c.l.b16 %v219
    %v1078 = vunpack.c.h.b16 %v219
    %v1079 = vunpack.c.l.b16 %v220
    %v1080 = vunpack.c.h.b16 %v220
    %v1081 = vunpack.c.l.b16 %v221
    %v1082 = vunpack.c.h.b16 %v221
    %v1083 = vunpack.c.l.b16 %v222
    %v1084 = vunpack.c.h.b16 %v222
    %v1085 = vunpack.c.l.b16 %v223
    %v1086 = vunpack.c.h.b16 %v223
    %v1087 = vunpack.c.l.b16 %v224
    %v1088 = vunpack.c.h.b16 %v224
    %v1089 = vunpack.c.l.b16 %v225
    %v1090 = vunpack.c.h.b16 %v225
    %v1091 = vunpack.c.l.b16 %v226
    %v1092 = vunpack.c.h.b16 %v226
    %v1093 = vunpack.c.l.b16 %v227
    %v1094 = vunpack.c.h.b16 %v227
    %v1095 = vunpack.c.l.b16 %v228
    %v1096 = vunpack.c.h.b16 %v228
    %v1097 = vunpack.c.l.b16 %v229
    %v1098 = vunpack.c.h.b16 %v229
    %v1099 = vunpack.c.l.b16 %v230
    %v1100 = vunpack.c.h.b16 %v230
    %v1101 = vunpack.c.l.b16 %v231
    %v1102 = vunpack.c.h.b16 %v231
    %v1103 = vunpack.c.l.b16 %v232
    %v1104 = vunpack.c.h.b16 %v232
    %v1105 = vunpack.c.l.b16 %v233
    %v1106 = vunpack.c.h.b16 %v233
    %v1107 = vunpack.c.l.b16 %v234
    %v1108 = vunpack.c.h.b16 %v234
    %v1109 = vunpack.c.l.b16 %v235
    %v1110 = vunpack.c.h.b16 %v235
    %v1111 = vunpack.c.l.b16 %v236
    %v1112 = vunpack.c.h.b16 %v236
    %v1113 = vunpack.c.l.b16 %v237
    %v1114 = vunpack.c.h.b16 %v237
    %v1115 = vunpack.c.l.b16 %v238
    %v1116 = vunpack.c.h.b16 %v238
    %v1117 = vunpack.c.l.b16 %v239
    %v1118 = vunpack.c.h.b16 %v239
    %v1119 = vunpack.c.l.b16 %v240
    %v1120 = vunpack.c.h.b16 %v240
    %v1121 = vunpack.c.l.b16 %v241
    %v1122 = vunpack.c.h.b16 %v241
    %v1123 = vunpack.c.l.b16 %v242
    %v1124 = vunpack.c.h.b16 %v242
    %v1125 = vunpack.c.l.b16 %v243
    %v1126 = vunpack.c.h.b16 %v243
    %v1127 = vunpack.c.l.b16 %v244
    %v1128 = vunpack.c.h.b16 %v244
    %v1129 = vunpack.c.l.b16 %v245
    %v1130 = vunpack.c.h.b16 %v245
    %v1131 = vunpack.c.l.b16 %v246
    %v1132 = vunpack.c.h.b16 %v246
    %v1133 = vunpack.c.l.b16 %v247
    %v1134 = vunpack.c.h.b16 %v247
    %v1135 = vunpack.c.l.b16 %v248
    %v1136 = vunpack.c.h.b16 %v248
    %v1137 = vunpack.c.l.b16 %v249
    %v1138 = vunpack.c.h.b16 %v249
    %v1139 = vunpack.c.l.b16 %v250
    %v1140 = vunpack.c.h.b16 %v250
    %v1141 = vunpack.c.l.b16 %v251
    %v1142 = vunpack.c.h.b16 %v251
    %v1143 = vunpack.c.l.b16 %v252
    %v1144 = vunpack.c.h.b16 %v252
    %v1145 = vunpack.c.l.b16 %v253
    %v1146 = vunpack.c.h.b16 %v253
    %v1147 = vunpack.c.l.b16 %v254
    %v1148 = vunpack.c.h.b16 %v254
    %v1149 = vunpack.c.l.b16 %v255
    %v1150 = vunpack.c.h.b16 %v255
    %v1151 = vunpack.c.l.b16 %v256
    %v1152 = vunpack.c.h.b16 %v256
    %v1153 = vunpack.c.l.b16 %v257
    %v1154 = vunpack.c.h.b16 %v257
    %v1155 = vunpack.c.l.b16 %v258
    %v1156 = vunpack.c.h.b16 %v258
    %v1157 = vunpack.c.l.b16 %v259
    %v1158 = vunpack.c.h.b16 %v259
    %v1159 = vunpack.c.l.b16 %v260
    %v1160 = vunpack.c.h.b16 %v260
    %v1161 = vunpack.c.l.b16 %v261
    %v1162 = vunpack.c.h.b16 %v261
    %v1163 = vunpack.c.l.b16 %v262
    %v1164 = vunpack.c.h.b16 %v262
    %v1165 = vunpack.c.l.b16 %v263
    %v1166 = vunpack.c.h.b16 %v263
    %v1167 = vunpack.c.l.b16 %v264
    %v1168 = vunpack.c.h.b16 %v264
    %v1169 = vunpack.c.l.b16 %v265
    %v1170 = vunpack.c.h.b16 %v265
    %v1171 = vunpack.c.l.b16 %v266
    %v1172 = vunpack.c.h.b16 %v266
    %v1173 = vunpack.c.l.b16 %v267
    %v1174 = vunpack.c.h.b16 %v267
    %v1175 = vunpack.c.l.b16 %v268
    %v1176 = vunpack.c.h.b16 %v268
    %v1177 = vunpack.c.l.b16 %v269
    %v1178 = vunpack.c.h.b16 %v269
    %v1179 = vunpack.c.l.b16 %v270
    %v1180 = vunpack.c.h.b16 %v270
    %v1181 = vunpack.c.l.b16 %v271
    %v1182 = vunpack.c.h.b16 %v271
    %v1183 = vunpack.c.l.b16 %v272
    %v1184 = vunpack.c.h.b16 %v272
    %v1185 = vunpack.c.l.b16 %v273
    %v1186 = vunpack.c.h.b16 %v273
    %v1187 = vunpack.c.l.b16 %v274
    %v1188 = vunpack.c.h.b16 %v274
    %v1189 = vunpack.c.l.b16 %v275
    %v1190 = vunpack.c.h.b16 %v275
    %v1191 = vunpack.c.l.b16 %v276
    %v1192 = vunpack.c.h.b16 %v276
    %v1193 = vunpack.c.l.b16 %v277
    %v1194 = vunpack.c.h.b16 %v277
    %v1195 = vunpack.c.l.b16 %v278
    %v1196 = vunpack.c.h.b16 %v278
    %v1197 = vunpack.c.l.b16 %v279
    %v1198 = vunpack.c.h.b16 %v279
    %v1199 = vunpack.c.l.b16 %v280
    %v1200 = vunpack.c.h.b16 %v280
    %v1201 = vunpack.c.l.b16 %v281
    %v1202 = vunpack.c.h.b16 %v281
    %v1203 = vunpack.c.l.b16 %v282
    %v1204 = vunpack.c.h.b16 %v282
    %v1205 = vunpack.c.l.b16 %v283
    %v1206 = vunpack.c.h.b16 %v283
    %v1207 = vunpack.c.l.b16 %v284
    %v1208 = vunpack.c.h.b16 %v284
    %v1209 = vunpack.c.l.b16 %v285
    %v1210 = vunpack.c.h.b16 %v285
    %v1211 = vunpack.c.l.b16 %v286
    %v1212 = vunpack.c.h.b16 %v286
    %v1213 = vunpack.c.l.b16 %v287
    %v1214 = vunpack.c.h.b16 %v287
    %v1215 = vunpack.c.l.b16 %v288
    %v1216 = vunpack.c.h.b16 %v288
    %v1217 = vunpack.c.l.b16 %v289
    %v1218 = vunpack.c.h.b16 %v289
    %v1219 = vunpack.c.l.b16 %v290
    %v1220 = vunpack.c.h.b16 %v290
    %v1221 = vunpack.c.l.b16 %v291
    %v1222 = vunpack.c.h.b16 %v291
    %v1223 = vunpack.c.l.b16 %v292
    %v1224 = vunpack.c.h.b16 %v292
    %v1225 = vunpack.c.l.b16 %v293
    %v1226 = vunpack.c.h.b16 %v293
    %v1227 = vunpack.c.l.b16 %v294
    %v1228 = vunpack.c.h.b16 %v294
    %v1229 = vunpack.c.l.b16 %v295
    %v1230 = vunpack.c.h.b16 %v295
    %v1231 = vunpack.c.l.b16 %v296
    %v1232 = vunpack.c.h.b16 %v296
    %v1233 = vunpack.c.l.b16 %v297
    %v1234 = vunpack.c.h.b16 %v297
    %v1235 = vunpack.c.l.b16 %v298
    %v1236 = vunpack.c.h.b16 %v298
    %v1237 = vunpack.c.l.b16 %v299
    %v1238 = vunpack.c.h.b16 %v299
    %v1239 = vunpack.c.l.b16 %v300
    %v1240 = vunpack.c.h.b16 %v300
    %v1241 = vunpack.c.l.b16 %v301
    %v1242 = vunpack.c.h.b16 %v301
    %v1243 = vunpack.c.l.b16 %v302
    %v1244 = vunpack.c.h.b16 %v302
    %v1245 = vunpack.c.l.b16 %v303
    %v1246 = vunpack.c.h.b16 %v303
    %v1247 = vunpack.c.l.b16 %v304
    %v1248 = vunpack.c.h.b16 %v304
    %v1249 = vunpack.c.l.b16 %v305
    %v1250 = vunpack.c.h.b16 %v305
    %v1251 = vunpack.c.l.b16 %v306
    %v1252 = vunpack.c.h.b16 %v306
    %v1253 = vunpack.c.l.b16 %v307
    %v1254 = vunpack.c.h.b16 %v307
    %v1255 = vunpack.c.l.b16 %v308
    %v1256 = vunpack.c.h.b16 %v308
    %v1257 = vunpack.c.l.b16 %v309
    %v1258 = vunpack.c.h.b16 %v309
    %v1259 = vunpack.c.l.b16 %v310
    %v1260 = vunpack.c.h.b16 %v310
    %v1261 = vpack.c.b16 %v693, %v685
    %v1262 = vpack.c.b16 %v694, %v686
    %v1263 = vpack.c.b16 %v695, %v687
    %v1264 = vpack.c.b16 %v696, %v688
    %v1265 = vpack.c.b16 %v697, %v689
    %v1266 = vpack.c.b16 %v698, %v690
    %v1267 = vpack.c.b16 %v699, %v691
    %v1268 = vpack.c.b16 %v700, %v692
    %v1269 = vpack.c.b16 %v709, %v701
    %v1270 = vpack.c.b16 %v710, %v702
    %v1271 = vpack.c.b16 %v711, %v703
    %v1272 = vpack.c.b16 %v712, %v704
    %v1273 = vpack.c.b16 %v713, %v705
    %v1274 = vpack.c.b16 %v714, %v706
    %v1275 = vpack.c.b16 %v715, %v707
    %v1276 = vpack.c.b16 %v716, %v708
    %v1277 = vpack.c.b16 %v725, %v717
    %v1278 = vpack.c.b16 %v726, %v718
    %v1279 = vpack.c.b16 %v727, %v719
    %v1280 = vpack.c.b16 %v728, %v720
    %v1281 = vpack.c.b16 %v729, %v721
    %v1282 = vpack.c.b16 %v730, %v722
    %v1283 = vpack.c.b16 %v731, %v723
    %v1284 = vpack.c.b16 %v732, %v724
    %v1285 = vpack.c.b16 %v741, %v733
    %v1286 = vpack.c.b16 %v742, %v734
    %v1287 = vpack.c.b16 %v743, %v735
    %v1288 = vpack.c.b16 %v744, %v736
    %v1289 = vpack.c.b16 %v745, %v737
    %v1290 = vpack.c.b16 %v746, %v738
    %v1291 = vpack.c.b16 %v747, %v739
    %v1292 = vpack.c.b16 %v748, %v740
    %v1293 = vpack.c.b16 %v757, %v749
    %v1294 = vpack.c.b16 %v758, %v750
    %v1295 = vpack.c.b16 %v759, %v751
    %v1296 = vpack.c.b16 %v760, %v752
    %v1297 = vpack.c.b16 %v761, %v753
    %v1298 = vpack.c.b16 %v762, %v754
    %v1299 = vpack.c.b16 %v763, %v755
    %v1300 = vpack.c.b16 %v764, %v756
    %v1301 = vpack.c.b16 %v773, %v765
    %v1302 = vpack.c.b16 %v774, %v766
    %v1303 = vpack.c.b16 %v775, %v767
    %v1304 = vpack.c.b16 %v776, %v768
    %v1305 = vpack.c.b16 %v777, %v769
    %v1306 = vpack.c.b16 %v778, %v770
    %v1307 = vpack.c.b16 %v779, %v771
    %v1308 = vpack.c.b16 %v780, %v772
    %v1309 = vpack.c.b16 %v789, %v781
    %v1310 = vpack.c.b16 %v790, %v782
    %v1311 = vpack.c.b16 %v791, %v783
    %v1312 = vpack.c.b16 %v792, %v784
    %v1313 = vpack.c.b16 %v793, %v785
    %v1314 = vpack.c.b16 %v794, %v786
    %v1315 = vpack.c.b16 %v795, %v787
    %v1316 = vpack.c.b16 %v796, %v788
    %v1317 = vpack.c.b16 %v805, %v797
    %v1318 = vpack.c.b16 %v806, %v798
    %v1319 = vpack.c.b16 %v807, %v799
    %v1320 = vpack.c.b16 %v808, %v800
    %v1321 = vpack.c.b16 %v809, %v801
    %v1322 = vpack.c.b16 %v810, %v802
    %v1323 = vpack.c.b16 %v811, %v803
    %v1324 = vpack.c.b16 %v812, %v804
    %v1325 = vpack.c.b16 %v821, %v813
    %v1326 = vpack.c.b16 %v822, %v814
    %v1327 = vpack.c.b16 %v823, %v815
    %v1328 = vpack.c.b16 %v824, %v816
    %v1329 = vpack.c.b16 %v825, %v817
    %v1330 = vpack.c.b16 %v826, %v818
    %v1331 = vpack.c.b16 %v827, %v819
    %v1332 = vpack.c.b16 %v828, %v820
    %v1333 = vpack.c.b16 %v837, %v829
    %v1334 = vpack.c.b16 %v838, %v830
    %v1335 = vpack.c.b16 %v839, %v831
    %v1336 = vpack.c.b16 %v840, %v832
    %v1337 = vpack.c.b16 %v841, %v833
    %v1338 = vpack.c.b16 %v842, %v834
    %v1339 = vpack.c.b16 %v843, %v835
    %v1340 = vpack.c.b16 %v844, %v836
    %v1341 = vpack.c.b16 %v853, %v845
    %v1342 = vpack.c.b16 %v854, %v846
    %v1343 = vpack.c.b16 %v855, %v847
    %v1344 = vpack.c.b16 %v856, %v848
    %v1345 = vpack.c.b16 %v857, %v849
    %v1346 = vpack.c.b16 %v858, %v850
    %v1347 = vpack.c.b16 %v859, %v851
    %v1348 = vpack.c.b16 %v860, %v852
    %v1349 = vpack.c.b16 %v869, %v861
    %v1350 = vpack.c.b16 %v870, %v862
    %v1351 = vpack.c.b16 %v871, %v863
    %v1352 = vpack.c.b16 %v872, %v864
    %v1353 = vpack.c.b16 %v873, %v865
    %v1354 = vpack.c.b16 %v874, %v866
    %v1355 = vpack.c.b16 %v875, %v867
    %v1356 = vpack.c.b16 %v876, %v868
    %v1357 = vpack.c.b16 %v885, %v877
    %v1358 = vpack.c.b16 %v886, %v878
    %v1359 = vpack.c.b16 %v887, %v879
    %v1360 = vpack.c.b16 %v888, %v880
    %v1361 = vpack.c.b16 %v889, %v881
    %v1362 = vpack.c.b16 %v890, %v882
    %v1363 = vpack.c.b16 %v891, %v883
    %v1364 = vpack.c.b16 %v892, %v884
    %v1365 = vpack.c.b16 %v901, %v893
    %v1366 = vpack.c.b16 %v902, %v894
    %v1367 = vpack.c.b16 %v903, %v895
    %v1368 = vpack.c.b16 %v904, %v896
    %v1369 = vpack.c.b16 %v905, %v897
    %v1370 = vpack.c.b16 %v906, %v898
    %v1371 = vpack.c.b16 %v907, %v899
    %v1372 = vpack.c.b16 %v908, %v900
    %v1373 = vpack.c.b16 %v917, %v909
    %v1374 = vpack.c.b16 %v918, %v910
    %v1375 = vpack.c.b16 %v919, %v911
    %v1376 = vpack.c.b16 %v920, %v912
    %v1377 = vpack.c.b16 %v921, %v913
    %v1378 = vpack.c.b16 %v922, %v914
    %v1379 = vpack.c.b16 %v923, %v915
    %v1380 = vpack.c.b16 %v924, %v916
    %v1381 = vpack.c.b16 %v933, %v925
    %v1382 = vpack.c.b16 %v934, %v926
    %v1383 = vpack.c.b16 %v935, %v927
    %v1384 = vpack.c.b16 %v936, %v928
    %v1385 = vpack.c.b16 %v937, %v929
    %v1386 = vpack.c.b16 %v938, %v930
    %v1387 = vpack.c.b16 %v939, %v931
    %v1388 = vpack.c.b16 %v940, %v932
    %v1389 = vpack.c.b16 %v949, %v941
    %v1390 = vpack.c.b16 %v950, %v942
    %v1391 = vpack.c.b16 %v951, %v943
    %v1392 = vpack.c.b16 %v952, %v944
    %v1393 = vpack.c.b16 %v953, %v945
    %v1394 = vpack.c.b16 %v954, %v946
    %v1395 = vpack.c.b16 %v955, %v947
    %v1396 = vpack.c.b16 %v956, %v948
    %v1397 = vpack.c.b16 %v965, %v957
    %v1398 = vpack.c.b16 %v966, %v958
    %v1399 = vpack.c.b16 %v967, %v959
    %v1400 = vpack.c.b16 %v968, %v960
    %v1401 = vpack.c.b16 %v969, %v961
    %v1402 = vpack.c.b16 %v970, %v962
    %v1403 = vpack.c.b16 %v971, %v963
    %v1404 = vpack.c.b16 %v972, %v964
    %v1405 = vpack.c.b16 %v981, %v973
    %v1406 = vpack.c.b16 %v982, %v974
    %v1407 = vpack.c.b16 %v983, %v975
    %v1408 = vpack.c.b16 %v984, %v976
    %v1409 = vpack.c.b16 %v985, %v977
    %v1410 = vpack.c.b16 %v986, %v978
    %v1411 = vpack.c.b16 %v987, %v979
    %v1412 = vpack.c.b16 %v988, %v980
    %v1413 = vpack.c.b16 %v997, %v989
    %v1414 = vpack.c.b16 %v998, %v990
    %v1415 = vpack.c.b16 %v999, %v991
    %v1416 = vpack.c.b16 %v1000, %v992
    %v1417 = vpack.c.b16 %v1001, %v993
    %v1418 = vpack.c.b16 %v1002, %v994
    %v1419 = vpack.c.b16 %v1003, %v995
    %v1420 = vpack.c.b16 %v1004, %v996
    %v1421 = vpack.c.b16 %v1013, %v1005
    %v1422 = vpack.c.b16 %v1014, %v1006
    %v1423 = vpack.c.b16 %v1015, %v1007
    %v1424 = vpack.c.b16 %v1016, %v1008
    %v1425 = vpack.c.b16 %v1017, %v1009
    %v1426 = vpack.c.b16 %v1018, %v1010
    %v1427 = vpack.c.b16 %v1019, %v1011
    %v1428 = vpack.c.b16 %v1020, %v1012
    %v1429 = vpack.c.b16 %v1029, %v1021
    %v1430 = vpack.c.b16 %v1030, %v1022
    %v1431 = vpack.c.b16 %v1031, %v1023
    %v1432 = vpack.c.b16 %v1032, %v1024
    %v1433 = vpack.c.b16 %v1033, %v1025
    %v1434 = vpack.c.b16 %v1034, %v1026
    %v1435 = vpack.c.b16 %v1035, %v1027
    %v1436 = vpack.c.b16 %v1036, %v1028
    %v1437 = vpack.c.b16 %v1045, %v1037
    %v1438 = vpack.c.b16 %v1046, %v1038
    %v1439 = vpack.c.b16 %v1047, %v1039
    %v1440 = vpack.c.b16 %v1048, %v1040
    %v1441 = vpack.c.b16 %v1049, %v1041
    %v1442 = vpack.c.b16 %v1050, %v1042
    %v1443 = vpack.c.b16 %v1051, %v1043
    %v1444 = vpack.c.b16 %v1052, %v1044
    %v1445 = vpack.c.b16 %v1061, %v1053
    %v1446 = vpack.c.b16 %v1062, %v1054
    %v1447 = vpack.c.b16 %v1063, %v1055
    %v1448 = vpack.c.b16 %v1064, %v1056
    %v1449 = vpack.c.b16 %v1065, %v1057
    %v1450 = vpack.c.b16 %v1066, %v1058
    %v1451 = vpack.c.b16 %v1067, %v1059
    %v1452 = vpack.c.b16 %v1068, %v1060
    %v1453 = vpack.c.b16 %v1077, %v1069
    %v1454 = vpack.c.b16 %v1078, %v1070
    %v1455 = vpack.c.b16 %v1079, %v1071
    %v1456 = vpack.c.b16 %v1080, %v1072
    %v1457 = vpack.c.b16 %v1081, %v1073
    %v1458 = vpack.c.b16 %v1082, %v1074
    %v1459 = vpack.c.b16 %v1083, %v1075
    %v1460 = vpack.c.b16 %v1084, %v1076
    %v1461 = vpack.c.b16 %v1093, %v1085
    %v1462 = vpack.c.b16 %v1094, %v1086
    %v1463 = vpack.c.b16 %v1095, %v1087
    %v1464 = vpack.c.b16 %v1096, %v1088
    %v1465 = vpack.c.b16 %v1097, %v1089
    %v1466 = vpack.c.b16 %v1098, %v1090
    %v1467 = vpack.c.b16 %v1099, %v1091
    %v1468 = vpack.c.b16 %v1100, %v1092
    %v1469 = vpack.c.b16 %v1109, %v1101
    %v1470 = vpack.c.b16 %v1110, %v1102
    %v1471 = vpack.c.b16 %v1111, %v1103
    %v1472 = vpack.c.b16 %v1112, %v1104
    %v1473 = vpack.c.b16 %v1113, %v1105
    %v1474 = vpack.c.b16 %v1114, %v1106
    %v1475 = vpack.c.b16 %v1115, %v1107
    %v1476 = vpack.c.b16 %v1116, %v1108
    %v1477 = vpack.c.b16 %v1125, %v1117
    %v1478 = vpack.c.b16 %v1126, %v1118
    %v1479 = vpack.c.b16 %v1127, %v1119
    %v1480 = vpack.c.b16 %v1128, %v1120
    %v1481 = vpack.c.b16 %v1129, %v1121
    %v1482 = vpack.c.b16 %v1130, %v1122
    %v1483 = vpack.c.b16 %v1131, %v1123
    %v1484 = vpack.c.b16 %v1132, %v1124
    %v1485 = vpack.c.b16 %v1141, %v1133
    %v1486 = vpack.c.b16 %v1142, %v1134
    %v1487 = vpack.c.b16 %v1143, %v1135
    %v1488 = vpack.c.b16 %v1144, %v1136
    %v1489 = vpack.c.b16 %v1145, %v1137
    %v1490 = vpack.c.b16 %v1146, %v1138
    %v1491 = vpack.c.b16 %v1147, %v1139
    %v1492 = vpack.c.b16 %v1148, %v1140
    %v1493 = vpack.c.b16 %v1157, %v1149
    %v1494 = vpack.c.b16 %v1158, %v1150
    %v1495 = vpack.c.b16 %v1159, %v1151
    %v1496 = vpack.c.b16 %v1160, %v1152
    %v1497 = vpack.c.b16 %v1161, %v1153
    %v1498 = vpack.c.b16 %v1162, %v1154
    %v1499 = vpack.c.b16 %v1163, %v1155
    %v1500 = vpack.c.b16 %v1164, %v1156
    %v1501 = vpack.c.b16 %v1173, %v1165
    %v1502 = vpack.c.b16 %v1174, %v1166
    %v1503 = vpack.c.b16 %v1175, %v1167
    %v1504 = vpack.c.b16 %v1176, %v1168
    %v1505 = vpack.c.b16 %v1177, %v1169
    %v1506 = vpack.c.b16 %v1178, %v1170
    %v1507 = vpack.c.b16 %v1179, %v1171
    %v1508 = vpack.c.b16 %v1180, %v1172
    %v1509 = vpack.c.b16 %v1189, %v1181
    %v1510 = vpack.c.b16 %v1190, %v1182
    %v1511 = vpack.c.b16 %v1191, %v1183
    %v1512 = vpack.c.b16 %v1192, %v1184
    %v1513 = vpack.c.b16 %v1193, %v1185
    %v1514 = vpack.c.b16 %v1194, %v1186
    %v1515 = vpack.c.b16 %v1195, %v1187
    %v1516 = vpack.c.b16 %v1196, %v1188
    %v1517 = vpack.c.b16 %v1205, %v1197
    %v1518 = vpack.c.b16 %v1206, %v1198
    %v1519 = vpack.c.b16 %v1207, %v1199
    %v1520 = vpack.c.b16 %v1208, %v1200
    %v1521 = vpack.c.b16 %v1209, %v1201
    %v1522 = vpack.c.b16 %v1210, %v1202
    %v1523 = vpack.c.b16 %v1211, %v1203
    %v1524 = vpack.c.b16 %v1212, %v1204
    %v1525 = vpack.c.b16 %v1221, %v1213
    %v1526 = vpack.c.b16 %v1222, %v1214
    %v1527 = vpack.c.b16 %v1223, %v1215
    %v1528 = vpack.c.b16 %v1224, %v1216
    %v1529 = vpack.c.b16 %v1225, %v1217
    %v1530 = vpack.c.b16 %v1226, %v1218
    %v1531 = vpack.c.b16 %v1227, %v1219
    %v1532 = vpack.c.b16 %v1228, %v1220
    %v1533 = vpack.c.b16 %v1237, %v1229
    %v1534 = vpack.c.b16 %v1238, %v1230
    %v1535 = vpack.c.b16 %v1239, %v1231
    %v1536 = vpack.c.b16 %v1240, %v1232
    %v1537 = vpack.c.b16 %v1241, %v1233
    %v1538 = vpack.c.b16 %v1242, %v1234
    %v1539 = vpack.c.b16 %v1243, %v1235
    %v1540 = vpack.c.b16 %v1244, %v1236
    %v1541 = vpack.c.b16 %v1253, %v1245
    %v1542 = vpack.c.b16 %v1254, %v1246
    %v1543 = vpack.c.b16 %v1255, %v1247
    %v1544 = vpack.c.b16 %v1256, %v1248
    %v1545 = vpack.c.b16 %v1257, %v1249
    %v1546 = vpack.c.b16 %v1258, %v1250
    %v1547 = vpack.c.b16 %v1259, %v1251
    %v1548 = vpack.c.b16 %v1260, %v1252
    %vm1837 = vcmask 523264
    %v1839 = vsel %vm1837, %v383, 0
    %1841 = vmatprep.subr.bf16.mxu0 %v1318
    %1842 = vmatpush1.bf16.msra.mxu0 %v1317
    %1843 = vmatprep.subr.bf16.mxu0 %v1310
    %1844 = vmatpush1.bf16.msra.mxu0 %v1309
    %1845 = vmatprep.subr.bf16.mxu0 %v1302
    %1846 = vmatpush1.bf16.msra.mxu0 %v1301
    %1847 = vmatprep.subr.bf16.mxu0 %v1294
    %1848 = vmatpush1.bf16.msra.mxu0 %v1293
    %1849 = vmatprep.subr.bf16.mxu0 %v1286
    %1850 = vmatpush1.bf16.msra.mxu0 %v1285
    %1851 = vmatprep.subr.bf16.mxu0 %v1278
    %1852 = vmatpush1.bf16.msra.mxu0 %v1277
    %1853 = vmatprep.subr.bf16.mxu0 %v1270
    %1854 = vmatpush1.bf16.msra.mxu0 %v1269
    %1855 = vmatprep.subr.bf16.mxu0 %v1262
    %1856 = vmatpush1.bf16.msra.mxu0 %v1261
    %1857 = vmatprep.subr.bf16.mxu0 %v1382
    %1858 = vmatpush2.bf16.msra.mxu0 %v1381
    %1859 = vmatprep.subr.bf16.mxu0 %v1374
    %1860 = vmatpush2.bf16.msra.mxu0 %v1373
    %1861 = vmatprep.subr.bf16.mxu0 %v1366
    %1862 = vmatpush2.bf16.msra.mxu0 %v1365
    %1863 = vmatprep.subr.bf16.mxu0 %v1358
    %1864 = vmatpush2.bf16.msra.mxu0 %v1357
    %1865 = vmatprep.subr.bf16.mxu0 %v1350
    %1866 = vmatpush2.bf16.msra.mxu0 %v1349
    %1867 = vmatprep.subr.bf16.mxu0 %v1342
    %1868 = vmatpush2.bf16.msra.mxu0 %v1341
    %1869 = vmatprep.subr.bf16.mxu0 %v1334
    %1870 = vmatpush2.bf16.msra.mxu0 %v1333
    %1871 = vmatprep.subr.bf16.mxu0 %v1326
    %1872 = vmatpush2.bf16.msra.mxu0 %v1325
    %1873 = vmatprep.mubr.bf16.mxu0 %v390
    %1874 = vmatmul.mubr.bf16.gmra.mxu0 %v376
    %v1875 = vpop.f32.mrf.mxu0
    %v1876 = vadd.f32 %v316, %v1875
    %v1877 = vpop.f32.mrf.mxu0
    %v1878 = vadd.f32 %v320, %v1877
    %v1879 = vpop.f32.mrf.mxu0
    %v1880 = vpop.f32.mrf.mxu0
    %1881 = vdwg.mxu0
    %1882 = vmatprep.subr.bf16.mxu0 %v1446
    %1883 = vmatpush1.bf16.msra.mxu0 %v1445
    %1884 = vmatprep.subr.bf16.mxu0 %v1438
    %1885 = vmatpush1.bf16.msra.mxu0 %v1437
    %1886 = vmatprep.subr.bf16.mxu0 %v1430
    %1887 = vmatpush1.bf16.msra.mxu0 %v1429
    %1888 = vmatprep.subr.bf16.mxu0 %v1422
    %1889 = vmatpush1.bf16.msra.mxu0 %v1421
    %1890 = vmatprep.subr.bf16.mxu0 %v1414
    %1891 = vmatpush1.bf16.msra.mxu0 %v1413
    %1892 = vmatprep.subr.bf16.mxu0 %v1406
    %1893 = vmatpush1.bf16.msra.mxu0 %v1405
    %1894 = vmatprep.subr.bf16.mxu0 %v1398
    %1895 = vmatpush1.bf16.msra.mxu0 %v1397
    %1896 = vmatprep.subr.bf16.mxu0 %v1390
    %1897 = vmatpush1.bf16.msra.mxu0 %v1389
    %1898 = vmatprep.subr.bf16.mxu0 %v1510
    %1899 = vmatpush2.bf16.msra.mxu0 %v1509
    %1900 = vmatprep.subr.bf16.mxu0 %v1502
    %1901 = vmatpush2.bf16.msra.mxu0 %v1501
    %1902 = vmatprep.subr.bf16.mxu0 %v1494
    %1903 = vmatpush2.bf16.msra.mxu0 %v1493
    %1904 = vmatprep.subr.bf16.mxu0 %v1486
    %1905 = vmatpush2.bf16.msra.mxu0 %v1485
    %1906 = vmatprep.subr.bf16.mxu0 %v1478
    %1907 = vmatpush2.bf16.msra.mxu0 %v1477
    %1908 = vmatprep.subr.bf16.mxu0 %v1470
    %1909 = vmatpush2.bf16.msra.mxu0 %v1469
    %1910 = vmatprep.subr.bf16.mxu0 %v1462
    %1911 = vmatpush2.bf16.msra.mxu0 %v1461
    %1912 = vmatprep.subr.bf16.mxu0 %v1454
    %1913 = vmatpush2.bf16.msra.mxu0 %v1453
    %1914 = vmatprep.mubr.bf16.mxu0 %v392
    %1915 = vmatmul.mubr.bf16.gmra.mxu0 %v391
    %v1916 = vpop.f32.mrf.mxu0
    %v1917 = vadd.f32 %v1876, %v1916
    %v1918 = vpop.f32.mrf.mxu0
    %v1919 = vadd.f32 %v1878, %v1918
    %v1920 = vpop.f32.mrf.mxu0
    %v1921 = vpop.f32.mrf.mxu0
    %1922 = vdwg.mxu0
    %1923 = vmatprep.subr.bf16.mxu0 0
    %1924 = vmatpush1.bf16.msra.mxu0 0
    %1925 = vmatprep.subr.bf16.mxu0 0
    %1926 = vmatpush1.bf16.msra.mxu0 0
    %1927 = vmatprep.subr.bf16.mxu0 0
    %1928 = vmatpush1.bf16.msra.mxu0 0
    %1929 = vmatprep.subr.bf16.mxu0 0
    %1930 = vmatpush1.bf16.msra.mxu0 0
    %1931 = vmatprep.subr.bf16.mxu0 %v1542
    %1932 = vmatpush1.bf16.msra.mxu0 %v1541
    %1933 = vmatprep.subr.bf16.mxu0 %v1534
    %1934 = vmatpush1.bf16.msra.mxu0 %v1533
    %1935 = vmatprep.subr.bf16.mxu0 %v1526
    %1936 = vmatpush1.bf16.msra.mxu0 %v1525
    %1937 = vmatprep.subr.bf16.mxu0 %v1518
    %1938 = vmatpush1.bf16.msra.mxu0 %v1517
    %1939 = vmatprep.subr.bf16.mxu0 0
    %1940 = vmatpush2.bf16.msra.mxu0 0
    %1941 = vmatprep.subr.bf16.mxu0 0
    %1942 = vmatpush2.bf16.msra.mxu0 0
    %1943 = vmatprep.subr.bf16.mxu0 0
    %1944 = vmatpush2.bf16.msra.mxu0 0
    %1945 = vmatprep.subr.bf16.mxu0 0
    %1946 = vmatpush2.bf16.msra.mxu0 0
    %1947 = vmatprep.subr.bf16.mxu0 0
    %1948 = vmatpush2.bf16.msra.mxu0 0
    %1949 = vmatprep.subr.bf16.mxu0 0
    %1950 = vmatpush2.bf16.msra.mxu0 0
    %1951 = vmatprep.subr.bf16.mxu0 0
    %1952 = vmatpush2.bf16.msra.mxu0 0
    %1953 = vmatprep.subr.bf16.mxu0 0
    %1954 = vmatpush2.bf16.msra.mxu0 0
    %1955 = vmatprep.mubr.bf16.mxu0 0
    %1956 = vmatmul.mubr.bf16.gmra.mxu0 %v1839
    %v1957 = vpop.f32.mrf.mxu0
    %v1958 = vadd.f32 %v1917, %v1957
    %v1959 = vpop.f32.mrf.mxu0
    %v1960 = vadd.f32 %v1919, %v1959
    %v1961 = vpop.f32.mrf.mxu0
    %v1962 = vpop.f32.mrf.mxu0
    %1963 = vdwg.mxu0
    %1964 = vmatprep.subr.bf16.mxu0 %v1320
    %1965 = vmatpush1.bf16.msra.mxu0 %v1319
    %1966 = vmatprep.subr.bf16.mxu0 %v1312
    %1967 = vmatpush1.bf16.msra.mxu0 %v1311
    %1968 = vmatprep.subr.bf16.mxu0 %v1304
    %1969 = vmatpush1.bf16.msra.mxu0 %v1303
    %1970 = vmatprep.subr.bf16.mxu0 %v1296
    %1971 = vmatpush1.bf16.msra.mxu0 %v1295
    %1972 = vmatprep.subr.bf16.mxu0 %v1288
    %1973 = vmatpush1.bf16.msra.mxu0 %v1287
    %1974 = vmatprep.subr.bf16.mxu0 %v1280
    %1975 = vmatpush1.bf16.msra.mxu0 %v1279
    %1976 = vmatprep.subr.bf16.mxu0 %v1272
    %1977 = vmatpush1.bf16.msra.mxu0 %v1271
    %1978 = vmatprep.subr.bf16.mxu0 %v1264
    %1979 = vmatpush1.bf16.msra.mxu0 %v1263
    %1980 = vmatprep.subr.bf16.mxu0 %v1384
    %1981 = vmatpush2.bf16.msra.mxu0 %v1383
    %1982 = vmatprep.subr.bf16.mxu0 %v1376
    %1983 = vmatpush2.bf16.msra.mxu0 %v1375
    %1984 = vmatprep.subr.bf16.mxu0 %v1368
    %1985 = vmatpush2.bf16.msra.mxu0 %v1367
    %1986 = vmatprep.subr.bf16.mxu0 %v1360
    %1987 = vmatpush2.bf16.msra.mxu0 %v1359
    %1988 = vmatprep.subr.bf16.mxu0 %v1352
    %1989 = vmatpush2.bf16.msra.mxu0 %v1351
    %1990 = vmatprep.subr.bf16.mxu0 %v1344
    %1991 = vmatpush2.bf16.msra.mxu0 %v1343
    %1992 = vmatprep.subr.bf16.mxu0 %v1336
    %1993 = vmatpush2.bf16.msra.mxu0 %v1335
    %1994 = vmatprep.subr.bf16.mxu0 %v1328
    %1995 = vmatpush2.bf16.msra.mxu0 %v1327
    %1996 = vmatprep.mubr.bf16.mxu0 %v390
    %1997 = vmatmul.mubr.bf16.gmra.mxu0 %v376
    %v1998 = vpop.f32.mrf.mxu0
    %v1999 = vadd.f32 %v324, %v1998
    %v2000 = vpop.f32.mrf.mxu0
    %v2001 = vadd.f32 %v328, %v2000
    %v2002 = vpop.f32.mrf.mxu0
    %v2003 = vpop.f32.mrf.mxu0
    %2004 = vdwg.mxu0
    %2005 = vmatprep.subr.bf16.mxu0 %v1448
    %2006 = vmatpush1.bf16.msra.mxu0 %v1447
    %2007 = vmatprep.subr.bf16.mxu0 %v1440
    %2008 = vmatpush1.bf16.msra.mxu0 %v1439
    %2009 = vmatprep.subr.bf16.mxu0 %v1432
    %2010 = vmatpush1.bf16.msra.mxu0 %v1431
    %2011 = vmatprep.subr.bf16.mxu0 %v1424
    %2012 = vmatpush1.bf16.msra.mxu0 %v1423
    %2013 = vmatprep.subr.bf16.mxu0 %v1416
    %2014 = vmatpush1.bf16.msra.mxu0 %v1415
    %2015 = vmatprep.subr.bf16.mxu0 %v1408
    %2016 = vmatpush1.bf16.msra.mxu0 %v1407
    %2017 = vmatprep.subr.bf16.mxu0 %v1400
    %2018 = vmatpush1.bf16.msra.mxu0 %v1399
    %2019 = vmatprep.subr.bf16.mxu0 %v1392
    %2020 = vmatpush1.bf16.msra.mxu0 %v1391
    %2021 = vmatprep.subr.bf16.mxu0 %v1512
    %2022 = vmatpush2.bf16.msra.mxu0 %v1511
    %2023 = vmatprep.subr.bf16.mxu0 %v1504
    %2024 = vmatpush2.bf16.msra.mxu0 %v1503
    %2025 = vmatprep.subr.bf16.mxu0 %v1496
    %2026 = vmatpush2.bf16.msra.mxu0 %v1495
    %2027 = vmatprep.subr.bf16.mxu0 %v1488
    %2028 = vmatpush2.bf16.msra.mxu0 %v1487
    %2029 = vmatprep.subr.bf16.mxu0 %v1480
    %2030 = vmatpush2.bf16.msra.mxu0 %v1479
    %2031 = vmatprep.subr.bf16.mxu0 %v1472
    %2032 = vmatpush2.bf16.msra.mxu0 %v1471
    %2033 = vmatprep.subr.bf16.mxu0 %v1464
    %2034 = vmatpush2.bf16.msra.mxu0 %v1463
    %2035 = vmatprep.subr.bf16.mxu0 %v1456
    %2036 = vmatpush2.bf16.msra.mxu0 %v1455
    %2037 = vmatprep.mubr.bf16.mxu0 %v392
    %2038 = vmatmul.mubr.bf16.gmra.mxu0 %v391
    %v2039 = vpop.f32.mrf.mxu0
    %v2040 = vadd.f32 %v1999, %v2039
    %v2041 = vpop.f32.mrf.mxu0
    %v2042 = vadd.f32 %v2001, %v2041
    %v2043 = vpop.f32.mrf.mxu0
    %v2044 = vpop.f32.mrf.mxu0
    %2045 = vdwg.mxu0
    %2046 = vmatprep.subr.bf16.mxu0 0
    %2047 = vmatpush1.bf16.msra.mxu0 0
    %2048 = vmatprep.subr.bf16.mxu0 0
    %2049 = vmatpush1.bf16.msra.mxu0 0
    %2050 = vmatprep.subr.bf16.mxu0 0
    %2051 = vmatpush1.bf16.msra.mxu0 0
    %2052 = vmatprep.subr.bf16.mxu0 0
    %2053 = vmatpush1.bf16.msra.mxu0 0
    %2054 = vmatprep.subr.bf16.mxu0 %v1544
    %2055 = vmatpush1.bf16.msra.mxu0 %v1543
    %2056 = vmatprep.subr.bf16.mxu0 %v1536
    %2057 = vmatpush1.bf16.msra.mxu0 %v1535
    %2058 = vmatprep.subr.bf16.mxu0 %v1528
    %2059 = vmatpush1.bf16.msra.mxu0 %v1527
    %2060 = vmatprep.subr.bf16.mxu0 %v1520
    %2061 = vmatpush1.bf16.msra.mxu0 %v1519
    %2062 = vmatprep.subr.bf16.mxu0 0
    %2063 = vmatpush2.bf16.msra.mxu0 0
    %2064 = vmatprep.subr.bf16.mxu0 0
    %2065 = vmatpush2.bf16.msra.mxu0 0
    %2066 = vmatprep.subr.bf16.mxu0 0
    %2067 = vmatpush2.bf16.msra.mxu0 0
    %2068 = vmatprep.subr.bf16.mxu0 0
    %2069 = vmatpush2.bf16.msra.mxu0 0
    %2070 = vmatprep.subr.bf16.mxu0 0
    %2071 = vmatpush2.bf16.msra.mxu0 0
    %2072 = vmatprep.subr.bf16.mxu0 0
    %2073 = vmatpush2.bf16.msra.mxu0 0
    %2074 = vmatprep.subr.bf16.mxu0 0
    %2075 = vmatpush2.bf16.msra.mxu0 0
    %2076 = vmatprep.subr.bf16.mxu0 0
    %2077 = vmatpush2.bf16.msra.mxu0 0
    %2078 = vmatprep.mubr.bf16.mxu0 0
    %2079 = vmatmul.mubr.bf16.gmra.mxu0 %v1839
    %v2080 = vpop.f32.mrf.mxu0
    %v2081 = vadd.f32 %v2040, %v2080
    %v2082 = vpop.f32.mrf.mxu0
    %v2083 = vadd.f32 %v2042, %v2082
    %v2084 = vpop.f32.mrf.mxu0
    %v2085 = vpop.f32.mrf.mxu0
    %2086 = vdwg.mxu0
    %2087 = vmatprep.subr.bf16.mxu0 %v1322
    %2088 = vmatpush1.bf16.msra.mxu0 %v1321
    %2089 = vmatprep.subr.bf16.mxu0 %v1314
    %2090 = vmatpush1.bf16.msra.mxu0 %v1313
    %2091 = vmatprep.subr.bf16.mxu0 %v1306
    %2092 = vmatpush1.bf16.msra.mxu0 %v1305
    %2093 = vmatprep.subr.bf16.mxu0 %v1298
    %2094 = vmatpush1.bf16.msra.mxu0 %v1297
    %2095 = vmatprep.subr.bf16.mxu0 %v1290
    %2096 = vmatpush1.bf16.msra.mxu0 %v1289
    %2097 = vmatprep.subr.bf16.mxu0 %v1282
    %2098 = vmatpush1.bf16.msra.mxu0 %v1281
    %2099 = vmatprep.subr.bf16.mxu0 %v1274
    %2100 = vmatpush1.bf16.msra.mxu0 %v1273
    %2101 = vmatprep.subr.bf16.mxu0 %v1266
    %2102 = vmatpush1.bf16.msra.mxu0 %v1265
    %2103 = vmatprep.subr.bf16.mxu0 %v1386
    %2104 = vmatpush2.bf16.msra.mxu0 %v1385
    %2105 = vmatprep.subr.bf16.mxu0 %v1378
    %2106 = vmatpush2.bf16.msra.mxu0 %v1377
    %2107 = vmatprep.subr.bf16.mxu0 %v1370
    %2108 = vmatpush2.bf16.msra.mxu0 %v1369
    %2109 = vmatprep.subr.bf16.mxu0 %v1362
    %2110 = vmatpush2.bf16.msra.mxu0 %v1361
    %2111 = vmatprep.subr.bf16.mxu0 %v1354
    %2112 = vmatpush2.bf16.msra.mxu0 %v1353
    %2113 = vmatprep.subr.bf16.mxu0 %v1346
    %2114 = vmatpush2.bf16.msra.mxu0 %v1345
    %2115 = vmatprep.subr.bf16.mxu0 %v1338
    %2116 = vmatpush2.bf16.msra.mxu0 %v1337
    %2117 = vmatprep.subr.bf16.mxu0 %v1330
    %2118 = vmatpush2.bf16.msra.mxu0 %v1329
    %2119 = vmatprep.mubr.bf16.mxu0 %v390
    %2120 = vmatmul.mubr.bf16.gmra.mxu0 %v376
    %v2121 = vpop.f32.mrf.mxu0
    %v2122 = vadd.f32 %v332, %v2121
    %v2123 = vpop.f32.mrf.mxu0
    %v2124 = vadd.f32 %v336, %v2123
    %v2125 = vpop.f32.mrf.mxu0
    %v2126 = vpop.f32.mrf.mxu0
    %2127 = vdwg.mxu0
    %2128 = vmatprep.subr.bf16.mxu0 %v1450
    %2129 = vmatpush1.bf16.msra.mxu0 %v1449
    %2130 = vmatprep.subr.bf16.mxu0 %v1442
    %2131 = vmatpush1.bf16.msra.mxu0 %v1441
    %2132 = vmatprep.subr.bf16.mxu0 %v1434
    %2133 = vmatpush1.bf16.msra.mxu0 %v1433
    %2134 = vmatprep.subr.bf16.mxu0 %v1426
    %2135 = vmatpush1.bf16.msra.mxu0 %v1425
    %2136 = vmatprep.subr.bf16.mxu0 %v1418
    %2137 = vmatpush1.bf16.msra.mxu0 %v1417
    %2138 = vmatprep.subr.bf16.mxu0 %v1410
    %2139 = vmatpush1.bf16.msra.mxu0 %v1409
    %2140 = vmatprep.subr.bf16.mxu0 %v1402
    %2141 = vmatpush1.bf16.msra.mxu0 %v1401
    %2142 = vmatprep.subr.bf16.mxu0 %v1394
    %2143 = vmatpush1.bf16.msra.mxu0 %v1393
    %2144 = vmatprep.subr.bf16.mxu0 %v1514
    %2145 = vmatpush2.bf16.msra.mxu0 %v1513
    %2146 = vmatprep.subr.bf16.mxu0 %v1506
    %2147 = vmatpush2.bf16.msra.mxu0 %v1505
    %2148 = vmatprep.subr.bf16.mxu0 %v1498
    %2149 = vmatpush2.bf16.msra.mxu0 %v1497
    %2150 = vmatprep.subr.bf16.mxu0 %v1490
    %2151 = vmatpush2.bf16.msra.mxu0 %v1489
    %2152 = vmatprep.subr.bf16.mxu0 %v1482
    %2153 = vmatpush2.bf16.msra.mxu0 %v1481
    %2154 = vmatprep.subr.bf16.mxu0 %v1474
    %2155 = vmatpush2.bf16.msra.mxu0 %v1473
    %2156 = vmatprep.subr.bf16.mxu0 %v1466
    %2157 = vmatpush2.bf16.msra.mxu0 %v1465
    %2158 = vmatprep.subr.bf16.mxu0 %v1458
    %2159 = vmatpush2.bf16.msra.mxu0 %v1457
    %2160 = vmatprep.mubr.bf16.mxu0 %v392
    %2161 = vmatmul.mubr.bf16.gmra.mxu0 %v391
    %v2162 = vpop.f32.mrf.mxu0
    %v2163 = vadd.f32 %v2122, %v2162
    %v2164 = vpop.f32.mrf.mxu0
    %v2165 = vadd.f32 %v2124, %v2164
    %v2166 = vpop.f32.mrf.mxu0
    %v2167 = vpop.f32.mrf.mxu0
    %2168 = vdwg.mxu0
    %2169 = vmatprep.subr.bf16.mxu0 0
    %2170 = vmatpush1.bf16.msra.mxu0 0
    %2171 = vmatprep.subr.bf16.mxu0 0
    %2172 = vmatpush1.bf16.msra.mxu0 0
    %2173 = vmatprep.subr.bf16.mxu0 0
    %2174 = vmatpush1.bf16.msra.mxu0 0
    %2175 = vmatprep.subr.bf16.mxu0 0
    %2176 = vmatpush1.bf16.msra.mxu0 0
    %2177 = vmatprep.subr.bf16.mxu0 %v1546
    %2178 = vmatpush1.bf16.msra.mxu0 %v1545
    %2179 = vmatprep.subr.bf16.mxu0 %v1538
    %2180 = vmatpush1.bf16.msra.mxu0 %v1537
    %2181 = vmatprep.subr.bf16.mxu0 %v1530
    %2182 = vmatpush1.bf16.msra.mxu0 %v1529
    %2183 = vmatprep.subr.bf16.mxu0 %v1522
    %2184 = vmatpush1.bf16.msra.mxu0 %v1521
    %2185 = vmatprep.subr.bf16.mxu0 0
    %2186 = vmatpush2.bf16.msra.mxu0 0
    %2187 = vmatprep.subr.bf16.mxu0 0
    %2188 = vmatpush2.bf16.msra.mxu0 0
    %2189 = vmatprep.subr.bf16.mxu0 0
    %2190 = vmatpush2.bf16.msra.mxu0 0
    %2191 = vmatprep.subr.bf16.mxu0 0
    %2192 = vmatpush2.bf16.msra.mxu0 0
    %2193 = vmatprep.subr.bf16.mxu0 0
    %2194 = vmatpush2.bf16.msra.mxu0 0
    %2195 = vmatprep.subr.bf16.mxu0 0
    %2196 = vmatpush2.bf16.msra.mxu0 0
    %2197 = vmatprep.subr.bf16.mxu0 0
    %2198 = vmatpush2.bf16.msra.mxu0 0
    %2199 = vmatprep.subr.bf16.mxu0 0
    %2200 = vmatpush2.bf16.msra.mxu0 0
    %2201 = vmatprep.mubr.bf16.mxu0 0
    %2202 = vmatmul.mubr.bf16.gmra.mxu0 %v1839
    %v2203 = vpop.f32.mrf.mxu0
    %v2204 = vadd.f32 %v2163, %v2203
    %v2205 = vpop.f32.mrf.mxu0
    %v2206 = vadd.f32 %v2165, %v2205
    %v2207 = vpop.f32.mrf.mxu0
    %v2208 = vpop.f32.mrf.mxu0
    %2209 = vdwg.mxu0
    %2210 = vmatprep.subr.bf16.mxu0 %v1324
    %2211 = vmatpush1.bf16.msra.mxu0 %v1323
    %2212 = vmatprep.subr.bf16.mxu0 %v1316
    %2213 = vmatpush1.bf16.msra.mxu0 %v1315
    %2214 = vmatprep.subr.bf16.mxu0 %v1308
    %2215 = vmatpush1.bf16.msra.mxu0 %v1307
    %2216 = vmatprep.subr.bf16.mxu0 %v1300
    %2217 = vmatpush1.bf16.msra.mxu0 %v1299
    %2218 = vmatprep.subr.bf16.mxu0 %v1292
    %2219 = vmatpush1.bf16.msra.mxu0 %v1291
    %2220 = vmatprep.subr.bf16.mxu0 %v1284
    %2221 = vmatpush1.bf16.msra.mxu0 %v1283
    %2222 = vmatprep.subr.bf16.mxu0 %v1276
    %2223 = vmatpush1.bf16.msra.mxu0 %v1275
    %2224 = vmatprep.subr.bf16.mxu0 %v1268
    %2225 = vmatpush1.bf16.msra.mxu0 %v1267
    %2226 = vmatprep.subr.bf16.mxu0 %v1388
    %2227 = vmatpush2.bf16.msra.mxu0 %v1387
    %2228 = vmatprep.subr.bf16.mxu0 %v1380
    %2229 = vmatpush2.bf16.msra.mxu0 %v1379
    %2230 = vmatprep.subr.bf16.mxu0 %v1372
    %2231 = vmatpush2.bf16.msra.mxu0 %v1371
    %2232 = vmatprep.subr.bf16.mxu0 %v1364
    %2233 = vmatpush2.bf16.msra.mxu0 %v1363
    %2234 = vmatprep.subr.bf16.mxu0 %v1356
    %2235 = vmatpush2.bf16.msra.mxu0 %v1355
    %2236 = vmatprep.subr.bf16.mxu0 %v1348
    %2237 = vmatpush2.bf16.msra.mxu0 %v1347
    %2238 = vmatprep.subr.bf16.mxu0 %v1340
    %2239 = vmatpush2.bf16.msra.mxu0 %v1339
    %2240 = vmatprep.subr.bf16.mxu0 %v1332
    %2241 = vmatpush2.bf16.msra.mxu0 %v1331
    %2242 = vmatprep.mubr.bf16.mxu0 %v390
    %2243 = vmatmul.mubr.bf16.gmra.mxu0 %v376
    %v2244 = vpop.f32.mrf.mxu0
    %v2245 = vadd.f32 %v340, %v2244
    %v2246 = vpop.f32.mrf.mxu0
    %v2247 = vadd.f32 %v344, %v2246
    %v2248 = vpop.f32.mrf.mxu0
    %v2249 = vpop.f32.mrf.mxu0
    %2250 = vdwg.mxu0
    %2251 = vmatprep.subr.bf16.mxu0 %v1452
    %2252 = vmatpush1.bf16.msra.mxu0 %v1451
    %2253 = vmatprep.subr.bf16.mxu0 %v1444
    %2254 = vmatpush1.bf16.msra.mxu0 %v1443
    %2255 = vmatprep.subr.bf16.mxu0 %v1436
    %2256 = vmatpush1.bf16.msra.mxu0 %v1435
    %2257 = vmatprep.subr.bf16.mxu0 %v1428
    %2258 = vmatpush1.bf16.msra.mxu0 %v1427
    %2259 = vmatprep.subr.bf16.mxu0 %v1420
    %2260 = vmatpush1.bf16.msra.mxu0 %v1419
    %2261 = vmatprep.subr.bf16.mxu0 %v1412
    %2262 = vmatpush1.bf16.msra.mxu0 %v1411
    %2263 = vmatprep.subr.bf16.mxu0 %v1404
    %2264 = vmatpush1.bf16.msra.mxu0 %v1403
    %2265 = vmatprep.subr.bf16.mxu0 %v1396
    %2266 = vmatpush1.bf16.msra.mxu0 %v1395
    %2267 = vmatprep.subr.bf16.mxu0 %v1516
    %2268 = vmatpush2.bf16.msra.mxu0 %v1515
    %2269 = vmatprep.subr.bf16.mxu0 %v1508
    %2270 = vmatpush2.bf16.msra.mxu0 %v1507
    %2271 = vmatprep.subr.bf16.mxu0 %v1500
    %2272 = vmatpush2.bf16.msra.mxu0 %v1499
    %2273 = vmatprep.subr.bf16.mxu0 %v1492
    %2274 = vmatpush2.bf16.msra.mxu0 %v1491
    %2275 = vmatprep.subr.bf16.mxu0 %v1484
    %2276 = vmatpush2.bf16.msra.mxu0 %v1483
    %2277 = vmatprep.subr.bf16.mxu0 %v1476
    %2278 = vmatpush2.bf16.msra.mxu0 %v1475
    %2279 = vmatprep.subr.bf16.mxu0 %v1468
    %2280 = vmatpush2.bf16.msra.mxu0 %v1467
    %2281 = vmatprep.subr.bf16.mxu0 %v1460
    %2282 = vmatpush2.bf16.msra.mxu0 %v1459
    %2283 = vmatprep.mubr.bf16.mxu0 %v392
    %2284 = vmatmul.mubr.bf16.gmra.mxu0 %v391
    %v2285 = vpop.f32.mrf.mxu0
    %v2286 = vadd.f32 %v2245, %v2285
    %v2287 = vpop.f32.mrf.mxu0
    %v2288 = vadd.f32 %v2247, %v2287
    %v2289 = vpop.f32.mrf.mxu0
    %v2290 = vpop.f32.mrf.mxu0
    %2291 = vdwg.mxu0
    %2292 = vmatprep.subr.bf16.mxu0 0
    %2293 = vmatpush1.bf16.msra.mxu0 0
    %2294 = vmatprep.subr.bf16.mxu0 0
    %2295 = vmatpush1.bf16.msra.mxu0 0
    %2296 = vmatprep.subr.bf16.mxu0 0
    %2297 = vmatpush1.bf16.msra.mxu0 0
    %2298 = vmatprep.subr.bf16.mxu0 0
    %2299 = vmatpush1.bf16.msra.mxu0 0
    %2300 = vmatprep.subr.bf16.mxu0 %v1548
    %2301 = vmatpush1.bf16.msra.mxu0 %v1547
    %2302 = vmatprep.subr.bf16.mxu0 %v1540
    %2303 = vmatpush1.bf16.msra.mxu0 %v1539
    %2304 = vmatprep.subr.bf16.mxu0 %v1532
    %2305 = vmatpush1.bf16.msra.mxu0 %v1531
    %2306 = vmatprep.subr.bf16.mxu0 %v1524
    %2307 = vmatpush1.bf16.msra.mxu0 %v1523
    %2308 = vmatprep.subr.bf16.mxu0 0
    %2309 = vmatpush2.bf16.msra.mxu0 0
    %2310 = vmatprep.subr.bf16.mxu0 0
    %2311 = vmatpush2.bf16.msra.mxu0 0
    %2312 = vmatprep.subr.bf16.mxu0 0
    %2313 = vmatpush2.bf16.msra.mxu0 0
    %2314 = vmatprep.subr.bf16.mxu0 0
    %2315 = vmatpush2.bf16.msra.mxu0 0
    %2316 = vmatprep.subr.bf16.mxu0 0
    %2317 = vmatpush2.bf16.msra.mxu0 0
    %2318 = vmatprep.subr.bf16.mxu0 0
    %2319 = vmatpush2.bf16.msra.mxu0 0
    %2320 = vmatprep.subr.bf16.mxu0 0
    %2321 = vmatpush2.bf16.msra.mxu0 0
    %2322 = vmatprep.subr.bf16.mxu0 0
    %2323 = vmatpush2.bf16.msra.mxu0 0
    %2324 = vmatprep.mubr.bf16.mxu0 0
    %2325 = vmatmul.mubr.bf16.gmra.mxu0 %v1839
    %v2326 = vpop.f32.mrf.mxu0
    %v2327 = vadd.f32 %v2286, %v2326
    %v2328 = vpop.f32.mrf.mxu0
    %v2329 = vadd.f32 %v2288, %v2328
    %v2330 = vpop.f32.mrf.mxu0
    %v2331 = vpop.f32.mrf.mxu0
    %2332 = vdwg.mxu0
    %v2333 = vpack.c.bf16 %v1958, %v1958
    %v2334 = vpack.c.bf16 %v1960, %v1960
    %v2335 = vpack.c.bf16 %v2081, %v2081
    %v2336 = vpack.c.bf16 %v2083, %v2083
    %v2337 = vpack.c.bf16 %v2204, %v2204
    %v2338 = vpack.c.bf16 %v2206, %v2206
    %v2339 = vpack.c.bf16 %v2327, %v2327
    %v2340 = vpack.c.bf16 %v2329, %v2329
    %v2341 = vld [vmem:[%s3] sm:$0xf]
    %v2342 = vld [vmem:[%s3 + $0x4] sm:$0xf]
    %v2343 = vld [vmem:[%s3 + $0x8] sm:$0xf]
    %v2344 = vld [vmem:[%s3 + $0xc] sm:$0xf]
    %v2345 = vld [vmem:[%s3 + $0x10] sm:$0xf]
    %v2346 = vld [vmem:[%s3 + $0x14] sm:$0xf]
    %v2347 = vld [vmem:[%s3 + $0x18] sm:$0xf]
    %v2348 = vld [vmem:[%s3 + $0x1c] sm:$0xf]
    %v2349 = vld [vmem:[%s3 + $0x20] sm:$0xf]
    %v2350 = vld [vmem:[%s3 + $0x24] sm:$0xf]
    %v2351 = vld [vmem:[%s3 + $0x28] sm:$0xf]
    %v2352 = vld [vmem:[%s3 + $0x2c] sm:$0xf]
    %v2353 = vld [vmem:[%s3 + $0x30] sm:$0xf]
    %v2354 = vld [vmem:[%s3 + $0x34] sm:$0xf]
    %v2355 = vld [vmem:[%s3 + $0x38] sm:$0xf]
    %v2356 = vld [vmem:[%s3 + $0x3c] sm:$0xf]
    %v2357 = vld [vmem:[%s3 + $0x40] sm:$0xf]
    %v2358 = vld [vmem:[%s3 + $0x44] sm:$0xf]
    %v2359 = vld [vmem:[%s3 + $0x48] sm:$0xf]
    %v2360 = vld [vmem:[%s3 + $0x4c] sm:$0xf]
    %v2361 = vld [vmem:[%s3 + $0x50] sm:$0xf]
    %v2362 = vld [vmem:[%s3 + $0x54] sm:$0xf]
    %v2363 = vld [vmem:[%s3 + $0x58] sm:$0xf]
    %v2364 = vld [vmem:[%s3 + $0x5c] sm:$0xf]
    %v2365 = vld [vmem:[%s3 + $0x60] sm:$0xf]
    %v2366 = vld [vmem:[%s3 + $0x64] sm:$0xf]
    %v2367 = vld [vmem:[%s3 + $0x68] sm:$0xf]
    %v2368 = vld [vmem:[%s3 + $0x6c] sm:$0xf]
    %v2369 = vld [vmem:[%s3 + $0x70] sm:$0xf]
    %v2370 = vld [vmem:[%s3 + $0x74] sm:$0xf]
    %v2371 = vld [vmem:[%s3 + $0x78] sm:$0xf]
    %v2372 = vld [vmem:[%s3 + $0x7c] sm:$0xf]
    %v2373 = vld [vmem:[%s3 + $0x80] sm:$0xf]
    %v2374 = vld [vmem:[%s3 + $0x84] sm:$0xf]
    %v2375 = vld [vmem:[%s3 + $0x88] sm:$0xf]
    %v2376 = vld [vmem:[%s3 + $0x8c] sm:$0xf]
    %v2377 = vld [vmem:[%s3 + $0x90] sm:$0xf]
    %v2378 = vld [vmem:[%s3 + $0x94] sm:$0xf]
    %v2379 = vld [vmem:[%s3 + $0x98] sm:$0xf]
    %v2380 = vld [vmem:[%s3 + $0x9c] sm:$0xf]
    %v2381 = vld [vmem:[%s3 + $0xa0] sm:$0xf]
    %v2382 = vld [vmem:[%s3 + $0xa4] sm:$0xf]
    %v2383 = vld [vmem:[%s3 + $0xa8] sm:$0xf]
    %v2384 = vld [vmem:[%s3 + $0xac] sm:$0xf]
    %v2385 = vld [vmem:[%s3 + $0xb0] sm:$0xf]
    %v2386 = vld [vmem:[%s3 + $0xb4] sm:$0xf]
    %v2387 = vld [vmem:[%s3 + $0xb8] sm:$0xf]
    %v2388 = vld [vmem:[%s3 + $0xbc] sm:$0xf]
    %v2389 = vld [vmem:[%s3 + $0xc0] sm:$0xf]
    %v2390 = vld [vmem:[%s3 + $0xc4] sm:$0xf]
    %v2391 = vld [vmem:[%s3 + $0xc8] sm:$0xf]
    %v2392 = vld [vmem:[%s3 + $0xcc] sm:$0xf]
    %v2393 = vld [vmem:[%s3 + $0xd0] sm:$0xf]
    %v2394 = vld [vmem:[%s3 + $0xd4] sm:$0xf]
    %v2395 = vld [vmem:[%s3 + $0xd8] sm:$0xf]
    %v2396 = vld [vmem:[%s3 + $0xdc] sm:$0xf]
    %v2397 = vld [vmem:[%s3 + $0xe0] sm:$0xf]
    %v2398 = vld [vmem:[%s3 + $0xe4] sm:$0xf]
    %v2399 = vld [vmem:[%s3 + $0xe8] sm:$0xf]
    %v2400 = vld [vmem:[%s3 + $0xec] sm:$0xf]
    %v2401 = vld [vmem:[%s3 + $0xf0] sm:$0xf]
    %v2402 = vld [vmem:[%s3 + $0xf4] sm:$0xf]
    %v2403 = vld [vmem:[%s3 + $0xf8] sm:$0xf]
    %v2404 = vld [vmem:[%s3 + $0xfc] sm:$0xf]
    %v2405 = vld [vmem:[%s3 + $0x100] sm:$0xf]
    %v2406 = vld [vmem:[%s3 + $0x104] sm:$0xf]
    %v2407 = vld [vmem:[%s3 + $0x108] sm:$0xf]
    %v2408 = vld [vmem:[%s3 + $0x10c] sm:$0xf]
    %v2409 = vld [vmem:[%s3 + $0x110] sm:$0xf]
    %v2410 = vld [vmem:[%s3 + $0x114] sm:$0xf]
    %v2411 = vld [vmem:[%s3 + $0x118] sm:$0xf]
    %v2412 = vld [vmem:[%s3 + $0x11c] sm:$0xf]
    %v2413 = vld [vmem:[%s3 + $0x120] sm:$0xf]
    %v2414 = vld [vmem:[%s3 + $0x124] sm:$0xf]
    %v2415 = vld [vmem:[%s3 + $0x128] sm:$0xf]
    %v2416 = vld [vmem:[%s3 + $0x12c] sm:$0xf]
    %v2417 = vld [vmem:[%s3 + $0x130] sm:$0xf]
    %v2418 = vld [vmem:[%s3 + $0x134] sm:$0xf]
    %v2419 = vld [vmem:[%s3 + $0x138] sm:$0xf]
    %v2420 = vld [vmem:[%s3 + $0x13c] sm:$0xf]
    %v2421 = vld [vmem:[%s3 + $0x140] sm:$0xf]
    %v2422 = vld [vmem:[%s3 + $0x144] sm:$0xf]
    %v2423 = vld [vmem:[%s3 + $0x148] sm:$0xf]
    %v2424 = vld [vmem:[%s3 + $0x14c] sm:$0xf]
    %v2425 = vld [vmem:[%s3 + $0x150] sm:$0xf]
    %v2426 = vld [vmem:[%s3 + $0x154] sm:$0xf]
    %v2427 = vld [vmem:[%s3 + $0x158] sm:$0xf]
    %v2428 = vld [vmem:[%s3 + $0x15c] sm:$0xf]
    %v2429 = vld [vmem:[%s3 + $0x160] sm:$0xf]
    %v2430 = vld [vmem:[%s3 + $0x164] sm:$0xf]
    %v2431 = vld [vmem:[%s3 + $0x168] sm:$0xf]
    %v2432 = vld [vmem:[%s3 + $0x16c] sm:$0xf]
    %v2433 = vld [vmem:[%s3 + $0x170] sm:$0xf]
    %v2434 = vld [vmem:[%s3 + $0x174] sm:$0xf]
    %v2435 = vld [vmem:[%s3 + $0x178] sm:$0xf]
    %v2436 = vld [vmem:[%s3 + $0x17c] sm:$0xf]
    %v2437 = vld [vmem:[%s3 + $0x180] sm:$0xf]
    %v2438 = vld [vmem:[%s3 + $0x184] sm:$0xf]
    %v2439 = vld [vmem:[%s3 + $0x188] sm:$0xf]
    %v2440 = vld [vmem:[%s3 + $0x18c] sm:$0xf]
    %v2441 = vld [vmem:[%s3 + $0x190] sm:$0xf]
    %v2442 = vld [vmem:[%s3 + $0x194] sm:$0xf]
    %v2443 = vld [vmem:[%s3 + $0x198] sm:$0xf]
    %v2444 = vld [vmem:[%s3 + $0x19c] sm:$0xf]
    %v2445 = vld [vmem:[%s3 + $0x1a0] sm:$0xf]
    %v2446 = vld [vmem:[%s3 + $0x1a4] sm:$0xf]
    %v2447 = vld [vmem:[%s3 + $0x1a8] sm:$0xf]
    %v2448 = vld [vmem:[%s3 + $0x1ac] sm:$0xf]
    %v2449 = vld [vmem:[%s3 + $0x1b0] sm:$0xf]
    %v2450 = vld [vmem:[%s3 + $0x1b4] sm:$0xf]
    %v2451 = vld [vmem:[%s3 + $0x1b8] sm:$0xf]
    %v2452 = vld [vmem:[%s3 + $0x1bc] sm:$0xf]
    %v2453 = vld [vmem:[%s3 + $0x1c0] sm:$0xf]
    %v2454 = vld [vmem:[%s3 + $0x1c4] sm:$0xf]
    %v2455 = vld [vmem:[%s3 + $0x1c8] sm:$0xf]
    %v2456 = vld [vmem:[%s3 + $0x1cc] sm:$0xf]
    %v2457 = vld [vmem:[%s3 + $0x1d0] sm:$0xf]
    %v2458 = vld [vmem:[%s3 + $0x1d4] sm:$0xf]
    %v2459 = vld [vmem:[%s3 + $0x1d8] sm:$0xf]
    %v2460 = vld [vmem:[%s3 + $0x1dc] sm:$0xf]
    %v2461 = vld [vmem:[%s3 + $0x1e0] sm:$0xf]
    %v2462 = vld [vmem:[%s3 + $0x1e4] sm:$0xf]
    %v2463 = vld [vmem:[%s3 + $0x1e8] sm:$0xf]
    %v2464 = vld [vmem:[%s3 + $0x1ec] sm:$0xf]
    %v2465 = vld [vmem:[%s3 + $0x1f0] sm:$0xf]
    %v2466 = vld [vmem:[%s3 + $0x1f4] sm:$0xf]
    %v2467 = vld [vmem:[%s3 + $0x1f8] sm:$0xf]
    %v2468 = vld [vmem:[%s3 + $0x1fc] sm:$0xf]
    %v2469 = vld [vmem:[%s4] sm:$0x1]
    %v2471 = vlaneseq
    %v2472 = vshrl.u32 %v2471, 7
    %v2473 = vsub.s32 0, %v2472
    %v2474 = vrot.slane %v2469, %v2473
    %v2604 = vunpack.c.l.b16 %v2341
    %v2605 = vunpack.c.l.b16 %v2342
    %v2606 = vunpack.c.l.b16 %v2343
    %v2607 = vunpack.c.l.b16 %v2344
    %v2608 = vunpack.c.l.b16 %v2345
    %v2609 = vunpack.c.l.b16 %v2346
    %v2610 = vunpack.c.l.b16 %v2347
    %v2611 = vunpack.c.l.b16 %v2348
    %v2612 = vunpack.c.l.b16 %v2349
    %v2613 = vunpack.c.l.b16 %v2350
    %v2614 = vunpack.c.l.b16 %v2351
    %v2615 = vunpack.c.l.b16 %v2352
    %v2616 = vunpack.c.l.b16 %v2353
    %v2617 = vunpack.c.l.b16 %v2354
    %v2618 = vunpack.c.l.b16 %v2355
    %v2619 = vunpack.c.l.b16 %v2356
    %v2620 = vunpack.c.l.b16 %v2357
    %v2621 = vunpack.c.l.b16 %v2358
    %v2622 = vunpack.c.l.b16 %v2359
    %v2623 = vunpack.c.l.b16 %v2360
    %v2624 = vunpack.c.l.b16 %v2361
    %v2625 = vunpack.c.l.b16 %v2362
    %v2626 = vunpack.c.l.b16 %v2363
    %v2627 = vunpack.c.l.b16 %v2364
    %v2628 = vunpack.c.l.b16 %v2365
    %v2629 = vunpack.c.l.b16 %v2366
    %v2630 = vunpack.c.l.b16 %v2367
    %v2631 = vunpack.c.l.b16 %v2368
    %v2632 = vunpack.c.l.b16 %v2369
    %v2633 = vunpack.c.l.b16 %v2370
    %v2634 = vunpack.c.l.b16 %v2371
    %v2635 = vunpack.c.l.b16 %v2372
    %v2636 = vunpack.c.l.b16 %v2373
    %v2637 = vunpack.c.l.b16 %v2374
    %v2638 = vunpack.c.l.b16 %v2375
    %v2639 = vunpack.c.l.b16 %v2376
    %v2640 = vunpack.c.l.b16 %v2377
    %v2641 = vunpack.c.l.b16 %v2378
    %v2642 = vunpack.c.l.b16 %v2379
    %v2643 = vunpack.c.l.b16 %v2380
    %v2644 = vunpack.c.l.b16 %v2381
    %v2645 = vunpack.c.l.b16 %v2382
    %v2646 = vunpack.c.l.b16 %v2383
    %v2647 = vunpack.c.l.b16 %v2384
    %v2648 = vunpack.c.l.b16 %v2385
    %v2649 = vunpack.c.l.b16 %v2386
    %v2650 = vunpack.c.l.b16 %v2387
    %v2651 = vunpack.c.l.b16 %v2388
    %v2652 = vunpack.c.l.b16 %v2389
    %v2653 = vunpack.c.l.b16 %v2390
    %v2654 = vunpack.c.l.b16 %v2391
    %v2655 = vunpack.c.l.b16 %v2392
    %v2656 = vunpack.c.l.b16 %v2393
    %v2657 = vunpack.c.l.b16 %v2394
    %v2658 = vunpack.c.l.b16 %v2395
    %v2659 = vunpack.c.l.b16 %v2396
    %v2660 = vunpack.c.l.b16 %v2397
    %v2661 = vunpack.c.l.b16 %v2398
    %v2662 = vunpack.c.l.b16 %v2399
    %v2663 = vunpack.c.l.b16 %v2400
    %v2664 = vunpack.c.l.b16 %v2401
    %v2665 = vunpack.c.l.b16 %v2402
    %v2666 = vunpack.c.l.b16 %v2403
    %v2667 = vunpack.c.l.b16 %v2404
    %v2668 = vunpack.c.l.b16 %v2405
    %v2669 = vunpack.c.l.b16 %v2406
    %v2670 = vunpack.c.l.b16 %v2407
    %v2671 = vunpack.c.l.b16 %v2408
    %v2672 = vunpack.c.l.b16 %v2409
    %v2673 = vunpack.c.l.b16 %v2410
    %v2674 = vunpack.c.l.b16 %v2411
    %v2675 = vunpack.c.l.b16 %v2412
    %v2676 = vunpack.c.l.b16 %v2413
    %v2677 = vunpack.c.l.b16 %v2414
    %v2678 = vunpack.c.l.b16 %v2415
    %v2679 = vunpack.c.l.b16 %v2416
    %v2680 = vunpack.c.l.b16 %v2417
    %v2681 = vunpack.c.l.b16 %v2418
    %v2682 = vunpack.c.l.b16 %v2419
    %v2683 = vunpack.c.l.b16 %v2420
    %v2684 = vunpack.c.l.b16 %v2421
    %v2685 = vunpack.c.l.b16 %v2422
    %v2686 = vunpack.c.l.b16 %v2423
    %v2687 = vunpack.c.l.b16 %v2424
    %v2688 = vunpack.c.l.b16 %v2425
    %v2689 = vunpack.c.l.b16 %v2426
    %v2690 = vunpack.c.l.b16 %v2427
    %v2691 = vunpack.c.l.b16 %v2428
    %v2692 = vunpack.c.l.b16 %v2429
    %v2693 = vunpack.c.l.b16 %v2430
    %v2694 = vunpack.c.l.b16 %v2431
    %v2695 = vunpack.c.l.b16 %v2432
    %v2696 = vunpack.c.l.b16 %v2433
    %v2697 = vunpack.c.l.b16 %v2434
    %v2698 = vunpack.c.l.b16 %v2435
    %v2699 = vunpack.c.l.b16 %v2436
    %v2700 = vunpack.c.l.b16 %v2437
    %v2701 = vunpack.c.l.b16 %v2438
    %v2702 = vunpack.c.l.b16 %v2439
    %v2703 = vunpack.c.l.b16 %v2440
    %v2704 = vunpack.c.l.b16 %v2441
    %v2705 = vunpack.c.l.b16 %v2442
    %v2706 = vunpack.c.l.b16 %v2443
    %v2707 = vunpack.c.l.b16 %v2444
    %v2708 = vunpack.c.l.b16 %v2445
    %v2709 = vunpack.c.l.b16 %v2446
    %v2710 = vunpack.c.l.b16 %v2447
    %v2711 = vunpack.c.l.b16 %v2448
    %v2712 = vunpack.c.l.b16 %v2449
    %v2713 = vunpack.c.l.b16 %v2450
    %v2714 = vunpack.c.l.b16 %v2451
    %v2715 = vunpack.c.l.b16 %v2452
    %v2716 = vunpack.c.l.b16 %v2453
    %v2717 = vunpack.c.l.b16 %v2454
    %v2718 = vunpack.c.l.b16 %v2455
    %v2719 = vunpack.c.l.b16 %v2456
    %v2720 = vunpack.c.l.b16 %v2457
    %v2721 = vunpack.c.l.b16 %v2458
    %v2722 = vunpack.c.l.b16 %v2459
    %v2723 = vunpack.c.l.b16 %v2460
    %v2724 = vunpack.c.l.b16 %v2461
    %v2725 = vunpack.c.l.b16 %v2462
    %v2726 = vunpack.c.l.b16 %v2463
    %v2727 = vunpack.c.l.b16 %v2464
    %v2728 = vunpack.c.l.b16 %v2465
    %v2729 = vunpack.c.l.b16 %v2466
    %v2730 = vunpack.c.l.b16 %v2467
    %v2731 = vunpack.c.l.b16 %v2468
    %v2732 = vpack.c.b16 %v2605, %v2604
    %v2733 = vpack.c.b16 %v2607, %v2606
    %v2734 = vpack.c.b16 %v2609, %v2608
    %v2735 = vpack.c.b16 %v2611, %v2610
    %v2736 = vpack.c.b16 %v2613, %v2612
    %v2737 = vpack.c.b16 %v2615, %v2614
    %v2738 = vpack.c.b16 %v2617, %v2616
    %v2739 = vpack.c.b16 %v2619, %v2618
    %v2740 = vpack.c.b16 %v2621, %v2620
    %v2741 = vpack.c.b16 %v2623, %v2622
    %v2742 = vpack.c.b16 %v2625, %v2624
    %v2743 = vpack.c.b16 %v2627, %v2626
    %v2744 = vpack.c.b16 %v2629, %v2628
    %v2745 = vpack.c.b16 %v2631, %v2630
    %v2746 = vpack.c.b16 %v2633, %v2632
    %v2747 = vpack.c.b16 %v2635, %v2634
    %v2748 = vpack.c.b16 %v2637, %v2636
    %v2749 = vpack.c.b16 %v2639, %v2638
    %v2750 = vpack.c.b16 %v2641, %v2640
    %v2751 = vpack.c.b16 %v2643, %v2642
    %v2752 = vpack.c.b16 %v2645, %v2644
    %v2753 = vpack.c.b16 %v2647, %v2646
    %v2754 = vpack.c.b16 %v2649, %v2648
    %v2755 = vpack.c.b16 %v2651, %v2650
    %v2756 = vpack.c.b16 %v2653, %v2652
    %v2757 = vpack.c.b16 %v2655, %v2654
    %v2758 = vpack.c.b16 %v2657, %v2656
    %v2759 = vpack.c.b16 %v2659, %v2658
    %v2760 = vpack.c.b16 %v2661, %v2660
    %v2761 = vpack.c.b16 %v2663, %v2662
    %v2762 = vpack.c.b16 %v2665, %v2664
    %v2763 = vpack.c.b16 %v2667, %v2666
    %v2764 = vpack.c.b16 %v2669, %v2668
    %v2765 = vpack.c.b16 %v2671, %v2670
    %v2766 = vpack.c.b16 %v2673, %v2672
    %v2767 = vpack.c.b16 %v2675, %v2674
    %v2768 = vpack.c.b16 %v2677, %v2676
    %v2769 = vpack.c.b16 %v2679, %v2678
    %v2770 = vpack.c.b16 %v2681, %v2680
    %v2771 = vpack.c.b16 %v2683, %v2682
    %v2772 = vpack.c.b16 %v2685, %v2684
    %v2773 = vpack.c.b16 %v2687, %v2686
    %v2774 = vpack.c.b16 %v2689, %v2688
    %v2775 = vpack.c.b16 %v2691, %v2690
    %v2776 = vpack.c.b16 %v2693, %v2692
    %v2777 = vpack.c.b16 %v2695, %v2694
    %v2778 = vpack.c.b16 %v2697, %v2696
    %v2779 = vpack.c.b16 %v2699, %v2698
    %v2780 = vpack.c.b16 %v2701, %v2700
    %v2781 = vpack.c.b16 %v2703, %v2702
    %v2782 = vpack.c.b16 %v2705, %v2704
    %v2783 = vpack.c.b16 %v2707, %v2706
    %v2784 = vpack.c.b16 %v2709, %v2708
    %v2785 = vpack.c.b16 %v2711, %v2710
    %v2786 = vpack.c.b16 %v2713, %v2712
    %v2787 = vpack.c.b16 %v2715, %v2714
    %v2788 = vpack.c.b16 %v2717, %v2716
    %v2789 = vpack.c.b16 %v2719, %v2718
    %v2790 = vpack.c.b16 %v2721, %v2720
    %v2791 = vpack.c.b16 %v2723, %v2722
    %v2792 = vpack.c.b16 %v2725, %v2724
    %v2793 = vpack.c.b16 %v2727, %v2726
    %v2794 = vpack.c.b16 %v2729, %v2728
    %v2795 = vpack.c.b16 %v2731, %v2730
    %2860 = vmatprep.subr.bf16.mxu0 0
    %2861 = vmatpush1.bf16.msra.mxu0 %v2739
    %2862 = vmatprep.subr.bf16.mxu0 0
    %2863 = vmatpush1.bf16.msra.mxu0 %v2738
    %2864 = vmatprep.subr.bf16.mxu0 0
    %2865 = vmatpush1.bf16.msra.mxu0 %v2737
    %2866 = vmatprep.subr.bf16.mxu0 0
    %2867 = vmatpush1.bf16.msra.mxu0 %v2736
    %2868 = vmatprep.subr.bf16.mxu0 0
    %2869 = vmatpush1.bf16.msra.mxu0 %v2735
    %2870 = vmatprep.subr.bf16.mxu0 0
    %2871 = vmatpush1.bf16.msra.mxu0 %v2734
    %2872 = vmatprep.subr.bf16.mxu0 0
    %2873 = vmatpush1.bf16.msra.mxu0 %v2733
    %2874 = vmatprep.subr.bf16.mxu0 0
    %2875 = vmatpush1.bf16.msra.mxu0 %v2732
    %2876 = vmatprep.subr.bf16.mxu0 0
    %2877 = vmatpush2.bf16.msra.mxu0 %v2747
    %2878 = vmatprep.subr.bf16.mxu0 0
    %2879 = vmatpush2.bf16.msra.mxu0 %v2746
    %2880 = vmatprep.subr.bf16.mxu0 0
    %2881 = vmatpush2.bf16.msra.mxu0 %v2745
    %2882 = vmatprep.subr.bf16.mxu0 0
    %2883 = vmatpush2.bf16.msra.mxu0 %v2744
    %2884 = vmatprep.subr.bf16.mxu0 0
    %2885 = vmatpush2.bf16.msra.mxu0 %v2743
    %2886 = vmatprep.subr.bf16.mxu0 0
    %2887 = vmatpush2.bf16.msra.mxu0 %v2742
    %2888 = vmatprep.subr.bf16.mxu0 0
    %2889 = vmatpush2.bf16.msra.mxu0 %v2741
    %2890 = vmatprep.subr.bf16.mxu0 0
    %2891 = vmatpush2.bf16.msra.mxu0 %v2740
    %2892 = vmatprep.mubr.bf16.mxu0 %v2334
    %2893 = vmatmul.mubr.bf16.gmra.mxu0 %v2333
    %v2894 = vpop.f32.mrf.mxu0
    %v2895 = vadd.f32 %v2474, %v2894
    %v2896 = vpop.f32.mrf.mxu0
    %v2897 = vpop.f32.mrf.mxu0
    %v2898 = vpop.f32.mrf.mxu0
    %2899 = vdwg.mxu0
    %2900 = vmatprep.subr.bf16.mxu0 0
    %2901 = vmatpush1.bf16.msra.mxu0 %v2755
    %2902 = vmatprep.subr.bf16.mxu0 0
    %2903 = vmatpush1.bf16.msra.mxu0 %v2754
    %2904 = vmatprep.subr.bf16.mxu0 0
    %2905 = vmatpush1.bf16.msra.mxu0 %v2753
    %2906 = vmatprep.subr.bf16.mxu0 0
    %2907 = vmatpush1.bf16.msra.mxu0 %v2752
    %2908 = vmatprep.subr.bf16.mxu0 0
    %2909 = vmatpush1.bf16.msra.mxu0 %v2751
    %2910 = vmatprep.subr.bf16.mxu0 0
    %2911 = vmatpush1.bf16.msra.mxu0 %v2750
    %2912 = vmatprep.subr.bf16.mxu0 0
    %2913 = vmatpush1.bf16.msra.mxu0 %v2749
    %2914 = vmatprep.subr.bf16.mxu0 0
    %2915 = vmatpush1.bf16.msra.mxu0 %v2748
    %2916 = vmatprep.subr.bf16.mxu0 0
    %2917 = vmatpush2.bf16.msra.mxu0 %v2763
    %2918 = vmatprep.subr.bf16.mxu0 0
    %2919 = vmatpush2.bf16.msra.mxu0 %v2762
    %2920 = vmatprep.subr.bf16.mxu0 0
    %2921 = vmatpush2.bf16.msra.mxu0 %v2761
    %2922 = vmatprep.subr.bf16.mxu0 0
    %2923 = vmatpush2.bf16.msra.mxu0 %v2760
    %2924 = vmatprep.subr.bf16.mxu0 0
    %2925 = vmatpush2.bf16.msra.mxu0 %v2759
    %2926 = vmatprep.subr.bf16.mxu0 0
    %2927 = vmatpush2.bf16.msra.mxu0 %v2758
    %2928 = vmatprep.subr.bf16.mxu0 0
    %2929 = vmatpush2.bf16.msra.mxu0 %v2757
    %2930 = vmatprep.subr.bf16.mxu0 0
    %2931 = vmatpush2.bf16.msra.mxu0 %v2756
    %2932 = vmatprep.mubr.bf16.mxu0 %v2336
    %2933 = vmatmul.mubr.bf16.gmra.mxu0 %v2335
    %v2934 = vpop.f32.mrf.mxu0
    %v2935 = vadd.f32 %v2895, %v2934
    %v2936 = vpop.f32.mrf.mxu0
    %v2937 = vpop.f32.mrf.mxu0
    %v2938 = vpop.f32.mrf.mxu0
    %2939 = vdwg.mxu0
    %2940 = vmatprep.subr.bf16.mxu0 0
    %2941 = vmatpush1.bf16.msra.mxu0 %v2771
    %2942 = vmatprep.subr.bf16.mxu0 0
    %2943 = vmatpush1.bf16.msra.mxu0 %v2770
    %2944 = vmatprep.subr.bf16.mxu0 0
    %2945 = vmatpush1.bf16.msra.mxu0 %v2769
    %2946 = vmatprep.subr.bf16.mxu0 0
    %2947 = vmatpush1.bf16.msra.mxu0 %v2768
    %2948 = vmatprep.subr.bf16.mxu0 0
    %2949 = vmatpush1.bf16.msra.mxu0 %v2767
    %2950 = vmatprep.subr.bf16.mxu0 0
    %2951 = vmatpush1.bf16.msra.mxu0 %v2766
    %2952 = vmatprep.subr.bf16.mxu0 0
    %2953 = vmatpush1.bf16.msra.mxu0 %v2765
    %2954 = vmatprep.subr.bf16.mxu0 0
    %2955 = vmatpush1.bf16.msra.mxu0 %v2764
    %2956 = vmatprep.subr.bf16.mxu0 0
    %2957 = vmatpush2.bf16.msra.mxu0 %v2779
    %2958 = vmatprep.subr.bf16.mxu0 0
    %2959 = vmatpush2.bf16.msra.mxu0 %v2778
    %2960 = vmatprep.subr.bf16.mxu0 0
    %2961 = vmatpush2.bf16.msra.mxu0 %v2777
    %2962 = vmatprep.subr.bf16.mxu0 0
    %2963 = vmatpush2.bf16.msra.mxu0 %v2776
    %2964 = vmatprep.subr.bf16.mxu0 0
    %2965 = vmatpush2.bf16.msra.mxu0 %v2775
    %2966 = vmatprep.subr.bf16.mxu0 0
    %2967 = vmatpush2.bf16.msra.mxu0 %v2774
    %2968 = vmatprep.subr.bf16.mxu0 0
    %2969 = vmatpush2.bf16.msra.mxu0 %v2773
    %2970 = vmatprep.subr.bf16.mxu0 0
    %2971 = vmatpush2.bf16.msra.mxu0 %v2772
    %2972 = vmatprep.mubr.bf16.mxu0 %v2338
    %2973 = vmatmul.mubr.bf16.gmra.mxu0 %v2337
    %v2974 = vpop.f32.mrf.mxu0
    %v2975 = vadd.f32 %v2935, %v2974
    %v2976 = vpop.f32.mrf.mxu0
    %v2977 = vpop.f32.mrf.mxu0
    %v2978 = vpop.f32.mrf.mxu0
    %2979 = vdwg.mxu0
    %2980 = vmatprep.subr.bf16.mxu0 0
    %2981 = vmatpush1.bf16.msra.mxu0 %v2787
    %2982 = vmatprep.subr.bf16.mxu0 0
    %2983 = vmatpush1.bf16.msra.mxu0 %v2786
    %2984 = vmatprep.subr.bf16.mxu0 0
    %2985 = vmatpush1.bf16.msra.mxu0 %v2785
    %2986 = vmatprep.subr.bf16.mxu0 0
    %2987 = vmatpush1.bf16.msra.mxu0 %v2784
    %2988 = vmatprep.subr.bf16.mxu0 0
    %2989 = vmatpush1.bf16.msra.mxu0 %v2783
    %2990 = vmatprep.subr.bf16.mxu0 0
    %2991 = vmatpush1.bf16.msra.mxu0 %v2782
    %2992 = vmatprep.subr.bf16.mxu0 0
    %2993 = vmatpush1.bf16.msra.mxu0 %v2781
    %2994 = vmatprep.subr.bf16.mxu0 0
    %2995 = vmatpush1.bf16.msra.mxu0 %v2780
    %2996 = vmatprep.subr.bf16.mxu0 0
    %2997 = vmatpush2.bf16.msra.mxu0 %v2795
    %2998 = vmatprep.subr.bf16.mxu0 0
    %2999 = vmatpush2.bf16.msra.mxu0 %v2794
    %3000 = vmatprep.subr.bf16.mxu0 0
    %3001 = vmatpush2.bf16.msra.mxu0 %v2793
    %3002 = vmatprep.subr.bf16.mxu0 0
    %3003 = vmatpush2.bf16.msra.mxu0 %v2792
    %3004 = vmatprep.subr.bf16.mxu0 0
    %3005 = vmatpush2.bf16.msra.mxu0 %v2791
    %3006 = vmatprep.subr.bf16.mxu0 0
    %3007 = vmatpush2.bf16.msra.mxu0 %v2790
    %3008 = vmatprep.subr.bf16.mxu0 0
    %3009 = vmatpush2.bf16.msra.mxu0 %v2789
    %3010 = vmatprep.subr.bf16.mxu0 0
    %3011 = vmatpush2.bf16.msra.mxu0 %v2788
    %3012 = vmatprep.mubr.bf16.mxu0 %v2340
    %3013 = vmatmul.mubr.bf16.gmra.mxu0 %v2339
    %v3014 = vpop.f32.mrf.mxu0
    %v3015 = vadd.f32 %v2975, %v3014
    %v3016 = vpop.f32.mrf.mxu0
    %v3017 = vpop.f32.mrf.mxu0
    %v3018 = vpop.f32.mrf.mxu0
    %3019 = vdwg.mxu0
    %3020 = vst [vmem:[#allocation2] sm:$0x3] %v3015
    // Predicated region
    $region22: #{convnet_forward.5} parent=1 // pred_check
      _
    $region23: #{convnet_forward.5} parent=1 // pred_check_branch
      %3022 = sbr.rel (0) target = $region25
    $region24: #{convnet_forward.5} parent=1 // pred_region
      %s3024 = ssub.s32 32, 32
      %3025 = vsyncadd [#allocation3], %s3024
      %s3027 = sshll.u32 [#allocation2], 4
      %s3028 = int_to_ptr.vmem [resolvable:$true] %s3027
      %3030 = dma.vmem_to_hbm [thread:$0]  %s3028, 32, %s5, [#allocation3]
    $region25: #{convnet_forward.5} parent=1 // pred_fallthru
      _
    // Predicated region
    $region26: #{convnet_forward.5} parent=1 // pred_check
      _
    $region27: #{convnet_forward.5} parent=1 // pred_check_branch
      %3032 = sbr.rel (0) target = $region29
    $region28: #{convnet_forward.5} parent=1 // pred_region
      %3033 = dma.done [#allocation3], 32
    $region29: #{convnet_forward.5} parent=1 // pred_fallthru
      _
    %3034 = vsyncpa [#allocation3], 1

</llo_original>
